<compile_context>
chip_gen: v7x
topology: tpu7x:2x2x1
jax: 0.10.0
libtpu: 0.0.40
codegen_flags: <defaults>
</compile_context>

<pallas_src>
import functools

import jax
import jax.numpy as jnp
import numpy as np
from jax import lax
from jax.experimental import pallas as pl
from jax.experimental.pallas import tpu as pltpu

LEAKY_SLOPE = 0.2
GN_GROUPS = 8
GN_EPS = 1e-5
_LANE = 128


def _flat_geometry(h2, w2):
    """Geometry of the 2-zero-padded, row-major flattened image."""
    ws = w2 + 4                      # row stride of the padded image
    q_raw = 2 * ws + 2               # flat index of image pixel (0, 0)
    lead = (-q_raw) % _LANE          # leading zeros -> lane-aligned stores
    flat = (h2 + 4) * ws + lead      # total flat length
    q0 = q_raw + lead                # aligned flat index of pixel (0, 0)
    m = h2 * ws                      # contiguous flat range covering all outputs
    return ws, flat, q0, q_raw, m


# ------------------------------ Pallas kernel ------------------------------ #

def _decoder_up_fuse_kernel(mask_ref, gmat_ref,
                            xu_ref, enc_ref,
                            wup_ref, bup_ref,
                            w1u_ref, w1e_ref, g1_ref, be1_ref,
                            w2_ref, g2_ref, be2_ref,
                            out_ref, up_scr, x1_scr,
                            *, h2, w2, cout, groups, residual):
    ws, flat, q0, _, m = _flat_geometry(h2, w2)
    gs = cout // groups
    inv_count = 1.0 / float(h2 * w2 * gs)
    tail = flat - (q0 + m)           # bottom padding strip length (= 2*ws - 2)

    maskf = mask_ref[...]            # (1, m) f32 {0,1}: valid-column mask
    gmat = gmat_ref[...]             # (cout, cout) f32 group-membership matrix

    def conv3x3(pairs):
        # 3x3 conv as 9 accumulated MXU matmuls over static lane-offset windows
        # of the flat 2-padded sources (no (9*sumC, m) tap stack in VMEM).
        # pairs: list of (weight_ref (9, cout, C) bf16, src ref view (C, flat) bf16)
        acc = None
        for t in range(9):
            dy, dx = t // 3, t % 3
            start = q0 + (dy - 1) * ws + (dx - 1)
            for w_ref, src in pairs:
                c = jnp.dot(w_ref[t], src[:, start:start + m],
                            preferred_element_type=jnp.float32)
                acc = c if acc is None else acc + c
        return acc

    def group_norm_lrelu(acc, gamma, beta):
        # Single masked pass: S1 = sum(x), S2 = sum(x^2) -> mean, var (f32).
        am = acc * maskf
        s1 = jnp.dot(gmat, jnp.sum(am, axis=1, keepdims=True),
                     preferred_element_type=jnp.float32)
        s2 = jnp.dot(gmat, jnp.sum(am * am, axis=1, keepdims=True),
                     preferred_element_type=jnp.float32)
        mean = s1 * inv_count
        var = jnp.maximum(s2 * inv_count - mean * mean, 0.0)
        y = (acc - mean) * lax.rsqrt(var + GN_EPS) * gamma + beta
        return jnp.where(y >= 0.0, y, LEAKY_SLOPE * y)

    # Zero only the top/bottom padding strips of the scratch slabs; the interior
    # [q0, q0+m) is fully overwritten (masked) below before it is ever read.
    # Done every iteration (cheap: ~4 rows) so correctness does not depend on
    # how the "parallel" batch axis is split across cores.
    up_scr[:, 0:q0] = jnp.zeros((cout, q0), up_scr.dtype)
    up_scr[:, q0 + m:flat] = jnp.zeros((cout, tail), up_scr.dtype)
    x1_scr[:, 0:q0] = jnp.zeros((cout, q0), x1_scr.dtype)
    x1_scr[:, q0 + m:flat] = jnp.zeros((cout, tail), x1_scr.dtype)

    # ---- UpConv: 3x3 conv (+bias) of the bilinearly upsampled decoder input --
    up = conv3x3([(wup_ref, xu_ref.at[0])]) + bup_ref[...]            # (cout, m) f32
    up_scr[:, q0:q0 + m] = (up * maskf).astype(up_scr.dtype)

    # ---- dec conv1 over concat([up, enc]) + GroupNorm + LeakyReLU ------------
    # The channel concat is free: two accumulated weight/source pairs.
    acc1 = conv3x3([(w1u_ref, up_scr), (w1e_ref, enc_ref.at[0])])
    x1 = group_norm_lrelu(acc1, g1_ref[...], be1_ref[...])
    x1_scr[:, q0:q0 + m] = (x1 * maskf).astype(x1_scr.dtype)

    # ---- dec conv2 + GroupNorm + LeakyReLU (+ residual add) ------------------
    acc2 = conv3x3([(w2_ref, x1_scr)])
    x2 = group_norm_lrelu(acc2, g2_ref[...], be2_ref[...])
    # No output masking: pad columns are sliced off by the wrapper.
    out_ref[0] = (x1 + x2) if residual else x2


# ------------------------------- JAX wrapper -------------------------------- #

# TODO(synk): fuse this fixed-weight x2 bilinear upsample into the Pallas kernel
# (4-phase folded up-conv on the low-res input) so xu_flat is never
# materialized in HBM — largest remaining avoidable HBM transfer.
def _upsample2x_bilinear_nchw(x):
    """F.interpolate(scale_factor=2, mode='bilinear', align_corners=False),
    expressed gather-free (clamped shifts + fixed 0.25/0.75 blends)."""
    n, c, h, w = x.shape
    top = jnp.concatenate([x[:, :, :1], x[:, :, :-1]], axis=2)    # row i-1 (clamped)
    bot = jnp.concatenate([x[:, :, 1:], x[:, :, -1:]], axis=2)    # row i+1 (clamped)
    even = 0.75 * x + 0.25 * top
    odd = 0.75 * x + 0.25 * bot
    xr = jnp.stack([even, odd], axis=3).reshape(n, c, 2 * h, w)
    lft = jnp.concatenate([xr[:, :, :, :1], xr[:, :, :, :-1]], axis=3)
    rgt = jnp.concatenate([xr[:, :, :, 1:], xr[:, :, :, -1:]], axis=3)
    even = 0.75 * xr + 0.25 * lft
    odd = 0.75 * xr + 0.25 * rgt
    return jnp.stack([even, odd], axis=4).reshape(n, c, 2 * h, 2 * w)


def _to_flat(x_nchw, lead):
    """Zero-pad spatially by 2, flatten H/W row-major, left-pad for lane alignment."""
    n, c, h, w = x_nchw.shape
    xp = jnp.pad(x_nchw, ((0, 0), (0, 0), (2, 2), (2, 2)))
    return jnp.pad(xp.reshape(n, c, (h + 4) * (w + 4)), ((0, 0), (0, 0), (lead, 0)))


def _weight_taps(w_hwio):
    """(3,3,I,O) HWIO conv weight -> (9, O, I) tap-major bf16 (t = dy*3 + dx)."""
    o = w_hwio.shape[-1]
    i = w_hwio.shape[-2]
    return jnp.transpose(w_hwio, (0, 1, 3, 2)).reshape(9, o, i).astype(jnp.bfloat16)


def _vmem_limit_bytes():
    """Generation-aware scoped-VMEM limit: ~96 MiB on v5e/v6e, ~48 MiB on v7x."""
    cap = 128 * 1024 * 1024
    try:
        cap = int(pltpu.get_tpu_info().vmem_capacity_bytes)
    except Exception:
        pass
    return int(min(100 * 1024 * 1024, (cap * 3) // 4))


@functools.partial(jax.jit, static_argnames=("residual_block",))
def decoder_up_fuse_forward(params, decoder_lower_nchw, encoder_nchw,
                            residual_block=True):
    """Pallas implementation of DecoderUpFuseModule.forward (NCHW in/out)."""
    n, cin, h, w = decoder_lower_nchw.shape
    cout = cin // 2
    h2, w2 = 2 * h, 2 * w
    ws, flat, q0, q_raw, m = _flat_geometry(h2, w2)
    lead = q0 - q_raw

    xu = _upsample2x_bilinear_nchw(decoder_lower_nchw.astype(jnp.float32))
    xu_flat = _to_flat(xu, lead).astype(jnp.bfloat16)                 # (n, cin, flat)
    enc_flat = _to_flat(encoder_nchw.astype(jnp.float32),
                        lead).astype(jnp.bfloat16)                    # (n, cout, flat)

    # Hoisted per-iteration constants (tiny, constant-index inputs).
    pos = np.arange(m, dtype=np.int64)
    col = (pos + q_raw) % ws
    maskf = jnp.asarray(((col >= 2) & (col < w2 + 2))
                        .astype(np.float32).reshape(1, m))            # (1, m)
    grp = np.arange(cout) // (cout // GN_GROUPS)
    gmat = jnp.asarray((grp[:, None] == grp[None, :]).astype(np.float32))

    w_up = _weight_taps(params["up_w"])                               # (9, cout, cin)
    w_d1 = _weight_taps(params["dec1_w"])                             # (9, cout, 2*cout)
    w_d1u = w_d1[:, :, :cout]                                         # taps on `up`
    w_d1e = w_d1[:, :, cout:]                                         # taps on `enc`
    w_d2 = _weight_taps(params["dec2_w"])                             # (9, cout, cout)
    b_up = params["up_b"].reshape(cout, 1).astype(jnp.float32)
    g1 = params["dec1_gamma"].reshape(cout, 1).astype(jnp.float32)
    be1 = params["dec1_beta"].reshape(cout, 1).astype(jnp.float32)
    g2 = params["dec2_gamma"].reshape(cout, 1).astype(jnp.float32)
    be2 = params["dec2_beta"].reshape(cout, 1).astype(jnp.float32)

    kernel = functools.partial(_decoder_up_fuse_kernel, h2=h2, w2=w2, cout=cout,
                               groups=GN_GROUPS, residual=residual_block)

    def _const(x):
        nd = x.ndim
        return pl.BlockSpec(x.shape, lambda i, nd=nd: (0,) * nd)

    # TODO(synk): for large H2*W2 on v7x (64 MiB VMEM) add a spatial row-block
    # grid axis with tile-accumulated GroupNorm statistics; here one sample
    # fits comfortably and the batch axis is the parallel axis.
    out_flat = pl.pallas_call(
        kernel,
        out_shape=jax.ShapeDtypeStruct((n, cout, m), jnp.float32),
        grid=(n,),
        in_specs=[
            _const(maskf), _const(gmat),
            pl.BlockSpec((1, cin, flat), lambda i: (i, 0, 0)),
            pl.BlockSpec((1, cout, flat), lambda i: (i, 0, 0)),
            _const(w_up), _const(b_up),
            _const(w_d1u), _const(w_d1e), _const(g1), _const(be1),
            _const(w_d2), _const(g2), _const(be2),
        ],
        out_specs=pl.BlockSpec((1, cout, m), lambda i: (i, 0, 0)),
        scratch_shapes=[pltpu.VMEM((cout, flat), jnp.bfloat16),
                        pltpu.VMEM((cout, flat), jnp.bfloat16)],
        compiler_params=pltpu.CompilerParams(
            dimension_semantics=("parallel",),
            vmem_limit_bytes=_vmem_limit_bytes()),
    )(maskf, gmat, xu_flat, enc_flat, w_up, b_up,
      w_d1u, w_d1e, g1, be1, w_d2, g2, be2)

    # (n, cout, h2*ws) -> NCHW: drop the padding columns of each image row.
    return out_flat.reshape(n, cout, h2, ws)[:, :, :, :w2]


# --------------------------- pure-JAX reference ----------------------------- #

def _conv3x3_nchw_ref(x, w_hwio, b=None):
    y = lax.conv_general_dilated(
        x, w_hwio, window_strides=(1, 1), padding=((1, 1), (1, 1)),
        dimension_numbers=("NCHW", "HWIO", "NCHW"))
    if b is not None:
        y = y + b.reshape(1, -1, 1, 1)
    return y


def _gn_lrelu_nchw_ref(x, gamma, beta):
    n, c, h, w = x.shape
    xg = x.reshape(n, GN_GROUPS, c // GN_GROUPS, h, w)
    mean = xg.mean(axis=(2, 3, 4), keepdims=True)
    var = ((xg - mean) ** 2).mean(axis=(2, 3, 4), keepdims=True)
    xn = ((xg - mean) * lax.rsqrt(var + GN_EPS)).reshape(n, c, h, w)
    y = xn * gamma.reshape(1, c, 1, 1) + beta.reshape(1, c, 1, 1)
    return jnp.where(y >= 0.0, y, LEAKY_SLOPE * y)


def decoder_up_fuse_reference(params, decoder_lower_nchw, encoder_nchw,
                              residual_block=True):
    x = decoder_lower_nchw.astype(jnp.float32)
    enc = encoder_nchw.astype(jnp.float32)
    up = _conv3x3_nchw_ref(_upsample2x_bilinear_nchw(x),
                           params["up_w"], params["up_b"])
    fused = jnp.concatenate([up, enc], axis=1)
    x1 = _gn_lrelu_nchw_ref(_conv3x3_nchw_ref(fused, params["dec1_w"]),
                            params["dec1_gamma"], params["dec1_beta"])
    x2 = _gn_lrelu_nchw_ref(_conv3x3_nchw_ref(x1, params["dec2_w"]),
                            params["dec2_gamma"], params["dec2_beta"])
    return (x1 + x2) if residual_block else x2


# ---------------------------------- params ---------------------------------- #

def init_params(key, in_channels):
    cout = in_channels // 2
    ks = jax.random.split(key, 4)

    def w_init(k, cin, co):  # canonical HWIO (3, 3, Cin, Cout)
        return jax.random.normal(k, (3, 3, cin, co), jnp.float32) / np.sqrt(9.0 * cin)

    return dict(
        up_w=w_init(ks[0], in_channels, cout),
        up_b=jax.random.normal(ks[1], (cout,), jnp.float32) * 0.05,
        dec1_w=w_init(ks[2], 2 * cout, cout),
        dec1_gamma=jnp.ones((cout,), jnp.float32),
        dec1_beta=jnp.zeros((cout,), jnp.float32),
        dec2_w=w_init(ks[3], cout, cout),
        dec2_gamma=jnp.ones((cout,), jnp.float32),
        dec2_beta=jnp.zeros((cout,), jnp.float32),
    )


# ----------------------------------- main ------------------------------------ #

if __name__ == "__main__":
    key = jax.random.PRNGKey(0)
    k_p, k_x, k_e = jax.random.split(key, 3)

    N, C_IN, H, W = 2, 32, 8, 8            # in_channels=32 -> out_channels=16
    C_OUT = C_IN // 2
    RESIDUAL = True

    params = init_params(k_p, C_IN)
    decoder_lower = jax.random.normal(k_x, (N, C_IN, H, W), jnp.float32)
    encoder = jax.random.normal(k_e, (N, C_OUT, 2 * H, 2 * W), jnp.float32)

    out = decoder_up_fuse_forward(params, decoder_lower, encoder,
                                  residual_block=RESIDUAL)
    out = jax.block_until_ready(out)
    assert out.shape == (N, C_OUT, 2 * H, 2 * W)

    ref = decoder_up_fuse_reference(params, decoder_lower, encoder,
                                    residual_block=RESIDUAL)
    np.testing.assert_allclose(np.asarray(out), np.asarray(ref),
                               rtol=5e-2, atol=5e-2)
    print("KERNEL_OK")
</pallas_src>

<mosaic_0001>
module attributes {stable_mosaic.version = 11 : i64} {
  func.func @_decoder_up_fuse_kernel(%arg0: i32, %arg1: memref<1x320xf32, #tpu.memory_space<vmem>>, %arg2: memref<16x16xf32, #tpu.memory_space<vmem>>, %arg3: memref<1x32x486xbf16, #tpu.memory_space<vmem>>, %arg4: memref<1x16x486xbf16, #tpu.memory_space<vmem>>, %arg5: memref<9x16x32xbf16, #tpu.memory_space<vmem>>, %arg6: memref<16x1xf32, #tpu.memory_space<vmem>>, %arg7: memref<9x16x16xbf16, #tpu.memory_space<vmem>>, %arg8: memref<9x16x16xbf16, #tpu.memory_space<vmem>>, %arg9: memref<16x1xf32, #tpu.memory_space<vmem>>, %arg10: memref<16x1xf32, #tpu.memory_space<vmem>>, %arg11: memref<9x16x16xbf16, #tpu.memory_space<vmem>>, %arg12: memref<16x1xf32, #tpu.memory_space<vmem>>, %arg13: memref<16x1xf32, #tpu.memory_space<vmem>>, %arg14: memref<1x16x320xf32, #tpu.memory_space<vmem>>, %arg15: memref<16x486xbf16, #tpu.memory_space<vmem>>, %arg16: memref<16x486xbf16, #tpu.memory_space<vmem>>) attributes {dimension_semantics = [#tpu.dimension_semantics<parallel>], iteration_bounds = array<i64: 2>, scalar_prefetch = 0 : i64, scratch_operands = 2 : i64, tpu.core_type = #tpu.core_type<tc>, window_params = [{pipeline_mode = #tpu.pipeline_mode<synchronous>, transform_indices = @transform_0, window_bounds = array<i64: 1, 320>}, {pipeline_mode = #tpu.pipeline_mode<synchronous>, transform_indices = @transform_1, window_bounds = array<i64: 16, 16>}, {transform_indices = @transform_2, window_bounds = array<i64: 1, 32, 486>}, {transform_indices = @transform_3, window_bounds = array<i64: 1, 16, 486>}, {pipeline_mode = #tpu.pipeline_mode<synchronous>, transform_indices = @transform_4, window_bounds = array<i64: 9, 16, 32>}, {pipeline_mode = #tpu.pipeline_mode<synchronous>, transform_indices = @transform_5, window_bounds = array<i64: 16, 1>}, {pipeline_mode = #tpu.pipeline_mode<synchronous>, transform_indices = @transform_6, window_bounds = array<i64: 9, 16, 16>}, {pipeline_mode = #tpu.pipeline_mode<synchronous>, transform_indices = @transform_7, window_bounds = array<i64: 9, 16, 16>}, {pipeline_mode = #tpu.pipeline_mode<synchronous>, transform_indices = @transform_8, window_bounds = array<i64: 16, 1>}, {pipeline_mode = #tpu.pipeline_mode<synchronous>, transform_indices = @transform_9, window_bounds = array<i64: 16, 1>}, {pipeline_mode = #tpu.pipeline_mode<synchronous>, transform_indices = @transform_10, window_bounds = array<i64: 9, 16, 16>}, {pipeline_mode = #tpu.pipeline_mode<synchronous>, transform_indices = @transform_11, window_bounds = array<i64: 16, 1>}, {pipeline_mode = #tpu.pipeline_mode<synchronous>, transform_indices = @transform_12, window_bounds = array<i64: 16, 1>}, {transform_indices = @transform_13, window_bounds = array<i64: 1, 16, 320>}]} {
    %c0 = arith.constant 0 : index
    %c0_0 = arith.constant 0 : index
    %0 = vector.load %arg1[%c0, %c0_0] : memref<1x320xf32, #tpu.memory_space<vmem>>, vector<1x320xf32>
    %c0_1 = arith.constant 0 : index
    %c0_2 = arith.constant 0 : index
    %1 = vector.load %arg2[%c0_1, %c0_2] : memref<16x16xf32, #tpu.memory_space<vmem>>, vector<16x16xf32>
    %cst = arith.constant 0.000000e+00 : bf16
    %2 = vector.broadcast %cst : bf16 to vector<16x128xbf16>
    %c0_3 = arith.constant 0 : index
    %c0_4 = arith.constant 0 : index
    %3 = vector.load %arg15[%c0_3, %c0_4] : memref<16x486xbf16, #tpu.memory_space<vmem>>, vector<16x128xbf16>
    tpu.vector_store %arg15[%c0_3, %c0_4], %2 {strides = array<i32>} : memref<16x486xbf16, #tpu.memory_space<vmem>>, vector<16x128xbf16>,
    %cst_5 = arith.constant 0.000000e+00 : bf16
    %4 = vector.broadcast %cst_5 : bf16 to vector<16x38xbf16>
    %c0_6 = arith.constant 0 : index
    %c448 = arith.constant 448 : index
    %5 = vector.load %arg15[%c0_6, %c448] : memref<16x486xbf16, #tpu.memory_space<vmem>>, vector<16x38xbf16>
    tpu.vector_store %arg15[%c0_6, %c448], %4 {strides = array<i32>} : memref<16x486xbf16, #tpu.memory_space<vmem>>, vector<16x38xbf16>,
    %cst_7 = arith.constant 0.000000e+00 : bf16
    %6 = vector.broadcast %cst_7 : bf16 to vector<16x128xbf16>
    %c0_8 = arith.constant 0 : index
    %c0_9 = arith.constant 0 : index
    %7 = vector.load %arg16[%c0_8, %c0_9] : memref<16x486xbf16, #tpu.memory_space<vmem>>, vector<16x128xbf16>
    tpu.vector_store %arg16[%c0_8, %c0_9], %6 {strides = array<i32>} : memref<16x486xbf16, #tpu.memory_space<vmem>>, vector<16x128xbf16>,
    %cst_10 = arith.constant 0.000000e+00 : bf16
    %8 = vector.broadcast %cst_10 : bf16 to vector<16x38xbf16>
    %c0_11 = arith.constant 0 : index
    %c448_12 = arith.constant 448 : index
    %9 = vector.load %arg16[%c0_11, %c448_12] : memref<16x486xbf16, #tpu.memory_space<vmem>>, vector<16x38xbf16>
    tpu.vector_store %arg16[%c0_11, %c448_12], %8 {strides = array<i32>} : memref<16x486xbf16, #tpu.memory_space<vmem>>, vector<16x38xbf16>,
    %c0_13 = arith.constant 0 : index
    %c0_14 = arith.constant 0 : index
    %c0_15 = arith.constant 0 : index
    %10 = vector.load %arg5[%c0_13, %c0_14, %c0_15] : memref<9x16x32xbf16, #tpu.memory_space<vmem>>, vector<1x16x32xbf16>
    %11 = vector.shape_cast %10 : vector<1x16x32xbf16> to vector<16x32xbf16>
    %c0_i32 = arith.constant 0 : i32
    %c0_i32_16 = arith.constant 0 : i32
    %c0_i32_17 = arith.constant 0 : i32
    %12 = tpu.memref_slice %arg3[%c0_i32, %c0_i32_16, %c0_i32_17] : memref<1x32x486xbf16, #tpu.memory_space<vmem>> -> memref<1x32x486xbf16, #tpu.memory_space<vmem>>
    %13 = tpu.memref_squeeze %12 : memref<1x32x486xbf16, #tpu.memory_space<vmem>> -> memref<32x486xbf16, #tpu.memory_space<vmem>>
    %c0_18 = arith.constant 0 : index
    %c107 = arith.constant 107 : index
    %14 = vector.load %13[%c0_18, %c107] : memref<32x486xbf16, #tpu.memory_space<vmem>>, vector<32x320xbf16>
    %cst_19 = arith.constant dense<0.000000e+00> : vector<16x320xf32>
    %15 = tpu.matmul %11, %14, %cst_19 {dimension_numbers = #tpu.dot_dimension_numbers<[1], [0], [0], [1], [0, 0, 1, 1], [], []>} : vector<16x32xbf16>, vector<32x320xbf16>, vector<16x320xf32> -> vector<16x320xf32>
    %c1 = arith.constant 1 : index
    %c0_20 = arith.constant 0 : index
    %c0_21 = arith.constant 0 : index
    %16 = vector.load %arg5[%c1, %c0_20, %c0_21] : memref<9x16x32xbf16, #tpu.memory_space<vmem>>, vector<1x16x32xbf16>
    %17 = vector.shape_cast %16 : vector<1x16x32xbf16> to vector<16x32xbf16>
    %c0_i32_22 = arith.constant 0 : i32
    %c0_i32_23 = arith.constant 0 : i32
    %c0_i32_24 = arith.constant 0 : i32
    %18 = tpu.memref_slice %arg3[%c0_i32_22, %c0_i32_23, %c0_i32_24] : memref<1x32x486xbf16, #tpu.memory_space<vmem>> -> memref<1x32x486xbf16, #tpu.memory_space<vmem>>
    %19 = tpu.memref_squeeze %18 : memref<1x32x486xbf16, #tpu.memory_space<vmem>> -> memref<32x486xbf16, #tpu.memory_space<vmem>>
    %c0_25 = arith.constant 0 : index
    %c108 = arith.constant 108 : index
    %20 = vector.load %19[%c0_25, %c108] : memref<32x486xbf16, #tpu.memory_space<vmem>>, vector<32x320xbf16>
    %cst_26 = arith.constant dense<0.000000e+00> : vector<16x320xf32>
    %21 = tpu.matmul %17, %20, %cst_26 {dimension_numbers = #tpu.dot_dimension_numbers<[1], [0], [0], [1], [0, 0, 1, 1], [], []>} : vector<16x32xbf16>, vector<32x320xbf16>, vector<16x320xf32> -> vector<16x320xf32>
    %22 = arith.addf %15, %21 : vector<16x320xf32>
    %c2 = arith.constant 2 : index
    %c0_27 = arith.constant 0 : index
    %c0_28 = arith.constant 0 : index
    %23 = vector.load %arg5[%c2, %c0_27, %c0_28] : memref<9x16x32xbf16, #tpu.memory_space<vmem>>, vector<1x16x32xbf16>
    %24 = vector.shape_cast %23 : vector<1x16x32xbf16> to vector<16x32xbf16>
    %c0_i32_29 = arith.constant 0 : i32
    %c0_i32_30 = arith.constant 0 : i32
    %c0_i32_31 = arith.constant 0 : i32
    %25 = tpu.memref_slice %arg3[%c0_i32_29, %c0_i32_30, %c0_i32_31] : memref<1x32x486xbf16, #tpu.memory_space<vmem>> -> memref<1x32x486xbf16, #tpu.memory_space<vmem>>
    %26 = tpu.memref_squeeze %25 : memref<1x32x486xbf16, #tpu.memory_space<vmem>> -> memref<32x486xbf16, #tpu.memory_space<vmem>>
    %c0_32 = arith.constant 0 : index
    %c109 = arith.constant 109 : index
    %27 = vector.load %26[%c0_32, %c109] : memref<32x486xbf16, #tpu.memory_space<vmem>>, vector<32x320xbf16>
    %cst_33 = arith.constant dense<0.000000e+00> : vector<16x320xf32>
    %28 = tpu.matmul %24, %27, %cst_33 {dimension_numbers = #tpu.dot_dimension_numbers<[1], [0], [0], [1], [0, 0, 1, 1], [], []>} : vector<16x32xbf16>, vector<32x320xbf16>, vector<16x320xf32> -> vector<16x320xf32>
    %29 = arith.addf %22, %28 : vector<16x320xf32>
    %c3 = arith.constant 3 : index
    %c0_34 = arith.constant 0 : index
    %c0_35 = arith.constant 0 : index
    %30 = vector.load %arg5[%c3, %c0_34, %c0_35] : memref<9x16x32xbf16, #tpu.memory_space<vmem>>, vector<1x16x32xbf16>
    %31 = vector.shape_cast %30 : vector<1x16x32xbf16> to vector<16x32xbf16>
    %c0_i32_36 = arith.constant 0 : i32
    %c0_i32_37 = arith.constant 0 : i32
    %c0_i32_38 = arith.constant 0 : i32
    %32 = tpu.memref_slice %arg3[%c0_i32_36, %c0_i32_37, %c0_i32_38] : memref<1x32x486xbf16, #tpu.memory_space<vmem>> -> memref<1x32x486xbf16, #tpu.memory_space<vmem>>
    %33 = tpu.memref_squeeze %32 : memref<1x32x486xbf16, #tpu.memory_space<vmem>> -> memref<32x486xbf16, #tpu.memory_space<vmem>>
    %c0_39 = arith.constant 0 : index
    %c127 = arith.constant 127 : index
    %34 = vector.load %33[%c0_39, %c127] : memref<32x486xbf16, #tpu.memory_space<vmem>>, vector<32x320xbf16>
    %cst_40 = arith.constant dense<0.000000e+00> : vector<16x320xf32>
    %35 = tpu.matmul %31, %34, %cst_40 {dimension_numbers = #tpu.dot_dimension_numbers<[1], [0], [0], [1], [0, 0, 1, 1], [], []>} : vector<16x32xbf16>, vector<32x320xbf16>, vector<16x320xf32> -> vector<16x320xf32>
    %36 = arith.addf %29, %35 : vector<16x320xf32>
    %c4 = arith.constant 4 : index
    %c0_41 = arith.constant 0 : index
    %c0_42 = arith.constant 0 : index
    %37 = vector.load %arg5[%c4, %c0_41, %c0_42] : memref<9x16x32xbf16, #tpu.memory_space<vmem>>, vector<1x16x32xbf16>
    %38 = vector.shape_cast %37 : vector<1x16x32xbf16> to vector<16x32xbf16>
    %c0_i32_43 = arith.constant 0 : i32
    %c0_i32_44 = arith.constant 0 : i32
    %c0_i32_45 = arith.constant 0 : i32
    %39 = tpu.memref_slice %arg3[%c0_i32_43, %c0_i32_44, %c0_i32_45] : memref<1x32x486xbf16, #tpu.memory_space<vmem>> -> memref<1x32x486xbf16, #tpu.memory_space<vmem>>
    %40 = tpu.memref_squeeze %39 : memref<1x32x486xbf16, #tpu.memory_space<vmem>> -> memref<32x486xbf16, #tpu.memory_space<vmem>>
    %c0_46 = arith.constant 0 : index
    %c128 = arith.constant 128 : index
    %41 = vector.load %40[%c0_46, %c128] : memref<32x486xbf16, #tpu.memory_space<vmem>>, vector<32x320xbf16>
    %cst_47 = arith.constant dense<0.000000e+00> : vector<16x320xf32>
    %42 = tpu.matmul %38, %41, %cst_47 {dimension_numbers = #tpu.dot_dimension_numbers<[1], [0], [0], [1], [0, 0, 1, 1], [], []>} : vector<16x32xbf16>, vector<32x320xbf16>, vector<16x320xf32> -> vector<16x320xf32>
    %43 = arith.addf %36, %42 : vector<16x320xf32>
    %c5 = arith.constant 5 : index
    %c0_48 = arith.constant 0 : index
    %c0_49 = arith.constant 0 : index
    %44 = vector.load %arg5[%c5, %c0_48, %c0_49] : memref<9x16x32xbf16, #tpu.memory_space<vmem>>, vector<1x16x32xbf16>
    %45 = vector.shape_cast %44 : vector<1x16x32xbf16> to vector<16x32xbf16>
    %c0_i32_50 = arith.constant 0 : i32
    %c0_i32_51 = arith.constant 0 : i32
    %c0_i32_52 = arith.constant 0 : i32
    %46 = tpu.memref_slice %arg3[%c0_i32_50, %c0_i32_51, %c0_i32_52] : memref<1x32x486xbf16, #tpu.memory_space<vmem>> -> memref<1x32x486xbf16, #tpu.memory_space<vmem>>
    %47 = tpu.memref_squeeze %46 : memref<1x32x486xbf16, #tpu.memory_space<vmem>> -> memref<32x486xbf16, #tpu.memory_space<vmem>>
    %c0_53 = arith.constant 0 : index
    %c129 = arith.constant 129 : index
    %48 = vector.load %47[%c0_53, %c129] : memref<32x486xbf16, #tpu.memory_space<vmem>>, vector<32x320xbf16>
    %cst_54 = arith.constant dense<0.000000e+00> : vector<16x320xf32>
    %49 = tpu.matmul %45, %48, %cst_54 {dimension_numbers = #tpu.dot_dimension_numbers<[1], [0], [0], [1], [0, 0, 1, 1], [], []>} : vector<16x32xbf16>, vector<32x320xbf16>, vector<16x320xf32> -> vector<16x320xf32>
    %50 = arith.addf %43, %49 : vector<16x320xf32>
    %c6 = arith.constant 6 : index
    %c0_55 = arith.constant 0 : index
    %c0_56 = arith.constant 0 : index
    %51 = vector.load %arg5[%c6, %c0_55, %c0_56] : memref<9x16x32xbf16, #tpu.memory_space<vmem>>, vector<1x16x32xbf16>
    %52 = vector.shape_cast %51 : vector<1x16x32xbf16> to vector<16x32xbf16>
    %c0_i32_57 = arith.constant 0 : i32
    %c0_i32_58 = arith.constant 0 : i32
    %c0_i32_59 = arith.constant 0 : i32
    %53 = tpu.memref_slice %arg3[%c0_i32_57, %c0_i32_58, %c0_i32_59] : memref<1x32x486xbf16, #tpu.memory_space<vmem>> -> memref<1x32x486xbf16, #tpu.memory_space<vmem>>
    %54 = tpu.memref_squeeze %53 : memref<1x32x486xbf16, #tpu.memory_space<vmem>> -> memref<32x486xbf16, #tpu.memory_space<vmem>>
    %c0_60 = arith.constant 0 : index
    %c147 = arith.constant 147 : index
    %55 = vector.load %54[%c0_60, %c147] : memref<32x486xbf16, #tpu.memory_space<vmem>>, vector<32x320xbf16>
    %cst_61 = arith.constant dense<0.000000e+00> : vector<16x320xf32>
    %56 = tpu.matmul %52, %55, %cst_61 {dimension_numbers = #tpu.dot_dimension_numbers<[1], [0], [0], [1], [0, 0, 1, 1], [], []>} : vector<16x32xbf16>, vector<32x320xbf16>, vector<16x320xf32> -> vector<16x320xf32>
    %57 = arith.addf %50, %56 : vector<16x320xf32>
    %c7 = arith.constant 7 : index
    %c0_62 = arith.constant 0 : index
    %c0_63 = arith.constant 0 : index
    %58 = vector.load %arg5[%c7, %c0_62, %c0_63] : memref<9x16x32xbf16, #tpu.memory_space<vmem>>, vector<1x16x32xbf16>
    %59 = vector.shape_cast %58 : vector<1x16x32xbf16> to vector<16x32xbf16>
    %c0_i32_64 = arith.constant 0 : i32
    %c0_i32_65 = arith.constant 0 : i32
    %c0_i32_66 = arith.constant 0 : i32
    %60 = tpu.memref_slice %arg3[%c0_i32_64, %c0_i32_65, %c0_i32_66] : memref<1x32x486xbf16, #tpu.memory_space<vmem>> -> memref<1x32x486xbf16, #tpu.memory_space<vmem>>
    %61 = tpu.memref_squeeze %60 : memref<1x32x486xbf16, #tpu.memory_space<vmem>> -> memref<32x486xbf16, #tpu.memory_space<vmem>>
    %c0_67 = arith.constant 0 : index
    %c148 = arith.constant 148 : index
    %62 = vector.load %61[%c0_67, %c148] : memref<32x486xbf16, #tpu.memory_space<vmem>>, vector<32x320xbf16>
    %cst_68 = arith.constant dense<0.000000e+00> : vector<16x320xf32>
    %63 = tpu.matmul %59, %62, %cst_68 {dimension_numbers = #tpu.dot_dimension_numbers<[1], [0], [0], [1], [0, 0, 1, 1], [], []>} : vector<16x32xbf16>, vector<32x320xbf16>, vector<16x320xf32> -> vector<16x320xf32>
    %64 = arith.addf %57, %63 : vector<16x320xf32>
    %c8 = arith.constant 8 : index
    %c0_69 = arith.constant 0 : index
    %c0_70 = arith.constant 0 : index
    %65 = vector.load %arg5[%c8, %c0_69, %c0_70] : memref<9x16x32xbf16, #tpu.memory_space<vmem>>, vector<1x16x32xbf16>
    %66 = vector.shape_cast %65 : vector<1x16x32xbf16> to vector<16x32xbf16>
    %c0_i32_71 = arith.constant 0 : i32
    %c0_i32_72 = arith.constant 0 : i32
    %c0_i32_73 = arith.constant 0 : i32
    %67 = tpu.memref_slice %arg3[%c0_i32_71, %c0_i32_72, %c0_i32_73] : memref<1x32x486xbf16, #tpu.memory_space<vmem>> -> memref<1x32x486xbf16, #tpu.memory_space<vmem>>
    %68 = tpu.memref_squeeze %67 : memref<1x32x486xbf16, #tpu.memory_space<vmem>> -> memref<32x486xbf16, #tpu.memory_space<vmem>>
    %c0_74 = arith.constant 0 : index
    %c149 = arith.constant 149 : index
    %69 = vector.load %68[%c0_74, %c149] : memref<32x486xbf16, #tpu.memory_space<vmem>>, vector<32x320xbf16>
    %cst_75 = arith.constant dense<0.000000e+00> : vector<16x320xf32>
    %70 = tpu.matmul %66, %69, %cst_75 {dimension_numbers = #tpu.dot_dimension_numbers<[1], [0], [0], [1], [0, 0, 1, 1], [], []>} : vector<16x32xbf16>, vector<32x320xbf16>, vector<16x320xf32> -> vector<16x320xf32>
    %71 = arith.addf %64, %70 : vector<16x320xf32>
    %c0_76 = arith.constant 0 : index
    %c0_77 = arith.constant 0 : index
    %72 = vector.load %arg6[%c0_76, %c0_77] : memref<16x1xf32, #tpu.memory_space<vmem>>, vector<16x1xf32>
    %73 = vector.broadcast %72 : vector<16x1xf32> to vector<16x320xf32>
    %74 = arith.addf %71, %73 : vector<16x320xf32>
    %75 = vector.broadcast %0 : vector<1x320xf32> to vector<16x320xf32>
    %76 = arith.mulf %74, %75 : vector<16x320xf32>
    %77 = arith.truncf %76 : vector<16x320xf32> to vector<16x320xbf16>
    %c0_78 = arith.constant 0 : index
    %c128_79 = arith.constant 128 : index
    %78 = vector.load %arg15[%c0_78, %c128_79] : memref<16x486xbf16, #tpu.memory_space<vmem>>, vector<16x320xbf16>
    tpu.vector_store %arg15[%c0_78, %c128_79], %77 {strides = array<i32>} : memref<16x486xbf16, #tpu.memory_space<vmem>>, vector<16x320xbf16>,
    %c0_80 = arith.constant 0 : index
    %c0_81 = arith.constant 0 : index
    %c0_82 = arith.constant 0 : index
    %79 = vector.load %arg7[%c0_80, %c0_81, %c0_82] : memref<9x16x16xbf16, #tpu.memory_space<vmem>>, vector<1x16x16xbf16>
    %80 = vector.shape_cast %79 : vector<1x16x16xbf16> to vector<16x16xbf16>
    %c0_83 = arith.constant 0 : index
    %c107_84 = arith.constant 107 : index
    %81 = vector.load %arg15[%c0_83, %c107_84] : memref<16x486xbf16, #tpu.memory_space<vmem>>, vector<16x320xbf16>
    %cst_85 = arith.constant dense<0.000000e+00> : vector<16x320xf32>
    %82 = tpu.matmul %80, %81, %cst_85 {dimension_numbers = #tpu.dot_dimension_numbers<[1], [0], [0], [1], [0, 0, 1, 1], [], []>} : vector<16x16xbf16>, vector<16x320xbf16>, vector<16x320xf32> -> vector<16x320xf32>
    %c0_86 = arith.constant 0 : index
    %c0_87 = arith.constant 0 : index
    %c0_88 = arith.constant 0 : index
    %83 = vector.load %arg8[%c0_86, %c0_87, %c0_88] : memref<9x16x16xbf16, #tpu.memory_space<vmem>>, vector<1x16x16xbf16>
    %84 = vector.shape_cast %83 : vector<1x16x16xbf16> to vector<16x16xbf16>
    %c0_i32_89 = arith.constant 0 : i32
    %c0_i32_90 = arith.constant 0 : i32
    %c0_i32_91 = arith.constant 0 : i32
    %85 = tpu.memref_slice %arg4[%c0_i32_89, %c0_i32_90, %c0_i32_91] : memref<1x16x486xbf16, #tpu.memory_space<vmem>> -> memref<1x16x486xbf16, #tpu.memory_space<vmem>>
    %86 = tpu.memref_squeeze %85 : memref<1x16x486xbf16, #tpu.memory_space<vmem>> -> memref<16x486xbf16, #tpu.memory_space<vmem>>
    %c0_92 = arith.constant 0 : index
    %c107_93 = arith.constant 107 : index
    %87 = vector.load %86[%c0_92, %c107_93] : memref<16x486xbf16, #tpu.memory_space<vmem>>, vector<16x320xbf16>
    %cst_94 = arith.constant dense<0.000000e+00> : vector<16x320xf32>
    %88 = tpu.matmul %84, %87, %cst_94 {dimension_numbers = #tpu.dot_dimension_numbers<[1], [0], [0], [1], [0, 0, 1, 1], [], []>} : vector<16x16xbf16>, vector<16x320xbf16>, vector<16x320xf32> -> vector<16x320xf32>
    %89 = arith.addf %82, %88 : vector<16x320xf32>
    %c1_95 = arith.constant 1 : index
    %c0_96 = arith.constant 0 : index
    %c0_97 = arith.constant 0 : index
    %90 = vector.load %arg7[%c1_95, %c0_96, %c0_97] : memref<9x16x16xbf16, #tpu.memory_space<vmem>>, vector<1x16x16xbf16>
    %91 = vector.shape_cast %90 : vector<1x16x16xbf16> to vector<16x16xbf16>
    %c0_98 = arith.constant 0 : index
    %c108_99 = arith.constant 108 : index
    %92 = vector.load %arg15[%c0_98, %c108_99] : memref<16x486xbf16, #tpu.memory_space<vmem>>, vector<16x320xbf16>
    %cst_100 = arith.constant dense<0.000000e+00> : vector<16x320xf32>
    %93 = tpu.matmul %91, %92, %cst_100 {dimension_numbers = #tpu.dot_dimension_numbers<[1], [0], [0], [1], [0, 0, 1, 1], [], []>} : vector<16x16xbf16>, vector<16x320xbf16>, vector<16x320xf32> -> vector<16x320xf32>
    %94 = arith.addf %89, %93 : vector<16x320xf32>
    %c1_101 = arith.constant 1 : index
    %c0_102 = arith.constant 0 : index
    %c0_103 = arith.constant 0 : index
    %95 = vector.load %arg8[%c1_101, %c0_102, %c0_103] : memref<9x16x16xbf16, #tpu.memory_space<vmem>>, vector<1x16x16xbf16>
    %96 = vector.shape_cast %95 : vector<1x16x16xbf16> to vector<16x16xbf16>
    %c0_i32_104 = arith.constant 0 : i32
    %c0_i32_105 = arith.constant 0 : i32
    %c0_i32_106 = arith.constant 0 : i32
    %97 = tpu.memref_slice %arg4[%c0_i32_104, %c0_i32_105, %c0_i32_106] : memref<1x16x486xbf16, #tpu.memory_space<vmem>> -> memref<1x16x486xbf16, #tpu.memory_space<vmem>>
    %98 = tpu.memref_squeeze %97 : memref<1x16x486xbf16, #tpu.memory_space<vmem>> -> memref<16x486xbf16, #tpu.memory_space<vmem>>
    %c0_107 = arith.constant 0 : index
    %c108_108 = arith.constant 108 : index
    %99 = vector.load %98[%c0_107, %c108_108] : memref<16x486xbf16, #tpu.memory_space<vmem>>, vector<16x320xbf16>
    %cst_109 = arith.constant dense<0.000000e+00> : vector<16x320xf32>
    %100 = tpu.matmul %96, %99, %cst_109 {dimension_numbers = #tpu.dot_dimension_numbers<[1], [0], [0], [1], [0, 0, 1, 1], [], []>} : vector<16x16xbf16>, vector<16x320xbf16>, vector<16x320xf32> -> vector<16x320xf32>
    %101 = arith.addf %94, %100 : vector<16x320xf32>
    %c2_110 = arith.constant 2 : index
    %c0_111 = arith.constant 0 : index
    %c0_112 = arith.constant 0 : index
    %102 = vector.load %arg7[%c2_110, %c0_111, %c0_112] : memref<9x16x16xbf16, #tpu.memory_space<vmem>>, vector<1x16x16xbf16>
    %103 = vector.shape_cast %102 : vector<1x16x16xbf16> to vector<16x16xbf16>
    %c0_113 = arith.constant 0 : index
    %c109_114 = arith.constant 109 : index
    %104 = vector.load %arg15[%c0_113, %c109_114] : memref<16x486xbf16, #tpu.memory_space<vmem>>, vector<16x320xbf16>
    %cst_115 = arith.constant dense<0.000000e+00> : vector<16x320xf32>
    %105 = tpu.matmul %103, %104, %cst_115 {dimension_numbers = #tpu.dot_dimension_numbers<[1], [0], [0], [1], [0, 0, 1, 1], [], []>} : vector<16x16xbf16>, vector<16x320xbf16>, vector<16x320xf32> -> vector<16x320xf32>
    %106 = arith.addf %101, %105 : vector<16x320xf32>
    %c2_116 = arith.constant 2 : index
    %c0_117 = arith.constant 0 : index
    %c0_118 = arith.constant 0 : index
    %107 = vector.load %arg8[%c2_116, %c0_117, %c0_118] : memref<9x16x16xbf16, #tpu.memory_space<vmem>>, vector<1x16x16xbf16>
    %108 = vector.shape_cast %107 : vector<1x16x16xbf16> to vector<16x16xbf16>
    %c0_i32_119 = arith.constant 0 : i32
    %c0_i32_120 = arith.constant 0 : i32
    %c0_i32_121 = arith.constant 0 : i32
    %109 = tpu.memref_slice %arg4[%c0_i32_119, %c0_i32_120, %c0_i32_121] : memref<1x16x486xbf16, #tpu.memory_space<vmem>> -> memref<1x16x486xbf16, #tpu.memory_space<vmem>>
    %110 = tpu.memref_squeeze %109 : memref<1x16x486xbf16, #tpu.memory_space<vmem>> -> memref<16x486xbf16, #tpu.memory_space<vmem>>
    %c0_122 = arith.constant 0 : index
    %c109_123 = arith.constant 109 : index
    %111 = vector.load %110[%c0_122, %c109_123] : memref<16x486xbf16, #tpu.memory_space<vmem>>, vector<16x320xbf16>
    %cst_124 = arith.constant dense<0.000000e+00> : vector<16x320xf32>
    %112 = tpu.matmul %108, %111, %cst_124 {dimension_numbers = #tpu.dot_dimension_numbers<[1], [0], [0], [1], [0, 0, 1, 1], [], []>} : vector<16x16xbf16>, vector<16x320xbf16>, vector<16x320xf32> -> vector<16x320xf32>
    %113 = arith.addf %106, %112 : vector<16x320xf32>
    %c3_125 = arith.constant 3 : index
    %c0_126 = arith.constant 0 : index
    %c0_127 = arith.constant 0 : index
    %114 = vector.load %arg7[%c3_125, %c0_126, %c0_127] : memref<9x16x16xbf16, #tpu.memory_space<vmem>>, vector<1x16x16xbf16>
    %115 = vector.shape_cast %114 : vector<1x16x16xbf16> to vector<16x16xbf16>
    %c0_128 = arith.constant 0 : index
    %c127_129 = arith.constant 127 : index
    %116 = vector.load %arg15[%c0_128, %c127_129] : memref<16x486xbf16, #tpu.memory_space<vmem>>, vector<16x320xbf16>
    %cst_130 = arith.constant dense<0.000000e+00> : vector<16x320xf32>
    %117 = tpu.matmul %115, %116, %cst_130 {dimension_numbers = #tpu.dot_dimension_numbers<[1], [0], [0], [1], [0, 0, 1, 1], [], []>} : vector<16x16xbf16>, vector<16x320xbf16>, vector<16x320xf32> -> vector<16x320xf32>
    %118 = arith.addf %113, %117 : vector<16x320xf32>
    %c3_131 = arith.constant 3 : index
    %c0_132 = arith.constant 0 : index
    %c0_133 = arith.constant 0 : index
    %119 = vector.load %arg8[%c3_131, %c0_132, %c0_133] : memref<9x16x16xbf16, #tpu.memory_space<vmem>>, vector<1x16x16xbf16>
    %120 = vector.shape_cast %119 : vector<1x16x16xbf16> to vector<16x16xbf16>
    %c0_i32_134 = arith.constant 0 : i32
    %c0_i32_135 = arith.constant 0 : i32
    %c0_i32_136 = arith.constant 0 : i32
    %121 = tpu.memref_slice %arg4[%c0_i32_134, %c0_i32_135, %c0_i32_136] : memref<1x16x486xbf16, #tpu.memory_space<vmem>> -> memref<1x16x486xbf16, #tpu.memory_space<vmem>>
    %122 = tpu.memref_squeeze %121 : memref<1x16x486xbf16, #tpu.memory_space<vmem>> -> memref<16x486xbf16, #tpu.memory_space<vmem>>
    %c0_137 = arith.constant 0 : index
    %c127_138 = arith.constant 127 : index
    %123 = vector.load %122[%c0_137, %c127_138] : memref<16x486xbf16, #tpu.memory_space<vmem>>, vector<16x320xbf16>
    %cst_139 = arith.constant dense<0.000000e+00> : vector<16x320xf32>
    %124 = tpu.matmul %120, %123, %cst_139 {dimension_numbers = #tpu.dot_dimension_numbers<[1], [0], [0], [1], [0, 0, 1, 1], [], []>} : vector<16x16xbf16>, vector<16x320xbf16>, vector<16x320xf32> -> vector<16x320xf32>
    %125 = arith.addf %118, %124 : vector<16x320xf32>
    %c4_140 = arith.constant 4 : index
    %c0_141 = arith.constant 0 : index
    %c0_142 = arith.constant 0 : index
    %126 = vector.load %arg7[%c4_140, %c0_141, %c0_142] : memref<9x16x16xbf16, #tpu.memory_space<vmem>>, vector<1x16x16xbf16>
    %127 = vector.shape_cast %126 : vector<1x16x16xbf16> to vector<16x16xbf16>
    %c0_143 = arith.constant 0 : index
    %c128_144 = arith.constant 128 : index
    %128 = vector.load %arg15[%c0_143, %c128_144] : memref<16x486xbf16, #tpu.memory_space<vmem>>, vector<16x320xbf16>
    %cst_145 = arith.constant dense<0.000000e+00> : vector<16x320xf32>
    %129 = tpu.matmul %127, %128, %cst_145 {dimension_numbers = #tpu.dot_dimension_numbers<[1], [0], [0], [1], [0, 0, 1, 1], [], []>} : vector<16x16xbf16>, vector<16x320xbf16>, vector<16x320xf32> -> vector<16x320xf32>
    %130 = arith.addf %125, %129 : vector<16x320xf32>
    %c4_146 = arith.constant 4 : index
    %c0_147 = arith.constant 0 : index
    %c0_148 = arith.constant 0 : index
    %131 = vector.load %arg8[%c4_146, %c0_147, %c0_148] : memref<9x16x16xbf16, #tpu.memory_space<vmem>>, vector<1x16x16xbf16>
    %132 = vector.shape_cast %131 : vector<1x16x16xbf16> to vector<16x16xbf16>
    %c0_i32_149 = arith.constant 0 : i32
    %c0_i32_150 = arith.constant 0 : i32
    %c0_i32_151 = arith.constant 0 : i32
    %133 = tpu.memref_slice %arg4[%c0_i32_149, %c0_i32_150, %c0_i32_151] : memref<1x16x486xbf16, #tpu.memory_space<vmem>> -> memref<1x16x486xbf16, #tpu.memory_space<vmem>>
    %134 = tpu.memref_squeeze %133 : memref<1x16x486xbf16, #tpu.memory_space<vmem>> -> memref<16x486xbf16, #tpu.memory_space<vmem>>
    %c0_152 = arith.constant 0 : index
    %c128_153 = arith.constant 128 : index
    %135 = vector.load %134[%c0_152, %c128_153] : memref<16x486xbf16, #tpu.memory_space<vmem>>, vector<16x320xbf16>
    %cst_154 = arith.constant dense<0.000000e+00> : vector<16x320xf32>
    %136 = tpu.matmul %132, %135, %cst_154 {dimension_numbers = #tpu.dot_dimension_numbers<[1], [0], [0], [1], [0, 0, 1, 1], [], []>} : vector<16x16xbf16>, vector<16x320xbf16>, vector<16x320xf32> -> vector<16x320xf32>
    %137 = arith.addf %130, %136 : vector<16x320xf32>
    %c5_155 = arith.constant 5 : index
    %c0_156 = arith.constant 0 : index
    %c0_157 = arith.constant 0 : index
    %138 = vector.load %arg7[%c5_155, %c0_156, %c0_157] : memref<9x16x16xbf16, #tpu.memory_space<vmem>>, vector<1x16x16xbf16>
    %139 = vector.shape_cast %138 : vector<1x16x16xbf16> to vector<16x16xbf16>
    %c0_158 = arith.constant 0 : index
    %c129_159 = arith.constant 129 : index
    %140 = vector.load %arg15[%c0_158, %c129_159] : memref<16x486xbf16, #tpu.memory_space<vmem>>, vector<16x320xbf16>
    %cst_160 = arith.constant dense<0.000000e+00> : vector<16x320xf32>
    %141 = tpu.matmul %139, %140, %cst_160 {dimension_numbers = #tpu.dot_dimension_numbers<[1], [0], [0], [1], [0, 0, 1, 1], [], []>} : vector<16x16xbf16>, vector<16x320xbf16>, vector<16x320xf32> -> vector<16x320xf32>
    %142 = arith.addf %137, %141 : vector<16x320xf32>
    %c5_161 = arith.constant 5 : index
    %c0_162 = arith.constant 0 : index
    %c0_163 = arith.constant 0 : index
    %143 = vector.load %arg8[%c5_161, %c0_162, %c0_163] : memref<9x16x16xbf16, #tpu.memory_space<vmem>>, vector<1x16x16xbf16>
    %144 = vector.shape_cast %143 : vector<1x16x16xbf16> to vector<16x16xbf16>
    %c0_i32_164 = arith.constant 0 : i32
    %c0_i32_165 = arith.constant 0 : i32
    %c0_i32_166 = arith.constant 0 : i32
    %145 = tpu.memref_slice %arg4[%c0_i32_164, %c0_i32_165, %c0_i32_166] : memref<1x16x486xbf16, #tpu.memory_space<vmem>> -> memref<1x16x486xbf16, #tpu.memory_space<vmem>>
    %146 = tpu.memref_squeeze %145 : memref<1x16x486xbf16, #tpu.memory_space<vmem>> -> memref<16x486xbf16, #tpu.memory_space<vmem>>
    %c0_167 = arith.constant 0 : index
    %c129_168 = arith.constant 129 : index
    %147 = vector.load %146[%c0_167, %c129_168] : memref<16x486xbf16, #tpu.memory_space<vmem>>, vector<16x320xbf16>
    %cst_169 = arith.constant dense<0.000000e+00> : vector<16x320xf32>
    %148 = tpu.matmul %144, %147, %cst_169 {dimension_numbers = #tpu.dot_dimension_numbers<[1], [0], [0], [1], [0, 0, 1, 1], [], []>} : vector<16x16xbf16>, vector<16x320xbf16>, vector<16x320xf32> -> vector<16x320xf32>
    %149 = arith.addf %142, %148 : vector<16x320xf32>
    %c6_170 = arith.constant 6 : index
    %c0_171 = arith.constant 0 : index
    %c0_172 = arith.constant 0 : index
    %150 = vector.load %arg7[%c6_170, %c0_171, %c0_172] : memref<9x16x16xbf16, #tpu.memory_space<vmem>>, vector<1x16x16xbf16>
    %151 = vector.shape_cast %150 : vector<1x16x16xbf16> to vector<16x16xbf16>
    %c0_173 = arith.constant 0 : index
    %c147_174 = arith.constant 147 : index
    %152 = vector.load %arg15[%c0_173, %c147_174] : memref<16x486xbf16, #tpu.memory_space<vmem>>, vector<16x320xbf16>
    %cst_175 = arith.constant dense<0.000000e+00> : vector<16x320xf32>
    %153 = tpu.matmul %151, %152, %cst_175 {dimension_numbers = #tpu.dot_dimension_numbers<[1], [0], [0], [1], [0, 0, 1, 1], [], []>} : vector<16x16xbf16>, vector<16x320xbf16>, vector<16x320xf32> -> vector<16x320xf32>
    %154 = arith.addf %149, %153 : vector<16x320xf32>
    %c6_176 = arith.constant 6 : index
    %c0_177 = arith.constant 0 : index
    %c0_178 = arith.constant 0 : index
    %155 = vector.load %arg8[%c6_176, %c0_177, %c0_178] : memref<9x16x16xbf16, #tpu.memory_space<vmem>>, vector<1x16x16xbf16>
    %156 = vector.shape_cast %155 : vector<1x16x16xbf16> to vector<16x16xbf16>
    %c0_i32_179 = arith.constant 0 : i32
    %c0_i32_180 = arith.constant 0 : i32
    %c0_i32_181 = arith.constant 0 : i32
    %157 = tpu.memref_slice %arg4[%c0_i32_179, %c0_i32_180, %c0_i32_181] : memref<1x16x486xbf16, #tpu.memory_space<vmem>> -> memref<1x16x486xbf16, #tpu.memory_space<vmem>>
    %158 = tpu.memref_squeeze %157 : memref<1x16x486xbf16, #tpu.memory_space<vmem>> -> memref<16x486xbf16, #tpu.memory_space<vmem>>
    %c0_182 = arith.constant 0 : index
    %c147_183 = arith.constant 147 : index
    %159 = vector.load %158[%c0_182, %c147_183] : memref<16x486xbf16, #tpu.memory_space<vmem>>, vector<16x320xbf16>
    %cst_184 = arith.constant dense<0.000000e+00> : vector<16x320xf32>
    %160 = tpu.matmul %156, %159, %cst_184 {dimension_numbers = #tpu.dot_dimension_numbers<[1], [0], [0], [1], [0, 0, 1, 1], [], []>} : vector<16x16xbf16>, vector<16x320xbf16>, vector<16x320xf32> -> vector<16x320xf32>
    %161 = arith.addf %154, %160 : vector<16x320xf32>
    %c7_185 = arith.constant 7 : index
    %c0_186 = arith.constant 0 : index
    %c0_187 = arith.constant 0 : index
    %162 = vector.load %arg7[%c7_185, %c0_186, %c0_187] : memref<9x16x16xbf16, #tpu.memory_space<vmem>>, vector<1x16x16xbf16>
    %163 = vector.shape_cast %162 : vector<1x16x16xbf16> to vector<16x16xbf16>
    %c0_188 = arith.constant 0 : index
    %c148_189 = arith.constant 148 : index
    %164 = vector.load %arg15[%c0_188, %c148_189] : memref<16x486xbf16, #tpu.memory_space<vmem>>, vector<16x320xbf16>
    %cst_190 = arith.constant dense<0.000000e+00> : vector<16x320xf32>
    %165 = tpu.matmul %163, %164, %cst_190 {dimension_numbers = #tpu.dot_dimension_numbers<[1], [0], [0], [1], [0, 0, 1, 1], [], []>} : vector<16x16xbf16>, vector<16x320xbf16>, vector<16x320xf32> -> vector<16x320xf32>
    %166 = arith.addf %161, %165 : vector<16x320xf32>
    %c7_191 = arith.constant 7 : index
    %c0_192 = arith.constant 0 : index
    %c0_193 = arith.constant 0 : index
    %167 = vector.load %arg8[%c7_191, %c0_192, %c0_193] : memref<9x16x16xbf16, #tpu.memory_space<vmem>>, vector<1x16x16xbf16>
    %168 = vector.shape_cast %167 : vector<1x16x16xbf16> to vector<16x16xbf16>
    %c0_i32_194 = arith.constant 0 : i32
    %c0_i32_195 = arith.constant 0 : i32
    %c0_i32_196 = arith.constant 0 : i32
    %169 = tpu.memref_slice %arg4[%c0_i32_194, %c0_i32_195, %c0_i32_196] : memref<1x16x486xbf16, #tpu.memory_space<vmem>> -> memref<1x16x486xbf16, #tpu.memory_space<vmem>>
    %170 = tpu.memref_squeeze %169 : memref<1x16x486xbf16, #tpu.memory_space<vmem>> -> memref<16x486xbf16, #tpu.memory_space<vmem>>
    %c0_197 = arith.constant 0 : index
    %c148_198 = arith.constant 148 : index
    %171 = vector.load %170[%c0_197, %c148_198] : memref<16x486xbf16, #tpu.memory_space<vmem>>, vector<16x320xbf16>
    %cst_199 = arith.constant dense<0.000000e+00> : vector<16x320xf32>
    %172 = tpu.matmul %168, %171, %cst_199 {dimension_numbers = #tpu.dot_dimension_numbers<[1], [0], [0], [1], [0, 0, 1, 1], [], []>} : vector<16x16xbf16>, vector<16x320xbf16>, vector<16x320xf32> -> vector<16x320xf32>
    %173 = arith.addf %166, %172 : vector<16x320xf32>
    %c8_200 = arith.constant 8 : index
    %c0_201 = arith.constant 0 : index
    %c0_202 = arith.constant 0 : index
    %174 = vector.load %arg7[%c8_200, %c0_201, %c0_202] : memref<9x16x16xbf16, #tpu.memory_space<vmem>>, vector<1x16x16xbf16>
    %175 = vector.shape_cast %174 : vector<1x16x16xbf16> to vector<16x16xbf16>
    %c0_203 = arith.constant 0 : index
    %c149_204 = arith.constant 149 : index
    %176 = vector.load %arg15[%c0_203, %c149_204] : memref<16x486xbf16, #tpu.memory_space<vmem>>, vector<16x320xbf16>
    %cst_205 = arith.constant dense<0.000000e+00> : vector<16x320xf32>
    %177 = tpu.matmul %175, %176, %cst_205 {dimension_numbers = #tpu.dot_dimension_numbers<[1], [0], [0], [1], [0, 0, 1, 1], [], []>} : vector<16x16xbf16>, vector<16x320xbf16>, vector<16x320xf32> -> vector<16x320xf32>
    %178 = arith.addf %173, %177 : vector<16x320xf32>
    %c8_206 = arith.constant 8 : index
    %c0_207 = arith.constant 0 : index
    %c0_208 = arith.constant 0 : index
    %179 = vector.load %arg8[%c8_206, %c0_207, %c0_208] : memref<9x16x16xbf16, #tpu.memory_space<vmem>>, vector<1x16x16xbf16>
    %180 = vector.shape_cast %179 : vector<1x16x16xbf16> to vector<16x16xbf16>
    %c0_i32_209 = arith.constant 0 : i32
    %c0_i32_210 = arith.constant 0 : i32
    %c0_i32_211 = arith.constant 0 : i32
    %181 = tpu.memref_slice %arg4[%c0_i32_209, %c0_i32_210, %c0_i32_211] : memref<1x16x486xbf16, #tpu.memory_space<vmem>> -> memref<1x16x486xbf16, #tpu.memory_space<vmem>>
    %182 = tpu.memref_squeeze %181 : memref<1x16x486xbf16, #tpu.memory_space<vmem>> -> memref<16x486xbf16, #tpu.memory_space<vmem>>
    %c0_212 = arith.constant 0 : index
    %c149_213 = arith.constant 149 : index
    %183 = vector.load %182[%c0_212, %c149_213] : memref<16x486xbf16, #tpu.memory_space<vmem>>, vector<16x320xbf16>
    %cst_214 = arith.constant dense<0.000000e+00> : vector<16x320xf32>
    %184 = tpu.matmul %180, %183, %cst_214 {dimension_numbers = #tpu.dot_dimension_numbers<[1], [0], [0], [1], [0, 0, 1, 1], [], []>} : vector<16x16xbf16>, vector<16x320xbf16>, vector<16x320xf32> -> vector<16x320xf32>
    %185 = arith.addf %178, %184 : vector<16x320xf32>
    %c0_215 = arith.constant 0 : index
    %c0_216 = arith.constant 0 : index
    %186 = vector.load %arg9[%c0_215, %c0_216] : memref<16x1xf32, #tpu.memory_space<vmem>>, vector<16x1xf32>
    %c0_217 = arith.constant 0 : index
    %c0_218 = arith.constant 0 : index
    %187 = vector.load %arg10[%c0_217, %c0_218] : memref<16x1xf32, #tpu.memory_space<vmem>>, vector<16x1xf32>
    %188 = vector.broadcast %0 : vector<1x320xf32> to vector<16x320xf32>
    %189 = arith.mulf %185, %188 : vector<16x320xf32>
    %cst_219 = arith.constant dense<0.000000e+00> : vector<16xf32>
    %190 = vector.multi_reduction <add>, %189, %cst_219 [1] : vector<16x320xf32> to vector<16xf32>
    %191 = vector.shape_cast %190 : vector<16xf32> to vector<16x1xf32>
    %cst_220 = arith.constant dense<0.000000e+00> : vector<16x1xf32>
    %192 = tpu.matmul %1, %191, %cst_220 {dimension_numbers = #tpu.dot_dimension_numbers<[1], [0], [0], [1], [0, 0, 1, 1], [], []>} : vector<16x16xf32>, vector<16x1xf32>, vector<16x1xf32> -> vector<16x1xf32>
    %193 = arith.mulf %189, %189 : vector<16x320xf32>
    %cst_221 = arith.constant dense<0.000000e+00> : vector<16xf32>
    %194 = vector.multi_reduction <add>, %193, %cst_221 [1] : vector<16x320xf32> to vector<16xf32>
    %195 = vector.shape_cast %194 : vector<16xf32> to vector<16x1xf32>
    %cst_222 = arith.constant dense<0.000000e+00> : vector<16x1xf32>
    %196 = tpu.matmul %1, %195, %cst_222 {dimension_numbers = #tpu.dot_dimension_numbers<[1], [0], [0], [1], [0, 0, 1, 1], [], []>} : vector<16x16xf32>, vector<16x1xf32>, vector<16x1xf32> -> vector<16x1xf32>
    %cst_223 = arith.constant 0.001953125 : f32
    %197 = vector.broadcast %cst_223 : f32 to vector<16x1xf32>
    %198 = arith.mulf %192, %197 : vector<16x1xf32>
    %cst_224 = arith.constant 0.001953125 : f32
    %199 = vector.broadcast %cst_224 : f32 to vector<16x1xf32>
    %200 = arith.mulf %196, %199 : vector<16x1xf32>
    %201 = arith.mulf %198, %198 : vector<16x1xf32>
    %202 = arith.subf %200, %201 : vector<16x1xf32>
    %cst_225 = arith.constant 0.000000e+00 : f32
    %203 = vector.broadcast %cst_225 : f32 to vector<16x1xf32>
    %204 = arith.maximumf %202, %203 : vector<16x1xf32>
    %205 = vector.broadcast %198 : vector<16x1xf32> to vector<16x320xf32>
    %206 = arith.subf %185, %205 : vector<16x320xf32>
    %cst_226 = arith.constant 9.99999974E-6 : f32
    %207 = vector.broadcast %cst_226 : f32 to vector<16x1xf32>
    %208 = arith.addf %204, %207 : vector<16x1xf32>
    %209 = math.rsqrt %208 : vector<16x1xf32>
    %210 = vector.broadcast %209 : vector<16x1xf32> to vector<16x320xf32>
    %211 = arith.mulf %206, %210 : vector<16x320xf32>
    %212 = vector.broadcast %186 : vector<16x1xf32> to vector<16x320xf32>
    %213 = arith.mulf %211, %212 : vector<16x320xf32>
    %214 = vector.broadcast %187 : vector<16x1xf32> to vector<16x320xf32>
    %215 = arith.addf %213, %214 : vector<16x320xf32>
    %cst_227 = arith.constant 0.000000e+00 : f32
    %216 = vector.broadcast %cst_227 : f32 to vector<16x320xf32>
    %217 = arith.cmpf oge, %215, %216 : vector<16x320xf32>
    %cst_228 = arith.constant 2.000000e-01 : f32
    %218 = vector.broadcast %cst_228 : f32 to vector<16x320xf32>
    %219 = arith.mulf %218, %215 : vector<16x320xf32>
    %220 = arith.select %217, %215, %219 : vector<16x320xi1>, vector<16x320xf32>
    %221 = vector.broadcast %0 : vector<1x320xf32> to vector<16x320xf32>
    %222 = arith.mulf %220, %221 : vector<16x320xf32>
    %223 = arith.truncf %222 : vector<16x320xf32> to vector<16x320xbf16>
    %c0_229 = arith.constant 0 : index
    %c128_230 = arith.constant 128 : index
    %224 = vector.load %arg16[%c0_229, %c128_230] : memref<16x486xbf16, #tpu.memory_space<vmem>>, vector<16x320xbf16>
    tpu.vector_store %arg16[%c0_229, %c128_230], %223 {strides = array<i32>} : memref<16x486xbf16, #tpu.memory_space<vmem>>, vector<16x320xbf16>,
    %c0_231 = arith.constant 0 : index
    %c0_232 = arith.constant 0 : index
    %c0_233 = arith.constant 0 : index
    %225 = vector.load %arg11[%c0_231, %c0_232, %c0_233] : memref<9x16x16xbf16, #tpu.memory_space<vmem>>, vector<1x16x16xbf16>
    %226 = vector.shape_cast %225 : vector<1x16x16xbf16> to vector<16x16xbf16>
    %c0_234 = arith.constant 0 : index
    %c107_235 = arith.constant 107 : index
    %227 = vector.load %arg16[%c0_234, %c107_235] : memref<16x486xbf16, #tpu.memory_space<vmem>>, vector<16x320xbf16>
    %cst_236 = arith.constant dense<0.000000e+00> : vector<16x320xf32>
    %228 = tpu.matmul %226, %227, %cst_236 {dimension_numbers = #tpu.dot_dimension_numbers<[1], [0], [0], [1], [0, 0, 1, 1], [], []>} : vector<16x16xbf16>, vector<16x320xbf16>, vector<16x320xf32> -> vector<16x320xf32>
    %c1_237 = arith.constant 1 : index
    %c0_238 = arith.constant 0 : index
    %c0_239 = arith.constant 0 : index
    %229 = vector.load %arg11[%c1_237, %c0_238, %c0_239] : memref<9x16x16xbf16, #tpu.memory_space<vmem>>, vector<1x16x16xbf16>
    %230 = vector.shape_cast %229 : vector<1x16x16xbf16> to vector<16x16xbf16>
    %c0_240 = arith.constant 0 : index
    %c108_241 = arith.constant 108 : index
    %231 = vector.load %arg16[%c0_240, %c108_241] : memref<16x486xbf16, #tpu.memory_space<vmem>>, vector<16x320xbf16>
    %cst_242 = arith.constant dense<0.000000e+00> : vector<16x320xf32>
    %232 = tpu.matmul %230, %231, %cst_242 {dimension_numbers = #tpu.dot_dimension_numbers<[1], [0], [0], [1], [0, 0, 1, 1], [], []>} : vector<16x16xbf16>, vector<16x320xbf16>, vector<16x320xf32> -> vector<16x320xf32>
    %233 = arith.addf %228, %232 : vector<16x320xf32>
    %c2_243 = arith.constant 2 : index
    %c0_244 = arith.constant 0 : index
    %c0_245 = arith.constant 0 : index
    %234 = vector.load %arg11[%c2_243, %c0_244, %c0_245] : memref<9x16x16xbf16, #tpu.memory_space<vmem>>, vector<1x16x16xbf16>
    %235 = vector.shape_cast %234 : vector<1x16x16xbf16> to vector<16x16xbf16>
    %c0_246 = arith.constant 0 : index
    %c109_247 = arith.constant 109 : index
    %236 = vector.load %arg16[%c0_246, %c109_247] : memref<16x486xbf16, #tpu.memory_space<vmem>>, vector<16x320xbf16>
    %cst_248 = arith.constant dense<0.000000e+00> : vector<16x320xf32>
    %237 = tpu.matmul %235, %236, %cst_248 {dimension_numbers = #tpu.dot_dimension_numbers<[1], [0], [0], [1], [0, 0, 1, 1], [], []>} : vector<16x16xbf16>, vector<16x320xbf16>, vector<16x320xf32> -> vector<16x320xf32>
    %238 = arith.addf %233, %237 : vector<16x320xf32>
    %c3_249 = arith.constant 3 : index
    %c0_250 = arith.constant 0 : index
    %c0_251 = arith.constant 0 : index
    %239 = vector.load %arg11[%c3_249, %c0_250, %c0_251] : memref<9x16x16xbf16, #tpu.memory_space<vmem>>, vector<1x16x16xbf16>
    %240 = vector.shape_cast %239 : vector<1x16x16xbf16> to vector<16x16xbf16>
    %c0_252 = arith.constant 0 : index
    %c127_253 = arith.constant 127 : index
    %241 = vector.load %arg16[%c0_252, %c127_253] : memref<16x486xbf16, #tpu.memory_space<vmem>>, vector<16x320xbf16>
    %cst_254 = arith.constant dense<0.000000e+00> : vector<16x320xf32>
    %242 = tpu.matmul %240, %241, %cst_254 {dimension_numbers = #tpu.dot_dimension_numbers<[1], [0], [0], [1], [0, 0, 1, 1], [], []>} : vector<16x16xbf16>, vector<16x320xbf16>, vector<16x320xf32> -> vector<16x320xf32>
    %243 = arith.addf %238, %242 : vector<16x320xf32>
    %c4_255 = arith.constant 4 : index
    %c0_256 = arith.constant 0 : index
    %c0_257 = arith.constant 0 : index
    %244 = vector.load %arg11[%c4_255, %c0_256, %c0_257] : memref<9x16x16xbf16, #tpu.memory_space<vmem>>, vector<1x16x16xbf16>
    %245 = vector.shape_cast %244 : vector<1x16x16xbf16> to vector<16x16xbf16>
    %c0_258 = arith.constant 0 : index
    %c128_259 = arith.constant 128 : index
    %246 = vector.load %arg16[%c0_258, %c128_259] : memref<16x486xbf16, #tpu.memory_space<vmem>>, vector<16x320xbf16>
    %cst_260 = arith.constant dense<0.000000e+00> : vector<16x320xf32>
    %247 = tpu.matmul %245, %246, %cst_260 {dimension_numbers = #tpu.dot_dimension_numbers<[1], [0], [0], [1], [0, 0, 1, 1], [], []>} : vector<16x16xbf16>, vector<16x320xbf16>, vector<16x320xf32> -> vector<16x320xf32>
    %248 = arith.addf %243, %247 : vector<16x320xf32>
    %c5_261 = arith.constant 5 : index
    %c0_262 = arith.constant 0 : index
    %c0_263 = arith.constant 0 : index
    %249 = vector.load %arg11[%c5_261, %c0_262, %c0_263] : memref<9x16x16xbf16, #tpu.memory_space<vmem>>, vector<1x16x16xbf16>
    %250 = vector.shape_cast %249 : vector<1x16x16xbf16> to vector<16x16xbf16>
    %c0_264 = arith.constant 0 : index
    %c129_265 = arith.constant 129 : index
    %251 = vector.load %arg16[%c0_264, %c129_265] : memref<16x486xbf16, #tpu.memory_space<vmem>>, vector<16x320xbf16>
    %cst_266 = arith.constant dense<0.000000e+00> : vector<16x320xf32>
    %252 = tpu.matmul %250, %251, %cst_266 {dimension_numbers = #tpu.dot_dimension_numbers<[1], [0], [0], [1], [0, 0, 1, 1], [], []>} : vector<16x16xbf16>, vector<16x320xbf16>, vector<16x320xf32> -> vector<16x320xf32>
    %253 = arith.addf %248, %252 : vector<16x320xf32>
    %c6_267 = arith.constant 6 : index
    %c0_268 = arith.constant 0 : index
    %c0_269 = arith.constant 0 : index
    %254 = vector.load %arg11[%c6_267, %c0_268, %c0_269] : memref<9x16x16xbf16, #tpu.memory_space<vmem>>, vector<1x16x16xbf16>
    %255 = vector.shape_cast %254 : vector<1x16x16xbf16> to vector<16x16xbf16>
    %c0_270 = arith.constant 0 : index
    %c147_271 = arith.constant 147 : index
    %256 = vector.load %arg16[%c0_270, %c147_271] : memref<16x486xbf16, #tpu.memory_space<vmem>>, vector<16x320xbf16>
    %cst_272 = arith.constant dense<0.000000e+00> : vector<16x320xf32>
    %257 = tpu.matmul %255, %256, %cst_272 {dimension_numbers = #tpu.dot_dimension_numbers<[1], [0], [0], [1], [0, 0, 1, 1], [], []>} : vector<16x16xbf16>, vector<16x320xbf16>, vector<16x320xf32> -> vector<16x320xf32>
    %258 = arith.addf %253, %257 : vector<16x320xf32>
    %c7_273 = arith.constant 7 : index
    %c0_274 = arith.constant 0 : index
    %c0_275 = arith.constant 0 : index
    %259 = vector.load %arg11[%c7_273, %c0_274, %c0_275] : memref<9x16x16xbf16, #tpu.memory_space<vmem>>, vector<1x16x16xbf16>
    %260 = vector.shape_cast %259 : vector<1x16x16xbf16> to vector<16x16xbf16>
    %c0_276 = arith.constant 0 : index
    %c148_277 = arith.constant 148 : index
    %261 = vector.load %arg16[%c0_276, %c148_277] : memref<16x486xbf16, #tpu.memory_space<vmem>>, vector<16x320xbf16>
    %cst_278 = arith.constant dense<0.000000e+00> : vector<16x320xf32>
    %262 = tpu.matmul %260, %261, %cst_278 {dimension_numbers = #tpu.dot_dimension_numbers<[1], [0], [0], [1], [0, 0, 1, 1], [], []>} : vector<16x16xbf16>, vector<16x320xbf16>, vector<16x320xf32> -> vector<16x320xf32>
    %263 = arith.addf %258, %262 : vector<16x320xf32>
    %c8_279 = arith.constant 8 : index
    %c0_280 = arith.constant 0 : index
    %c0_281 = arith.constant 0 : index
    %264 = vector.load %arg11[%c8_279, %c0_280, %c0_281] : memref<9x16x16xbf16, #tpu.memory_space<vmem>>, vector<1x16x16xbf16>
    %265 = vector.shape_cast %264 : vector<1x16x16xbf16> to vector<16x16xbf16>
    %c0_282 = arith.constant 0 : index
    %c149_283 = arith.constant 149 : index
    %266 = vector.load %arg16[%c0_282, %c149_283] : memref<16x486xbf16, #tpu.memory_space<vmem>>, vector<16x320xbf16>
    %cst_284 = arith.constant dense<0.000000e+00> : vector<16x320xf32>
    %267 = tpu.matmul %265, %266, %cst_284 {dimension_numbers = #tpu.dot_dimension_numbers<[1], [0], [0], [1], [0, 0, 1, 1], [], []>} : vector<16x16xbf16>, vector<16x320xbf16>, vector<16x320xf32> -> vector<16x320xf32>
    %268 = arith.addf %263, %267 : vector<16x320xf32>
    %c0_285 = arith.constant 0 : index
    %c0_286 = arith.constant 0 : index
    %269 = vector.load %arg12[%c0_285, %c0_286] : memref<16x1xf32, #tpu.memory_space<vmem>>, vector<16x1xf32>
    %c0_287 = arith.constant 0 : index
    %c0_288 = arith.constant 0 : index
    %270 = vector.load %arg13[%c0_287, %c0_288] : memref<16x1xf32, #tpu.memory_space<vmem>>, vector<16x1xf32>
    %271 = vector.broadcast %0 : vector<1x320xf32> to vector<16x320xf32>
    %272 = arith.mulf %268, %271 : vector<16x320xf32>
    %cst_289 = arith.constant dense<0.000000e+00> : vector<16xf32>
    %273 = vector.multi_reduction <add>, %272, %cst_289 [1] : vector<16x320xf32> to vector<16xf32>
    %274 = vector.shape_cast %273 : vector<16xf32> to vector<16x1xf32>
    %cst_290 = arith.constant dense<0.000000e+00> : vector<16x1xf32>
    %275 = tpu.matmul %1, %274, %cst_290 {dimension_numbers = #tpu.dot_dimension_numbers<[1], [0], [0], [1], [0, 0, 1, 1], [], []>} : vector<16x16xf32>, vector<16x1xf32>, vector<16x1xf32> -> vector<16x1xf32>
    %276 = arith.mulf %272, %272 : vector<16x320xf32>
    %cst_291 = arith.constant dense<0.000000e+00> : vector<16xf32>
    %277 = vector.multi_reduction <add>, %276, %cst_291 [1] : vector<16x320xf32> to vector<16xf32>
    %278 = vector.shape_cast %277 : vector<16xf32> to vector<16x1xf32>
    %cst_292 = arith.constant dense<0.000000e+00> : vector<16x1xf32>
    %279 = tpu.matmul %1, %278, %cst_292 {dimension_numbers = #tpu.dot_dimension_numbers<[1], [0], [0], [1], [0, 0, 1, 1], [], []>} : vector<16x16xf32>, vector<16x1xf32>, vector<16x1xf32> -> vector<16x1xf32>
    %cst_293 = arith.constant 0.001953125 : f32
    %280 = vector.broadcast %cst_293 : f32 to vector<16x1xf32>
    %281 = arith.mulf %275, %280 : vector<16x1xf32>
    %cst_294 = arith.constant 0.001953125 : f32
    %282 = vector.broadcast %cst_294 : f32 to vector<16x1xf32>
    %283 = arith.mulf %279, %282 : vector<16x1xf32>
    %284 = arith.mulf %281, %281 : vector<16x1xf32>
    %285 = arith.subf %283, %284 : vector<16x1xf32>
    %cst_295 = arith.constant 0.000000e+00 : f32
    %286 = vector.broadcast %cst_295 : f32 to vector<16x1xf32>
    %287 = arith.maximumf %285, %286 : vector<16x1xf32>
    %288 = vector.broadcast %281 : vector<16x1xf32> to vector<16x320xf32>
    %289 = arith.subf %268, %288 : vector<16x320xf32>
    %cst_296 = arith.constant 9.99999974E-6 : f32
    %290 = vector.broadcast %cst_296 : f32 to vector<16x1xf32>
    %291 = arith.addf %287, %290 : vector<16x1xf32>
    %292 = math.rsqrt %291 : vector<16x1xf32>
    %293 = vector.broadcast %292 : vector<16x1xf32> to vector<16x320xf32>
    %294 = arith.mulf %289, %293 : vector<16x320xf32>
    %295 = vector.broadcast %269 : vector<16x1xf32> to vector<16x320xf32>
    %296 = arith.mulf %294, %295 : vector<16x320xf32>
    %297 = vector.broadcast %270 : vector<16x1xf32> to vector<16x320xf32>
    %298 = arith.addf %296, %297 : vector<16x320xf32>
    %cst_297 = arith.constant 0.000000e+00 : f32
    %299 = vector.broadcast %cst_297 : f32 to vector<16x320xf32>
    %300 = arith.cmpf oge, %298, %299 : vector<16x320xf32>
    %cst_298 = arith.constant 2.000000e-01 : f32
    %301 = vector.broadcast %cst_298 : f32 to vector<16x320xf32>
    %302 = arith.mulf %301, %298 : vector<16x320xf32>
    %303 = arith.select %300, %298, %302 : vector<16x320xi1>, vector<16x320xf32>
    %304 = arith.addf %220, %303 : vector<16x320xf32>
    %c0_299 = arith.constant 0 : index
    %c0_300 = arith.constant 0 : index
    %c0_301 = arith.constant 0 : index
    %305 = vector.load %arg14[%c0_299, %c0_300, %c0_301] : memref<1x16x320xf32, #tpu.memory_space<vmem>>, vector<1x16x320xf32>
    %306 = vector.shape_cast %305 : vector<1x16x320xf32> to vector<16x320xf32>
    %307 = vector.shape_cast %304 : vector<16x320xf32> to vector<1x16x320xf32>
    tpu.vector_store %arg14[%c0_299, %c0_300, %c0_301], %307 {strides = array<i32>} : memref<1x16x320xf32, #tpu.memory_space<vmem>>, vector<1x16x320xf32>,
    return
  }
  func.func @transform_0(%arg0: i32) -> (i32, i32) {
    %c0_i32 = arith.constant 0 : i32
    %c0_i32_0 = arith.constant 0 : i32
    %c0_i32_1 = arith.constant 0 : i32
    return %c0_i32, %c0_i32_0 : i32, i32
  }
  func.func @transform_1(%arg0: i32) -> (i32, i32) {
    %c0_i32 = arith.constant 0 : i32
    %c0_i32_0 = arith.constant 0 : i32
    %c0_i32_1 = arith.constant 0 : i32
    return %c0_i32, %c0_i32_0 : i32, i32
  }
  func.func @transform_2(%arg0: i32) -> (i32, i32, i32) {
    %c0_i32 = arith.constant 0 : i32
    %c0_i32_0 = arith.constant 0 : i32
    %c0_i32_1 = arith.constant 0 : i32
    return %arg0, %c0_i32, %c0_i32_0 : i32, i32, i32
  }
  func.func @transform_3(%arg0: i32) -> (i32, i32, i32) {
    %c0_i32 = arith.constant 0 : i32
    %c0_i32_0 = arith.constant 0 : i32
    %c0_i32_1 = arith.constant 0 : i32
    return %arg0, %c0_i32, %c0_i32_0 : i32, i32, i32
  }
  func.func @transform_4(%arg0: i32) -> (i32, i32, i32) {
    %c0_i32 = arith.constant 0 : i32
    %c0_i32_0 = arith.constant 0 : i32
    %c0_i32_1 = arith.constant 0 : i32
    %c0_i32_2 = arith.constant 0 : i32
    return %c0_i32, %c0_i32_0, %c0_i32_1 : i32, i32, i32
  }
  func.func @transform_5(%arg0: i32) -> (i32, i32) {
    %c0_i32 = arith.constant 0 : i32
    %c0_i32_0 = arith.constant 0 : i32
    %c0_i32_1 = arith.constant 0 : i32
    return %c0_i32, %c0_i32_0 : i32, i32
  }
  func.func @transform_6(%arg0: i32) -> (i32, i32, i32) {
    %c0_i32 = arith.constant 0 : i32
    %c0_i32_0 = arith.constant 0 : i32
    %c0_i32_1 = arith.constant 0 : i32
    %c0_i32_2 = arith.constant 0 : i32
    return %c0_i32, %c0_i32_0, %c0_i32_1 : i32, i32, i32
  }
  func.func @transform_7(%arg0: i32) -> (i32, i32, i32) {
    %c0_i32 = arith.constant 0 : i32
    %c0_i32_0 = arith.constant 0 : i32
    %c0_i32_1 = arith.constant 0 : i32
    %c0_i32_2 = arith.constant 0 : i32
    return %c0_i32, %c0_i32_0, %c0_i32_1 : i32, i32, i32
  }
  func.func @transform_8(%arg0: i32) -> (i32, i32) {
    %c0_i32 = arith.constant 0 : i32
    %c0_i32_0 = arith.constant 0 : i32
    %c0_i32_1 = arith.constant 0 : i32
    return %c0_i32, %c0_i32_0 : i32, i32
  }
  func.func @transform_9(%arg0: i32) -> (i32, i32) {
    %c0_i32 = arith.constant 0 : i32
    %c0_i32_0 = arith.constant 0 : i32
    %c0_i32_1 = arith.constant 0 : i32
    return %c0_i32, %c0_i32_0 : i32, i32
  }
  func.func @transform_10(%arg0: i32) -> (i32, i32, i32) {
    %c0_i32 = arith.constant 0 : i32
    %c0_i32_0 = arith.constant 0 : i32
    %c0_i32_1 = arith.constant 0 : i32
    %c0_i32_2 = arith.constant 0 : i32
    return %c0_i32, %c0_i32_0, %c0_i32_1 : i32, i32, i32
  }
  func.func @transform_11(%arg0: i32) -> (i32, i32) {
    %c0_i32 = arith.constant 0 : i32
    %c0_i32_0 = arith.constant 0 : i32
    %c0_i32_1 = arith.constant 0 : i32
    return %c0_i32, %c0_i32_0 : i32, i32
  }
  func.func @transform_12(%arg0: i32) -> (i32, i32) {
    %c0_i32 = arith.constant 0 : i32
    %c0_i32_0 = arith.constant 0 : i32
    %c0_i32_1 = arith.constant 0 : i32
    return %c0_i32, %c0_i32_0 : i32, i32
  }
  func.func @transform_13(%arg0: i32) -> (i32, i32, i32) {
    %c0_i32 = arith.constant 0 : i32
    %c0_i32_0 = arith.constant 0 : i32
    %c0_i32_1 = arith.constant 0 : i32
    return %arg0, %c0_i32, %c0_i32_0 : i32, i32, i32
  }
}

</mosaic_0001>

<llo_original>
// kernel: decoder_up_fuse_forward.1
$region0: #{decoder_up_fuse_forward.1}
  #allocation0 [shape = 'u32[]', space=smem, size = 0x4, offset = 0x4, fixed_abs, tag = 'smem constant byte address 0x4 - core index']
  #allocation1 [shape = 'u32[144,128]{1,0:T(1,128)}', space=vmem, size = 0x12000, scoped, tag = 'internal scratch']
  #allocation2 [shape = 'bf16[16,486]{1,0:T(16,128)(2,1)}', space=vmem, size = 0x4000, scoped, tag = 'scratch operand']
  #allocation3 [shape = 'bf16[16,486]{1,0:T(16,128)(2,1)}', space=vmem, size = 0x4000, scoped, tag = 'scratch operand']
  %s0 = inlined_call_operand.hbm [shape: f32[1,320], index: 0, kind: input, shape index: {}]
  %s1 = inlined_call_operand.hbm [shape: f32[16,16], index: 1, kind: input, shape index: {}]
  %s2 = inlined_call_operand.hbm [shape: bf16[2,32,486], index: 2, kind: input, shape index: {}]
  %s3 = inlined_call_operand.hbm [shape: bf16[2,16,486], index: 3, kind: input, shape index: {}]
  %s4 = inlined_call_operand.hbm [shape: bf16[9,16,32], index: 4, kind: input, shape index: {}]
  %s5 = inlined_call_operand.hbm [shape: f32[16,1], index: 5, kind: input, shape index: {}]
  %s6 = inlined_call_operand.hbm [shape: bf16[9,16,16], index: 6, kind: input, shape index: {}]
  %s7 = inlined_call_operand.hbm [shape: bf16[9,16,16], index: 7, kind: input, shape index: {}]
  %s8 = inlined_call_operand.hbm [shape: f32[16,1], index: 8, kind: input, shape index: {}]
  %s9 = inlined_call_operand.hbm [shape: f32[16,1], index: 9, kind: input, shape index: {}]
  %s10 = inlined_call_operand.hbm [shape: bf16[9,16,16], index: 10, kind: input, shape index: {}]
  %s11 = inlined_call_operand.hbm [shape: f32[16,1], index: 11, kind: input, shape index: {}]
  %s12 = inlined_call_operand.hbm [shape: f32[16,1], index: 12, kind: input, shape index: {}]
  %s13 = inlined_call_operand.hbm [shape: f32[2,16,320], index: 13, kind: output, shape index: {}]
  %s14 = sld [smem:[#allocation0]]
  $region137: #{decoder_up_fuse_forward.1} parent=0
    _
  %s16 = ssub.s32 1, %s14
  %s17 = scalar_select 0, %s16, %s14
  $region1: #{decoder_up_fuse_forward.1} parent=0
    #allocation4 [shape = 'u8[1536]{0}', space=vmem, size = 0x800, scoped, tag = 'input window, operand 0, single buffered']
    #allocation5 [shape = 's32[2]{0}', space=sflag, size = 0x8, scoped, tag = 'scoped memory for decoder_up_fuse_forward.1']
    #allocation6 [shape = 's32[2]{0}', space=sflag, size = 0x8, scoped, tag = 'scoped memory for decoder_up_fuse_forward.1']
    #allocation7 [shape = 'u8[8192]{0}', space=vmem, size = 0x2000, scoped, tag = 'input window, operand 1, single buffered']
    #allocation8 [shape = 's32[1]{0}', space=sflag, size = 0x4, scoped, tag = 'scoped memory for decoder_up_fuse_forward.1']
    #allocation9 [shape = 'u8[65536]{0}', space=vmem, size = 0x10000, scoped, tag = 'input window, operand 2']
    #allocation10 [shape = 'u8[32768]{0}', space=vmem, size = 0x8000, scoped, tag = 'input window, operand 3']
    #allocation11 [shape = 'u8[36864]{0}', space=vmem, size = 0x9000, scoped, tag = 'input window, operand 4, single buffered']
    #allocation12 [shape = 'u8[8192]{0}', space=vmem, size = 0x2000, scoped, tag = 'input window, operand 5, single buffered']
    #allocation13 [shape = 's32[1]{0}', space=sflag, size = 0x4, scoped, tag = 'scoped memory for decoder_up_fuse_forward.1']
    #allocation14 [shape = 'u8[36864]{0}', space=vmem, size = 0x9000, scoped, tag = 'input window, operand 6, single buffered']
    #allocation15 [shape = 'u8[36864]{0}', space=vmem, size = 0x9000, scoped, tag = 'input window, operand 7, single buffered']
    #allocation16 [shape = 's32[1]{0}', space=sflag, size = 0x4, scoped, tag = 'scoped memory for decoder_up_fuse_forward.1']
    #allocation17 [shape = 'u8[8192]{0}', space=vmem, size = 0x2000, scoped, tag = 'input window, operand 8, single buffered']
    #allocation18 [shape = 'u8[8192]{0}', space=vmem, size = 0x2000, scoped, tag = 'input window, operand 9, single buffered']
    #allocation19 [shape = 's32[1]{0}', space=sflag, size = 0x4, scoped, tag = 'scoped memory for decoder_up_fuse_forward.1']
    #allocation20 [shape = 'u8[36864]{0}', space=vmem, size = 0x9000, scoped, tag = 'input window, operand 10, single buffered']
    #allocation21 [shape = 'u8[8192]{0}', space=vmem, size = 0x2000, scoped, tag = 'input window, operand 11, single buffered']
    #allocation22 [shape = 's32[1]{0}', space=sflag, size = 0x4, scoped, tag = 'scoped memory for decoder_up_fuse_forward.1']
    #allocation23 [shape = 'u8[8192]{0}', space=vmem, size = 0x2000, scoped, tag = 'input window, operand 12, single buffered']
    #allocation24 [shape = 'u8[49152]{0}', space=vmem, size = 0xc000, scoped, tag = 'output window, operand 0']
    %18 = vsyncpa [#allocation5], 0
    %19 = vsyncpa [#allocation8], 0
    %20 = vsyncpa [#allocation13], 0
    %21 = vsyncpa [#allocation16], 0
    %22 = vsyncpa [#allocation19], 0
    %23 = vsyncpa [#allocation22], 0
    %24 = vsyncpa [#allocation6], 0
    %s25 = scalar_lea.sflag [#allocation6], 1
    %26 = vsyncpa %s25, 0
    loop: start=0, step=1, limit=4
    $region2: #{decoder_up_fuse_forward.1} parent=1 // loop_pre_header
      _
    $region3: #{decoder_up_fuse_forward.1} parent=1 // loop_header
      %s28 = sphi 0, %s32
      %p29 = scmp.ge.s32.totalorder %s28, 4
      %s36 = sphi 0, %s36
      %s38 = sphi 0, %s36
      %s39 = sphi 0, %s38
      %s53 = sphi 0, %s39
      %s57 = sphi 0, %s57
      %s59 = sphi 0, %s57
      %s60 = sphi 0, %s59
      %s74 = sphi 0, %s60
      %s80 = sphi 0, %s82
      %s83 = sphi 0, %s80
      %s84 = sphi 0, %s83
      %s100 = sphi 0, %s84
      %s106 = sphi 0, %s108
      %s109 = sphi 0, %s106
      %s110 = sphi 0, %s109
      %s126 = sphi 0, %s110
      %s130 = sphi 0, %s130
      %s132 = sphi 0, %s130
      %s133 = sphi 0, %s132
      %s147 = sphi 0, %s133
      %s151 = sphi 0, %s151
      %s153 = sphi 0, %s151
      %s154 = sphi 0, %s153
      %s168 = sphi 0, %s154
      %s172 = sphi 0, %s172
      %s174 = sphi 0, %s172
      %s175 = sphi 0, %s174
      %s189 = sphi 0, %s175
      %s193 = sphi 0, %s193
      %s195 = sphi 0, %s193
      %s196 = sphi 0, %s195
      %s210 = sphi 0, %s196
      %s214 = sphi 0, %s214
      %s216 = sphi 0, %s214
      %s217 = sphi 0, %s216
      %s231 = sphi 0, %s217
      %s235 = sphi 0, %s235
      %s237 = sphi 0, %s235
      %s238 = sphi 0, %s237
      %s252 = sphi 0, %s238
      %s256 = sphi 0, %s256
      %s258 = sphi 0, %s256
      %s259 = sphi 0, %s258
      %s273 = sphi 0, %s259
      %s277 = sphi 0, %s277
      %s279 = sphi 0, %s277
      %s280 = sphi 0, %s279
      %s294 = sphi 0, %s280
      %s298 = sphi 0, %s298
      %s300 = sphi 0, %s298
      %s301 = sphi 0, %s300
      %s315 = sphi 0, %s301
      %s321 = sphi 0, %s323
      %s324 = sphi 0, %s321
      %s325 = sphi 0, %s324
      %s341 = sphi 0, %s325
    $region4: #{decoder_up_fuse_forward.1} parent=1 // loop_header_branch
      %31 = sbr.rel (%p29) target = $region8
    $region5: #{decoder_up_fuse_forward.1} parent=1 // loop_body
      %s33 = ssub.s32 %s28, 1
      %s34 = ssub.s32 %s28, 2
      %s35 = sadd.s32 %s28, 1
      %s37 = sadd.s32 %s36, 1
      %p40 = scmp.eq.s32.totalorder %s28, 1
      %p41 = scmp.ne.s32.totalorder %s36, %s38
      %p42 = scmp.eq.s32.totalorder %s28, 0
      %p43 = por %p41, %p42
      %p44 = scmp.ne.s32.totalorder %s36, %s38
      %p45 = scmp.eq.s32.totalorder %s33, 1
      %p46 = por %p44, %p45
      %p47 = scmp.ne.s32.totalorder %s38, %s39
      %p48 = scmp.eq.s32.totalorder %s33, 0
      %p49 = por %p47, %p48
      %p50 = scmp.ne.s32.totalorder %s38, %s39
      %p51 = scmp.eq.s32.totalorder %s34, 1
      %p52 = por %p50, %p51
      %p54 = scmp.ne.s32.totalorder %s39, %s53
      %p55 = scmp.eq.s32.totalorder %s34, 0
      %p56 = por %p54, %p55
      %s58 = sadd.s32 %s57, 1
      %p61 = scmp.eq.s32.totalorder %s28, 1
      %p62 = scmp.ne.s32.totalorder %s57, %s59
      %p63 = scmp.eq.s32.totalorder %s28, 0
      %p64 = por %p62, %p63
      %p65 = scmp.ne.s32.totalorder %s57, %s59
      %p66 = scmp.eq.s32.totalorder %s33, 1
      %p67 = por %p65, %p66
      %p68 = scmp.ne.s32.totalorder %s59, %s60
      %p69 = scmp.eq.s32.totalorder %s33, 0
      %p70 = por %p68, %p69
      %p71 = scmp.ne.s32.totalorder %s59, %s60
      %p72 = scmp.eq.s32.totalorder %s34, 1
      %p73 = por %p71, %p72
      %p75 = scmp.ne.s32.totalorder %s60, %s74
      %p76 = scmp.eq.s32.totalorder %s34, 0
      %p77 = por %p75, %p76
      %s78 = ssub.s32 %s28, %s35
      %p79 = scmp.eq.s32.totalorder %s78, 0
      %s81 = sadd.s32 %s80, 1
      %s82 = scalar_select %p79, %s80, %s81
      %p85 = pneg %p79
      %p86 = scmp.eq.s32.totalorder %s28, 1
      %p87 = por %p85, %p86
      %p88 = scmp.ne.s32.totalorder %s80, %s83
      %p89 = scmp.eq.s32.totalorder %s28, 0
      %p90 = por %p88, %p89
      %p91 = scmp.ne.s32.totalorder %s80, %s83
      %p92 = scmp.eq.s32.totalorder %s33, 1
      %p93 = por %p91, %p92
      %p94 = scmp.ne.s32.totalorder %s83, %s84
      %p95 = scmp.eq.s32.totalorder %s33, 0
      %p96 = por %p94, %p95
      %p97 = scmp.ne.s32.totalorder %s83, %s84
      %p98 = scmp.eq.s32.totalorder %s34, 1
      %p99 = por %p97, %p98
      %p101 = scmp.ne.s32.totalorder %s84, %s100
      %p102 = scmp.eq.s32.totalorder %s34, 0
      %p103 = por %p101, %p102
      %s104 = ssub.s32 %s28, %s35
      %p105 = scmp.eq.s32.totalorder %s104, 0
      %s107 = sadd.s32 %s106, 1
      %s108 = scalar_select %p105, %s106, %s107
      %p111 = pneg %p105
      %p112 = scmp.eq.s32.totalorder %s28, 1
      %p113 = por %p111, %p112
      %p114 = scmp.ne.s32.totalorder %s106, %s109
      %p115 = scmp.eq.s32.totalorder %s28, 0
      %p116 = por %p114, %p115
      %p117 = scmp.ne.s32.totalorder %s106, %s109
      %p118 = scmp.eq.s32.totalorder %s33, 1
      %p119 = por %p117, %p118
      %p120 = scmp.ne.s32.totalorder %s109, %s110
      %p121 = scmp.eq.s32.totalorder %s33, 0
      %p122 = por %p120, %p121
      %p123 = scmp.ne.s32.totalorder %s109, %s110
      %p124 = scmp.eq.s32.totalorder %s34, 1
      %p125 = por %p123, %p124
      %p127 = scmp.ne.s32.totalorder %s110, %s126
      %p128 = scmp.eq.s32.totalorder %s34, 0
      %p129 = por %p127, %p128
      %s131 = sadd.s32 %s130, 1
      %p134 = scmp.eq.s32.totalorder %s28, 1
      %p135 = scmp.ne.s32.totalorder %s130, %s132
      %p136 = scmp.eq.s32.totalorder %s28, 0
      %p137 = por %p135, %p136
      %p138 = scmp.ne.s32.totalorder %s130, %s132
      %p139 = scmp.eq.s32.totalorder %s33, 1
      %p140 = por %p138, %p139
      %p141 = scmp.ne.s32.totalorder %s132, %s133
      %p142 = scmp.eq.s32.totalorder %s33, 0
      %p143 = por %p141, %p142
      %p144 = scmp.ne.s32.totalorder %s132, %s133
      %p145 = scmp.eq.s32.totalorder %s34, 1
      %p146 = por %p144, %p145
      %p148 = scmp.ne.s32.totalorder %s133, %s147
      %p149 = scmp.eq.s32.totalorder %s34, 0
      %p150 = por %p148, %p149
      %s152 = sadd.s32 %s151, 1
      %p155 = scmp.eq.s32.totalorder %s28, 1
      %p156 = scmp.ne.s32.totalorder %s151, %s153
      %p157 = scmp.eq.s32.totalorder %s28, 0
      %p158 = por %p156, %p157
      %p159 = scmp.ne.s32.totalorder %s151, %s153
      %p160 = scmp.eq.s32.totalorder %s33, 1
      %p161 = por %p159, %p160
      %p162 = scmp.ne.s32.totalorder %s153, %s154
      %p163 = scmp.eq.s32.totalorder %s33, 0
      %p164 = por %p162, %p163
      %p165 = scmp.ne.s32.totalorder %s153, %s154
      %p166 = scmp.eq.s32.totalorder %s34, 1
      %p167 = por %p165, %p166
      %p169 = scmp.ne.s32.totalorder %s154, %s168
      %p170 = scmp.eq.s32.totalorder %s34, 0
      %p171 = por %p169, %p170
      %s173 = sadd.s32 %s172, 1
      %p176 = scmp.eq.s32.totalorder %s28, 1
      %p177 = scmp.ne.s32.totalorder %s172, %s174
      %p178 = scmp.eq.s32.totalorder %s28, 0
      %p179 = por %p177, %p178
      %p180 = scmp.ne.s32.totalorder %s172, %s174
      %p181 = scmp.eq.s32.totalorder %s33, 1
      %p182 = por %p180, %p181
      %p183 = scmp.ne.s32.totalorder %s174, %s175
      %p184 = scmp.eq.s32.totalorder %s33, 0
      %p185 = por %p183, %p184
      %p186 = scmp.ne.s32.totalorder %s174, %s175
      %p187 = scmp.eq.s32.totalorder %s34, 1
      %p188 = por %p186, %p187
      %p190 = scmp.ne.s32.totalorder %s175, %s189
      %p191 = scmp.eq.s32.totalorder %s34, 0
      %p192 = por %p190, %p191
      %s194 = sadd.s32 %s193, 1
      %p197 = scmp.eq.s32.totalorder %s28, 1
      %p198 = scmp.ne.s32.totalorder %s193, %s195
      %p199 = scmp.eq.s32.totalorder %s28, 0
      %p200 = por %p198, %p199
      %p201 = scmp.ne.s32.totalorder %s193, %s195
      %p202 = scmp.eq.s32.totalorder %s33, 1
      %p203 = por %p201, %p202
      %p204 = scmp.ne.s32.totalorder %s195, %s196
      %p205 = scmp.eq.s32.totalorder %s33, 0
      %p206 = por %p204, %p205
      %p207 = scmp.ne.s32.totalorder %s195, %s196
      %p208 = scmp.eq.s32.totalorder %s34, 1
      %p209 = por %p207, %p208
      %p211 = scmp.ne.s32.totalorder %s196, %s210
      %p212 = scmp.eq.s32.totalorder %s34, 0
      %p213 = por %p211, %p212
      %s215 = sadd.s32 %s214, 1
      %p218 = scmp.eq.s32.totalorder %s28, 1
      %p219 = scmp.ne.s32.totalorder %s214, %s216
      %p220 = scmp.eq.s32.totalorder %s28, 0
      %p221 = por %p219, %p220
      %p222 = scmp.ne.s32.totalorder %s214, %s216
      %p223 = scmp.eq.s32.totalorder %s33, 1
      %p224 = por %p222, %p223
      %p225 = scmp.ne.s32.totalorder %s216, %s217
      %p226 = scmp.eq.s32.totalorder %s33, 0
      %p227 = por %p225, %p226
      %p228 = scmp.ne.s32.totalorder %s216, %s217
      %p229 = scmp.eq.s32.totalorder %s34, 1
      %p230 = por %p228, %p229
      %p232 = scmp.ne.s32.totalorder %s217, %s231
      %p233 = scmp.eq.s32.totalorder %s34, 0
      %p234 = por %p232, %p233
      %s236 = sadd.s32 %s235, 1
      %p239 = scmp.eq.s32.totalorder %s28, 1
      %p240 = scmp.ne.s32.totalorder %s235, %s237
      %p241 = scmp.eq.s32.totalorder %s28, 0
      %p242 = por %p240, %p241
      %p243 = scmp.ne.s32.totalorder %s235, %s237
      %p244 = scmp.eq.s32.totalorder %s33, 1
      %p245 = por %p243, %p244
      %p246 = scmp.ne.s32.totalorder %s237, %s238
      %p247 = scmp.eq.s32.totalorder %s33, 0
      %p248 = por %p246, %p247
      %p249 = scmp.ne.s32.totalorder %s237, %s238
      %p250 = scmp.eq.s32.totalorder %s34, 1
      %p251 = por %p249, %p250
      %p253 = scmp.ne.s32.totalorder %s238, %s252
      %p254 = scmp.eq.s32.totalorder %s34, 0
      %p255 = por %p253, %p254
      %s257 = sadd.s32 %s256, 1
      %p260 = scmp.eq.s32.totalorder %s28, 1
      %p261 = scmp.ne.s32.totalorder %s256, %s258
      %p262 = scmp.eq.s32.totalorder %s28, 0
      %p263 = por %p261, %p262
      %p264 = scmp.ne.s32.totalorder %s256, %s258
      %p265 = scmp.eq.s32.totalorder %s33, 1
      %p266 = por %p264, %p265
      %p267 = scmp.ne.s32.totalorder %s258, %s259
      %p268 = scmp.eq.s32.totalorder %s33, 0
      %p269 = por %p267, %p268
      %p270 = scmp.ne.s32.totalorder %s258, %s259
      %p271 = scmp.eq.s32.totalorder %s34, 1
      %p272 = por %p270, %p271
      %p274 = scmp.ne.s32.totalorder %s259, %s273
      %p275 = scmp.eq.s32.totalorder %s34, 0
      %p276 = por %p274, %p275
      %s278 = sadd.s32 %s277, 1
      %p281 = scmp.eq.s32.totalorder %s28, 1
      %p282 = scmp.ne.s32.totalorder %s277, %s279
      %p283 = scmp.eq.s32.totalorder %s28, 0
      %p284 = por %p282, %p283
      %p285 = scmp.ne.s32.totalorder %s277, %s279
      %p286 = scmp.eq.s32.totalorder %s33, 1
      %p287 = por %p285, %p286
      %p288 = scmp.ne.s32.totalorder %s279, %s280
      %p289 = scmp.eq.s32.totalorder %s33, 0
      %p290 = por %p288, %p289
      %p291 = scmp.ne.s32.totalorder %s279, %s280
      %p292 = scmp.eq.s32.totalorder %s34, 1
      %p293 = por %p291, %p292
      %p295 = scmp.ne.s32.totalorder %s280, %s294
      %p296 = scmp.eq.s32.totalorder %s34, 0
      %p297 = por %p295, %p296
      %s299 = sadd.s32 %s298, 1
      %p302 = scmp.eq.s32.totalorder %s28, 1
      %p303 = scmp.ne.s32.totalorder %s298, %s300
      %p304 = scmp.eq.s32.totalorder %s28, 0
      %p305 = por %p303, %p304
      %p306 = scmp.ne.s32.totalorder %s298, %s300
      %p307 = scmp.eq.s32.totalorder %s33, 1
      %p308 = por %p306, %p307
      %p309 = scmp.ne.s32.totalorder %s300, %s301
      %p310 = scmp.eq.s32.totalorder %s33, 0
      %p311 = por %p309, %p310
      %p312 = scmp.ne.s32.totalorder %s300, %s301
      %p313 = scmp.eq.s32.totalorder %s34, 1
      %p314 = por %p312, %p313
      %p316 = scmp.ne.s32.totalorder %s301, %s315
      %p317 = scmp.eq.s32.totalorder %s34, 0
      %p318 = por %p316, %p317
      %s319 = ssub.s32 %s28, %s35
      %p320 = scmp.eq.s32.totalorder %s319, 0
      %s322 = sadd.s32 %s321, 1
      %s323 = scalar_select %p320, %s321, %s322
      %p326 = pneg %p320
      %p327 = scmp.eq.s32.totalorder %s28, 1
      %p328 = por %p326, %p327
      %p329 = scmp.ne.s32.totalorder %s321, %s324
      %p330 = scmp.eq.s32.totalorder %s28, 0
      %p331 = por %p329, %p330
      %p332 = scmp.ne.s32.totalorder %s321, %s324
      %p333 = scmp.eq.s32.totalorder %s33, 1
      %p334 = por %p332, %p333
      %p335 = scmp.ne.s32.totalorder %s324, %s325
      %p336 = scmp.eq.s32.totalorder %s33, 0
      %p337 = por %p335, %p336
      %p338 = scmp.ne.s32.totalorder %s324, %s325
      %p339 = scmp.eq.s32.totalorder %s34, 1
      %p340 = por %p338, %p339
      %p342 = scmp.ne.s32.totalorder %s325, %s341
      %p343 = scmp.eq.s32.totalorder %s34, 0
      %p344 = por %p342, %p343
      %p345 = scmp.le.s32.totalorder 1, %s28
      %p346 = scmp.lt.s32.totalorder %s28, 3
      %p347 = pnand %p345, %p346
      %p348 = pneg %p347
      // Predicated region
      $region9: #{decoder_up_fuse_forward.1} parent=5 // pred_check
        _
      $region10: #{decoder_up_fuse_forward.1} parent=5 // pred_check_branch
        %350 = sbr.rel (%p347) target = $region12
      $region11: #{decoder_up_fuse_forward.1} parent=5 // pred_region
        %s351 = ssub.s32 %s28, 1
        // Predicated region
        $region13: #{decoder_up_fuse_forward.1} parent=11 // pred_check
          %p352 = pneg %p49
        $region14: #{decoder_up_fuse_forward.1} parent=11 // pred_check_branch
          %354 = sbr.rel (%p352) target = $region16
        $region15: #{decoder_up_fuse_forward.1} parent=11 // pred_region
          %s356 = ssub.s32 48, 48
          %357 = vsyncadd [#allocation5], %s356
          %s359 = sshll.u32 [#allocation4], 4
          %s360 = int_to_ptr.vmem [resolvable:$true] %s359
          %362 = dma.hbm_to_vmem [thread:$0]  %s0, 48, %s360, [#allocation5]
        $region16: #{decoder_up_fuse_forward.1} parent=11 // pred_fallthru
          _
        // Predicated region
        $region17: #{decoder_up_fuse_forward.1} parent=11 // pred_check
          %p363 = pneg %p70
        $region18: #{decoder_up_fuse_forward.1} parent=11 // pred_check_branch
          %365 = sbr.rel (%p363) target = $region20
        $region19: #{decoder_up_fuse_forward.1} parent=11 // pred_region
          %s367 = ssub.s32 256, 256
          %368 = vsyncadd [#allocation8], %s367
          %s369 = sshll.u32 [#allocation7], 4
          %s370 = int_to_ptr.vmem [resolvable:$true] %s369
          %375 = dma.hbm_to_vmem [thread:$0]  %s1, 256, %s370, [#allocation8], 128, 128, 8
        $region20: #{decoder_up_fuse_forward.1} parent=11 // pred_fallthru
          _
        // Predicated region
        $region21: #{decoder_up_fuse_forward.1} parent=11 // pred_check
          %p376 = pneg %p143
        $region22: #{decoder_up_fuse_forward.1} parent=11 // pred_check_branch
          %378 = sbr.rel (%p376) target = $region24
        $region23: #{decoder_up_fuse_forward.1} parent=11 // pred_region
          %s380 = ssub.s32 1152, 1152
          %381 = vsyncadd [#allocation8], %s380
          %s382 = sshll.u32 [#allocation11], 4
          %s383 = int_to_ptr.vmem [resolvable:$true] %s382
          %388 = dma.hbm_to_vmem [thread:$0]  %s4, 1152, %s383, [#allocation8], 64, 64, 4
        $region24: #{decoder_up_fuse_forward.1} parent=11 // pred_fallthru
          _
        // Predicated region
        $region25: #{decoder_up_fuse_forward.1} parent=11 // pred_check
          %p389 = pneg %p164
        $region26: #{decoder_up_fuse_forward.1} parent=11 // pred_check_branch
          %391 = sbr.rel (%p389) target = $region28
        $region27: #{decoder_up_fuse_forward.1} parent=11 // pred_region
          %s393 = ssub.s32 256, 256
          %394 = vsyncadd [#allocation13], %s393
          %s395 = sshll.u32 [#allocation12], 4
          %s396 = int_to_ptr.vmem [resolvable:$true] %s395
          %401 = dma.hbm_to_vmem [thread:$0]  %s5, 256, %s396, [#allocation13], 128, 128, 8
        $region28: #{decoder_up_fuse_forward.1} parent=11 // pred_fallthru
          _
        // Predicated region
        $region29: #{decoder_up_fuse_forward.1} parent=11 // pred_check
          %p402 = pneg %p185
        $region30: #{decoder_up_fuse_forward.1} parent=11 // pred_check_branch
          %404 = sbr.rel (%p402) target = $region32
        $region31: #{decoder_up_fuse_forward.1} parent=11 // pred_region
          %s406 = ssub.s32 1152, 1152
          %407 = vsyncadd [#allocation13], %s406
          %s408 = sshll.u32 [#allocation14], 4
          %s409 = int_to_ptr.vmem [resolvable:$true] %s408
          %414 = dma.hbm_to_vmem [thread:$0]  %s6, 1152, %s409, [#allocation13], 64, 64, 4
        $region32: #{decoder_up_fuse_forward.1} parent=11 // pred_fallthru
          _
        // Predicated region
        $region33: #{decoder_up_fuse_forward.1} parent=11 // pred_check
          %p415 = pneg %p206
        $region34: #{decoder_up_fuse_forward.1} parent=11 // pred_check_branch
          %417 = sbr.rel (%p415) target = $region36
        $region35: #{decoder_up_fuse_forward.1} parent=11 // pred_region
          %s419 = ssub.s32 1152, 1152
          %420 = vsyncadd [#allocation16], %s419
          %s421 = sshll.u32 [#allocation15], 4
          %s422 = int_to_ptr.vmem [resolvable:$true] %s421
          %427 = dma.hbm_to_vmem [thread:$0]  %s7, 1152, %s422, [#allocation16], 64, 64, 4
        $region36: #{decoder_up_fuse_forward.1} parent=11 // pred_fallthru
          _
        // Predicated region
        $region37: #{decoder_up_fuse_forward.1} parent=11 // pred_check
          %p428 = pneg %p227
        $region38: #{decoder_up_fuse_forward.1} parent=11 // pred_check_branch
          %430 = sbr.rel (%p428) target = $region40
        $region39: #{decoder_up_fuse_forward.1} parent=11 // pred_region
          %s432 = ssub.s32 256, 256
          %433 = vsyncadd [#allocation16], %s432
          %s434 = sshll.u32 [#allocation17], 4
          %s435 = int_to_ptr.vmem [resolvable:$true] %s434
          %440 = dma.hbm_to_vmem [thread:$0]  %s8, 256, %s435, [#allocation16], 128, 128, 8
        $region40: #{decoder_up_fuse_forward.1} parent=11 // pred_fallthru
          _
        // Predicated region
        $region41: #{decoder_up_fuse_forward.1} parent=11 // pred_check
          %p441 = pneg %p248
        $region42: #{decoder_up_fuse_forward.1} parent=11 // pred_check_branch
          %443 = sbr.rel (%p441) target = $region44
        $region43: #{decoder_up_fuse_forward.1} parent=11 // pred_region
          %s445 = ssub.s32 256, 256
          %446 = vsyncadd [#allocation19], %s445
          %s447 = sshll.u32 [#allocation18], 4
          %s448 = int_to_ptr.vmem [resolvable:$true] %s447
          %453 = dma.hbm_to_vmem [thread:$0]  %s9, 256, %s448, [#allocation19], 128, 128, 8
        $region44: #{decoder_up_fuse_forward.1} parent=11 // pred_fallthru
          _
        // Predicated region
        $region45: #{decoder_up_fuse_forward.1} parent=11 // pred_check
          %p454 = pneg %p269
        $region46: #{decoder_up_fuse_forward.1} parent=11 // pred_check_branch
          %456 = sbr.rel (%p454) target = $region48
        $region47: #{decoder_up_fuse_forward.1} parent=11 // pred_region
          %s458 = ssub.s32 1152, 1152
          %459 = vsyncadd [#allocation19], %s458
          %s460 = sshll.u32 [#allocation20], 4
          %s461 = int_to_ptr.vmem [resolvable:$true] %s460
          %466 = dma.hbm_to_vmem [thread:$0]  %s10, 1152, %s461, [#allocation19], 64, 64, 4
        $region48: #{decoder_up_fuse_forward.1} parent=11 // pred_fallthru
          _
        // Predicated region
        $region49: #{decoder_up_fuse_forward.1} parent=11 // pred_check
          %p467 = pneg %p290
        $region50: #{decoder_up_fuse_forward.1} parent=11 // pred_check_branch
          %469 = sbr.rel (%p467) target = $region52
        $region51: #{decoder_up_fuse_forward.1} parent=11 // pred_region
          %s471 = ssub.s32 256, 256
          %472 = vsyncadd [#allocation22], %s471
          %s473 = sshll.u32 [#allocation21], 4
          %s474 = int_to_ptr.vmem [resolvable:$true] %s473
          %479 = dma.hbm_to_vmem [thread:$0]  %s11, 256, %s474, [#allocation22], 128, 128, 8
        $region52: #{decoder_up_fuse_forward.1} parent=11 // pred_fallthru
          _
        // Predicated region
        $region53: #{decoder_up_fuse_forward.1} parent=11 // pred_check
          %p480 = pneg %p311
        $region54: #{decoder_up_fuse_forward.1} parent=11 // pred_check_branch
          %482 = sbr.rel (%p480) target = $region56
        $region55: #{decoder_up_fuse_forward.1} parent=11 // pred_region
          %s484 = ssub.s32 256, 256
          %485 = vsyncadd [#allocation22], %s484
          %s486 = sshll.u32 [#allocation23], 4
          %s487 = int_to_ptr.vmem [resolvable:$true] %s486
          %492 = dma.hbm_to_vmem [thread:$0]  %s12, 256, %s487, [#allocation22], 128, 128, 8
        $region56: #{decoder_up_fuse_forward.1} parent=11 // pred_fallthru
          _
      $region12: #{decoder_up_fuse_forward.1} parent=5 // pred_fallthru
        _
      %p493 = scmp.lt.s32.totalorder %s28, 2
      // Predicated region
      $region57: #{decoder_up_fuse_forward.1} parent=5 // pred_check
        %p494 = pneg %p493
      $region58: #{decoder_up_fuse_forward.1} parent=5 // pred_check_branch
        %496 = sbr.rel (%p494) target = $region60
      $region59: #{decoder_up_fuse_forward.1} parent=5 // pred_region
        // Predicated region
        $region61: #{decoder_up_fuse_forward.1} parent=59 // pred_check
          %p497 = pneg %p90
        $region62: #{decoder_up_fuse_forward.1} parent=59 // pred_check_branch
          %499 = sbr.rel (%p497) target = $region64
        $region63: #{decoder_up_fuse_forward.1} parent=59 // pred_region
          %s500 = sand.u32 %s28, 1
          %s501 = scalar_lea.sflag [#allocation5], %s500
          %s502 = sand.u32 %s80, 1
          %s503 = smul.addr %s502, 64
          %s504 = scalar_lea.vmem [#allocation9], %s503
          %s506 = ssub.s32 1024, 1024
          %507 = vsyncadd %s501, %s506
          %s508 = smul.addr %s28, 16
          %s509 = smul.addr %s508, 64
          %s510 = scalar_lea.hbm %s2, %s509
          %s511 = sshll.u32 %s504, 4
          %s512 = int_to_ptr.vmem [resolvable:$true] %s511
          %517 = dma.hbm_to_vmem [thread:$0]  %s510, 1024, %s512, %s501, 256, 256, 16
        $region64: #{decoder_up_fuse_forward.1} parent=59 // pred_fallthru
          _
        // Predicated region
        $region65: #{decoder_up_fuse_forward.1} parent=59 // pred_check
          %p518 = pneg %p116
        $region66: #{decoder_up_fuse_forward.1} parent=59 // pred_check_branch
          %520 = sbr.rel (%p518) target = $region68
        $region67: #{decoder_up_fuse_forward.1} parent=59 // pred_region
          %s521 = sand.u32 %s28, 1
          %s522 = scalar_lea.sflag [#allocation5], %s521
          %s523 = sand.u32 %s106, 1
          %s524 = smul.addr %s523, 32
          %s525 = scalar_lea.vmem [#allocation10], %s524
          %s527 = ssub.s32 512, 512
          %528 = vsyncadd %s522, %s527
          %s529 = smul.addr %s28, 8
          %s530 = smul.addr %s529, 64
          %s531 = scalar_lea.hbm %s3, %s530
          %s532 = sshll.u32 %s525, 4
          %s533 = int_to_ptr.vmem [resolvable:$true] %s532
          %538 = dma.hbm_to_vmem [thread:$0]  %s531, 512, %s533, %s522, 256, 256, 16
        $region68: #{decoder_up_fuse_forward.1} parent=59 // pred_fallthru
          _
      $region60: #{decoder_up_fuse_forward.1} parent=5 // pred_fallthru
        _
      %p539 = scmp.le.s32.totalorder 1, %s28
      %p540 = scmp.lt.s32.totalorder %s28, 3
      %p541 = pnand %p539, %p540
      %p542 = pneg %p541
      // Predicated region
      $region69: #{decoder_up_fuse_forward.1} parent=5 // pred_check
        _
      $region70: #{decoder_up_fuse_forward.1} parent=5 // pred_check_branch
        %544 = sbr.rel (%p541) target = $region72
      $region71: #{decoder_up_fuse_forward.1} parent=5 // pred_region
        %s545 = ssub.s32 %s28, 1
        // Predicated region
        $region73: #{decoder_up_fuse_forward.1} parent=71 // pred_check
          %p546 = pneg %p49
        $region74: #{decoder_up_fuse_forward.1} parent=71 // pred_check_branch
          %548 = sbr.rel (%p546) target = $region76
        $region75: #{decoder_up_fuse_forward.1} parent=71 // pred_region
          %549 = dma.done [#allocation5], 48
        $region76: #{decoder_up_fuse_forward.1} parent=71 // pred_fallthru
          _
        // Predicated region
        $region77: #{decoder_up_fuse_forward.1} parent=71 // pred_check
          %p550 = pneg %p70
        $region78: #{decoder_up_fuse_forward.1} parent=71 // pred_check_branch
          %552 = sbr.rel (%p550) target = $region80
        $region79: #{decoder_up_fuse_forward.1} parent=71 // pred_region
          %553 = dma.done [#allocation8], 256
        $region80: #{decoder_up_fuse_forward.1} parent=71 // pred_fallthru
          _
        %s554 = sand.u32 %s33, 1
        %s555 = scalar_lea.sflag [#allocation5], %s554
        %s556 = sand.u32 %s83, 1
        %s557 = smul.addr %s556, 64
        %s558 = scalar_lea.vmem [#allocation9], %s557
        // Predicated region
        $region81: #{decoder_up_fuse_forward.1} parent=71 // pred_check
          %p559 = pneg %p96
        $region82: #{decoder_up_fuse_forward.1} parent=71 // pred_check_branch
          %561 = sbr.rel (%p559) target = $region84
        $region83: #{decoder_up_fuse_forward.1} parent=71 // pred_region
          %562 = dma.done %s555, 1024
        $region84: #{decoder_up_fuse_forward.1} parent=71 // pred_fallthru
          _
        %s563 = sand.u32 %s33, 1
        %s564 = scalar_lea.sflag [#allocation5], %s563
        %s565 = sand.u32 %s109, 1
        %s566 = smul.addr %s565, 32
        %s567 = scalar_lea.vmem [#allocation10], %s566
        // Predicated region
        $region85: #{decoder_up_fuse_forward.1} parent=71 // pred_check
          %p568 = pneg %p122
        $region86: #{decoder_up_fuse_forward.1} parent=71 // pred_check_branch
          %570 = sbr.rel (%p568) target = $region88
        $region87: #{decoder_up_fuse_forward.1} parent=71 // pred_region
          %571 = dma.done %s564, 512
        $region88: #{decoder_up_fuse_forward.1} parent=71 // pred_fallthru
          _
        // Predicated region
        $region89: #{decoder_up_fuse_forward.1} parent=71 // pred_check
          %p572 = pneg %p143
        $region90: #{decoder_up_fuse_forward.1} parent=71 // pred_check_branch
          %574 = sbr.rel (%p572) target = $region92
        $region91: #{decoder_up_fuse_forward.1} parent=71 // pred_region
          %575 = dma.done [#allocation8], 1152
        $region92: #{decoder_up_fuse_forward.1} parent=71 // pred_fallthru
          _
        // Predicated region
        $region93: #{decoder_up_fuse_forward.1} parent=71 // pred_check
          %p576 = pneg %p164
        $region94: #{decoder_up_fuse_forward.1} parent=71 // pred_check_branch
          %578 = sbr.rel (%p576) target = $region96
        $region95: #{decoder_up_fuse_forward.1} parent=71 // pred_region
          %579 = dma.done [#allocation13], 256
        $region96: #{decoder_up_fuse_forward.1} parent=71 // pred_fallthru
          _
        // Predicated region
        $region97: #{decoder_up_fuse_forward.1} parent=71 // pred_check
          %p580 = pneg %p185
        $region98: #{decoder_up_fuse_forward.1} parent=71 // pred_check_branch
          %582 = sbr.rel (%p580) target = $region100
        $region99: #{decoder_up_fuse_forward.1} parent=71 // pred_region
          %583 = dma.done [#allocation13], 1152
        $region100: #{decoder_up_fuse_forward.1} parent=71 // pred_fallthru
          _
        // Predicated region
        $region101: #{decoder_up_fuse_forward.1} parent=71 // pred_check
          %p584 = pneg %p206
        $region102: #{decoder_up_fuse_forward.1} parent=71 // pred_check_branch
          %586 = sbr.rel (%p584) target = $region104
        $region103: #{decoder_up_fuse_forward.1} parent=71 // pred_region
          %587 = dma.done [#allocation16], 1152
        $region104: #{decoder_up_fuse_forward.1} parent=71 // pred_fallthru
          _
        // Predicated region
        $region105: #{decoder_up_fuse_forward.1} parent=71 // pred_check
          %p588 = pneg %p227
        $region106: #{decoder_up_fuse_forward.1} parent=71 // pred_check_branch
          %590 = sbr.rel (%p588) target = $region108
        $region107: #{decoder_up_fuse_forward.1} parent=71 // pred_region
          %591 = dma.done [#allocation16], 256
        $region108: #{decoder_up_fuse_forward.1} parent=71 // pred_fallthru
          _
        // Predicated region
        $region109: #{decoder_up_fuse_forward.1} parent=71 // pred_check
          %p592 = pneg %p248
        $region110: #{decoder_up_fuse_forward.1} parent=71 // pred_check_branch
          %594 = sbr.rel (%p592) target = $region112
        $region111: #{decoder_up_fuse_forward.1} parent=71 // pred_region
          %595 = dma.done [#allocation19], 256
        $region112: #{decoder_up_fuse_forward.1} parent=71 // pred_fallthru
          _
        // Predicated region
        $region113: #{decoder_up_fuse_forward.1} parent=71 // pred_check
          %p596 = pneg %p269
        $region114: #{decoder_up_fuse_forward.1} parent=71 // pred_check_branch
          %598 = sbr.rel (%p596) target = $region116
        $region115: #{decoder_up_fuse_forward.1} parent=71 // pred_region
          %599 = dma.done [#allocation19], 1152
        $region116: #{decoder_up_fuse_forward.1} parent=71 // pred_fallthru
          _
        // Predicated region
        $region117: #{decoder_up_fuse_forward.1} parent=71 // pred_check
          %p600 = pneg %p290
        $region118: #{decoder_up_fuse_forward.1} parent=71 // pred_check_branch
          %602 = sbr.rel (%p600) target = $region120
        $region119: #{decoder_up_fuse_forward.1} parent=71 // pred_region
          %603 = dma.done [#allocation22], 256
        $region120: #{decoder_up_fuse_forward.1} parent=71 // pred_fallthru
          _
        // Predicated region
        $region121: #{decoder_up_fuse_forward.1} parent=71 // pred_check
          %p604 = pneg %p311
        $region122: #{decoder_up_fuse_forward.1} parent=71 // pred_check_branch
          %606 = sbr.rel (%p604) target = $region124
        $region123: #{decoder_up_fuse_forward.1} parent=71 // pred_region
          %607 = dma.done [#allocation22], 256
        $region124: #{decoder_up_fuse_forward.1} parent=71 // pred_fallthru
          _
        %p608 = pneg %p49
        %p609 = pneg %p46
        %p610 = pneg %p70
        %p611 = pneg %p67
        %s612 = sand.u32 %s33, 1
        %s613 = scalar_lea.sflag [#allocation5], %s612
        %s614 = sand.u32 %s83, 1
        %s615 = smul.addr %s614, 64
        %s616 = scalar_lea.vmem [#allocation9], %s615
        %p617 = pneg %p96
        %p618 = pneg %p93
        %s619 = sand.u32 %s33, 1
        %s620 = scalar_lea.sflag [#allocation5], %s619
        %s621 = sand.u32 %s109, 1
        %s622 = smul.addr %s621, 32
        %s623 = scalar_lea.vmem [#allocation10], %s622
        %p624 = pneg %p122
        %p625 = pneg %p119
        %p626 = pneg %p143
        %p627 = pneg %p140
        %p628 = pneg %p164
        %p629 = pneg %p161
        %p630 = pneg %p185
        %p631 = pneg %p182
        %p632 = pneg %p206
        %p633 = pneg %p203
        %p634 = pneg %p227
        %p635 = pneg %p224
        %p636 = pneg %p248
        %p637 = pneg %p245
        %p638 = pneg %p269
        %p639 = pneg %p266
        %p640 = pneg %p290
        %p641 = pneg %p287
        %p642 = pneg %p311
        %p643 = pneg %p308
        %p644 = pneg %p337
        %p645 = pneg %p334
        %s646 = sand.u32 %s324, 1
        %s647 = scalar_lea.sflag [#allocation6], %s646
        %s648 = sand.u32 %s324, 1
        %s649 = smul.addr %s648, 48
        %s650 = scalar_lea.vmem [#allocation24], %s649
        %v652 = vld [vmem:[#allocation4] sm:$0x7]
        %v653 = vld [vmem:[#allocation7] sm:$0xff]
        %v654 = vld [vmem:[#allocation7 + $0x8] sm:$0xff]
        %655 = vst [vmem:[#allocation2] sm:$0xff] 0
        %vm656 = vcmask 835072
        %657 = vst.msk [vmem:[#allocation2 + $0x18] sm:$0xff] %vm656, 0
        %658 = vst [vmem:[#allocation3] sm:$0xff] 0
        %659 = vst.msk [vmem:[#allocation3 + $0x18] sm:$0xff] %vm656, 0
        %v660 = vld [vmem:[#allocation11] sm:$0xf]
        %v661 = vld [vmem:[#allocation11 + $0x4] sm:$0xf]
        %v662 = vld [vmem:[%s558] sm:$0xff]
        %v663 = vld [vmem:[%s558 + $0x8] sm:$0xff]
        %v664 = vld [vmem:[%s558 + $0x10] sm:$0xff]
        %v665 = vld [vmem:[%s558 + $0x18] sm:$0xff]
        %v666 = vld [vmem:[%s558 + $0x20] sm:$0xff]
        %v667 = vld [vmem:[%s558 + $0x28] sm:$0xff]
        %v668 = vld [vmem:[%s558 + $0x30] sm:$0xff]
        %v669 = vld [vmem:[%s558 + $0x38] sm:$0xff]
        %s670 = scalar_lea.vmem [#allocation11], 8
        %v671 = vld [vmem:[%s670] sm:$0xf]
        %v672 = vld [vmem:[%s670 + $0x4] sm:$0xf]
        %v675 = vunpack.c.l.b16 %v671
        %v676 = vunpack.c.l.b16 %v672
        %v677 = vpack.c.b16 %v676, %v675
        %v686 = vunpack.c.l.b16 %v662
        %v687 = vunpack.c.h.b16 %v662
        %v688 = vunpack.c.l.b16 %v663
        %v689 = vunpack.c.h.b16 %v663
        %v690 = vunpack.c.l.b16 %v664
        %v691 = vunpack.c.h.b16 %v664
        %v692 = vunpack.c.l.b16 %v665
        %v693 = vunpack.c.h.b16 %v665
        %v694 = vunpack.c.l.b16 %v666
        %v695 = vunpack.c.h.b16 %v666
        %v696 = vunpack.c.l.b16 %v667
        %v697 = vunpack.c.h.b16 %v667
        %v698 = vunpack.c.l.b16 %v668
        %v699 = vunpack.c.h.b16 %v668
        %v700 = vunpack.c.l.b16 %v669
        %v701 = vunpack.c.h.b16 %v669
        %v702 = vpack.c.b16 %v690, %v686
        %v703 = vpack.c.b16 %v691, %v687
        %v704 = vpack.c.b16 %v692, %v688
        %v705 = vpack.c.b16 %v693, %v689
        %v706 = vpack.c.b16 %v698, %v694
        %v707 = vpack.c.b16 %v699, %v695
        %v708 = vpack.c.b16 %v700, %v696
        %v709 = vpack.c.b16 %v701, %v697
        %710 = vrot.lane.b32.xlu0 %v702, 20
        %v711 = vpop.permute.xlu0 %710
        %712 = vrot.lane.b32.xlu0 %v703, 20
        %v713 = vpop.permute.xlu0 %712
        %714 = vrot.lane.b32.xlu0 %v704, 20
        %v715 = vpop.permute.xlu0 %714
        %716 = vrot.lane.b32.xlu0 %v705, 20
        %v717 = vpop.permute.xlu0 %716
        %718 = vrot.lane.b32.xlu0 %v706, 20
        %v719 = vpop.permute.xlu0 %718
        %720 = vrot.lane.b32.xlu0 %v707, 20
        %v721 = vpop.permute.xlu0 %720
        %722 = vrot.lane.b32.xlu0 %v708, 20
        %v723 = vpop.permute.xlu0 %722
        %724 = vrot.lane.b32.xlu0 %v709, 20
        %v725 = vpop.permute.xlu0 %724
        %vm726 = vcmask 162816
        %v727 = vsel %vm726, %v711, %v713
        %v728 = vsel %vm726, %v713, %v715
        %v729 = vsel %vm726, %v715, %v717
        %v730 = vsel %vm726, %v719, %v721
        %v731 = vsel %vm726, %v721, %v723
        %v732 = vsel %vm726, %v723, %v725
        %vm739 = vcmask 261120
        %v741 = vsel %vm739, %v677, 0
        %743 = vmatprep.subr.bf16.mxu0 %v728
        %744 = vmatpush1.bf16.msra.mxu0 %v727
        %745 = vmatprep.subr.bf16.mxu0 %v731
        %746 = vmatpush1.bf16.msra.mxu0 %v730
        %747 = vmatprep.subr.bf16.mxu0 0
        %748 = vmatpush1.bf16.msra.mxu0 0
        %749 = vmatprep.subr.bf16.mxu0 0
        %750 = vmatpush1.bf16.msra.mxu0 0
        %751 = vmatprep.subr.bf16.mxu0 0
        %752 = vmatpush1.bf16.msra.mxu0 0
        %753 = vmatprep.subr.bf16.mxu0 0
        %754 = vmatpush1.bf16.msra.mxu0 0
        %755 = vmatprep.subr.bf16.mxu0 0
        %756 = vmatpush1.bf16.msra.mxu0 0
        %757 = vmatprep.subr.bf16.mxu0 0
        %758 = vmatpush1.bf16.msra.mxu0 0
        %759 = vmatprep.subr.bf16.mxu0 0
        %760 = vmatpush1.bf16.msra.mxu0 0
        %761 = vmatprep.subr.bf16.mxu0 0
        %762 = vmatpush1.bf16.msra.mxu0 0
        %763 = vmatprep.subr.bf16.mxu0 0
        %764 = vmatpush1.bf16.msra.mxu0 0
        %765 = vmatprep.subr.bf16.mxu0 0
        %766 = vmatpush1.bf16.msra.mxu0 0
        %767 = vmatprep.subr.bf16.mxu0 0
        %768 = vmatpush1.bf16.msra.mxu0 0
        %769 = vmatprep.subr.bf16.mxu0 0
        %770 = vmatpush1.bf16.msra.mxu0 0
        %771 = vmatprep.subr.bf16.mxu0 0
        %772 = vmatpush1.bf16.msra.mxu0 0
        %773 = vmatprep.subr.bf16.mxu0 0
        %774 = vmatpush1.bf16.msra.mxu0 0
        %775 = vmatprep.mubr.bf16.mxu0 0
        %776 = vmatmul.mubr.bf16.gmra.mrb[0].mxu0 %v741
        %v777 = vpop.f32.mrb[0].mxu0
        %v778 = vadd.f32 0.0, %v777
        %v779 = vpop.f32.mrb[0].mxu0
        %v780 = vadd.f32 0.0, %v779
        %v781 = vpop.f32.mrb[0].mxu0
        %v782 = vadd.f32 0.0, %v781
        %v783 = vpop.f32.mrb[0].mxu0
        %v784 = vadd.f32 0.0, %v783
        %785 = vdwg.mxu0
        %786 = vmatprep.subr.bf16.mxu0 0
        %787 = vmatpush1.bf16.msra.mxu0 %v729
        %788 = vmatprep.subr.bf16.mxu0 0
        %789 = vmatpush1.bf16.msra.mxu0 %v732
        %790 = vmatprep.subr.bf16.mxu0 0
        %791 = vmatpush1.bf16.msra.mxu0 0
        %792 = vmatprep.subr.bf16.mxu0 0
        %793 = vmatpush1.bf16.msra.mxu0 0
        %794 = vmatprep.subr.bf16.mxu0 0
        %795 = vmatpush1.bf16.msra.mxu0 0
        %796 = vmatprep.subr.bf16.mxu0 0
        %797 = vmatpush1.bf16.msra.mxu0 0
        %798 = vmatprep.subr.bf16.mxu0 0
        %799 = vmatpush1.bf16.msra.mxu0 0
        %800 = vmatprep.subr.bf16.mxu0 0
        %801 = vmatpush1.bf16.msra.mxu0 0
        %802 = vmatprep.subr.bf16.mxu0 0
        %803 = vmatpush1.bf16.msra.mxu0 0
        %804 = vmatprep.subr.bf16.mxu0 0
        %805 = vmatpush1.bf16.msra.mxu0 0
        %806 = vmatprep.subr.bf16.mxu0 0
        %807 = vmatpush1.bf16.msra.mxu0 0
        %808 = vmatprep.subr.bf16.mxu0 0
        %809 = vmatpush1.bf16.msra.mxu0 0
        %810 = vmatprep.subr.bf16.mxu0 0
        %811 = vmatpush1.bf16.msra.mxu0 0
        %812 = vmatprep.subr.bf16.mxu0 0
        %813 = vmatpush1.bf16.msra.mxu0 0
        %814 = vmatprep.subr.bf16.mxu0 0
        %815 = vmatpush1.bf16.msra.mxu0 0
        %816 = vmatprep.subr.bf16.mxu0 0
        %817 = vmatpush1.bf16.msra.mxu0 0
        %818 = vmatprep.mubr.bf16.mxu0 0
        %819 = vmatmul.mubr.bf16.gmra.mrb[0].mxu0 %v741
        %v820 = vpop.f32.mrb[0].mxu0
        %v821 = vadd.f32 0.0, %v820
        %v822 = vpop.f32.mrb[0].mxu0
        %v823 = vpop.f32.mrb[0].mxu0
        %v824 = vadd.f32 0.0, %v823
        %v825 = vpop.f32.mrb[0].mxu0
        %826 = vdwg.mxu0
        %v829 = vunpack.c.l.b16 %v660
        %v830 = vunpack.c.l.b16 %v661
        %v831 = vpack.c.b16 %v830, %v829
        %832 = vrot.lane.b32.xlu0 %v702, 21
        %v833 = vpop.permute.xlu0 %832
        %834 = vrot.lane.b32.xlu0 %v703, 21
        %v835 = vpop.permute.xlu0 %834
        %836 = vrot.lane.b32.xlu0 %v704, 21
        %v837 = vpop.permute.xlu0 %836
        %838 = vrot.lane.b32.xlu0 %v705, 21
        %v839 = vpop.permute.xlu0 %838
        %840 = vrot.lane.b32.xlu0 %v706, 21
        %v841 = vpop.permute.xlu0 %840
        %842 = vrot.lane.b32.xlu0 %v707, 21
        %v843 = vpop.permute.xlu0 %842
        %844 = vrot.lane.b32.xlu0 %v708, 21
        %v845 = vpop.permute.xlu0 %844
        %846 = vrot.lane.b32.xlu0 %v709, 21
        %v847 = vpop.permute.xlu0 %846
        %vm848 = vcmask 171008
        %v849 = vsel %vm848, %v833, %v835
        %v850 = vsel %vm848, %v835, %v837
        %v851 = vsel %vm848, %v837, %v839
        %v852 = vsel %vm848, %v841, %v843
        %v853 = vsel %vm848, %v843, %v845
        %v854 = vsel %vm848, %v845, %v847
        %v862 = vsel %vm739, %v831, 0
        %864 = vmatprep.subr.bf16.mxu0 %v850
        %865 = vmatpush1.bf16.msra.mxu0 %v849
        %866 = vmatprep.subr.bf16.mxu0 %v853
        %867 = vmatpush1.bf16.msra.mxu0 %v852
        %868 = vmatprep.subr.bf16.mxu0 0
        %869 = vmatpush1.bf16.msra.mxu0 0
        %870 = vmatprep.subr.bf16.mxu0 0
        %871 = vmatpush1.bf16.msra.mxu0 0
        %872 = vmatprep.subr.bf16.mxu0 0
        %873 = vmatpush1.bf16.msra.mxu0 0
        %874 = vmatprep.subr.bf16.mxu0 0
        %875 = vmatpush1.bf16.msra.mxu0 0
        %876 = vmatprep.subr.bf16.mxu0 0
        %877 = vmatpush1.bf16.msra.mxu0 0
        %878 = vmatprep.subr.bf16.mxu0 0
        %879 = vmatpush1.bf16.msra.mxu0 0
        %880 = vmatprep.subr.bf16.mxu0 0
        %881 = vmatpush1.bf16.msra.mxu0 0
        %882 = vmatprep.subr.bf16.mxu0 0
        %883 = vmatpush1.bf16.msra.mxu0 0
        %884 = vmatprep.subr.bf16.mxu0 0
        %885 = vmatpush1.bf16.msra.mxu0 0
        %886 = vmatprep.subr.bf16.mxu0 0
        %887 = vmatpush1.bf16.msra.mxu0 0
        %888 = vmatprep.subr.bf16.mxu0 0
        %889 = vmatpush1.bf16.msra.mxu0 0
        %890 = vmatprep.subr.bf16.mxu0 0
        %891 = vmatpush1.bf16.msra.mxu0 0
        %892 = vmatprep.subr.bf16.mxu0 0
        %893 = vmatpush1.bf16.msra.mxu0 0
        %894 = vmatprep.subr.bf16.mxu0 0
        %895 = vmatpush1.bf16.msra.mxu0 0
        %896 = vmatprep.mubr.bf16.mxu0 0
        %897 = vmatmul.mubr.bf16.gmra.mrb[0].mxu0 %v862
        %v898 = vpop.f32.mrb[0].mxu0
        %v899 = vadd.f32 %v778, %v898
        %v900 = vpop.f32.mrb[0].mxu0
        %v901 = vadd.f32 %v780, %v900
        %v902 = vpop.f32.mrb[0].mxu0
        %v903 = vadd.f32 %v782, %v902
        %v904 = vpop.f32.mrb[0].mxu0
        %v905 = vadd.f32 %v784, %v904
        %906 = vdwg.mxu0
        %907 = vmatprep.subr.bf16.mxu0 0
        %908 = vmatpush1.bf16.msra.mxu0 %v851
        %909 = vmatprep.subr.bf16.mxu0 0
        %910 = vmatpush1.bf16.msra.mxu0 %v854
        %911 = vmatprep.subr.bf16.mxu0 0
        %912 = vmatpush1.bf16.msra.mxu0 0
        %913 = vmatprep.subr.bf16.mxu0 0
        %914 = vmatpush1.bf16.msra.mxu0 0
        %915 = vmatprep.subr.bf16.mxu0 0
        %916 = vmatpush1.bf16.msra.mxu0 0
        %917 = vmatprep.subr.bf16.mxu0 0
        %918 = vmatpush1.bf16.msra.mxu0 0
        %919 = vmatprep.subr.bf16.mxu0 0
        %920 = vmatpush1.bf16.msra.mxu0 0
        %921 = vmatprep.subr.bf16.mxu0 0
        %922 = vmatpush1.bf16.msra.mxu0 0
        %923 = vmatprep.subr.bf16.mxu0 0
        %924 = vmatpush1.bf16.msra.mxu0 0
        %925 = vmatprep.subr.bf16.mxu0 0
        %926 = vmatpush1.bf16.msra.mxu0 0
        %927 = vmatprep.subr.bf16.mxu0 0
        %928 = vmatpush1.bf16.msra.mxu0 0
        %929 = vmatprep.subr.bf16.mxu0 0
        %930 = vmatpush1.bf16.msra.mxu0 0
        %931 = vmatprep.subr.bf16.mxu0 0
        %932 = vmatpush1.bf16.msra.mxu0 0
        %933 = vmatprep.subr.bf16.mxu0 0
        %934 = vmatpush1.bf16.msra.mxu0 0
        %935 = vmatprep.subr.bf16.mxu0 0
        %936 = vmatpush1.bf16.msra.mxu0 0
        %937 = vmatprep.subr.bf16.mxu0 0
        %938 = vmatpush1.bf16.msra.mxu0 0
        %939 = vmatprep.mubr.bf16.mxu0 0
        %940 = vmatmul.mubr.bf16.gmra.mrb[0].mxu0 %v862
        %v941 = vpop.f32.mrb[0].mxu0
        %v942 = vadd.f32 %v821, %v941
        %v943 = vpop.f32.mrb[0].mxu0
        %v944 = vpop.f32.mrb[0].mxu0
        %v945 = vadd.f32 %v824, %v944
        %v946 = vpop.f32.mrb[0].mxu0
        %947 = vdwg.mxu0
        %s948 = scalar_lea.vmem [#allocation11], 16
        %v949 = vld [vmem:[%s948] sm:$0xf]
        %v950 = vld [vmem:[%s948 + $0x4] sm:$0xf]
        %v953 = vunpack.c.l.b16 %v949
        %v954 = vunpack.c.l.b16 %v950
        %v955 = vpack.c.b16 %v954, %v953
        %956 = vrot.lane.b32.xlu0 %v702, 19
        %v957 = vpop.permute.xlu0 %956
        %958 = vrot.lane.b32.xlu0 %v703, 19
        %v959 = vpop.permute.xlu0 %958
        %960 = vrot.lane.b32.xlu0 %v704, 19
        %v961 = vpop.permute.xlu0 %960
        %962 = vrot.lane.b32.xlu0 %v705, 19
        %v963 = vpop.permute.xlu0 %962
        %964 = vrot.lane.b32.xlu0 %v706, 19
        %v965 = vpop.permute.xlu0 %964
        %966 = vrot.lane.b32.xlu0 %v707, 19
        %v967 = vpop.permute.xlu0 %966
        %968 = vrot.lane.b32.xlu0 %v708, 19
        %v969 = vpop.permute.xlu0 %968
        %970 = vrot.lane.b32.xlu0 %v709, 19
        %v971 = vpop.permute.xlu0 %970
        %vm972 = vcmask 154624
        %v973 = vsel %vm972, %v957, %v959
        %v974 = vsel %vm972, %v959, %v961
        %v975 = vsel %vm972, %v961, %v963
        %v976 = vsel %vm972, %v965, %v967
        %v977 = vsel %vm972, %v967, %v969
        %v978 = vsel %vm972, %v969, %v971
        %v986 = vsel %vm739, %v955, 0
        %988 = vmatprep.subr.bf16.mxu0 %v974
        %989 = vmatpush1.bf16.msra.mxu0 %v973
        %990 = vmatprep.subr.bf16.mxu0 %v977
        %991 = vmatpush1.bf16.msra.mxu0 %v976
        %992 = vmatprep.subr.bf16.mxu0 0
        %993 = vmatpush1.bf16.msra.mxu0 0
        %994 = vmatprep.subr.bf16.mxu0 0
        %995 = vmatpush1.bf16.msra.mxu0 0
        %996 = vmatprep.subr.bf16.mxu0 0
        %997 = vmatpush1.bf16.msra.mxu0 0
        %998 = vmatprep.subr.bf16.mxu0 0
        %999 = vmatpush1.bf16.msra.mxu0 0
        %1000 = vmatprep.subr.bf16.mxu0 0
        %1001 = vmatpush1.bf16.msra.mxu0 0
        %1002 = vmatprep.subr.bf16.mxu0 0
        %1003 = vmatpush1.bf16.msra.mxu0 0
        %1004 = vmatprep.subr.bf16.mxu0 0
        %1005 = vmatpush1.bf16.msra.mxu0 0
        %1006 = vmatprep.subr.bf16.mxu0 0
        %1007 = vmatpush1.bf16.msra.mxu0 0
        %1008 = vmatprep.subr.bf16.mxu0 0
        %1009 = vmatpush1.bf16.msra.mxu0 0
        %1010 = vmatprep.subr.bf16.mxu0 0
        %1011 = vmatpush1.bf16.msra.mxu0 0
        %1012 = vmatprep.subr.bf16.mxu0 0
        %1013 = vmatpush1.bf16.msra.mxu0 0
        %1014 = vmatprep.subr.bf16.mxu0 0
        %1015 = vmatpush1.bf16.msra.mxu0 0
        %1016 = vmatprep.subr.bf16.mxu0 0
        %1017 = vmatpush1.bf16.msra.mxu0 0
        %1018 = vmatprep.subr.bf16.mxu0 0
        %1019 = vmatpush1.bf16.msra.mxu0 0
        %1020 = vmatprep.mubr.bf16.mxu0 0
        %1021 = vmatmul.mubr.bf16.gmra.mrb[0].mxu0 %v986
        %v1022 = vpop.f32.mrb[0].mxu0
        %v1023 = vadd.f32 0.0, %v1022
        %v1024 = vpop.f32.mrb[0].mxu0
        %v1025 = vadd.f32 0.0, %v1024
        %v1026 = vpop.f32.mrb[0].mxu0
        %v1027 = vadd.f32 0.0, %v1026
        %v1028 = vpop.f32.mrb[0].mxu0
        %v1029 = vadd.f32 0.0, %v1028
        %1030 = vdwg.mxu0
        %1031 = vmatprep.subr.bf16.mxu0 0
        %1032 = vmatpush1.bf16.msra.mxu0 %v975
        %1033 = vmatprep.subr.bf16.mxu0 0
        %1034 = vmatpush1.bf16.msra.mxu0 %v978
        %1035 = vmatprep.subr.bf16.mxu0 0
        %1036 = vmatpush1.bf16.msra.mxu0 0
        %1037 = vmatprep.subr.bf16.mxu0 0
        %1038 = vmatpush1.bf16.msra.mxu0 0
        %1039 = vmatprep.subr.bf16.mxu0 0
        %1040 = vmatpush1.bf16.msra.mxu0 0
        %1041 = vmatprep.subr.bf16.mxu0 0
        %1042 = vmatpush1.bf16.msra.mxu0 0
        %1043 = vmatprep.subr.bf16.mxu0 0
        %1044 = vmatpush1.bf16.msra.mxu0 0
        %1045 = vmatprep.subr.bf16.mxu0 0
        %1046 = vmatpush1.bf16.msra.mxu0 0
        %1047 = vmatprep.subr.bf16.mxu0 0
        %1048 = vmatpush1.bf16.msra.mxu0 0
        %1049 = vmatprep.subr.bf16.mxu0 0
        %1050 = vmatpush1.bf16.msra.mxu0 0
        %1051 = vmatprep.subr.bf16.mxu0 0
        %1052 = vmatpush1.bf16.msra.mxu0 0
        %1053 = vmatprep.subr.bf16.mxu0 0
        %1054 = vmatpush1.bf16.msra.mxu0 0
        %1055 = vmatprep.subr.bf16.mxu0 0
        %1056 = vmatpush1.bf16.msra.mxu0 0
        %1057 = vmatprep.subr.bf16.mxu0 0
        %1058 = vmatpush1.bf16.msra.mxu0 0
        %1059 = vmatprep.subr.bf16.mxu0 0
        %1060 = vmatpush1.bf16.msra.mxu0 0
        %1061 = vmatprep.subr.bf16.mxu0 0
        %1062 = vmatpush1.bf16.msra.mxu0 0
        %1063 = vmatprep.mubr.bf16.mxu0 0
        %1064 = vmatmul.mubr.bf16.gmra.mrb[0].mxu0 %v986
        %v1065 = vpop.f32.mrb[0].mxu0
        %v1066 = vadd.f32 0.0, %v1065
        %v1067 = vpop.f32.mrb[0].mxu0
        %v1068 = vpop.f32.mrb[0].mxu0
        %v1069 = vadd.f32 0.0, %v1068
        %v1070 = vpop.f32.mrb[0].mxu0
        %1071 = vdwg.mxu0
        %v1072 = vadd.f32 %v899, %v1023
        %v1073 = vadd.f32 %v901, %v1025
        %v1074 = vadd.f32 %v942, %v1066
        %v1075 = vadd.f32 %v903, %v1027
        %v1076 = vadd.f32 %v905, %v1029
        %v1077 = vadd.f32 %v945, %v1069
        %s1078 = scalar_lea.vmem [#allocation11], 24
        %v1079 = vld [vmem:[%s1078] sm:$0xf]
        %v1080 = vld [vmem:[%s1078 + $0x4] sm:$0xf]
        %v1083 = vunpack.c.l.b16 %v1079
        %v1084 = vunpack.c.l.b16 %v1080
        %v1085 = vpack.c.b16 %v1084, %v1083
        %1086 = vrot.lane.b32.xlu0 %v702, 1
        %v1087 = vpop.permute.xlu0 %1086
        %1088 = vrot.lane.b32.xlu0 %v703, 1
        %v1089 = vpop.permute.xlu0 %1088
        %1090 = vrot.lane.b32.xlu0 %v704, 1
        %v1091 = vpop.permute.xlu0 %1090
        %1092 = vrot.lane.b32.xlu0 %v705, 1
        %v1093 = vpop.permute.xlu0 %1092
        %1094 = vrot.lane.b32.xlu0 %v706, 1
        %v1095 = vpop.permute.xlu0 %1094
        %1096 = vrot.lane.b32.xlu0 %v707, 1
        %v1097 = vpop.permute.xlu0 %1096
        %1098 = vrot.lane.b32.xlu0 %v708, 1
        %v1099 = vpop.permute.xlu0 %1098
        %1100 = vrot.lane.b32.xlu0 %v709, 1
        %v1101 = vpop.permute.xlu0 %1100
        %vm1102 = vcmask 7168
        %v1103 = vsel %vm1102, %v1087, %v1089
        %v1104 = vsel %vm1102, %v1089, %v1091
        %v1105 = vsel %vm1102, %v1091, %v1093
        %v1106 = vsel %vm1102, %v1095, %v1097
        %v1107 = vsel %vm1102, %v1097, %v1099
        %v1108 = vsel %vm1102, %v1099, %v1101
        %v1116 = vsel %vm739, %v1085, 0
        %1118 = vmatprep.subr.bf16.mxu0 %v1104
        %1119 = vmatpush1.bf16.msra.mxu0 %v1103
        %1120 = vmatprep.subr.bf16.mxu0 %v1107
        %1121 = vmatpush1.bf16.msra.mxu0 %v1106
        %1122 = vmatprep.subr.bf16.mxu0 0
        %1123 = vmatpush1.bf16.msra.mxu0 0
        %1124 = vmatprep.subr.bf16.mxu0 0
        %1125 = vmatpush1.bf16.msra.mxu0 0
        %1126 = vmatprep.subr.bf16.mxu0 0
        %1127 = vmatpush1.bf16.msra.mxu0 0
        %1128 = vmatprep.subr.bf16.mxu0 0
        %1129 = vmatpush1.bf16.msra.mxu0 0
        %1130 = vmatprep.subr.bf16.mxu0 0
        %1131 = vmatpush1.bf16.msra.mxu0 0
        %1132 = vmatprep.subr.bf16.mxu0 0
        %1133 = vmatpush1.bf16.msra.mxu0 0
        %1134 = vmatprep.subr.bf16.mxu0 0
        %1135 = vmatpush1.bf16.msra.mxu0 0
        %1136 = vmatprep.subr.bf16.mxu0 0
        %1137 = vmatpush1.bf16.msra.mxu0 0
        %1138 = vmatprep.subr.bf16.mxu0 0
        %1139 = vmatpush1.bf16.msra.mxu0 0
        %1140 = vmatprep.subr.bf16.mxu0 0
        %1141 = vmatpush1.bf16.msra.mxu0 0
        %1142 = vmatprep.subr.bf16.mxu0 0
        %1143 = vmatpush1.bf16.msra.mxu0 0
        %1144 = vmatprep.subr.bf16.mxu0 0
        %1145 = vmatpush1.bf16.msra.mxu0 0
        %1146 = vmatprep.subr.bf16.mxu0 0
        %1147 = vmatpush1.bf16.msra.mxu0 0
        %1148 = vmatprep.subr.bf16.mxu0 0
        %1149 = vmatpush1.bf16.msra.mxu0 0
        %1150 = vmatprep.mubr.bf16.mxu0 0
        %1151 = vmatmul.mubr.bf16.gmra.mrb[0].mxu0 %v1116
        %v1152 = vpop.f32.mrb[0].mxu0
        %v1153 = vadd.f32 0.0, %v1152
        %v1154 = vpop.f32.mrb[0].mxu0
        %v1155 = vadd.f32 0.0, %v1154
        %v1156 = vpop.f32.mrb[0].mxu0
        %v1157 = vadd.f32 0.0, %v1156
        %v1158 = vpop.f32.mrb[0].mxu0
        %v1159 = vadd.f32 0.0, %v1158
        %1160 = vdwg.mxu0
        %1161 = vmatprep.subr.bf16.mxu0 0
        %1162 = vmatpush1.bf16.msra.mxu0 %v1105
        %1163 = vmatprep.subr.bf16.mxu0 0
        %1164 = vmatpush1.bf16.msra.mxu0 %v1108
        %1165 = vmatprep.subr.bf16.mxu0 0
        %1166 = vmatpush1.bf16.msra.mxu0 0
        %1167 = vmatprep.subr.bf16.mxu0 0
        %1168 = vmatpush1.bf16.msra.mxu0 0
        %1169 = vmatprep.subr.bf16.mxu0 0
        %1170 = vmatpush1.bf16.msra.mxu0 0
        %1171 = vmatprep.subr.bf16.mxu0 0
        %1172 = vmatpush1.bf16.msra.mxu0 0
        %1173 = vmatprep.subr.bf16.mxu0 0
        %1174 = vmatpush1.bf16.msra.mxu0 0
        %1175 = vmatprep.subr.bf16.mxu0 0
        %1176 = vmatpush1.bf16.msra.mxu0 0
        %1177 = vmatprep.subr.bf16.mxu0 0
        %1178 = vmatpush1.bf16.msra.mxu0 0
        %1179 = vmatprep.subr.bf16.mxu0 0
        %1180 = vmatpush1.bf16.msra.mxu0 0
        %1181 = vmatprep.subr.bf16.mxu0 0
        %1182 = vmatpush1.bf16.msra.mxu0 0
        %1183 = vmatprep.subr.bf16.mxu0 0
        %1184 = vmatpush1.bf16.msra.mxu0 0
        %1185 = vmatprep.subr.bf16.mxu0 0
        %1186 = vmatpush1.bf16.msra.mxu0 0
        %1187 = vmatprep.subr.bf16.mxu0 0
        %1188 = vmatpush1.bf16.msra.mxu0 0
        %1189 = vmatprep.subr.bf16.mxu0 0
        %1190 = vmatpush1.bf16.msra.mxu0 0
        %1191 = vmatprep.subr.bf16.mxu0 0
        %1192 = vmatpush1.bf16.msra.mxu0 0
        %1193 = vmatprep.mubr.bf16.mxu0 0
        %1194 = vmatmul.mubr.bf16.gmra.mrb[0].mxu0 %v1116
        %v1195 = vpop.f32.mrb[0].mxu0
        %v1196 = vadd.f32 0.0, %v1195
        %v1197 = vpop.f32.mrb[0].mxu0
        %v1198 = vpop.f32.mrb[0].mxu0
        %v1199 = vadd.f32 0.0, %v1198
        %v1200 = vpop.f32.mrb[0].mxu0
        %1201 = vdwg.mxu0
        %v1202 = vadd.f32 %v1072, %v1153
        %v1203 = vadd.f32 %v1073, %v1155
        %v1204 = vadd.f32 %v1074, %v1196
        %v1205 = vadd.f32 %v1075, %v1157
        %v1206 = vadd.f32 %v1076, %v1159
        %v1207 = vadd.f32 %v1077, %v1199
        %s1208 = scalar_lea.vmem [#allocation11], 32
        %v1209 = vld [vmem:[%s1208] sm:$0xf]
        %v1210 = vld [vmem:[%s1208 + $0x4] sm:$0xf]
        %v1211 = vld [vmem:[%s558 + $0x4] sm:$0xff]
        %v1212 = vld [vmem:[%s558 + $0xc] sm:$0xf]
        %v1213 = vld [vmem:[%s558 + $0x14] sm:$0xff]
        %v1214 = vld [vmem:[%s558 + $0x1c] sm:$0xf]
        %v1215 = vld [vmem:[%s558 + $0x24] sm:$0xff]
        %v1216 = vld [vmem:[%s558 + $0x2c] sm:$0xf]
        %v1217 = vld [vmem:[%s558 + $0x34] sm:$0xff]
        %v1218 = vld [vmem:[%s558 + $0x3c] sm:$0xf]
        %v1221 = vunpack.c.l.b16 %v1209
        %v1222 = vunpack.c.l.b16 %v1210
        %v1223 = vpack.c.b16 %v1222, %v1221
        %v1232 = vunpack.c.l.b16 %v1211
        %v1233 = vunpack.c.h.b16 %v1211
        %v1234 = vunpack.c.l.b16 %v1212
        %v1235 = vunpack.c.l.b16 %v1213
        %v1236 = vunpack.c.h.b16 %v1213
        %v1237 = vunpack.c.l.b16 %v1214
        %v1238 = vunpack.c.l.b16 %v1215
        %v1239 = vunpack.c.h.b16 %v1215
        %v1240 = vunpack.c.l.b16 %v1216
        %v1241 = vunpack.c.l.b16 %v1217
        %v1242 = vunpack.c.h.b16 %v1217
        %v1243 = vunpack.c.l.b16 %v1218
        %v1244 = vpack.c.b16 %v1235, %v1232
        %v1245 = vpack.c.b16 %v1236, %v1233
        %v1246 = vpack.c.b16 %v1237, %v1234
        %v1247 = vpack.c.b16 %v1241, %v1238
        %v1248 = vpack.c.b16 %v1242, %v1239
        %v1249 = vpack.c.b16 %v1243, %v1240
        %v1257 = vsel %vm739, %v1223, 0
        %1259 = vmatprep.subr.bf16.mxu0 %v1245
        %1260 = vmatpush1.bf16.msra.mxu0 %v1244
        %1261 = vmatprep.subr.bf16.mxu0 %v1248
        %1262 = vmatpush1.bf16.msra.mxu0 %v1247
        %1263 = vmatprep.subr.bf16.mxu0 0
        %1264 = vmatpush1.bf16.msra.mxu0 0
        %1265 = vmatprep.subr.bf16.mxu0 0
        %1266 = vmatpush1.bf16.msra.mxu0 0
        %1267 = vmatprep.subr.bf16.mxu0 0
        %1268 = vmatpush1.bf16.msra.mxu0 0
        %1269 = vmatprep.subr.bf16.mxu0 0
        %1270 = vmatpush1.bf16.msra.mxu0 0
        %1271 = vmatprep.subr.bf16.mxu0 0
        %1272 = vmatpush1.bf16.msra.mxu0 0
        %1273 = vmatprep.subr.bf16.mxu0 0
        %1274 = vmatpush1.bf16.msra.mxu0 0
        %1275 = vmatprep.subr.bf16.mxu0 0
        %1276 = vmatpush1.bf16.msra.mxu0 0
        %1277 = vmatprep.subr.bf16.mxu0 0
        %1278 = vmatpush1.bf16.msra.mxu0 0
        %1279 = vmatprep.subr.bf16.mxu0 0
        %1280 = vmatpush1.bf16.msra.mxu0 0
        %1281 = vmatprep.subr.bf16.mxu0 0
        %1282 = vmatpush1.bf16.msra.mxu0 0
        %1283 = vmatprep.subr.bf16.mxu0 0
        %1284 = vmatpush1.bf16.msra.mxu0 0
        %1285 = vmatprep.subr.bf16.mxu0 0
        %1286 = vmatpush1.bf16.msra.mxu0 0
        %1287 = vmatprep.subr.bf16.mxu0 0
        %1288 = vmatpush1.bf16.msra.mxu0 0
        %1289 = vmatprep.subr.bf16.mxu0 0
        %1290 = vmatpush1.bf16.msra.mxu0 0
        %1291 = vmatprep.mubr.bf16.mxu0 0
        %1292 = vmatmul.mubr.bf16.gmra.mrb[0].mxu0 %v1257
        %v1293 = vpop.f32.mrb[0].mxu0
        %v1294 = vadd.f32 0.0, %v1293
        %v1295 = vpop.f32.mrb[0].mxu0
        %v1296 = vadd.f32 0.0, %v1295
        %v1297 = vpop.f32.mrb[0].mxu0
        %v1298 = vadd.f32 0.0, %v1297
        %v1299 = vpop.f32.mrb[0].mxu0
        %v1300 = vadd.f32 0.0, %v1299
        %1301 = vdwg.mxu0
        %1302 = vmatprep.subr.bf16.mxu0 0
        %1303 = vmatpush1.bf16.msra.mxu0 %v1246
        %1304 = vmatprep.subr.bf16.mxu0 0
        %1305 = vmatpush1.bf16.msra.mxu0 %v1249
        %1306 = vmatprep.subr.bf16.mxu0 0
        %1307 = vmatpush1.bf16.msra.mxu0 0
        %1308 = vmatprep.subr.bf16.mxu0 0
        %1309 = vmatpush1.bf16.msra.mxu0 0
        %1310 = vmatprep.subr.bf16.mxu0 0
        %1311 = vmatpush1.bf16.msra.mxu0 0
        %1312 = vmatprep.subr.bf16.mxu0 0
        %1313 = vmatpush1.bf16.msra.mxu0 0
        %1314 = vmatprep.subr.bf16.mxu0 0
        %1315 = vmatpush1.bf16.msra.mxu0 0
        %1316 = vmatprep.subr.bf16.mxu0 0
        %1317 = vmatpush1.bf16.msra.mxu0 0
        %1318 = vmatprep.subr.bf16.mxu0 0
        %1319 = vmatpush1.bf16.msra.mxu0 0
        %1320 = vmatprep.subr.bf16.mxu0 0
        %1321 = vmatpush1.bf16.msra.mxu0 0
        %1322 = vmatprep.subr.bf16.mxu0 0
        %1323 = vmatpush1.bf16.msra.mxu0 0
        %1324 = vmatprep.subr.bf16.mxu0 0
        %1325 = vmatpush1.bf16.msra.mxu0 0
        %1326 = vmatprep.subr.bf16.mxu0 0
        %1327 = vmatpush1.bf16.msra.mxu0 0
        %1328 = vmatprep.subr.bf16.mxu0 0
        %1329 = vmatpush1.bf16.msra.mxu0 0
        %1330 = vmatprep.subr.bf16.mxu0 0
        %1331 = vmatpush1.bf16.msra.mxu0 0
        %1332 = vmatprep.subr.bf16.mxu0 0
        %1333 = vmatpush1.bf16.msra.mxu0 0
        %1334 = vmatprep.mubr.bf16.mxu0 0
        %1335 = vmatmul.mubr.bf16.gmra.mrb[0].mxu0 %v1257
        %v1336 = vpop.f32.mrb[0].mxu0
        %v1337 = vadd.f32 0.0, %v1336
        %v1338 = vpop.f32.mrb[0].mxu0
        %v1339 = vpop.f32.mrb[0].mxu0
        %v1340 = vadd.f32 0.0, %v1339
        %v1341 = vpop.f32.mrb[0].mxu0
        %1342 = vdwg.mxu0
        %v1343 = vadd.f32 %v1202, %v1294
        %v1344 = vadd.f32 %v1203, %v1296
        %v1345 = vadd.f32 %v1204, %v1337
        %v1346 = vadd.f32 %v1205, %v1298
        %v1347 = vadd.f32 %v1206, %v1300
        %v1348 = vadd.f32 %v1207, %v1340
        %s1349 = scalar_lea.vmem [#allocation11], 40
        %v1350 = vld [vmem:[%s1349] sm:$0xf]
        %v1351 = vld [vmem:[%s1349 + $0x4] sm:$0xf]
        %v1354 = vunpack.c.l.b16 %v1350
        %v1355 = vunpack.c.l.b16 %v1351
        %v1356 = vpack.c.b16 %v1355, %v1354
        %1357 = vrot.lane.b32.xlu0 %v1244, 127
        %v1358 = vpop.permute.xlu0 %1357
        %1359 = vrot.lane.b32.xlu0 %v1245, 127
        %v1360 = vpop.permute.xlu0 %1359
        %1361 = vrot.lane.b32.xlu0 %v1246, 127
        %v1362 = vpop.permute.xlu0 %1361
        %1363 = vrot.lane.b32.xlu0 %v1247, 127
        %v1364 = vpop.permute.xlu0 %1363
        %1365 = vrot.lane.b32.xlu0 %v1248, 127
        %v1366 = vpop.permute.xlu0 %1365
        %1367 = vrot.lane.b32.xlu0 %v1249, 127
        %v1368 = vpop.permute.xlu0 %1367
        %vm1369 = vcmask 1039360
        %v1370 = vsel %vm1369, %v1358, %v1360
        %v1371 = vsel %vm1369, %v1360, %v1362
        %v1372 = vsel %vm1369, %v1364, %v1366
        %v1373 = vsel %vm1369, %v1366, %v1368
        %v1381 = vsel %vm739, %v1356, 0
        %1383 = vmatprep.subr.bf16.mxu0 %v1371
        %1384 = vmatpush1.bf16.msra.mxu0 %v1370
        %1385 = vmatprep.subr.bf16.mxu0 %v1373
        %1386 = vmatpush1.bf16.msra.mxu0 %v1372
        %1387 = vmatprep.subr.bf16.mxu0 0
        %1388 = vmatpush1.bf16.msra.mxu0 0
        %1389 = vmatprep.subr.bf16.mxu0 0
        %1390 = vmatpush1.bf16.msra.mxu0 0
        %1391 = vmatprep.subr.bf16.mxu0 0
        %1392 = vmatpush1.bf16.msra.mxu0 0
        %1393 = vmatprep.subr.bf16.mxu0 0
        %1394 = vmatpush1.bf16.msra.mxu0 0
        %1395 = vmatprep.subr.bf16.mxu0 0
        %1396 = vmatpush1.bf16.msra.mxu0 0
        %1397 = vmatprep.subr.bf16.mxu0 0
        %1398 = vmatpush1.bf16.msra.mxu0 0
        %1399 = vmatprep.subr.bf16.mxu0 0
        %1400 = vmatpush1.bf16.msra.mxu0 0
        %1401 = vmatprep.subr.bf16.mxu0 0
        %1402 = vmatpush1.bf16.msra.mxu0 0
        %1403 = vmatprep.subr.bf16.mxu0 0
        %1404 = vmatpush1.bf16.msra.mxu0 0
        %1405 = vmatprep.subr.bf16.mxu0 0
        %1406 = vmatpush1.bf16.msra.mxu0 0
        %1407 = vmatprep.subr.bf16.mxu0 0
        %1408 = vmatpush1.bf16.msra.mxu0 0
        %1409 = vmatprep.subr.bf16.mxu0 0
        %1410 = vmatpush1.bf16.msra.mxu0 0
        %1411 = vmatprep.subr.bf16.mxu0 0
        %1412 = vmatpush1.bf16.msra.mxu0 0
        %1413 = vmatprep.subr.bf16.mxu0 0
        %1414 = vmatpush1.bf16.msra.mxu0 0
        %1415 = vmatprep.mubr.bf16.mxu0 0
        %1416 = vmatmul.mubr.bf16.gmra.mrb[0].mxu0 %v1381
        %v1417 = vpop.f32.mrb[0].mxu0
        %v1418 = vadd.f32 0.0, %v1417
        %v1419 = vpop.f32.mrb[0].mxu0
        %v1420 = vadd.f32 0.0, %v1419
        %v1421 = vpop.f32.mrb[0].mxu0
        %v1422 = vadd.f32 0.0, %v1421
        %v1423 = vpop.f32.mrb[0].mxu0
        %v1424 = vadd.f32 0.0, %v1423
        %1425 = vdwg.mxu0
        %1426 = vmatprep.subr.bf16.mxu0 0
        %1427 = vmatpush1.bf16.msra.mxu0 %v1362
        %1428 = vmatprep.subr.bf16.mxu0 0
        %1429 = vmatpush1.bf16.msra.mxu0 %v1368
        %1430 = vmatprep.subr.bf16.mxu0 0
        %1431 = vmatpush1.bf16.msra.mxu0 0
        %1432 = vmatprep.subr.bf16.mxu0 0
        %1433 = vmatpush1.bf16.msra.mxu0 0
        %1434 = vmatprep.subr.bf16.mxu0 0
        %1435 = vmatpush1.bf16.msra.mxu0 0
        %1436 = vmatprep.subr.bf16.mxu0 0
        %1437 = vmatpush1.bf16.msra.mxu0 0
        %1438 = vmatprep.subr.bf16.mxu0 0
        %1439 = vmatpush1.bf16.msra.mxu0 0
        %1440 = vmatprep.subr.bf16.mxu0 0
        %1441 = vmatpush1.bf16.msra.mxu0 0
        %1442 = vmatprep.subr.bf16.mxu0 0
        %1443 = vmatpush1.bf16.msra.mxu0 0
        %1444 = vmatprep.subr.bf16.mxu0 0
        %1445 = vmatpush1.bf16.msra.mxu0 0
        %1446 = vmatprep.subr.bf16.mxu0 0
        %1447 = vmatpush1.bf16.msra.mxu0 0
        %1448 = vmatprep.subr.bf16.mxu0 0
        %1449 = vmatpush1.bf16.msra.mxu0 0
        %1450 = vmatprep.subr.bf16.mxu0 0
        %1451 = vmatpush1.bf16.msra.mxu0 0
        %1452 = vmatprep.subr.bf16.mxu0 0
        %1453 = vmatpush1.bf16.msra.mxu0 0
        %1454 = vmatprep.subr.bf16.mxu0 0
        %1455 = vmatpush1.bf16.msra.mxu0 0
        %1456 = vmatprep.subr.bf16.mxu0 0
        %1457 = vmatpush1.bf16.msra.mxu0 0
        %1458 = vmatprep.mubr.bf16.mxu0 0
        %1459 = vmatmul.mubr.bf16.gmra.mrb[0].mxu0 %v1381
        %v1460 = vpop.f32.mrb[0].mxu0
        %v1461 = vadd.f32 0.0, %v1460
        %v1462 = vpop.f32.mrb[0].mxu0
        %v1463 = vpop.f32.mrb[0].mxu0
        %v1464 = vadd.f32 0.0, %v1463
        %v1465 = vpop.f32.mrb[0].mxu0
        %1466 = vdwg.mxu0
        %v1467 = vadd.f32 %v1343, %v1418
        %v1468 = vadd.f32 %v1344, %v1420
        %v1469 = vadd.f32 %v1345, %v1461
        %v1470 = vadd.f32 %v1346, %v1422
        %v1471 = vadd.f32 %v1347, %v1424
        %v1472 = vadd.f32 %v1348, %v1464
        %s1473 = scalar_lea.vmem [#allocation11], 48
        %v1474 = vld [vmem:[%s1473] sm:$0xf]
        %v1475 = vld [vmem:[%s1473 + $0x4] sm:$0xf]
        %v1478 = vunpack.c.l.b16 %v1474
        %v1479 = vunpack.c.l.b16 %v1475
        %v1480 = vpack.c.b16 %v1479, %v1478
        %1481 = vrot.lane.b32.xlu0 %v1244, 109
        %v1482 = vpop.permute.xlu0 %1481
        %1483 = vrot.lane.b32.xlu0 %v1245, 109
        %v1484 = vpop.permute.xlu0 %1483
        %1485 = vrot.lane.b32.xlu0 %v1246, 109
        %v1486 = vpop.permute.xlu0 %1485
        %1487 = vrot.lane.b32.xlu0 %v1247, 109
        %v1488 = vpop.permute.xlu0 %1487
        %1489 = vrot.lane.b32.xlu0 %v1248, 109
        %v1490 = vpop.permute.xlu0 %1489
        %1491 = vrot.lane.b32.xlu0 %v1249, 109
        %v1492 = vpop.permute.xlu0 %1491
        %vm1493 = vcmask 891904
        %v1494 = vsel %vm1493, %v1482, %v1484
        %v1495 = vsel %vm1493, %v1484, %v1486
        %v1496 = vsel %vm1493, %v1488, %v1490
        %v1497 = vsel %vm1493, %v1490, %v1492
        %v1505 = vsel %vm739, %v1480, 0
        %1507 = vmatprep.subr.bf16.mxu0 %v1495
        %1508 = vmatpush1.bf16.msra.mxu0 %v1494
        %1509 = vmatprep.subr.bf16.mxu0 %v1497
        %1510 = vmatpush1.bf16.msra.mxu0 %v1496
        %1511 = vmatprep.subr.bf16.mxu0 0
        %1512 = vmatpush1.bf16.msra.mxu0 0
        %1513 = vmatprep.subr.bf16.mxu0 0
        %1514 = vmatpush1.bf16.msra.mxu0 0
        %1515 = vmatprep.subr.bf16.mxu0 0
        %1516 = vmatpush1.bf16.msra.mxu0 0
        %1517 = vmatprep.subr.bf16.mxu0 0
        %1518 = vmatpush1.bf16.msra.mxu0 0
        %1519 = vmatprep.subr.bf16.mxu0 0
        %1520 = vmatpush1.bf16.msra.mxu0 0
        %1521 = vmatprep.subr.bf16.mxu0 0
        %1522 = vmatpush1.bf16.msra.mxu0 0
        %1523 = vmatprep.subr.bf16.mxu0 0
        %1524 = vmatpush1.bf16.msra.mxu0 0
        %1525 = vmatprep.subr.bf16.mxu0 0
        %1526 = vmatpush1.bf16.msra.mxu0 0
        %1527 = vmatprep.subr.bf16.mxu0 0
        %1528 = vmatpush1.bf16.msra.mxu0 0
        %1529 = vmatprep.subr.bf16.mxu0 0
        %1530 = vmatpush1.bf16.msra.mxu0 0
        %1531 = vmatprep.subr.bf16.mxu0 0
        %1532 = vmatpush1.bf16.msra.mxu0 0
        %1533 = vmatprep.subr.bf16.mxu0 0
        %1534 = vmatpush1.bf16.msra.mxu0 0
        %1535 = vmatprep.subr.bf16.mxu0 0
        %1536 = vmatpush1.bf16.msra.mxu0 0
        %1537 = vmatprep.subr.bf16.mxu0 0
        %1538 = vmatpush1.bf16.msra.mxu0 0
        %1539 = vmatprep.mubr.bf16.mxu0 0
        %1540 = vmatmul.mubr.bf16.gmra.mrb[0].mxu0 %v1505
        %v1541 = vpop.f32.mrb[0].mxu0
        %v1542 = vadd.f32 0.0, %v1541
        %v1543 = vpop.f32.mrb[0].mxu0
        %v1544 = vadd.f32 0.0, %v1543
        %v1545 = vpop.f32.mrb[0].mxu0
        %v1546 = vadd.f32 0.0, %v1545
        %v1547 = vpop.f32.mrb[0].mxu0
        %v1548 = vadd.f32 0.0, %v1547
        %1549 = vdwg.mxu0
        %1550 = vmatprep.subr.bf16.mxu0 0
        %1551 = vmatpush1.bf16.msra.mxu0 %v1486
        %1552 = vmatprep.subr.bf16.mxu0 0
        %1553 = vmatpush1.bf16.msra.mxu0 %v1492
        %1554 = vmatprep.subr.bf16.mxu0 0
        %1555 = vmatpush1.bf16.msra.mxu0 0
        %1556 = vmatprep.subr.bf16.mxu0 0
        %1557 = vmatpush1.bf16.msra.mxu0 0
        %1558 = vmatprep.subr.bf16.mxu0 0
        %1559 = vmatpush1.bf16.msra.mxu0 0
        %1560 = vmatprep.subr.bf16.mxu0 0
        %1561 = vmatpush1.bf16.msra.mxu0 0
        %1562 = vmatprep.subr.bf16.mxu0 0
        %1563 = vmatpush1.bf16.msra.mxu0 0
        %1564 = vmatprep.subr.bf16.mxu0 0
        %1565 = vmatpush1.bf16.msra.mxu0 0
        %1566 = vmatprep.subr.bf16.mxu0 0
        %1567 = vmatpush1.bf16.msra.mxu0 0
        %1568 = vmatprep.subr.bf16.mxu0 0
        %1569 = vmatpush1.bf16.msra.mxu0 0
        %1570 = vmatprep.subr.bf16.mxu0 0
        %1571 = vmatpush1.bf16.msra.mxu0 0
        %1572 = vmatprep.subr.bf16.mxu0 0
        %1573 = vmatpush1.bf16.msra.mxu0 0
        %1574 = vmatprep.subr.bf16.mxu0 0
        %1575 = vmatpush1.bf16.msra.mxu0 0
        %1576 = vmatprep.subr.bf16.mxu0 0
        %1577 = vmatpush1.bf16.msra.mxu0 0
        %1578 = vmatprep.subr.bf16.mxu0 0
        %1579 = vmatpush1.bf16.msra.mxu0 0
        %1580 = vmatprep.subr.bf16.mxu0 0
        %1581 = vmatpush1.bf16.msra.mxu0 0
        %1582 = vmatprep.mubr.bf16.mxu0 0
        %1583 = vmatmul.mubr.bf16.gmra.mrb[0].mxu0 %v1505
        %v1584 = vpop.f32.mrb[0].mxu0
        %v1585 = vadd.f32 0.0, %v1584
        %v1586 = vpop.f32.mrb[0].mxu0
        %v1587 = vpop.f32.mrb[0].mxu0
        %v1588 = vadd.f32 0.0, %v1587
        %v1589 = vpop.f32.mrb[0].mxu0
        %1590 = vdwg.mxu0
        %v1591 = vadd.f32 %v1467, %v1542
        %v1592 = vadd.f32 %v1468, %v1544
        %v1593 = vadd.f32 %v1469, %v1585
        %v1594 = vadd.f32 %v1470, %v1546
        %v1595 = vadd.f32 %v1471, %v1548
        %v1596 = vadd.f32 %v1472, %v1588
        %s1597 = scalar_lea.vmem [#allocation11], 56
        %v1598 = vld [vmem:[%s1597] sm:$0xf]
        %v1599 = vld [vmem:[%s1597 + $0x4] sm:$0xf]
        %v1602 = vunpack.c.l.b16 %v1598
        %v1603 = vunpack.c.l.b16 %v1599
        %v1604 = vpack.c.b16 %v1603, %v1602
        %1605 = vrot.lane.b32.xlu0 %v1244, 108
        %v1606 = vpop.permute.xlu0 %1605
        %1607 = vrot.lane.b32.xlu0 %v1245, 108
        %v1608 = vpop.permute.xlu0 %1607
        %1609 = vrot.lane.b32.xlu0 %v1246, 108
        %v1610 = vpop.permute.xlu0 %1609
        %1611 = vrot.lane.b32.xlu0 %v1247, 108
        %v1612 = vpop.permute.xlu0 %1611
        %1613 = vrot.lane.b32.xlu0 %v1248, 108
        %v1614 = vpop.permute.xlu0 %1613
        %1615 = vrot.lane.b32.xlu0 %v1249, 108
        %v1616 = vpop.permute.xlu0 %1615
        %vm1617 = vcmask 883712
        %v1618 = vsel %vm1617, %v1606, %v1608
        %v1619 = vsel %vm1617, %v1608, %v1610
        %v1620 = vsel %vm1617, %v1612, %v1614
        %v1621 = vsel %vm1617, %v1614, %v1616
        %v1629 = vsel %vm739, %v1604, 0
        %1631 = vmatprep.subr.bf16.mxu0 %v1619
        %1632 = vmatpush1.bf16.msra.mxu0 %v1618
        %1633 = vmatprep.subr.bf16.mxu0 %v1621
        %1634 = vmatpush1.bf16.msra.mxu0 %v1620
        %1635 = vmatprep.subr.bf16.mxu0 0
        %1636 = vmatpush1.bf16.msra.mxu0 0
        %1637 = vmatprep.subr.bf16.mxu0 0
        %1638 = vmatpush1.bf16.msra.mxu0 0
        %1639 = vmatprep.subr.bf16.mxu0 0
        %1640 = vmatpush1.bf16.msra.mxu0 0
        %1641 = vmatprep.subr.bf16.mxu0 0
        %1642 = vmatpush1.bf16.msra.mxu0 0
        %1643 = vmatprep.subr.bf16.mxu0 0
        %1644 = vmatpush1.bf16.msra.mxu0 0
        %1645 = vmatprep.subr.bf16.mxu0 0
        %1646 = vmatpush1.bf16.msra.mxu0 0
        %1647 = vmatprep.subr.bf16.mxu0 0
        %1648 = vmatpush1.bf16.msra.mxu0 0
        %1649 = vmatprep.subr.bf16.mxu0 0
        %1650 = vmatpush1.bf16.msra.mxu0 0
        %1651 = vmatprep.subr.bf16.mxu0 0
        %1652 = vmatpush1.bf16.msra.mxu0 0
        %1653 = vmatprep.subr.bf16.mxu0 0
        %1654 = vmatpush1.bf16.msra.mxu0 0
        %1655 = vmatprep.subr.bf16.mxu0 0
        %1656 = vmatpush1.bf16.msra.mxu0 0
        %1657 = vmatprep.subr.bf16.mxu0 0
        %1658 = vmatpush1.bf16.msra.mxu0 0
        %1659 = vmatprep.subr.bf16.mxu0 0
        %1660 = vmatpush1.bf16.msra.mxu0 0
        %1661 = vmatprep.subr.bf16.mxu0 0
        %1662 = vmatpush1.bf16.msra.mxu0 0
        %1663 = vmatprep.mubr.bf16.mxu0 0
        %1664 = vmatmul.mubr.bf16.gmra.mrb[0].mxu0 %v1629
        %v1665 = vpop.f32.mrb[0].mxu0
        %v1666 = vadd.f32 0.0, %v1665
        %v1667 = vpop.f32.mrb[0].mxu0
        %v1668 = vadd.f32 0.0, %v1667
        %v1669 = vpop.f32.mrb[0].mxu0
        %v1670 = vadd.f32 0.0, %v1669
        %v1671 = vpop.f32.mrb[0].mxu0
        %v1672 = vadd.f32 0.0, %v1671
        %1673 = vdwg.mxu0
        %1674 = vmatprep.subr.bf16.mxu0 0
        %1675 = vmatpush1.bf16.msra.mxu0 %v1610
        %1676 = vmatprep.subr.bf16.mxu0 0
        %1677 = vmatpush1.bf16.msra.mxu0 %v1616
        %1678 = vmatprep.subr.bf16.mxu0 0
        %1679 = vmatpush1.bf16.msra.mxu0 0
        %1680 = vmatprep.subr.bf16.mxu0 0
        %1681 = vmatpush1.bf16.msra.mxu0 0
        %1682 = vmatprep.subr.bf16.mxu0 0
        %1683 = vmatpush1.bf16.msra.mxu0 0
        %1684 = vmatprep.subr.bf16.mxu0 0
        %1685 = vmatpush1.bf16.msra.mxu0 0
        %1686 = vmatprep.subr.bf16.mxu0 0
        %1687 = vmatpush1.bf16.msra.mxu0 0
        %1688 = vmatprep.subr.bf16.mxu0 0
        %1689 = vmatpush1.bf16.msra.mxu0 0
        %1690 = vmatprep.subr.bf16.mxu0 0
        %1691 = vmatpush1.bf16.msra.mxu0 0
        %1692 = vmatprep.subr.bf16.mxu0 0
        %1693 = vmatpush1.bf16.msra.mxu0 0
        %1694 = vmatprep.subr.bf16.mxu0 0
        %1695 = vmatpush1.bf16.msra.mxu0 0
        %1696 = vmatprep.subr.bf16.mxu0 0
        %1697 = vmatpush1.bf16.msra.mxu0 0
        %1698 = vmatprep.subr.bf16.mxu0 0
        %1699 = vmatpush1.bf16.msra.mxu0 0
        %1700 = vmatprep.subr.bf16.mxu0 0
        %1701 = vmatpush1.bf16.msra.mxu0 0
        %1702 = vmatprep.subr.bf16.mxu0 0
        %1703 = vmatpush1.bf16.msra.mxu0 0
        %1704 = vmatprep.subr.bf16.mxu0 0
        %1705 = vmatpush1.bf16.msra.mxu0 0
        %1706 = vmatprep.mubr.bf16.mxu0 0
        %1707 = vmatmul.mubr.bf16.gmra.mrb[0].mxu0 %v1629
        %v1708 = vpop.f32.mrb[0].mxu0
        %v1709 = vadd.f32 0.0, %v1708
        %v1710 = vpop.f32.mrb[0].mxu0
        %v1711 = vpop.f32.mrb[0].mxu0
        %v1712 = vadd.f32 0.0, %v1711
        %v1713 = vpop.f32.mrb[0].mxu0
        %1714 = vdwg.mxu0
        %v1715 = vadd.f32 %v1591, %v1666
        %v1716 = vadd.f32 %v1592, %v1668
        %v1717 = vadd.f32 %v1593, %v1709
        %v1718 = vadd.f32 %v1594, %v1670
        %v1719 = vadd.f32 %v1595, %v1672
        %v1720 = vadd.f32 %v1596, %v1712
        %s1721 = scalar_lea.vmem [#allocation11], 64
        %v1722 = vld [vmem:[%s1721] sm:$0xf]
        %v1723 = vld [vmem:[%s1721 + $0x4] sm:$0xf]
        %v1726 = vunpack.c.l.b16 %v1722
        %v1727 = vunpack.c.l.b16 %v1723
        %v1728 = vpack.c.b16 %v1727, %v1726
        %1729 = vrot.lane.b32.xlu0 %v1244, 107
        %v1730 = vpop.permute.xlu0 %1729
        %1731 = vrot.lane.b32.xlu0 %v1245, 107
        %v1732 = vpop.permute.xlu0 %1731
        %1733 = vrot.lane.b32.xlu0 %v1246, 107
        %v1734 = vpop.permute.xlu0 %1733
        %1735 = vrot.lane.b32.xlu0 %v1247, 107
        %v1736 = vpop.permute.xlu0 %1735
        %1737 = vrot.lane.b32.xlu0 %v1248, 107
        %v1738 = vpop.permute.xlu0 %1737
        %1739 = vrot.lane.b32.xlu0 %v1249, 107
        %v1740 = vpop.permute.xlu0 %1739
        %vm1741 = vcmask 875520
        %v1742 = vsel %vm1741, %v1730, %v1732
        %v1743 = vsel %vm1741, %v1732, %v1734
        %v1744 = vsel %vm1741, %v1736, %v1738
        %v1745 = vsel %vm1741, %v1738, %v1740
        %v1753 = vsel %vm739, %v1728, 0
        %1755 = vmatprep.subr.bf16.mxu0 %v1743
        %1756 = vmatpush1.bf16.msra.mxu0 %v1742
        %1757 = vmatprep.subr.bf16.mxu0 %v1745
        %1758 = vmatpush1.bf16.msra.mxu0 %v1744
        %1759 = vmatprep.subr.bf16.mxu0 0
        %1760 = vmatpush1.bf16.msra.mxu0 0
        %1761 = vmatprep.subr.bf16.mxu0 0
        %1762 = vmatpush1.bf16.msra.mxu0 0
        %1763 = vmatprep.subr.bf16.mxu0 0
        %1764 = vmatpush1.bf16.msra.mxu0 0
        %1765 = vmatprep.subr.bf16.mxu0 0
        %1766 = vmatpush1.bf16.msra.mxu0 0
        %1767 = vmatprep.subr.bf16.mxu0 0
        %1768 = vmatpush1.bf16.msra.mxu0 0
        %1769 = vmatprep.subr.bf16.mxu0 0
        %1770 = vmatpush1.bf16.msra.mxu0 0
        %1771 = vmatprep.subr.bf16.mxu0 0
        %1772 = vmatpush1.bf16.msra.mxu0 0
        %1773 = vmatprep.subr.bf16.mxu0 0
        %1774 = vmatpush1.bf16.msra.mxu0 0
        %1775 = vmatprep.subr.bf16.mxu0 0
        %1776 = vmatpush1.bf16.msra.mxu0 0
        %1777 = vmatprep.subr.bf16.mxu0 0
        %1778 = vmatpush1.bf16.msra.mxu0 0
        %1779 = vmatprep.subr.bf16.mxu0 0
        %1780 = vmatpush1.bf16.msra.mxu0 0
        %1781 = vmatprep.subr.bf16.mxu0 0
        %1782 = vmatpush1.bf16.msra.mxu0 0
        %1783 = vmatprep.subr.bf16.mxu0 0
        %1784 = vmatpush1.bf16.msra.mxu0 0
        %1785 = vmatprep.subr.bf16.mxu0 0
        %1786 = vmatpush1.bf16.msra.mxu0 0
        %1787 = vmatprep.mubr.bf16.mxu0 0
        %1788 = vmatmul.mubr.bf16.gmra.mrb[0].mxu0 %v1753
        %v1789 = vpop.f32.mrb[0].mxu0
        %v1790 = vadd.f32 0.0, %v1789
        %v1791 = vpop.f32.mrb[0].mxu0
        %v1792 = vadd.f32 0.0, %v1791
        %v1793 = vpop.f32.mrb[0].mxu0
        %v1794 = vadd.f32 0.0, %v1793
        %v1795 = vpop.f32.mrb[0].mxu0
        %v1796 = vadd.f32 0.0, %v1795
        %1797 = vdwg.mxu0
        %1798 = vmatprep.subr.bf16.mxu0 0
        %1799 = vmatpush1.bf16.msra.mxu0 %v1734
        %1800 = vmatprep.subr.bf16.mxu0 0
        %1801 = vmatpush1.bf16.msra.mxu0 %v1740
        %1802 = vmatprep.subr.bf16.mxu0 0
        %1803 = vmatpush1.bf16.msra.mxu0 0
        %1804 = vmatprep.subr.bf16.mxu0 0
        %1805 = vmatpush1.bf16.msra.mxu0 0
        %1806 = vmatprep.subr.bf16.mxu0 0
        %1807 = vmatpush1.bf16.msra.mxu0 0
        %1808 = vmatprep.subr.bf16.mxu0 0
        %1809 = vmatpush1.bf16.msra.mxu0 0
        %1810 = vmatprep.subr.bf16.mxu0 0
        %1811 = vmatpush1.bf16.msra.mxu0 0
        %1812 = vmatprep.subr.bf16.mxu0 0
        %1813 = vmatpush1.bf16.msra.mxu0 0
        %1814 = vmatprep.subr.bf16.mxu0 0
        %1815 = vmatpush1.bf16.msra.mxu0 0
        %1816 = vmatprep.subr.bf16.mxu0 0
        %1817 = vmatpush1.bf16.msra.mxu0 0
        %1818 = vmatprep.subr.bf16.mxu0 0
        %1819 = vmatpush1.bf16.msra.mxu0 0
        %1820 = vmatprep.subr.bf16.mxu0 0
        %1821 = vmatpush1.bf16.msra.mxu0 0
        %1822 = vmatprep.subr.bf16.mxu0 0
        %1823 = vmatpush1.bf16.msra.mxu0 0
        %1824 = vmatprep.subr.bf16.mxu0 0
        %1825 = vmatpush1.bf16.msra.mxu0 0
        %1826 = vmatprep.subr.bf16.mxu0 0
        %1827 = vmatpush1.bf16.msra.mxu0 0
        %1828 = vmatprep.subr.bf16.mxu0 0
        %1829 = vmatpush1.bf16.msra.mxu0 0
        %1830 = vmatprep.mubr.bf16.mxu0 0
        %1831 = vmatmul.mubr.bf16.gmra.mrb[0].mxu0 %v1753
        %v1832 = vpop.f32.mrb[0].mxu0
        %v1833 = vadd.f32 0.0, %v1832
        %v1834 = vpop.f32.mrb[0].mxu0
        %v1835 = vpop.f32.mrb[0].mxu0
        %v1836 = vadd.f32 0.0, %v1835
        %v1837 = vpop.f32.mrb[0].mxu0
        %1838 = vdwg.mxu0
        %v1839 = vadd.f32 %v1715, %v1790
        %v1840 = vadd.f32 %v1716, %v1792
        %v1841 = vadd.f32 %v1717, %v1833
        %v1842 = vadd.f32 %v1718, %v1794
        %v1843 = vadd.f32 %v1719, %v1796
        %v1844 = vadd.f32 %v1720, %v1836
        %v1845 = vld [vmem:[#allocation12] sm:$0xff]
        %v1846 = vld [vmem:[#allocation12 + $0x8] sm:$0xff]
        %1848 = vset.pattern.permute.xlu0 0
        %1849 = vperm.xlu0 %1848, %v1845
        %v1850 = vpop.permute.xlu0 %1849
        %1853 = vset.pattern.permute.xlu0 0
        %1854 = vperm.xlu0 %1853, %v1846
        %v1855 = vpop.permute.xlu0 %1854
        %v1857 = vadd.f32 %v1839, %v1850
        %v1858 = vadd.f32 %v1840, %v1850
        %v1859 = vadd.f32 %v1841, %v1850
        %v1860 = vadd.f32 %v1842, %v1855
        %v1861 = vadd.f32 %v1843, %v1855
        %v1862 = vadd.f32 %v1844, %v1855
        %v1864 = vlaneseq
        %v1865 = vshrl.u32 %v1864, 7
        %v1866 = vsub.s32 0, %v1865
        %v1867 = vrot.slane %v652, %v1866
        %v1868 = vlaneseq
        %v1869 = vshrl.u32 %v1868, 7
        %v1870 = vsub.s32 1, %v1869
        %v1871 = vrot.slane %v652, %v1870
        %v1872 = vlaneseq
        %v1873 = vshrl.u32 %v1872, 7
        %v1874 = vsub.s32 2, %v1873
        %v1875 = vrot.slane %v652, %v1874
        %v1879 = vmul.f32 %v1857, %v1867
        %v1880 = vmul.f32 %v1858, %v1871
        %v1881 = vmul.f32 %v1859, %v1875
        %v1882 = vmul.f32 %v1860, %v1867
        %v1883 = vmul.f32 %v1861, %v1871
        %v1884 = vmul.f32 %v1862, %v1875
        %v1885 = vpack.c.bf16 %v1882, %v1879
        %v1886 = vpack.c.bf16 %v1883, %v1880
        %v1887 = vpack.c.bf16 %v1884, %v1881
        %1888 = vst [vmem:[#allocation2 + $0x8] sm:$0xff] %v1885
        %1889 = vst [vmem:[#allocation2 + $0x10] sm:$0xff] %v1886
        %vm1890 = vcmask 523264
        %1891 = vst.msk [vmem:[#allocation2 + $0x18] sm:$0xff] %vm1890, %v1887
        %v1892 = vld [vmem:[#allocation14] sm:$0xf]
        %v1893 = vld [vmem:[#allocation14 + $0x4] sm:$0xf]
        %v1894 = vld [vmem:[#allocation2] sm:$0xff]
        %v1895 = vld [vmem:[#allocation2 + $0x8] sm:$0xff]
        %v1896 = vld [vmem:[#allocation2 + $0x10] sm:$0xff]
        %v1897 = vld [vmem:[#allocation2 + $0x18] sm:$0xff]
        %v1898 = vld [vmem:[#allocation15] sm:$0xf]
        %v1899 = vld [vmem:[#allocation15 + $0x4] sm:$0xf]
        %v1900 = vld [vmem:[%s567] sm:$0xff]
        %v1901 = vld [vmem:[%s567 + $0x8] sm:$0xff]
        %v1902 = vld [vmem:[%s567 + $0x10] sm:$0xff]
        %v1903 = vld [vmem:[%s567 + $0x18] sm:$0xff]
        %v1906 = vunpack.c.l.b16 %v1898
        %v1907 = vunpack.c.l.b16 %v1899
        %v1908 = vpack.c.b16 %v1907, %v1906
        %v1913 = vunpack.c.l.b16 %v1900
        %v1914 = vunpack.c.h.b16 %v1900
        %v1915 = vunpack.c.l.b16 %v1901
        %v1916 = vunpack.c.h.b16 %v1901
        %v1917 = vunpack.c.l.b16 %v1902
        %v1918 = vunpack.c.h.b16 %v1902
        %v1919 = vunpack.c.l.b16 %v1903
        %v1920 = vunpack.c.h.b16 %v1903
        %v1921 = vpack.c.b16 %v1917, %v1913
        %v1922 = vpack.c.b16 %v1918, %v1914
        %v1923 = vpack.c.b16 %v1919, %v1915
        %v1924 = vpack.c.b16 %v1920, %v1916
        %1925 = vrot.lane.b32.xlu0 %v1921, 21
        %v1926 = vpop.permute.xlu0 %1925
        %1927 = vrot.lane.b32.xlu0 %v1922, 21
        %v1928 = vpop.permute.xlu0 %1927
        %1929 = vrot.lane.b32.xlu0 %v1923, 21
        %v1930 = vpop.permute.xlu0 %1929
        %1931 = vrot.lane.b32.xlu0 %v1924, 21
        %v1932 = vpop.permute.xlu0 %1931
        %v1933 = vsel %vm848, %v1926, %v1928
        %v1934 = vsel %vm848, %v1928, %v1930
        %v1935 = vsel %vm848, %v1930, %v1932
        %vm1939 = vcmask 130048
        %v1941 = vsel %vm1939, %v1908, 0
        %1943 = vmatprep.subr.bf16.mxu0 %v1934
        %1944 = vmatpush1.bf16.msra.mxu0 %v1933
        %1945 = vmatprep.subr.bf16.mxu0 0
        %1946 = vmatpush1.bf16.msra.mxu0 0
        %1947 = vmatprep.subr.bf16.mxu0 0
        %1948 = vmatpush1.bf16.msra.mxu0 0
        %1949 = vmatprep.subr.bf16.mxu0 0
        %1950 = vmatpush1.bf16.msra.mxu0 0
        %1951 = vmatprep.subr.bf16.mxu0 0
        %1952 = vmatpush1.bf16.msra.mxu0 0
        %1953 = vmatprep.subr.bf16.mxu0 0
        %1954 = vmatpush1.bf16.msra.mxu0 0
        %1955 = vmatprep.subr.bf16.mxu0 0
        %1956 = vmatpush1.bf16.msra.mxu0 0
        %1957 = vmatprep.subr.bf16.mxu0 0
        %1958 = vmatpush1.bf16.msra.mxu0 0
        %1959 = vmatprep.subr.bf16.mxu0 0
        %1960 = vmatpush1.bf16.msra.mxu0 0
        %1961 = vmatprep.subr.bf16.mxu0 0
        %1962 = vmatpush1.bf16.msra.mxu0 0
        %1963 = vmatprep.subr.bf16.mxu0 0
        %1964 = vmatpush1.bf16.msra.mxu0 0
        %1965 = vmatprep.subr.bf16.mxu0 0
        %1966 = vmatpush1.bf16.msra.mxu0 0
        %1967 = vmatprep.subr.bf16.mxu0 0
        %1968 = vmatpush1.bf16.msra.mxu0 0
        %1969 = vmatprep.subr.bf16.mxu0 0
        %1970 = vmatpush1.bf16.msra.mxu0 0
        %1971 = vmatprep.subr.bf16.mxu0 0
        %1972 = vmatpush1.bf16.msra.mxu0 0
        %1973 = vmatprep.subr.bf16.mxu0 0
        %1974 = vmatpush1.bf16.msra.mxu0 0
        %1975 = vmatprep.mubr.bf16.mxu0 0
        %1976 = vmatmul.mubr.bf16.gmra.mrb[0].mxu0 %v1941
        %v1977 = vpop.f32.mrb[0].mxu0
        %v1978 = vadd.f32 0.0, %v1977
        %v1979 = vpop.f32.mrb[0].mxu0
        %v1980 = vadd.f32 0.0, %v1979
        %v1981 = vpop.f32.mrb[0].mxu0
        %v1982 = vadd.f32 0.0, %v1981
        %v1983 = vpop.f32.mrb[0].mxu0
        %v1984 = vadd.f32 0.0, %v1983
        %1985 = vdwg.mxu0
        %1986 = vmatprep.subr.bf16.mxu0 0
        %1987 = vmatpush1.bf16.msra.mxu0 %v1935
        %1988 = vmatprep.subr.bf16.mxu0 0
        %1989 = vmatpush1.bf16.msra.mxu0 0
        %1990 = vmatprep.subr.bf16.mxu0 0
        %1991 = vmatpush1.bf16.msra.mxu0 0
        %1992 = vmatprep.subr.bf16.mxu0 0
        %1993 = vmatpush1.bf16.msra.mxu0 0
        %1994 = vmatprep.subr.bf16.mxu0 0
        %1995 = vmatpush1.bf16.msra.mxu0 0
        %1996 = vmatprep.subr.bf16.mxu0 0
        %1997 = vmatpush1.bf16.msra.mxu0 0
        %1998 = vmatprep.subr.bf16.mxu0 0
        %1999 = vmatpush1.bf16.msra.mxu0 0
        %2000 = vmatprep.subr.bf16.mxu0 0
        %2001 = vmatpush1.bf16.msra.mxu0 0
        %2002 = vmatprep.subr.bf16.mxu0 0
        %2003 = vmatpush1.bf16.msra.mxu0 0
        %2004 = vmatprep.subr.bf16.mxu0 0
        %2005 = vmatpush1.bf16.msra.mxu0 0
        %2006 = vmatprep.subr.bf16.mxu0 0
        %2007 = vmatpush1.bf16.msra.mxu0 0
        %2008 = vmatprep.subr.bf16.mxu0 0
        %2009 = vmatpush1.bf16.msra.mxu0 0
        %2010 = vmatprep.subr.bf16.mxu0 0
        %2011 = vmatpush1.bf16.msra.mxu0 0
        %2012 = vmatprep.subr.bf16.mxu0 0
        %2013 = vmatpush1.bf16.msra.mxu0 0
        %2014 = vmatprep.subr.bf16.mxu0 0
        %2015 = vmatpush1.bf16.msra.mxu0 0
        %2016 = vmatprep.subr.bf16.mxu0 0
        %2017 = vmatpush1.bf16.msra.mxu0 0
        %2018 = vmatprep.mubr.bf16.mxu0 0
        %2019 = vmatmul.mubr.bf16.gmra.mrb[0].mxu0 %v1941
        %v2020 = vpop.f32.mrb[0].mxu0
        %v2021 = vadd.f32 0.0, %v2020
        %v2022 = vpop.f32.mrb[0].mxu0
        %v2023 = vpop.f32.mrb[0].mxu0
        %v2024 = vadd.f32 0.0, %v2023
        %v2025 = vpop.f32.mrb[0].mxu0
        %2026 = vdwg.mxu0
        %v2029 = vunpack.c.l.b16 %v1892
        %v2030 = vunpack.c.l.b16 %v1893
        %v2031 = vpack.c.b16 %v2030, %v2029
        %2036 = vrot.lane.b32.xlu0 %v1894, 21
        %v2037 = vpop.permute.xlu0 %2036
        %2038 = vrot.lane.b32.xlu0 %v1895, 21
        %v2039 = vpop.permute.xlu0 %2038
        %2040 = vrot.lane.b32.xlu0 %v1896, 21
        %v2041 = vpop.permute.xlu0 %2040
        %2042 = vrot.lane.b32.xlu0 %v1897, 21
        %v2043 = vpop.permute.xlu0 %2042
        %v2044 = vsel %vm848, %v2037, %v2039
        %v2045 = vsel %vm848, %v2039, %v2041
        %v2046 = vsel %vm848, %v2041, %v2043
        %v2051 = vsel %vm1939, %v2031, 0
        %2053 = vmatprep.subr.bf16.mxu0 %v2045
        %2054 = vmatpush1.bf16.msra.mxu0 %v2044
        %2055 = vmatprep.subr.bf16.mxu0 0
        %2056 = vmatpush1.bf16.msra.mxu0 0
        %2057 = vmatprep.subr.bf16.mxu0 0
        %2058 = vmatpush1.bf16.msra.mxu0 0
        %2059 = vmatprep.subr.bf16.mxu0 0
        %2060 = vmatpush1.bf16.msra.mxu0 0
        %2061 = vmatprep.subr.bf16.mxu0 0
        %2062 = vmatpush1.bf16.msra.mxu0 0
        %2063 = vmatprep.subr.bf16.mxu0 0
        %2064 = vmatpush1.bf16.msra.mxu0 0
        %2065 = vmatprep.subr.bf16.mxu0 0
        %2066 = vmatpush1.bf16.msra.mxu0 0
        %2067 = vmatprep.subr.bf16.mxu0 0
        %2068 = vmatpush1.bf16.msra.mxu0 0
        %2069 = vmatprep.subr.bf16.mxu0 0
        %2070 = vmatpush1.bf16.msra.mxu0 0
        %2071 = vmatprep.subr.bf16.mxu0 0
        %2072 = vmatpush1.bf16.msra.mxu0 0
        %2073 = vmatprep.subr.bf16.mxu0 0
        %2074 = vmatpush1.bf16.msra.mxu0 0
        %2075 = vmatprep.subr.bf16.mxu0 0
        %2076 = vmatpush1.bf16.msra.mxu0 0
        %2077 = vmatprep.subr.bf16.mxu0 0
        %2078 = vmatpush1.bf16.msra.mxu0 0
        %2079 = vmatprep.subr.bf16.mxu0 0
        %2080 = vmatpush1.bf16.msra.mxu0 0
        %2081 = vmatprep.subr.bf16.mxu0 0
        %2082 = vmatpush1.bf16.msra.mxu0 0
        %2083 = vmatprep.subr.bf16.mxu0 0
        %2084 = vmatpush1.bf16.msra.mxu0 0
        %2085 = vmatprep.mubr.bf16.mxu0 0
        %2086 = vmatmul.mubr.bf16.gmra.mrb[0].mxu0 %v2051
        %v2087 = vpop.f32.mrb[0].mxu0
        %v2088 = vadd.f32 %v1978, %v2087
        %v2089 = vpop.f32.mrb[0].mxu0
        %v2090 = vadd.f32 %v1980, %v2089
        %v2091 = vpop.f32.mrb[0].mxu0
        %v2092 = vadd.f32 %v1982, %v2091
        %v2093 = vpop.f32.mrb[0].mxu0
        %v2094 = vadd.f32 %v1984, %v2093
        %2095 = vdwg.mxu0
        %2096 = vmatprep.subr.bf16.mxu0 0
        %2097 = vmatpush1.bf16.msra.mxu0 %v2046
        %2098 = vmatprep.subr.bf16.mxu0 0
        %2099 = vmatpush1.bf16.msra.mxu0 0
        %2100 = vmatprep.subr.bf16.mxu0 0
        %2101 = vmatpush1.bf16.msra.mxu0 0
        %2102 = vmatprep.subr.bf16.mxu0 0
        %2103 = vmatpush1.bf16.msra.mxu0 0
        %2104 = vmatprep.subr.bf16.mxu0 0
        %2105 = vmatpush1.bf16.msra.mxu0 0
        %2106 = vmatprep.subr.bf16.mxu0 0
        %2107 = vmatpush1.bf16.msra.mxu0 0
        %2108 = vmatprep.subr.bf16.mxu0 0
        %2109 = vmatpush1.bf16.msra.mxu0 0
        %2110 = vmatprep.subr.bf16.mxu0 0
        %2111 = vmatpush1.bf16.msra.mxu0 0
        %2112 = vmatprep.subr.bf16.mxu0 0
        %2113 = vmatpush1.bf16.msra.mxu0 0
        %2114 = vmatprep.subr.bf16.mxu0 0
        %2115 = vmatpush1.bf16.msra.mxu0 0
        %2116 = vmatprep.subr.bf16.mxu0 0
        %2117 = vmatpush1.bf16.msra.mxu0 0
        %2118 = vmatprep.subr.bf16.mxu0 0
        %2119 = vmatpush1.bf16.msra.mxu0 0
        %2120 = vmatprep.subr.bf16.mxu0 0
        %2121 = vmatpush1.bf16.msra.mxu0 0
        %2122 = vmatprep.subr.bf16.mxu0 0
        %2123 = vmatpush1.bf16.msra.mxu0 0
        %2124 = vmatprep.subr.bf16.mxu0 0
        %2125 = vmatpush1.bf16.msra.mxu0 0
        %2126 = vmatprep.subr.bf16.mxu0 0
        %2127 = vmatpush1.bf16.msra.mxu0 0
        %2128 = vmatprep.mubr.bf16.mxu0 0
        %2129 = vmatmul.mubr.bf16.gmra.mrb[0].mxu0 %v2051
        %v2130 = vpop.f32.mrb[0].mxu0
        %v2131 = vadd.f32 %v2021, %v2130
        %v2132 = vpop.f32.mrb[0].mxu0
        %v2133 = vpop.f32.mrb[0].mxu0
        %v2134 = vadd.f32 %v2024, %v2133
        %v2135 = vpop.f32.mrb[0].mxu0
        %2136 = vdwg.mxu0
        %s2137 = scalar_lea.vmem [#allocation14], 8
        %v2138 = vld [vmem:[%s2137] sm:$0xf]
        %v2139 = vld [vmem:[%s2137 + $0x4] sm:$0xf]
        %v2142 = vunpack.c.l.b16 %v2138
        %v2143 = vunpack.c.l.b16 %v2139
        %v2144 = vpack.c.b16 %v2143, %v2142
        %2145 = vrot.lane.b32.xlu0 %v1894, 20
        %v2146 = vpop.permute.xlu0 %2145
        %2147 = vrot.lane.b32.xlu0 %v1895, 20
        %v2148 = vpop.permute.xlu0 %2147
        %2149 = vrot.lane.b32.xlu0 %v1896, 20
        %v2150 = vpop.permute.xlu0 %2149
        %2151 = vrot.lane.b32.xlu0 %v1897, 20
        %v2152 = vpop.permute.xlu0 %2151
        %v2153 = vsel %vm726, %v2146, %v2148
        %v2154 = vsel %vm726, %v2148, %v2150
        %v2155 = vsel %vm726, %v2150, %v2152
        %v2160 = vsel %vm1939, %v2144, 0
        %2162 = vmatprep.subr.bf16.mxu0 %v2154
        %2163 = vmatpush1.bf16.msra.mxu0 %v2153
        %2164 = vmatprep.subr.bf16.mxu0 0
        %2165 = vmatpush1.bf16.msra.mxu0 0
        %2166 = vmatprep.subr.bf16.mxu0 0
        %2167 = vmatpush1.bf16.msra.mxu0 0
        %2168 = vmatprep.subr.bf16.mxu0 0
        %2169 = vmatpush1.bf16.msra.mxu0 0
        %2170 = vmatprep.subr.bf16.mxu0 0
        %2171 = vmatpush1.bf16.msra.mxu0 0
        %2172 = vmatprep.subr.bf16.mxu0 0
        %2173 = vmatpush1.bf16.msra.mxu0 0
        %2174 = vmatprep.subr.bf16.mxu0 0
        %2175 = vmatpush1.bf16.msra.mxu0 0
        %2176 = vmatprep.subr.bf16.mxu0 0
        %2177 = vmatpush1.bf16.msra.mxu0 0
        %2178 = vmatprep.subr.bf16.mxu0 0
        %2179 = vmatpush1.bf16.msra.mxu0 0
        %2180 = vmatprep.subr.bf16.mxu0 0
        %2181 = vmatpush1.bf16.msra.mxu0 0
        %2182 = vmatprep.subr.bf16.mxu0 0
        %2183 = vmatpush1.bf16.msra.mxu0 0
        %2184 = vmatprep.subr.bf16.mxu0 0
        %2185 = vmatpush1.bf16.msra.mxu0 0
        %2186 = vmatprep.subr.bf16.mxu0 0
        %2187 = vmatpush1.bf16.msra.mxu0 0
        %2188 = vmatprep.subr.bf16.mxu0 0
        %2189 = vmatpush1.bf16.msra.mxu0 0
        %2190 = vmatprep.subr.bf16.mxu0 0
        %2191 = vmatpush1.bf16.msra.mxu0 0
        %2192 = vmatprep.subr.bf16.mxu0 0
        %2193 = vmatpush1.bf16.msra.mxu0 0
        %2194 = vmatprep.mubr.bf16.mxu0 0
        %2195 = vmatmul.mubr.bf16.gmra.mrb[0].mxu0 %v2160
        %v2196 = vpop.f32.mrb[0].mxu0
        %v2197 = vadd.f32 0.0, %v2196
        %v2198 = vpop.f32.mrb[0].mxu0
        %v2199 = vadd.f32 0.0, %v2198
        %v2200 = vpop.f32.mrb[0].mxu0
        %v2201 = vadd.f32 0.0, %v2200
        %v2202 = vpop.f32.mrb[0].mxu0
        %v2203 = vadd.f32 0.0, %v2202
        %2204 = vdwg.mxu0
        %2205 = vmatprep.subr.bf16.mxu0 0
        %2206 = vmatpush1.bf16.msra.mxu0 %v2155
        %2207 = vmatprep.subr.bf16.mxu0 0
        %2208 = vmatpush1.bf16.msra.mxu0 0
        %2209 = vmatprep.subr.bf16.mxu0 0
        %2210 = vmatpush1.bf16.msra.mxu0 0
        %2211 = vmatprep.subr.bf16.mxu0 0
        %2212 = vmatpush1.bf16.msra.mxu0 0
        %2213 = vmatprep.subr.bf16.mxu0 0
        %2214 = vmatpush1.bf16.msra.mxu0 0
        %2215 = vmatprep.subr.bf16.mxu0 0
        %2216 = vmatpush1.bf16.msra.mxu0 0
        %2217 = vmatprep.subr.bf16.mxu0 0
        %2218 = vmatpush1.bf16.msra.mxu0 0
        %2219 = vmatprep.subr.bf16.mxu0 0
        %2220 = vmatpush1.bf16.msra.mxu0 0
        %2221 = vmatprep.subr.bf16.mxu0 0
        %2222 = vmatpush1.bf16.msra.mxu0 0
        %2223 = vmatprep.subr.bf16.mxu0 0
        %2224 = vmatpush1.bf16.msra.mxu0 0
        %2225 = vmatprep.subr.bf16.mxu0 0
        %2226 = vmatpush1.bf16.msra.mxu0 0
        %2227 = vmatprep.subr.bf16.mxu0 0
        %2228 = vmatpush1.bf16.msra.mxu0 0
        %2229 = vmatprep.subr.bf16.mxu0 0
        %2230 = vmatpush1.bf16.msra.mxu0 0
        %2231 = vmatprep.subr.bf16.mxu0 0
        %2232 = vmatpush1.bf16.msra.mxu0 0
        %2233 = vmatprep.subr.bf16.mxu0 0
        %2234 = vmatpush1.bf16.msra.mxu0 0
        %2235 = vmatprep.subr.bf16.mxu0 0
        %2236 = vmatpush1.bf16.msra.mxu0 0
        %2237 = vmatprep.mubr.bf16.mxu0 0
        %2238 = vmatmul.mubr.bf16.gmra.mrb[0].mxu0 %v2160
        %v2239 = vpop.f32.mrb[0].mxu0
        %v2240 = vadd.f32 0.0, %v2239
        %v2241 = vpop.f32.mrb[0].mxu0
        %v2242 = vpop.f32.mrb[0].mxu0
        %v2243 = vadd.f32 0.0, %v2242
        %v2244 = vpop.f32.mrb[0].mxu0
        %2245 = vdwg.mxu0
        %v2246 = vadd.f32 %v2088, %v2197
        %v2247 = vadd.f32 %v2090, %v2199
        %v2248 = vadd.f32 %v2131, %v2240
        %v2249 = vadd.f32 %v2092, %v2201
        %v2250 = vadd.f32 %v2094, %v2203
        %v2251 = vadd.f32 %v2134, %v2243
        %s2252 = scalar_lea.vmem [#allocation15], 8
        %v2253 = vld [vmem:[%s2252] sm:$0xf]
        %v2254 = vld [vmem:[%s2252 + $0x4] sm:$0xf]
        %v2257 = vunpack.c.l.b16 %v2253
        %v2258 = vunpack.c.l.b16 %v2254
        %v2259 = vpack.c.b16 %v2258, %v2257
        %2260 = vrot.lane.b32.xlu0 %v1921, 20
        %v2261 = vpop.permute.xlu0 %2260
        %2262 = vrot.lane.b32.xlu0 %v1922, 20
        %v2263 = vpop.permute.xlu0 %2262
        %2264 = vrot.lane.b32.xlu0 %v1923, 20
        %v2265 = vpop.permute.xlu0 %2264
        %2266 = vrot.lane.b32.xlu0 %v1924, 20
        %v2267 = vpop.permute.xlu0 %2266
        %v2268 = vsel %vm726, %v2261, %v2263
        %v2269 = vsel %vm726, %v2263, %v2265
        %v2270 = vsel %vm726, %v2265, %v2267
        %v2275 = vsel %vm1939, %v2259, 0
        %2277 = vmatprep.subr.bf16.mxu0 %v2269
        %2278 = vmatpush1.bf16.msra.mxu0 %v2268
        %2279 = vmatprep.subr.bf16.mxu0 0
        %2280 = vmatpush1.bf16.msra.mxu0 0
        %2281 = vmatprep.subr.bf16.mxu0 0
        %2282 = vmatpush1.bf16.msra.mxu0 0
        %2283 = vmatprep.subr.bf16.mxu0 0
        %2284 = vmatpush1.bf16.msra.mxu0 0
        %2285 = vmatprep.subr.bf16.mxu0 0
        %2286 = vmatpush1.bf16.msra.mxu0 0
        %2287 = vmatprep.subr.bf16.mxu0 0
        %2288 = vmatpush1.bf16.msra.mxu0 0
        %2289 = vmatprep.subr.bf16.mxu0 0
        %2290 = vmatpush1.bf16.msra.mxu0 0
        %2291 = vmatprep.subr.bf16.mxu0 0
        %2292 = vmatpush1.bf16.msra.mxu0 0
        %2293 = vmatprep.subr.bf16.mxu0 0
        %2294 = vmatpush1.bf16.msra.mxu0 0
        %2295 = vmatprep.subr.bf16.mxu0 0
        %2296 = vmatpush1.bf16.msra.mxu0 0
        %2297 = vmatprep.subr.bf16.mxu0 0
        %2298 = vmatpush1.bf16.msra.mxu0 0
        %2299 = vmatprep.subr.bf16.mxu0 0
        %2300 = vmatpush1.bf16.msra.mxu0 0
        %2301 = vmatprep.subr.bf16.mxu0 0
        %2302 = vmatpush1.bf16.msra.mxu0 0
        %2303 = vmatprep.subr.bf16.mxu0 0
        %2304 = vmatpush1.bf16.msra.mxu0 0
        %2305 = vmatprep.subr.bf16.mxu0 0
        %2306 = vmatpush1.bf16.msra.mxu0 0
        %2307 = vmatprep.subr.bf16.mxu0 0
        %2308 = vmatpush1.bf16.msra.mxu0 0
        %2309 = vmatprep.mubr.bf16.mxu0 0
        %2310 = vmatmul.mubr.bf16.gmra.mrb[0].mxu0 %v2275
        %v2311 = vpop.f32.mrb[0].mxu0
        %v2312 = vadd.f32 0.0, %v2311
        %v2313 = vpop.f32.mrb[0].mxu0
        %v2314 = vadd.f32 0.0, %v2313
        %v2315 = vpop.f32.mrb[0].mxu0
        %v2316 = vadd.f32 0.0, %v2315
        %v2317 = vpop.f32.mrb[0].mxu0
        %v2318 = vadd.f32 0.0, %v2317
        %2319 = vdwg.mxu0
        %2320 = vmatprep.subr.bf16.mxu0 0
        %2321 = vmatpush1.bf16.msra.mxu0 %v2270
        %2322 = vmatprep.subr.bf16.mxu0 0
        %2323 = vmatpush1.bf16.msra.mxu0 0
        %2324 = vmatprep.subr.bf16.mxu0 0
        %2325 = vmatpush1.bf16.msra.mxu0 0
        %2326 = vmatprep.subr.bf16.mxu0 0
        %2327 = vmatpush1.bf16.msra.mxu0 0
        %2328 = vmatprep.subr.bf16.mxu0 0
        %2329 = vmatpush1.bf16.msra.mxu0 0
        %2330 = vmatprep.subr.bf16.mxu0 0
        %2331 = vmatpush1.bf16.msra.mxu0 0
        %2332 = vmatprep.subr.bf16.mxu0 0
        %2333 = vmatpush1.bf16.msra.mxu0 0
        %2334 = vmatprep.subr.bf16.mxu0 0
        %2335 = vmatpush1.bf16.msra.mxu0 0
        %2336 = vmatprep.subr.bf16.mxu0 0
        %2337 = vmatpush1.bf16.msra.mxu0 0
        %2338 = vmatprep.subr.bf16.mxu0 0
        %2339 = vmatpush1.bf16.msra.mxu0 0
        %2340 = vmatprep.subr.bf16.mxu0 0
        %2341 = vmatpush1.bf16.msra.mxu0 0
        %2342 = vmatprep.subr.bf16.mxu0 0
        %2343 = vmatpush1.bf16.msra.mxu0 0
        %2344 = vmatprep.subr.bf16.mxu0 0
        %2345 = vmatpush1.bf16.msra.mxu0 0
        %2346 = vmatprep.subr.bf16.mxu0 0
        %2347 = vmatpush1.bf16.msra.mxu0 0
        %2348 = vmatprep.subr.bf16.mxu0 0
        %2349 = vmatpush1.bf16.msra.mxu0 0
        %2350 = vmatprep.subr.bf16.mxu0 0
        %2351 = vmatpush1.bf16.msra.mxu0 0
        %2352 = vmatprep.mubr.bf16.mxu0 0
        %2353 = vmatmul.mubr.bf16.gmra.mrb[0].mxu0 %v2275
        %v2354 = vpop.f32.mrb[0].mxu0
        %v2355 = vadd.f32 0.0, %v2354
        %v2356 = vpop.f32.mrb[0].mxu0
        %v2357 = vpop.f32.mrb[0].mxu0
        %v2358 = vadd.f32 0.0, %v2357
        %v2359 = vpop.f32.mrb[0].mxu0
        %2360 = vdwg.mxu0
        %v2361 = vadd.f32 %v2246, %v2312
        %v2362 = vadd.f32 %v2247, %v2314
        %v2363 = vadd.f32 %v2248, %v2355
        %v2364 = vadd.f32 %v2249, %v2316
        %v2365 = vadd.f32 %v2250, %v2318
        %v2366 = vadd.f32 %v2251, %v2358
        %s2367 = scalar_lea.vmem [#allocation14], 16
        %v2368 = vld [vmem:[%s2367] sm:$0xf]
        %v2369 = vld [vmem:[%s2367 + $0x4] sm:$0xf]
        %v2372 = vunpack.c.l.b16 %v2368
        %v2373 = vunpack.c.l.b16 %v2369
        %v2374 = vpack.c.b16 %v2373, %v2372
        %2375 = vrot.lane.b32.xlu0 %v1894, 19
        %v2376 = vpop.permute.xlu0 %2375
        %2377 = vrot.lane.b32.xlu0 %v1895, 19
        %v2378 = vpop.permute.xlu0 %2377
        %2379 = vrot.lane.b32.xlu0 %v1896, 19
        %v2380 = vpop.permute.xlu0 %2379
        %2381 = vrot.lane.b32.xlu0 %v1897, 19
        %v2382 = vpop.permute.xlu0 %2381
        %v2383 = vsel %vm972, %v2376, %v2378
        %v2384 = vsel %vm972, %v2378, %v2380
        %v2385 = vsel %vm972, %v2380, %v2382
        %v2390 = vsel %vm1939, %v2374, 0
        %2392 = vmatprep.subr.bf16.mxu0 %v2384
        %2393 = vmatpush1.bf16.msra.mxu0 %v2383
        %2394 = vmatprep.subr.bf16.mxu0 0
        %2395 = vmatpush1.bf16.msra.mxu0 0
        %2396 = vmatprep.subr.bf16.mxu0 0
        %2397 = vmatpush1.bf16.msra.mxu0 0
        %2398 = vmatprep.subr.bf16.mxu0 0
        %2399 = vmatpush1.bf16.msra.mxu0 0
        %2400 = vmatprep.subr.bf16.mxu0 0
        %2401 = vmatpush1.bf16.msra.mxu0 0
        %2402 = vmatprep.subr.bf16.mxu0 0
        %2403 = vmatpush1.bf16.msra.mxu0 0
        %2404 = vmatprep.subr.bf16.mxu0 0
        %2405 = vmatpush1.bf16.msra.mxu0 0
        %2406 = vmatprep.subr.bf16.mxu0 0
        %2407 = vmatpush1.bf16.msra.mxu0 0
        %2408 = vmatprep.subr.bf16.mxu0 0
        %2409 = vmatpush1.bf16.msra.mxu0 0
        %2410 = vmatprep.subr.bf16.mxu0 0
        %2411 = vmatpush1.bf16.msra.mxu0 0
        %2412 = vmatprep.subr.bf16.mxu0 0
        %2413 = vmatpush1.bf16.msra.mxu0 0
        %2414 = vmatprep.subr.bf16.mxu0 0
        %2415 = vmatpush1.bf16.msra.mxu0 0
        %2416 = vmatprep.subr.bf16.mxu0 0
        %2417 = vmatpush1.bf16.msra.mxu0 0
        %2418 = vmatprep.subr.bf16.mxu0 0
        %2419 = vmatpush1.bf16.msra.mxu0 0
        %2420 = vmatprep.subr.bf16.mxu0 0
        %2421 = vmatpush1.bf16.msra.mxu0 0
        %2422 = vmatprep.subr.bf16.mxu0 0
        %2423 = vmatpush1.bf16.msra.mxu0 0
        %2424 = vmatprep.mubr.bf16.mxu0 0
        %2425 = vmatmul.mubr.bf16.gmra.mrb[0].mxu0 %v2390
        %v2426 = vpop.f32.mrb[0].mxu0
        %v2427 = vadd.f32 0.0, %v2426
        %v2428 = vpop.f32.mrb[0].mxu0
        %v2429 = vadd.f32 0.0, %v2428
        %v2430 = vpop.f32.mrb[0].mxu0
        %v2431 = vadd.f32 0.0, %v2430
        %v2432 = vpop.f32.mrb[0].mxu0
        %v2433 = vadd.f32 0.0, %v2432
        %2434 = vdwg.mxu0
        %2435 = vmatprep.subr.bf16.mxu0 0
        %2436 = vmatpush1.bf16.msra.mxu0 %v2385
        %2437 = vmatprep.subr.bf16.mxu0 0
        %2438 = vmatpush1.bf16.msra.mxu0 0
        %2439 = vmatprep.subr.bf16.mxu0 0
        %2440 = vmatpush1.bf16.msra.mxu0 0
        %2441 = vmatprep.subr.bf16.mxu0 0
        %2442 = vmatpush1.bf16.msra.mxu0 0
        %2443 = vmatprep.subr.bf16.mxu0 0
        %2444 = vmatpush1.bf16.msra.mxu0 0
        %2445 = vmatprep.subr.bf16.mxu0 0
        %2446 = vmatpush1.bf16.msra.mxu0 0
        %2447 = vmatprep.subr.bf16.mxu0 0
        %2448 = vmatpush1.bf16.msra.mxu0 0
        %2449 = vmatprep.subr.bf16.mxu0 0
        %2450 = vmatpush1.bf16.msra.mxu0 0
        %2451 = vmatprep.subr.bf16.mxu0 0
        %2452 = vmatpush1.bf16.msra.mxu0 0
        %2453 = vmatprep.subr.bf16.mxu0 0
        %2454 = vmatpush1.bf16.msra.mxu0 0
        %2455 = vmatprep.subr.bf16.mxu0 0
        %2456 = vmatpush1.bf16.msra.mxu0 0
        %2457 = vmatprep.subr.bf16.mxu0 0
        %2458 = vmatpush1.bf16.msra.mxu0 0
        %2459 = vmatprep.subr.bf16.mxu0 0
        %2460 = vmatpush1.bf16.msra.mxu0 0
        %2461 = vmatprep.subr.bf16.mxu0 0
        %2462 = vmatpush1.bf16.msra.mxu0 0
        %2463 = vmatprep.subr.bf16.mxu0 0
        %2464 = vmatpush1.bf16.msra.mxu0 0
        %2465 = vmatprep.subr.bf16.mxu0 0
        %2466 = vmatpush1.bf16.msra.mxu0 0
        %2467 = vmatprep.mubr.bf16.mxu0 0
        %2468 = vmatmul.mubr.bf16.gmra.mrb[0].mxu0 %v2390
        %v2469 = vpop.f32.mrb[0].mxu0
        %v2470 = vadd.f32 0.0, %v2469
        %v2471 = vpop.f32.mrb[0].mxu0
        %v2472 = vpop.f32.mrb[0].mxu0
        %v2473 = vadd.f32 0.0, %v2472
        %v2474 = vpop.f32.mrb[0].mxu0
        %2475 = vdwg.mxu0
        %v2476 = vadd.f32 %v2361, %v2427
        %v2477 = vadd.f32 %v2362, %v2429
        %v2478 = vadd.f32 %v2363, %v2470
        %v2479 = vadd.f32 %v2364, %v2431
        %v2480 = vadd.f32 %v2365, %v2433
        %v2481 = vadd.f32 %v2366, %v2473
        %s2482 = scalar_lea.vmem [#allocation15], 16
        %v2483 = vld [vmem:[%s2482] sm:$0xf]
        %v2484 = vld [vmem:[%s2482 + $0x4] sm:$0xf]
        %v2487 = vunpack.c.l.b16 %v2483
        %v2488 = vunpack.c.l.b16 %v2484
        %v2489 = vpack.c.b16 %v2488, %v2487
        %2490 = vrot.lane.b32.xlu0 %v1921, 19
        %v2491 = vpop.permute.xlu0 %2490
        %2492 = vrot.lane.b32.xlu0 %v1922, 19
        %v2493 = vpop.permute.xlu0 %2492
        %2494 = vrot.lane.b32.xlu0 %v1923, 19
        %v2495 = vpop.permute.xlu0 %2494
        %2496 = vrot.lane.b32.xlu0 %v1924, 19
        %v2497 = vpop.permute.xlu0 %2496
        %v2498 = vsel %vm972, %v2491, %v2493
        %v2499 = vsel %vm972, %v2493, %v2495
        %v2500 = vsel %vm972, %v2495, %v2497
        %v2505 = vsel %vm1939, %v2489, 0
        %2507 = vmatprep.subr.bf16.mxu0 %v2499
        %2508 = vmatpush1.bf16.msra.mxu0 %v2498
        %2509 = vmatprep.subr.bf16.mxu0 0
        %2510 = vmatpush1.bf16.msra.mxu0 0
        %2511 = vmatprep.subr.bf16.mxu0 0
        %2512 = vmatpush1.bf16.msra.mxu0 0
        %2513 = vmatprep.subr.bf16.mxu0 0
        %2514 = vmatpush1.bf16.msra.mxu0 0
        %2515 = vmatprep.subr.bf16.mxu0 0
        %2516 = vmatpush1.bf16.msra.mxu0 0
        %2517 = vmatprep.subr.bf16.mxu0 0
        %2518 = vmatpush1.bf16.msra.mxu0 0
        %2519 = vmatprep.subr.bf16.mxu0 0
        %2520 = vmatpush1.bf16.msra.mxu0 0
        %2521 = vmatprep.subr.bf16.mxu0 0
        %2522 = vmatpush1.bf16.msra.mxu0 0
        %2523 = vmatprep.subr.bf16.mxu0 0
        %2524 = vmatpush1.bf16.msra.mxu0 0
        %2525 = vmatprep.subr.bf16.mxu0 0
        %2526 = vmatpush1.bf16.msra.mxu0 0
        %2527 = vmatprep.subr.bf16.mxu0 0
        %2528 = vmatpush1.bf16.msra.mxu0 0
        %2529 = vmatprep.subr.bf16.mxu0 0
        %2530 = vmatpush1.bf16.msra.mxu0 0
        %2531 = vmatprep.subr.bf16.mxu0 0
        %2532 = vmatpush1.bf16.msra.mxu0 0
        %2533 = vmatprep.subr.bf16.mxu0 0
        %2534 = vmatpush1.bf16.msra.mxu0 0
        %2535 = vmatprep.subr.bf16.mxu0 0
        %2536 = vmatpush1.bf16.msra.mxu0 0
        %2537 = vmatprep.subr.bf16.mxu0 0
        %2538 = vmatpush1.bf16.msra.mxu0 0
        %2539 = vmatprep.mubr.bf16.mxu0 0
        %2540 = vmatmul.mubr.bf16.gmra.mrb[0].mxu0 %v2505
        %v2541 = vpop.f32.mrb[0].mxu0
        %v2542 = vadd.f32 0.0, %v2541
        %v2543 = vpop.f32.mrb[0].mxu0
        %v2544 = vadd.f32 0.0, %v2543
        %v2545 = vpop.f32.mrb[0].mxu0
        %v2546 = vadd.f32 0.0, %v2545
        %v2547 = vpop.f32.mrb[0].mxu0
        %v2548 = vadd.f32 0.0, %v2547
        %2549 = vdwg.mxu0
        %2550 = vmatprep.subr.bf16.mxu0 0
        %2551 = vmatpush1.bf16.msra.mxu0 %v2500
        %2552 = vmatprep.subr.bf16.mxu0 0
        %2553 = vmatpush1.bf16.msra.mxu0 0
        %2554 = vmatprep.subr.bf16.mxu0 0
        %2555 = vmatpush1.bf16.msra.mxu0 0
        %2556 = vmatprep.subr.bf16.mxu0 0
        %2557 = vmatpush1.bf16.msra.mxu0 0
        %2558 = vmatprep.subr.bf16.mxu0 0
        %2559 = vmatpush1.bf16.msra.mxu0 0
        %2560 = vmatprep.subr.bf16.mxu0 0
        %2561 = vmatpush1.bf16.msra.mxu0 0
        %2562 = vmatprep.subr.bf16.mxu0 0
        %2563 = vmatpush1.bf16.msra.mxu0 0
        %2564 = vmatprep.subr.bf16.mxu0 0
        %2565 = vmatpush1.bf16.msra.mxu0 0
        %2566 = vmatprep.subr.bf16.mxu0 0
        %2567 = vmatpush1.bf16.msra.mxu0 0
        %2568 = vmatprep.subr.bf16.mxu0 0
        %2569 = vmatpush1.bf16.msra.mxu0 0
        %2570 = vmatprep.subr.bf16.mxu0 0
        %2571 = vmatpush1.bf16.msra.mxu0 0
        %2572 = vmatprep.subr.bf16.mxu0 0
        %2573 = vmatpush1.bf16.msra.mxu0 0
        %2574 = vmatprep.subr.bf16.mxu0 0
        %2575 = vmatpush1.bf16.msra.mxu0 0
        %2576 = vmatprep.subr.bf16.mxu0 0
        %2577 = vmatpush1.bf16.msra.mxu0 0
        %2578 = vmatprep.subr.bf16.mxu0 0
        %2579 = vmatpush1.bf16.msra.mxu0 0
        %2580 = vmatprep.subr.bf16.mxu0 0
        %2581 = vmatpush1.bf16.msra.mxu0 0
        %2582 = vmatprep.mubr.bf16.mxu0 0
        %2583 = vmatmul.mubr.bf16.gmra.mrb[0].mxu0 %v2505
        %v2584 = vpop.f32.mrb[0].mxu0
        %v2585 = vadd.f32 0.0, %v2584
        %v2586 = vpop.f32.mrb[0].mxu0
        %v2587 = vpop.f32.mrb[0].mxu0
        %v2588 = vadd.f32 0.0, %v2587
        %v2589 = vpop.f32.mrb[0].mxu0
        %2590 = vdwg.mxu0
        %v2591 = vadd.f32 %v2476, %v2542
        %v2592 = vadd.f32 %v2477, %v2544
        %v2593 = vadd.f32 %v2478, %v2585
        %v2594 = vadd.f32 %v2479, %v2546
        %v2595 = vadd.f32 %v2480, %v2548
        %v2596 = vadd.f32 %v2481, %v2588
        %s2597 = scalar_lea.vmem [#allocation14], 24
        %v2598 = vld [vmem:[%s2597] sm:$0xf]
        %v2599 = vld [vmem:[%s2597 + $0x4] sm:$0xf]
        %v2602 = vunpack.c.l.b16 %v2598
        %v2603 = vunpack.c.l.b16 %v2599
        %v2604 = vpack.c.b16 %v2603, %v2602
        %2605 = vrot.lane.b32.xlu0 %v1894, 1
        %v2606 = vpop.permute.xlu0 %2605
        %2607 = vrot.lane.b32.xlu0 %v1895, 1
        %v2608 = vpop.permute.xlu0 %2607
        %2609 = vrot.lane.b32.xlu0 %v1896, 1
        %v2610 = vpop.permute.xlu0 %2609
        %2611 = vrot.lane.b32.xlu0 %v1897, 1
        %v2612 = vpop.permute.xlu0 %2611
        %v2613 = vsel %vm1102, %v2606, %v2608
        %v2614 = vsel %vm1102, %v2608, %v2610
        %v2615 = vsel %vm1102, %v2610, %v2612
        %v2620 = vsel %vm1939, %v2604, 0
        %2622 = vmatprep.subr.bf16.mxu0 %v2614
        %2623 = vmatpush1.bf16.msra.mxu0 %v2613
        %2624 = vmatprep.subr.bf16.mxu0 0
        %2625 = vmatpush1.bf16.msra.mxu0 0
        %2626 = vmatprep.subr.bf16.mxu0 0
        %2627 = vmatpush1.bf16.msra.mxu0 0
        %2628 = vmatprep.subr.bf16.mxu0 0
        %2629 = vmatpush1.bf16.msra.mxu0 0
        %2630 = vmatprep.subr.bf16.mxu0 0
        %2631 = vmatpush1.bf16.msra.mxu0 0
        %2632 = vmatprep.subr.bf16.mxu0 0
        %2633 = vmatpush1.bf16.msra.mxu0 0
        %2634 = vmatprep.subr.bf16.mxu0 0
        %2635 = vmatpush1.bf16.msra.mxu0 0
        %2636 = vmatprep.subr.bf16.mxu0 0
        %2637 = vmatpush1.bf16.msra.mxu0 0
        %2638 = vmatprep.subr.bf16.mxu0 0
        %2639 = vmatpush1.bf16.msra.mxu0 0
        %2640 = vmatprep.subr.bf16.mxu0 0
        %2641 = vmatpush1.bf16.msra.mxu0 0
        %2642 = vmatprep.subr.bf16.mxu0 0
        %2643 = vmatpush1.bf16.msra.mxu0 0
        %2644 = vmatprep.subr.bf16.mxu0 0
        %2645 = vmatpush1.bf16.msra.mxu0 0
        %2646 = vmatprep.subr.bf16.mxu0 0
        %2647 = vmatpush1.bf16.msra.mxu0 0
        %2648 = vmatprep.subr.bf16.mxu0 0
        %2649 = vmatpush1.bf16.msra.mxu0 0
        %2650 = vmatprep.subr.bf16.mxu0 0
        %2651 = vmatpush1.bf16.msra.mxu0 0
        %2652 = vmatprep.subr.bf16.mxu0 0
        %2653 = vmatpush1.bf16.msra.mxu0 0
        %2654 = vmatprep.mubr.bf16.mxu0 0
        %2655 = vmatmul.mubr.bf16.gmra.mrb[0].mxu0 %v2620
        %v2656 = vpop.f32.mrb[0].mxu0
        %v2657 = vadd.f32 0.0, %v2656
        %v2658 = vpop.f32.mrb[0].mxu0
        %v2659 = vadd.f32 0.0, %v2658
        %v2660 = vpop.f32.mrb[0].mxu0
        %v2661 = vadd.f32 0.0, %v2660
        %v2662 = vpop.f32.mrb[0].mxu0
        %v2663 = vadd.f32 0.0, %v2662
        %2664 = vdwg.mxu0
        %2665 = vmatprep.subr.bf16.mxu0 0
        %2666 = vmatpush1.bf16.msra.mxu0 %v2615
        %2667 = vmatprep.subr.bf16.mxu0 0
        %2668 = vmatpush1.bf16.msra.mxu0 0
        %2669 = vmatprep.subr.bf16.mxu0 0
        %2670 = vmatpush1.bf16.msra.mxu0 0
        %2671 = vmatprep.subr.bf16.mxu0 0
        %2672 = vmatpush1.bf16.msra.mxu0 0
        %2673 = vmatprep.subr.bf16.mxu0 0
        %2674 = vmatpush1.bf16.msra.mxu0 0
        %2675 = vmatprep.subr.bf16.mxu0 0
        %2676 = vmatpush1.bf16.msra.mxu0 0
        %2677 = vmatprep.subr.bf16.mxu0 0
        %2678 = vmatpush1.bf16.msra.mxu0 0
        %2679 = vmatprep.subr.bf16.mxu0 0
        %2680 = vmatpush1.bf16.msra.mxu0 0
        %2681 = vmatprep.subr.bf16.mxu0 0
        %2682 = vmatpush1.bf16.msra.mxu0 0
        %2683 = vmatprep.subr.bf16.mxu0 0
        %2684 = vmatpush1.bf16.msra.mxu0 0
        %2685 = vmatprep.subr.bf16.mxu0 0
        %2686 = vmatpush1.bf16.msra.mxu0 0
        %2687 = vmatprep.subr.bf16.mxu0 0
        %2688 = vmatpush1.bf16.msra.mxu0 0
        %2689 = vmatprep.subr.bf16.mxu0 0
        %2690 = vmatpush1.bf16.msra.mxu0 0
        %2691 = vmatprep.subr.bf16.mxu0 0
        %2692 = vmatpush1.bf16.msra.mxu0 0
        %2693 = vmatprep.subr.bf16.mxu0 0
        %2694 = vmatpush1.bf16.msra.mxu0 0
        %2695 = vmatprep.subr.bf16.mxu0 0
        %2696 = vmatpush1.bf16.msra.mxu0 0
        %2697 = vmatprep.mubr.bf16.mxu0 0
        %2698 = vmatmul.mubr.bf16.gmra.mrb[0].mxu0 %v2620
        %v2699 = vpop.f32.mrb[0].mxu0
        %v2700 = vadd.f32 0.0, %v2699
        %v2701 = vpop.f32.mrb[0].mxu0
        %v2702 = vpop.f32.mrb[0].mxu0
        %v2703 = vadd.f32 0.0, %v2702
        %v2704 = vpop.f32.mrb[0].mxu0
        %2705 = vdwg.mxu0
        %v2706 = vadd.f32 %v2591, %v2657
        %v2707 = vadd.f32 %v2592, %v2659
        %v2708 = vadd.f32 %v2593, %v2700
        %v2709 = vadd.f32 %v2594, %v2661
        %v2710 = vadd.f32 %v2595, %v2663
        %v2711 = vadd.f32 %v2596, %v2703
        %s2712 = scalar_lea.vmem [#allocation15], 24
        %v2713 = vld [vmem:[%s2712] sm:$0xf]
        %v2714 = vld [vmem:[%s2712 + $0x4] sm:$0xf]
        %v2717 = vunpack.c.l.b16 %v2713
        %v2718 = vunpack.c.l.b16 %v2714
        %v2719 = vpack.c.b16 %v2718, %v2717
        %2720 = vrot.lane.b32.xlu0 %v1921, 1
        %v2721 = vpop.permute.xlu0 %2720
        %2722 = vrot.lane.b32.xlu0 %v1922, 1
        %v2723 = vpop.permute.xlu0 %2722
        %2724 = vrot.lane.b32.xlu0 %v1923, 1
        %v2725 = vpop.permute.xlu0 %2724
        %2726 = vrot.lane.b32.xlu0 %v1924, 1
        %v2727 = vpop.permute.xlu0 %2726
        %v2728 = vsel %vm1102, %v2721, %v2723
        %v2729 = vsel %vm1102, %v2723, %v2725
        %v2730 = vsel %vm1102, %v2725, %v2727
        %v2735 = vsel %vm1939, %v2719, 0
        %2737 = vmatprep.subr.bf16.mxu0 %v2729
        %2738 = vmatpush1.bf16.msra.mxu0 %v2728
        %2739 = vmatprep.subr.bf16.mxu0 0
        %2740 = vmatpush1.bf16.msra.mxu0 0
        %2741 = vmatprep.subr.bf16.mxu0 0
        %2742 = vmatpush1.bf16.msra.mxu0 0
        %2743 = vmatprep.subr.bf16.mxu0 0
        %2744 = vmatpush1.bf16.msra.mxu0 0
        %2745 = vmatprep.subr.bf16.mxu0 0
        %2746 = vmatpush1.bf16.msra.mxu0 0
        %2747 = vmatprep.subr.bf16.mxu0 0
        %2748 = vmatpush1.bf16.msra.mxu0 0
        %2749 = vmatprep.subr.bf16.mxu0 0
        %2750 = vmatpush1.bf16.msra.mxu0 0
        %2751 = vmatprep.subr.bf16.mxu0 0
        %2752 = vmatpush1.bf16.msra.mxu0 0
        %2753 = vmatprep.subr.bf16.mxu0 0
        %2754 = vmatpush1.bf16.msra.mxu0 0
        %2755 = vmatprep.subr.bf16.mxu0 0
        %2756 = vmatpush1.bf16.msra.mxu0 0
        %2757 = vmatprep.subr.bf16.mxu0 0
        %2758 = vmatpush1.bf16.msra.mxu0 0
        %2759 = vmatprep.subr.bf16.mxu0 0
        %2760 = vmatpush1.bf16.msra.mxu0 0
        %2761 = vmatprep.subr.bf16.mxu0 0
        %2762 = vmatpush1.bf16.msra.mxu0 0
        %2763 = vmatprep.subr.bf16.mxu0 0
        %2764 = vmatpush1.bf16.msra.mxu0 0
        %2765 = vmatprep.subr.bf16.mxu0 0
        %2766 = vmatpush1.bf16.msra.mxu0 0
        %2767 = vmatprep.subr.bf16.mxu0 0
        %2768 = vmatpush1.bf16.msra.mxu0 0
        %2769 = vmatprep.mubr.bf16.mxu0 0
        %2770 = vmatmul.mubr.bf16.gmra.mrb[0].mxu0 %v2735
        %v2771 = vpop.f32.mrb[0].mxu0
        %v2772 = vadd.f32 0.0, %v2771
        %v2773 = vpop.f32.mrb[0].mxu0
        %v2774 = vadd.f32 0.0, %v2773
        %v2775 = vpop.f32.mrb[0].mxu0
        %v2776 = vadd.f32 0.0, %v2775
        %v2777 = vpop.f32.mrb[0].mxu0
        %v2778 = vadd.f32 0.0, %v2777
        %2779 = vdwg.mxu0
        %2780 = vmatprep.subr.bf16.mxu0 0
        %2781 = vmatpush1.bf16.msra.mxu0 %v2730
        %2782 = vmatprep.subr.bf16.mxu0 0
        %2783 = vmatpush1.bf16.msra.mxu0 0
        %2784 = vmatprep.subr.bf16.mxu0 0
        %2785 = vmatpush1.bf16.msra.mxu0 0
        %2786 = vmatprep.subr.bf16.mxu0 0
        %2787 = vmatpush1.bf16.msra.mxu0 0
        %2788 = vmatprep.subr.bf16.mxu0 0
        %2789 = vmatpush1.bf16.msra.mxu0 0
        %2790 = vmatprep.subr.bf16.mxu0 0
        %2791 = vmatpush1.bf16.msra.mxu0 0
        %2792 = vmatprep.subr.bf16.mxu0 0
        %2793 = vmatpush1.bf16.msra.mxu0 0
        %2794 = vmatprep.subr.bf16.mxu0 0
        %2795 = vmatpush1.bf16.msra.mxu0 0
        %2796 = vmatprep.subr.bf16.mxu0 0
        %2797 = vmatpush1.bf16.msra.mxu0 0
        %2798 = vmatprep.subr.bf16.mxu0 0
        %2799 = vmatpush1.bf16.msra.mxu0 0
        %2800 = vmatprep.subr.bf16.mxu0 0
        %2801 = vmatpush1.bf16.msra.mxu0 0
        %2802 = vmatprep.subr.bf16.mxu0 0
        %2803 = vmatpush1.bf16.msra.mxu0 0
        %2804 = vmatprep.subr.bf16.mxu0 0
        %2805 = vmatpush1.bf16.msra.mxu0 0
        %2806 = vmatprep.subr.bf16.mxu0 0
        %2807 = vmatpush1.bf16.msra.mxu0 0
        %2808 = vmatprep.subr.bf16.mxu0 0
        %2809 = vmatpush1.bf16.msra.mxu0 0
        %2810 = vmatprep.subr.bf16.mxu0 0
        %2811 = vmatpush1.bf16.msra.mxu0 0
        %2812 = vmatprep.mubr.bf16.mxu0 0
        %2813 = vmatmul.mubr.bf16.gmra.mrb[0].mxu0 %v2735
        %v2814 = vpop.f32.mrb[0].mxu0
        %v2815 = vadd.f32 0.0, %v2814
        %v2816 = vpop.f32.mrb[0].mxu0
        %v2817 = vpop.f32.mrb[0].mxu0
        %v2818 = vadd.f32 0.0, %v2817
        %v2819 = vpop.f32.mrb[0].mxu0
        %2820 = vdwg.mxu0
        %v2821 = vadd.f32 %v2706, %v2772
        %v2822 = vadd.f32 %v2707, %v2774
        %v2823 = vadd.f32 %v2708, %v2815
        %v2824 = vadd.f32 %v2709, %v2776
        %v2825 = vadd.f32 %v2710, %v2778
        %v2826 = vadd.f32 %v2711, %v2818
        %s2827 = scalar_lea.vmem [#allocation14], 32
        %v2828 = vld [vmem:[%s2827] sm:$0xf]
        %v2829 = vld [vmem:[%s2827 + $0x4] sm:$0xf]
        %v2832 = vunpack.c.l.b16 %v2828
        %v2833 = vunpack.c.l.b16 %v2829
        %v2834 = vpack.c.b16 %v2833, %v2832
        %v2836 = vsel %vm1939, %v2834, 0
        %2838 = vmatprep.subr.bf16.mxu0 %v1896
        %2839 = vmatpush1.bf16.msra.mxu0 %v1895
        %2840 = vmatprep.subr.bf16.mxu0 0
        %2841 = vmatpush1.bf16.msra.mxu0 0
        %2842 = vmatprep.subr.bf16.mxu0 0
        %2843 = vmatpush1.bf16.msra.mxu0 0
        %2844 = vmatprep.subr.bf16.mxu0 0
        %2845 = vmatpush1.bf16.msra.mxu0 0
        %2846 = vmatprep.subr.bf16.mxu0 0
        %2847 = vmatpush1.bf16.msra.mxu0 0
        %2848 = vmatprep.subr.bf16.mxu0 0
        %2849 = vmatpush1.bf16.msra.mxu0 0
        %2850 = vmatprep.subr.bf16.mxu0 0
        %2851 = vmatpush1.bf16.msra.mxu0 0
        %2852 = vmatprep.subr.bf16.mxu0 0
        %2853 = vmatpush1.bf16.msra.mxu0 0
        %2854 = vmatprep.subr.bf16.mxu0 0
        %2855 = vmatpush1.bf16.msra.mxu0 0
        %2856 = vmatprep.subr.bf16.mxu0 0
        %2857 = vmatpush1.bf16.msra.mxu0 0
        %2858 = vmatprep.subr.bf16.mxu0 0
        %2859 = vmatpush1.bf16.msra.mxu0 0
        %2860 = vmatprep.subr.bf16.mxu0 0
        %2861 = vmatpush1.bf16.msra.mxu0 0
        %2862 = vmatprep.subr.bf16.mxu0 0
        %2863 = vmatpush1.bf16.msra.mxu0 0
        %2864 = vmatprep.subr.bf16.mxu0 0
        %2865 = vmatpush1.bf16.msra.mxu0 0
        %2866 = vmatprep.subr.bf16.mxu0 0
        %2867 = vmatpush1.bf16.msra.mxu0 0
        %2868 = vmatprep.subr.bf16.mxu0 0
        %2869 = vmatpush1.bf16.msra.mxu0 0
        %2870 = vmatprep.mubr.bf16.mxu0 0
        %2871 = vmatmul.mubr.bf16.gmra.mrb[0].mxu0 %v2836
        %v2872 = vpop.f32.mrb[0].mxu0
        %v2873 = vadd.f32 0.0, %v2872
        %v2874 = vpop.f32.mrb[0].mxu0
        %v2875 = vadd.f32 0.0, %v2874
        %v2876 = vpop.f32.mrb[0].mxu0
        %v2877 = vadd.f32 0.0, %v2876
        %v2878 = vpop.f32.mrb[0].mxu0
        %v2879 = vadd.f32 0.0, %v2878
        %2880 = vdwg.mxu0
        %2881 = vmatprep.subr.bf16.mxu0 0
        %2882 = vmatpush1.bf16.msra.mxu0 %v1897
        %2883 = vmatprep.subr.bf16.mxu0 0
        %2884 = vmatpush1.bf16.msra.mxu0 0
        %2885 = vmatprep.subr.bf16.mxu0 0
        %2886 = vmatpush1.bf16.msra.mxu0 0
        %2887 = vmatprep.subr.bf16.mxu0 0
        %2888 = vmatpush1.bf16.msra.mxu0 0
        %2889 = vmatprep.subr.bf16.mxu0 0
        %2890 = vmatpush1.bf16.msra.mxu0 0
        %2891 = vmatprep.subr.bf16.mxu0 0
        %2892 = vmatpush1.bf16.msra.mxu0 0
        %2893 = vmatprep.subr.bf16.mxu0 0
        %2894 = vmatpush1.bf16.msra.mxu0 0
        %2895 = vmatprep.subr.bf16.mxu0 0
        %2896 = vmatpush1.bf16.msra.mxu0 0
        %2897 = vmatprep.subr.bf16.mxu0 0
        %2898 = vmatpush1.bf16.msra.mxu0 0
        %2899 = vmatprep.subr.bf16.mxu0 0
        %2900 = vmatpush1.bf16.msra.mxu0 0
        %2901 = vmatprep.subr.bf16.mxu0 0
        %2902 = vmatpush1.bf16.msra.mxu0 0
        %2903 = vmatprep.subr.bf16.mxu0 0
        %2904 = vmatpush1.bf16.msra.mxu0 0
        %2905 = vmatprep.subr.bf16.mxu0 0
        %2906 = vmatpush1.bf16.msra.mxu0 0
        %2907 = vmatprep.subr.bf16.mxu0 0
        %2908 = vmatpush1.bf16.msra.mxu0 0
        %2909 = vmatprep.subr.bf16.mxu0 0
        %2910 = vmatpush1.bf16.msra.mxu0 0
        %2911 = vmatprep.subr.bf16.mxu0 0
        %2912 = vmatpush1.bf16.msra.mxu0 0
        %2913 = vmatprep.mubr.bf16.mxu0 0
        %2914 = vmatmul.mubr.bf16.gmra.mrb[0].mxu0 %v2836
        %v2915 = vpop.f32.mrb[0].mxu0
        %v2916 = vadd.f32 0.0, %v2915
        %v2917 = vpop.f32.mrb[0].mxu0
        %v2918 = vpop.f32.mrb[0].mxu0
        %v2919 = vadd.f32 0.0, %v2918
        %v2920 = vpop.f32.mrb[0].mxu0
        %2921 = vdwg.mxu0
        %v2922 = vadd.f32 %v2821, %v2873
        %v2923 = vadd.f32 %v2822, %v2875
        %v2924 = vadd.f32 %v2823, %v2916
        %v2925 = vadd.f32 %v2824, %v2877
        %v2926 = vadd.f32 %v2825, %v2879
        %v2927 = vadd.f32 %v2826, %v2919
        %s2928 = scalar_lea.vmem [#allocation15], 32
        %v2929 = vld [vmem:[%s2928] sm:$0xf]
        %v2930 = vld [vmem:[%s2928 + $0x4] sm:$0xf]
        %v2931 = vld [vmem:[%s567 + $0x4] sm:$0xff]
        %v2932 = vld [vmem:[%s567 + $0xc] sm:$0xf]
        %v2933 = vld [vmem:[%s567 + $0x14] sm:$0xff]
        %v2934 = vld [vmem:[%s567 + $0x1c] sm:$0xf]
        %v2937 = vunpack.c.l.b16 %v2929
        %v2938 = vunpack.c.l.b16 %v2930
        %v2939 = vpack.c.b16 %v2938, %v2937
        %v2944 = vunpack.c.l.b16 %v2931
        %v2945 = vunpack.c.h.b16 %v2931
        %v2946 = vunpack.c.l.b16 %v2932
        %v2947 = vunpack.c.l.b16 %v2933
        %v2948 = vunpack.c.h.b16 %v2933
        %v2949 = vunpack.c.l.b16 %v2934
        %v2950 = vpack.c.b16 %v2947, %v2944
        %v2951 = vpack.c.b16 %v2948, %v2945
        %v2952 = vpack.c.b16 %v2949, %v2946
        %v2957 = vsel %vm1939, %v2939, 0
        %2959 = vmatprep.subr.bf16.mxu0 %v2951
        %2960 = vmatpush1.bf16.msra.mxu0 %v2950
        %2961 = vmatprep.subr.bf16.mxu0 0
        %2962 = vmatpush1.bf16.msra.mxu0 0
        %2963 = vmatprep.subr.bf16.mxu0 0
        %2964 = vmatpush1.bf16.msra.mxu0 0
        %2965 = vmatprep.subr.bf16.mxu0 0
        %2966 = vmatpush1.bf16.msra.mxu0 0
        %2967 = vmatprep.subr.bf16.mxu0 0
        %2968 = vmatpush1.bf16.msra.mxu0 0
        %2969 = vmatprep.subr.bf16.mxu0 0
        %2970 = vmatpush1.bf16.msra.mxu0 0
        %2971 = vmatprep.subr.bf16.mxu0 0
        %2972 = vmatpush1.bf16.msra.mxu0 0
        %2973 = vmatprep.subr.bf16.mxu0 0
        %2974 = vmatpush1.bf16.msra.mxu0 0
        %2975 = vmatprep.subr.bf16.mxu0 0
        %2976 = vmatpush1.bf16.msra.mxu0 0
        %2977 = vmatprep.subr.bf16.mxu0 0
        %2978 = vmatpush1.bf16.msra.mxu0 0
        %2979 = vmatprep.subr.bf16.mxu0 0
        %2980 = vmatpush1.bf16.msra.mxu0 0
        %2981 = vmatprep.subr.bf16.mxu0 0
        %2982 = vmatpush1.bf16.msra.mxu0 0
        %2983 = vmatprep.subr.bf16.mxu0 0
        %2984 = vmatpush1.bf16.msra.mxu0 0
        %2985 = vmatprep.subr.bf16.mxu0 0
        %2986 = vmatpush1.bf16.msra.mxu0 0
        %2987 = vmatprep.subr.bf16.mxu0 0
        %2988 = vmatpush1.bf16.msra.mxu0 0
        %2989 = vmatprep.subr.bf16.mxu0 0
        %2990 = vmatpush1.bf16.msra.mxu0 0
        %2991 = vmatprep.mubr.bf16.mxu0 0
        %2992 = vmatmul.mubr.bf16.gmra.mrb[0].mxu0 %v2957
        %v2993 = vpop.f32.mrb[0].mxu0
        %v2994 = vadd.f32 0.0, %v2993
        %v2995 = vpop.f32.mrb[0].mxu0
        %v2996 = vadd.f32 0.0, %v2995
        %v2997 = vpop.f32.mrb[0].mxu0
        %v2998 = vadd.f32 0.0, %v2997
        %v2999 = vpop.f32.mrb[0].mxu0
        %v3000 = vadd.f32 0.0, %v2999
        %3001 = vdwg.mxu0
        %3002 = vmatprep.subr.bf16.mxu0 0
        %3003 = vmatpush1.bf16.msra.mxu0 %v2952
        %3004 = vmatprep.subr.bf16.mxu0 0
        %3005 = vmatpush1.bf16.msra.mxu0 0
        %3006 = vmatprep.subr.bf16.mxu0 0
        %3007 = vmatpush1.bf16.msra.mxu0 0
        %3008 = vmatprep.subr.bf16.mxu0 0
        %3009 = vmatpush1.bf16.msra.mxu0 0
        %3010 = vmatprep.subr.bf16.mxu0 0
        %3011 = vmatpush1.bf16.msra.mxu0 0
        %3012 = vmatprep.subr.bf16.mxu0 0
        %3013 = vmatpush1.bf16.msra.mxu0 0
        %3014 = vmatprep.subr.bf16.mxu0 0
        %3015 = vmatpush1.bf16.msra.mxu0 0
        %3016 = vmatprep.subr.bf16.mxu0 0
        %3017 = vmatpush1.bf16.msra.mxu0 0
        %3018 = vmatprep.subr.bf16.mxu0 0
        %3019 = vmatpush1.bf16.msra.mxu0 0
        %3020 = vmatprep.subr.bf16.mxu0 0
        %3021 = vmatpush1.bf16.msra.mxu0 0
        %3022 = vmatprep.subr.bf16.mxu0 0
        %3023 = vmatpush1.bf16.msra.mxu0 0
        %3024 = vmatprep.subr.bf16.mxu0 0
        %3025 = vmatpush1.bf16.msra.mxu0 0
        %3026 = vmatprep.subr.bf16.mxu0 0
        %3027 = vmatpush1.bf16.msra.mxu0 0
        %3028 = vmatprep.subr.bf16.mxu0 0
        %3029 = vmatpush1.bf16.msra.mxu0 0
        %3030 = vmatprep.subr.bf16.mxu0 0
        %3031 = vmatpush1.bf16.msra.mxu0 0
        %3032 = vmatprep.subr.bf16.mxu0 0
        %3033 = vmatpush1.bf16.msra.mxu0 0
        %3034 = vmatprep.mubr.bf16.mxu0 0
        %3035 = vmatmul.mubr.bf16.gmra.mrb[0].mxu0 %v2957
        %v3036 = vpop.f32.mrb[0].mxu0
        %v3037 = vadd.f32 0.0, %v3036
        %v3038 = vpop.f32.mrb[0].mxu0
        %v3039 = vpop.f32.mrb[0].mxu0
        %v3040 = vadd.f32 0.0, %v3039
        %v3041 = vpop.f32.mrb[0].mxu0
        %3042 = vdwg.mxu0
        %v3043 = vadd.f32 %v2922, %v2994
        %v3044 = vadd.f32 %v2923, %v2996
        %v3045 = vadd.f32 %v2924, %v3037
        %v3046 = vadd.f32 %v2925, %v2998
        %v3047 = vadd.f32 %v2926, %v3000
        %v3048 = vadd.f32 %v2927, %v3040
        %s3049 = scalar_lea.vmem [#allocation14], 40
        %v3050 = vld [vmem:[%s3049] sm:$0xf]
        %v3051 = vld [vmem:[%s3049 + $0x4] sm:$0xf]
        %v3054 = vunpack.c.l.b16 %v3050
        %v3055 = vunpack.c.l.b16 %v3051
        %v3056 = vpack.c.b16 %v3055, %v3054
        %3057 = vrot.lane.b32.xlu0 %v1895, 127
        %v3058 = vpop.permute.xlu0 %3057
        %3059 = vrot.lane.b32.xlu0 %v1896, 127
        %v3060 = vpop.permute.xlu0 %3059
        %3061 = vrot.lane.b32.xlu0 %v1897, 127
        %v3062 = vpop.permute.xlu0 %3061
        %v3063 = vsel %vm1369, %v3058, %v3060
        %v3064 = vsel %vm1369, %v3060, %v3062
        %v3069 = vsel %vm1939, %v3056, 0
        %3071 = vmatprep.subr.bf16.mxu0 %v3064
        %3072 = vmatpush1.bf16.msra.mxu0 %v3063
        %3073 = vmatprep.subr.bf16.mxu0 0
        %3074 = vmatpush1.bf16.msra.mxu0 0
        %3075 = vmatprep.subr.bf16.mxu0 0
        %3076 = vmatpush1.bf16.msra.mxu0 0
        %3077 = vmatprep.subr.bf16.mxu0 0
        %3078 = vmatpush1.bf16.msra.mxu0 0
        %3079 = vmatprep.subr.bf16.mxu0 0
        %3080 = vmatpush1.bf16.msra.mxu0 0
        %3081 = vmatprep.subr.bf16.mxu0 0
        %3082 = vmatpush1.bf16.msra.mxu0 0
        %3083 = vmatprep.subr.bf16.mxu0 0
        %3084 = vmatpush1.bf16.msra.mxu0 0
        %3085 = vmatprep.subr.bf16.mxu0 0
        %3086 = vmatpush1.bf16.msra.mxu0 0
        %3087 = vmatprep.subr.bf16.mxu0 0
        %3088 = vmatpush1.bf16.msra.mxu0 0
        %3089 = vmatprep.subr.bf16.mxu0 0
        %3090 = vmatpush1.bf16.msra.mxu0 0
        %3091 = vmatprep.subr.bf16.mxu0 0
        %3092 = vmatpush1.bf16.msra.mxu0 0
        %3093 = vmatprep.subr.bf16.mxu0 0
        %3094 = vmatpush1.bf16.msra.mxu0 0
        %3095 = vmatprep.subr.bf16.mxu0 0
        %3096 = vmatpush1.bf16.msra.mxu0 0
        %3097 = vmatprep.subr.bf16.mxu0 0
        %3098 = vmatpush1.bf16.msra.mxu0 0
        %3099 = vmatprep.subr.bf16.mxu0 0
        %3100 = vmatpush1.bf16.msra.mxu0 0
        %3101 = vmatprep.subr.bf16.mxu0 0
        %3102 = vmatpush1.bf16.msra.mxu0 0
        %3103 = vmatprep.mubr.bf16.mxu0 0
        %3104 = vmatmul.mubr.bf16.gmra.mrb[0].mxu0 %v3069
        %v3105 = vpop.f32.mrb[0].mxu0
        %v3106 = vadd.f32 0.0, %v3105
        %v3107 = vpop.f32.mrb[0].mxu0
        %v3108 = vadd.f32 0.0, %v3107
        %v3109 = vpop.f32.mrb[0].mxu0
        %v3110 = vadd.f32 0.0, %v3109
        %v3111 = vpop.f32.mrb[0].mxu0
        %v3112 = vadd.f32 0.0, %v3111
        %3113 = vdwg.mxu0
        %3114 = vmatprep.subr.bf16.mxu0 0
        %3115 = vmatpush1.bf16.msra.mxu0 %v3062
        %3116 = vmatprep.subr.bf16.mxu0 0
        %3117 = vmatpush1.bf16.msra.mxu0 0
        %3118 = vmatprep.subr.bf16.mxu0 0
        %3119 = vmatpush1.bf16.msra.mxu0 0
        %3120 = vmatprep.subr.bf16.mxu0 0
        %3121 = vmatpush1.bf16.msra.mxu0 0
        %3122 = vmatprep.subr.bf16.mxu0 0
        %3123 = vmatpush1.bf16.msra.mxu0 0
        %3124 = vmatprep.subr.bf16.mxu0 0
        %3125 = vmatpush1.bf16.msra.mxu0 0
        %3126 = vmatprep.subr.bf16.mxu0 0
        %3127 = vmatpush1.bf16.msra.mxu0 0
        %3128 = vmatprep.subr.bf16.mxu0 0
        %3129 = vmatpush1.bf16.msra.mxu0 0
        %3130 = vmatprep.subr.bf16.mxu0 0
        %3131 = vmatpush1.bf16.msra.mxu0 0
        %3132 = vmatprep.subr.bf16.mxu0 0
        %3133 = vmatpush1.bf16.msra.mxu0 0
        %3134 = vmatprep.subr.bf16.mxu0 0
        %3135 = vmatpush1.bf16.msra.mxu0 0
        %3136 = vmatprep.subr.bf16.mxu0 0
        %3137 = vmatpush1.bf16.msra.mxu0 0
        %3138 = vmatprep.subr.bf16.mxu0 0
        %3139 = vmatpush1.bf16.msra.mxu0 0
        %3140 = vmatprep.subr.bf16.mxu0 0
        %3141 = vmatpush1.bf16.msra.mxu0 0
        %3142 = vmatprep.subr.bf16.mxu0 0
        %3143 = vmatpush1.bf16.msra.mxu0 0
        %3144 = vmatprep.subr.bf16.mxu0 0
        %3145 = vmatpush1.bf16.msra.mxu0 0
        %3146 = vmatprep.mubr.bf16.mxu0 0
        %3147 = vmatmul.mubr.bf16.gmra.mrb[0].mxu0 %v3069
        %v3148 = vpop.f32.mrb[0].mxu0
        %v3149 = vadd.f32 0.0, %v3148
        %v3150 = vpop.f32.mrb[0].mxu0
        %v3151 = vpop.f32.mrb[0].mxu0
        %v3152 = vadd.f32 0.0, %v3151
        %v3153 = vpop.f32.mrb[0].mxu0
        %3154 = vdwg.mxu0
        %v3155 = vadd.f32 %v3043, %v3106
        %v3156 = vadd.f32 %v3044, %v3108
        %v3157 = vadd.f32 %v3045, %v3149
        %v3158 = vadd.f32 %v3046, %v3110
        %v3159 = vadd.f32 %v3047, %v3112
        %v3160 = vadd.f32 %v3048, %v3152
        %s3161 = scalar_lea.vmem [#allocation15], 40
        %v3162 = vld [vmem:[%s3161] sm:$0xf]
        %v3163 = vld [vmem:[%s3161 + $0x4] sm:$0xf]
        %v3166 = vunpack.c.l.b16 %v3162
        %v3167 = vunpack.c.l.b16 %v3163
        %v3168 = vpack.c.b16 %v3167, %v3166
        %3169 = vrot.lane.b32.xlu0 %v2950, 127
        %v3170 = vpop.permute.xlu0 %3169
        %3171 = vrot.lane.b32.xlu0 %v2951, 127
        %v3172 = vpop.permute.xlu0 %3171
        %3173 = vrot.lane.b32.xlu0 %v2952, 127
        %v3174 = vpop.permute.xlu0 %3173
        %v3175 = vsel %vm1369, %v3170, %v3172
        %v3176 = vsel %vm1369, %v3172, %v3174
        %v3181 = vsel %vm1939, %v3168, 0
        %3183 = vmatprep.subr.bf16.mxu0 %v3176
        %3184 = vmatpush1.bf16.msra.mxu0 %v3175
        %3185 = vmatprep.subr.bf16.mxu0 0
        %3186 = vmatpush1.bf16.msra.mxu0 0
        %3187 = vmatprep.subr.bf16.mxu0 0
        %3188 = vmatpush1.bf16.msra.mxu0 0
        %3189 = vmatprep.subr.bf16.mxu0 0
        %3190 = vmatpush1.bf16.msra.mxu0 0
        %3191 = vmatprep.subr.bf16.mxu0 0
        %3192 = vmatpush1.bf16.msra.mxu0 0
        %3193 = vmatprep.subr.bf16.mxu0 0
        %3194 = vmatpush1.bf16.msra.mxu0 0
        %3195 = vmatprep.subr.bf16.mxu0 0
        %3196 = vmatpush1.bf16.msra.mxu0 0
        %3197 = vmatprep.subr.bf16.mxu0 0
        %3198 = vmatpush1.bf16.msra.mxu0 0
        %3199 = vmatprep.subr.bf16.mxu0 0
        %3200 = vmatpush1.bf16.msra.mxu0 0
        %3201 = vmatprep.subr.bf16.mxu0 0
        %3202 = vmatpush1.bf16.msra.mxu0 0
        %3203 = vmatprep.subr.bf16.mxu0 0
        %3204 = vmatpush1.bf16.msra.mxu0 0
        %3205 = vmatprep.subr.bf16.mxu0 0
        %3206 = vmatpush1.bf16.msra.mxu0 0
        %3207 = vmatprep.subr.bf16.mxu0 0
        %3208 = vmatpush1.bf16.msra.mxu0 0
        %3209 = vmatprep.subr.bf16.mxu0 0
        %3210 = vmatpush1.bf16.msra.mxu0 0
        %3211 = vmatprep.subr.bf16.mxu0 0
        %3212 = vmatpush1.bf16.msra.mxu0 0
        %3213 = vmatprep.subr.bf16.mxu0 0
        %3214 = vmatpush1.bf16.msra.mxu0 0
        %3215 = vmatprep.mubr.bf16.mxu0 0
        %3216 = vmatmul.mubr.bf16.gmra.mrb[0].mxu0 %v3181
        %v3217 = vpop.f32.mrb[0].mxu0
        %v3218 = vadd.f32 0.0, %v3217
        %v3219 = vpop.f32.mrb[0].mxu0
        %v3220 = vadd.f32 0.0, %v3219
        %v3221 = vpop.f32.mrb[0].mxu0
        %v3222 = vadd.f32 0.0, %v3221
        %v3223 = vpop.f32.mrb[0].mxu0
        %v3224 = vadd.f32 0.0, %v3223
        %3225 = vdwg.mxu0
        %3226 = vmatprep.subr.bf16.mxu0 0
        %3227 = vmatpush1.bf16.msra.mxu0 %v3174
        %3228 = vmatprep.subr.bf16.mxu0 0
        %3229 = vmatpush1.bf16.msra.mxu0 0
        %3230 = vmatprep.subr.bf16.mxu0 0
        %3231 = vmatpush1.bf16.msra.mxu0 0
        %3232 = vmatprep.subr.bf16.mxu0 0
        %3233 = vmatpush1.bf16.msra.mxu0 0
        %3234 = vmatprep.subr.bf16.mxu0 0
        %3235 = vmatpush1.bf16.msra.mxu0 0
        %3236 = vmatprep.subr.bf16.mxu0 0
        %3237 = vmatpush1.bf16.msra.mxu0 0
        %3238 = vmatprep.subr.bf16.mxu0 0
        %3239 = vmatpush1.bf16.msra.mxu0 0
        %3240 = vmatprep.subr.bf16.mxu0 0
        %3241 = vmatpush1.bf16.msra.mxu0 0
        %3242 = vmatprep.subr.bf16.mxu0 0
        %3243 = vmatpush1.bf16.msra.mxu0 0
        %3244 = vmatprep.subr.bf16.mxu0 0
        %3245 = vmatpush1.bf16.msra.mxu0 0
        %3246 = vmatprep.subr.bf16.mxu0 0
        %3247 = vmatpush1.bf16.msra.mxu0 0
        %3248 = vmatprep.subr.bf16.mxu0 0
        %3249 = vmatpush1.bf16.msra.mxu0 0
        %3250 = vmatprep.subr.bf16.mxu0 0
        %3251 = vmatpush1.bf16.msra.mxu0 0
        %3252 = vmatprep.subr.bf16.mxu0 0
        %3253 = vmatpush1.bf16.msra.mxu0 0
        %3254 = vmatprep.subr.bf16.mxu0 0
        %3255 = vmatpush1.bf16.msra.mxu0 0
        %3256 = vmatprep.subr.bf16.mxu0 0
        %3257 = vmatpush1.bf16.msra.mxu0 0
        %3258 = vmatprep.mubr.bf16.mxu0 0
        %3259 = vmatmul.mubr.bf16.gmra.mrb[0].mxu0 %v3181
        %v3260 = vpop.f32.mrb[0].mxu0
        %v3261 = vadd.f32 0.0, %v3260
        %v3262 = vpop.f32.mrb[0].mxu0
        %v3263 = vpop.f32.mrb[0].mxu0
        %v3264 = vadd.f32 0.0, %v3263
        %v3265 = vpop.f32.mrb[0].mxu0
        %3266 = vdwg.mxu0
        %v3267 = vadd.f32 %v3155, %v3218
        %v3268 = vadd.f32 %v3156, %v3220
        %v3269 = vadd.f32 %v3157, %v3261
        %v3270 = vadd.f32 %v3158, %v3222
        %v3271 = vadd.f32 %v3159, %v3224
        %v3272 = vadd.f32 %v3160, %v3264
        %s3273 = scalar_lea.vmem [#allocation14], 48
        %v3274 = vld [vmem:[%s3273] sm:$0xf]
        %v3275 = vld [vmem:[%s3273 + $0x4] sm:$0xf]
        %v3278 = vunpack.c.l.b16 %v3274
        %v3279 = vunpack.c.l.b16 %v3275
        %v3280 = vpack.c.b16 %v3279, %v3278
        %3281 = vrot.lane.b32.xlu0 %v1895, 109
        %v3282 = vpop.permute.xlu0 %3281
        %3283 = vrot.lane.b32.xlu0 %v1896, 109
        %v3284 = vpop.permute.xlu0 %3283
        %3285 = vrot.lane.b32.xlu0 %v1897, 109
        %v3286 = vpop.permute.xlu0 %3285
        %v3287 = vsel %vm1493, %v3282, %v3284
        %v3288 = vsel %vm1493, %v3284, %v3286
        %v3293 = vsel %vm1939, %v3280, 0
        %3295 = vmatprep.subr.bf16.mxu0 %v3288
        %3296 = vmatpush1.bf16.msra.mxu0 %v3287
        %3297 = vmatprep.subr.bf16.mxu0 0
        %3298 = vmatpush1.bf16.msra.mxu0 0
        %3299 = vmatprep.subr.bf16.mxu0 0
        %3300 = vmatpush1.bf16.msra.mxu0 0
        %3301 = vmatprep.subr.bf16.mxu0 0
        %3302 = vmatpush1.bf16.msra.mxu0 0
        %3303 = vmatprep.subr.bf16.mxu0 0
        %3304 = vmatpush1.bf16.msra.mxu0 0
        %3305 = vmatprep.subr.bf16.mxu0 0
        %3306 = vmatpush1.bf16.msra.mxu0 0
        %3307 = vmatprep.subr.bf16.mxu0 0
        %3308 = vmatpush1.bf16.msra.mxu0 0
        %3309 = vmatprep.subr.bf16.mxu0 0
        %3310 = vmatpush1.bf16.msra.mxu0 0
        %3311 = vmatprep.subr.bf16.mxu0 0
        %3312 = vmatpush1.bf16.msra.mxu0 0
        %3313 = vmatprep.subr.bf16.mxu0 0
        %3314 = vmatpush1.bf16.msra.mxu0 0
        %3315 = vmatprep.subr.bf16.mxu0 0
        %3316 = vmatpush1.bf16.msra.mxu0 0
        %3317 = vmatprep.subr.bf16.mxu0 0
        %3318 = vmatpush1.bf16.msra.mxu0 0
        %3319 = vmatprep.subr.bf16.mxu0 0
        %3320 = vmatpush1.bf16.msra.mxu0 0
        %3321 = vmatprep.subr.bf16.mxu0 0
        %3322 = vmatpush1.bf16.msra.mxu0 0
        %3323 = vmatprep.subr.bf16.mxu0 0
        %3324 = vmatpush1.bf16.msra.mxu0 0
        %3325 = vmatprep.subr.bf16.mxu0 0
        %3326 = vmatpush1.bf16.msra.mxu0 0
        %3327 = vmatprep.mubr.bf16.mxu0 0
        %3328 = vmatmul.mubr.bf16.gmra.mrb[0].mxu0 %v3293
        %v3329 = vpop.f32.mrb[0].mxu0
        %v3330 = vadd.f32 0.0, %v3329
        %v3331 = vpop.f32.mrb[0].mxu0
        %v3332 = vadd.f32 0.0, %v3331
        %v3333 = vpop.f32.mrb[0].mxu0
        %v3334 = vadd.f32 0.0, %v3333
        %v3335 = vpop.f32.mrb[0].mxu0
        %v3336 = vadd.f32 0.0, %v3335
        %3337 = vdwg.mxu0
        %3338 = vmatprep.subr.bf16.mxu0 0
        %3339 = vmatpush1.bf16.msra.mxu0 %v3286
        %3340 = vmatprep.subr.bf16.mxu0 0
        %3341 = vmatpush1.bf16.msra.mxu0 0
        %3342 = vmatprep.subr.bf16.mxu0 0
        %3343 = vmatpush1.bf16.msra.mxu0 0
        %3344 = vmatprep.subr.bf16.mxu0 0
        %3345 = vmatpush1.bf16.msra.mxu0 0
        %3346 = vmatprep.subr.bf16.mxu0 0
        %3347 = vmatpush1.bf16.msra.mxu0 0
        %3348 = vmatprep.subr.bf16.mxu0 0
        %3349 = vmatpush1.bf16.msra.mxu0 0
        %3350 = vmatprep.subr.bf16.mxu0 0
        %3351 = vmatpush1.bf16.msra.mxu0 0
        %3352 = vmatprep.subr.bf16.mxu0 0
        %3353 = vmatpush1.bf16.msra.mxu0 0
        %3354 = vmatprep.subr.bf16.mxu0 0
        %3355 = vmatpush1.bf16.msra.mxu0 0
        %3356 = vmatprep.subr.bf16.mxu0 0
        %3357 = vmatpush1.bf16.msra.mxu0 0
        %3358 = vmatprep.subr.bf16.mxu0 0
        %3359 = vmatpush1.bf16.msra.mxu0 0
        %3360 = vmatprep.subr.bf16.mxu0 0
        %3361 = vmatpush1.bf16.msra.mxu0 0
        %3362 = vmatprep.subr.bf16.mxu0 0
        %3363 = vmatpush1.bf16.msra.mxu0 0
        %3364 = vmatprep.subr.bf16.mxu0 0
        %3365 = vmatpush1.bf16.msra.mxu0 0
        %3366 = vmatprep.subr.bf16.mxu0 0
        %3367 = vmatpush1.bf16.msra.mxu0 0
        %3368 = vmatprep.subr.bf16.mxu0 0
        %3369 = vmatpush1.bf16.msra.mxu0 0
        %3370 = vmatprep.mubr.bf16.mxu0 0
        %3371 = vmatmul.mubr.bf16.gmra.mrb[0].mxu0 %v3293
        %v3372 = vpop.f32.mrb[0].mxu0
        %v3373 = vadd.f32 0.0, %v3372
        %v3374 = vpop.f32.mrb[0].mxu0
        %v3375 = vpop.f32.mrb[0].mxu0
        %v3376 = vadd.f32 0.0, %v3375
        %v3377 = vpop.f32.mrb[0].mxu0
        %3378 = vdwg.mxu0
        %v3379 = vadd.f32 %v3267, %v3330
        %v3380 = vadd.f32 %v3268, %v3332
        %v3381 = vadd.f32 %v3269, %v3373
        %v3382 = vadd.f32 %v3270, %v3334
        %v3383 = vadd.f32 %v3271, %v3336
        %v3384 = vadd.f32 %v3272, %v3376
        %s3385 = scalar_lea.vmem [#allocation15], 48
        %v3386 = vld [vmem:[%s3385] sm:$0xf]
        %v3387 = vld [vmem:[%s3385 + $0x4] sm:$0xf]
        %v3390 = vunpack.c.l.b16 %v3386
        %v3391 = vunpack.c.l.b16 %v3387
        %v3392 = vpack.c.b16 %v3391, %v3390
        %3393 = vrot.lane.b32.xlu0 %v2950, 109
        %v3394 = vpop.permute.xlu0 %3393
        %3395 = vrot.lane.b32.xlu0 %v2951, 109
        %v3396 = vpop.permute.xlu0 %3395
        %3397 = vrot.lane.b32.xlu0 %v2952, 109
        %v3398 = vpop.permute.xlu0 %3397
        %v3399 = vsel %vm1493, %v3394, %v3396
        %v3400 = vsel %vm1493, %v3396, %v3398
        %v3405 = vsel %vm1939, %v3392, 0
        %3407 = vmatprep.subr.bf16.mxu0 %v3400
        %3408 = vmatpush1.bf16.msra.mxu0 %v3399
        %3409 = vmatprep.subr.bf16.mxu0 0
        %3410 = vmatpush1.bf16.msra.mxu0 0
        %3411 = vmatprep.subr.bf16.mxu0 0
        %3412 = vmatpush1.bf16.msra.mxu0 0
        %3413 = vmatprep.subr.bf16.mxu0 0
        %3414 = vmatpush1.bf16.msra.mxu0 0
        %3415 = vmatprep.subr.bf16.mxu0 0
        %3416 = vmatpush1.bf16.msra.mxu0 0
        %3417 = vmatprep.subr.bf16.mxu0 0
        %3418 = vmatpush1.bf16.msra.mxu0 0
        %3419 = vmatprep.subr.bf16.mxu0 0
        %3420 = vmatpush1.bf16.msra.mxu0 0
        %3421 = vmatprep.subr.bf16.mxu0 0
        %3422 = vmatpush1.bf16.msra.mxu0 0
        %3423 = vmatprep.subr.bf16.mxu0 0
        %3424 = vmatpush1.bf16.msra.mxu0 0
        %3425 = vmatprep.subr.bf16.mxu0 0
        %3426 = vmatpush1.bf16.msra.mxu0 0
        %3427 = vmatprep.subr.bf16.mxu0 0
        %3428 = vmatpush1.bf16.msra.mxu0 0
        %3429 = vmatprep.subr.bf16.mxu0 0
        %3430 = vmatpush1.bf16.msra.mxu0 0
        %3431 = vmatprep.subr.bf16.mxu0 0
        %3432 = vmatpush1.bf16.msra.mxu0 0
        %3433 = vmatprep.subr.bf16.mxu0 0
        %3434 = vmatpush1.bf16.msra.mxu0 0
        %3435 = vmatprep.subr.bf16.mxu0 0
        %3436 = vmatpush1.bf16.msra.mxu0 0
        %3437 = vmatprep.subr.bf16.mxu0 0
        %3438 = vmatpush1.bf16.msra.mxu0 0
        %3439 = vmatprep.mubr.bf16.mxu0 0
        %3440 = vmatmul.mubr.bf16.gmra.mrb[0].mxu0 %v3405
        %v3441 = vpop.f32.mrb[0].mxu0
        %v3442 = vadd.f32 0.0, %v3441
        %v3443 = vpop.f32.mrb[0].mxu0
        %v3444 = vadd.f32 0.0, %v3443
        %v3445 = vpop.f32.mrb[0].mxu0
        %v3446 = vadd.f32 0.0, %v3445
        %v3447 = vpop.f32.mrb[0].mxu0
        %v3448 = vadd.f32 0.0, %v3447
        %3449 = vdwg.mxu0
        %3450 = vmatprep.subr.bf16.mxu0 0
        %3451 = vmatpush1.bf16.msra.mxu0 %v3398
        %3452 = vmatprep.subr.bf16.mxu0 0
        %3453 = vmatpush1.bf16.msra.mxu0 0
        %3454 = vmatprep.subr.bf16.mxu0 0
        %3455 = vmatpush1.bf16.msra.mxu0 0
        %3456 = vmatprep.subr.bf16.mxu0 0
        %3457 = vmatpush1.bf16.msra.mxu0 0
        %3458 = vmatprep.subr.bf16.mxu0 0
        %3459 = vmatpush1.bf16.msra.mxu0 0
        %3460 = vmatprep.subr.bf16.mxu0 0
        %3461 = vmatpush1.bf16.msra.mxu0 0
        %3462 = vmatprep.subr.bf16.mxu0 0
        %3463 = vmatpush1.bf16.msra.mxu0 0
        %3464 = vmatprep.subr.bf16.mxu0 0
        %3465 = vmatpush1.bf16.msra.mxu0 0
        %3466 = vmatprep.subr.bf16.mxu0 0
        %3467 = vmatpush1.bf16.msra.mxu0 0
        %3468 = vmatprep.subr.bf16.mxu0 0
        %3469 = vmatpush1.bf16.msra.mxu0 0
        %3470 = vmatprep.subr.bf16.mxu0 0
        %3471 = vmatpush1.bf16.msra.mxu0 0
        %3472 = vmatprep.subr.bf16.mxu0 0
        %3473 = vmatpush1.bf16.msra.mxu0 0
        %3474 = vmatprep.subr.bf16.mxu0 0
        %3475 = vmatpush1.bf16.msra.mxu0 0
        %3476 = vmatprep.subr.bf16.mxu0 0
        %3477 = vmatpush1.bf16.msra.mxu0 0
        %3478 = vmatprep.subr.bf16.mxu0 0
        %3479 = vmatpush1.bf16.msra.mxu0 0
        %3480 = vmatprep.subr.bf16.mxu0 0
        %3481 = vmatpush1.bf16.msra.mxu0 0
        %3482 = vmatprep.mubr.bf16.mxu0 0
        %3483 = vmatmul.mubr.bf16.gmra.mrb[0].mxu0 %v3405
        %v3484 = vpop.f32.mrb[0].mxu0
        %v3485 = vadd.f32 0.0, %v3484
        %v3486 = vpop.f32.mrb[0].mxu0
        %v3487 = vpop.f32.mrb[0].mxu0
        %v3488 = vadd.f32 0.0, %v3487
        %v3489 = vpop.f32.mrb[0].mxu0
        %3490 = vdwg.mxu0
        %v3491 = vadd.f32 %v3379, %v3442
        %v3492 = vadd.f32 %v3380, %v3444
        %v3493 = vadd.f32 %v3381, %v3485
        %v3494 = vadd.f32 %v3382, %v3446
        %v3495 = vadd.f32 %v3383, %v3448
        %v3496 = vadd.f32 %v3384, %v3488
        %s3497 = scalar_lea.vmem [#allocation14], 56
        %v3498 = vld [vmem:[%s3497] sm:$0xf]
        %v3499 = vld [vmem:[%s3497 + $0x4] sm:$0xf]
        %v3502 = vunpack.c.l.b16 %v3498
        %v3503 = vunpack.c.l.b16 %v3499
        %v3504 = vpack.c.b16 %v3503, %v3502
        %3505 = vrot.lane.b32.xlu0 %v1895, 108
        %v3506 = vpop.permute.xlu0 %3505
        %3507 = vrot.lane.b32.xlu0 %v1896, 108
        %v3508 = vpop.permute.xlu0 %3507
        %3509 = vrot.lane.b32.xlu0 %v1897, 108
        %v3510 = vpop.permute.xlu0 %3509
        %v3511 = vsel %vm1617, %v3506, %v3508
        %v3512 = vsel %vm1617, %v3508, %v3510
        %v3517 = vsel %vm1939, %v3504, 0
        %3519 = vmatprep.subr.bf16.mxu0 %v3512
        %3520 = vmatpush1.bf16.msra.mxu0 %v3511
        %3521 = vmatprep.subr.bf16.mxu0 0
        %3522 = vmatpush1.bf16.msra.mxu0 0
        %3523 = vmatprep.subr.bf16.mxu0 0
        %3524 = vmatpush1.bf16.msra.mxu0 0
        %3525 = vmatprep.subr.bf16.mxu0 0
        %3526 = vmatpush1.bf16.msra.mxu0 0
        %3527 = vmatprep.subr.bf16.mxu0 0
        %3528 = vmatpush1.bf16.msra.mxu0 0
        %3529 = vmatprep.subr.bf16.mxu0 0
        %3530 = vmatpush1.bf16.msra.mxu0 0
        %3531 = vmatprep.subr.bf16.mxu0 0
        %3532 = vmatpush1.bf16.msra.mxu0 0
        %3533 = vmatprep.subr.bf16.mxu0 0
        %3534 = vmatpush1.bf16.msra.mxu0 0
        %3535 = vmatprep.subr.bf16.mxu0 0
        %3536 = vmatpush1.bf16.msra.mxu0 0
        %3537 = vmatprep.subr.bf16.mxu0 0
        %3538 = vmatpush1.bf16.msra.mxu0 0
        %3539 = vmatprep.subr.bf16.mxu0 0
        %3540 = vmatpush1.bf16.msra.mxu0 0
        %3541 = vmatprep.subr.bf16.mxu0 0
        %3542 = vmatpush1.bf16.msra.mxu0 0
        %3543 = vmatprep.subr.bf16.mxu0 0
        %3544 = vmatpush1.bf16.msra.mxu0 0
        %3545 = vmatprep.subr.bf16.mxu0 0
        %3546 = vmatpush1.bf16.msra.mxu0 0
        %3547 = vmatprep.subr.bf16.mxu0 0
        %3548 = vmatpush1.bf16.msra.mxu0 0
        %3549 = vmatprep.subr.bf16.mxu0 0
        %3550 = vmatpush1.bf16.msra.mxu0 0
        %3551 = vmatprep.mubr.bf16.mxu0 0
        %3552 = vmatmul.mubr.bf16.gmra.mrb[0].mxu0 %v3517
        %v3553 = vpop.f32.mrb[0].mxu0
        %v3554 = vadd.f32 0.0, %v3553
        %v3555 = vpop.f32.mrb[0].mxu0
        %v3556 = vadd.f32 0.0, %v3555
        %v3557 = vpop.f32.mrb[0].mxu0
        %v3558 = vadd.f32 0.0, %v3557
        %v3559 = vpop.f32.mrb[0].mxu0
        %v3560 = vadd.f32 0.0, %v3559
        %3561 = vdwg.mxu0
        %3562 = vmatprep.subr.bf16.mxu0 0
        %3563 = vmatpush1.bf16.msra.mxu0 %v3510
        %3564 = vmatprep.subr.bf16.mxu0 0
        %3565 = vmatpush1.bf16.msra.mxu0 0
        %3566 = vmatprep.subr.bf16.mxu0 0
        %3567 = vmatpush1.bf16.msra.mxu0 0
        %3568 = vmatprep.subr.bf16.mxu0 0
        %3569 = vmatpush1.bf16.msra.mxu0 0
        %3570 = vmatprep.subr.bf16.mxu0 0
        %3571 = vmatpush1.bf16.msra.mxu0 0
        %3572 = vmatprep.subr.bf16.mxu0 0
        %3573 = vmatpush1.bf16.msra.mxu0 0
        %3574 = vmatprep.subr.bf16.mxu0 0
        %3575 = vmatpush1.bf16.msra.mxu0 0
        %3576 = vmatprep.subr.bf16.mxu0 0
        %3577 = vmatpush1.bf16.msra.mxu0 0
        %3578 = vmatprep.subr.bf16.mxu0 0
        %3579 = vmatpush1.bf16.msra.mxu0 0
        %3580 = vmatprep.subr.bf16.mxu0 0
        %3581 = vmatpush1.bf16.msra.mxu0 0
        %3582 = vmatprep.subr.bf16.mxu0 0
        %3583 = vmatpush1.bf16.msra.mxu0 0
        %3584 = vmatprep.subr.bf16.mxu0 0
        %3585 = vmatpush1.bf16.msra.mxu0 0
        %3586 = vmatprep.subr.bf16.mxu0 0
        %3587 = vmatpush1.bf16.msra.mxu0 0
        %3588 = vmatprep.subr.bf16.mxu0 0
        %3589 = vmatpush1.bf16.msra.mxu0 0
        %3590 = vmatprep.subr.bf16.mxu0 0
        %3591 = vmatpush1.bf16.msra.mxu0 0
        %3592 = vmatprep.subr.bf16.mxu0 0
        %3593 = vmatpush1.bf16.msra.mxu0 0
        %3594 = vmatprep.mubr.bf16.mxu0 0
        %3595 = vmatmul.mubr.bf16.gmra.mrb[0].mxu0 %v3517
        %v3596 = vpop.f32.mrb[0].mxu0
        %v3597 = vadd.f32 0.0, %v3596
        %v3598 = vpop.f32.mrb[0].mxu0
        %v3599 = vpop.f32.mrb[0].mxu0
        %v3600 = vadd.f32 0.0, %v3599
        %v3601 = vpop.f32.mrb[0].mxu0
        %3602 = vdwg.mxu0
        %v3603 = vadd.f32 %v3491, %v3554
        %v3604 = vadd.f32 %v3492, %v3556
        %v3605 = vadd.f32 %v3493, %v3597
        %v3606 = vadd.f32 %v3494, %v3558
        %v3607 = vadd.f32 %v3495, %v3560
        %v3608 = vadd.f32 %v3496, %v3600
        %s3609 = scalar_lea.vmem [#allocation15], 56
        %v3610 = vld [vmem:[%s3609] sm:$0xf]
        %v3611 = vld [vmem:[%s3609 + $0x4] sm:$0xf]
        %v3614 = vunpack.c.l.b16 %v3610
        %v3615 = vunpack.c.l.b16 %v3611
        %v3616 = vpack.c.b16 %v3615, %v3614
        %3617 = vrot.lane.b32.xlu0 %v2950, 108
        %v3618 = vpop.permute.xlu0 %3617
        %3619 = vrot.lane.b32.xlu0 %v2951, 108
        %v3620 = vpop.permute.xlu0 %3619
        %3621 = vrot.lane.b32.xlu0 %v2952, 108
        %v3622 = vpop.permute.xlu0 %3621
        %v3623 = vsel %vm1617, %v3618, %v3620
        %v3624 = vsel %vm1617, %v3620, %v3622
        %v3629 = vsel %vm1939, %v3616, 0
        %3631 = vmatprep.subr.bf16.mxu0 %v3624
        %3632 = vmatpush1.bf16.msra.mxu0 %v3623
        %3633 = vmatprep.subr.bf16.mxu0 0
        %3634 = vmatpush1.bf16.msra.mxu0 0
        %3635 = vmatprep.subr.bf16.mxu0 0
        %3636 = vmatpush1.bf16.msra.mxu0 0
        %3637 = vmatprep.subr.bf16.mxu0 0
        %3638 = vmatpush1.bf16.msra.mxu0 0
        %3639 = vmatprep.subr.bf16.mxu0 0
        %3640 = vmatpush1.bf16.msra.mxu0 0
        %3641 = vmatprep.subr.bf16.mxu0 0
        %3642 = vmatpush1.bf16.msra.mxu0 0
        %3643 = vmatprep.subr.bf16.mxu0 0
        %3644 = vmatpush1.bf16.msra.mxu0 0
        %3645 = vmatprep.subr.bf16.mxu0 0
        %3646 = vmatpush1.bf16.msra.mxu0 0
        %3647 = vmatprep.subr.bf16.mxu0 0
        %3648 = vmatpush1.bf16.msra.mxu0 0
        %3649 = vmatprep.subr.bf16.mxu0 0
        %3650 = vmatpush1.bf16.msra.mxu0 0
        %3651 = vmatprep.subr.bf16.mxu0 0
        %3652 = vmatpush1.bf16.msra.mxu0 0
        %3653 = vmatprep.subr.bf16.mxu0 0
        %3654 = vmatpush1.bf16.msra.mxu0 0
        %3655 = vmatprep.subr.bf16.mxu0 0
        %3656 = vmatpush1.bf16.msra.mxu0 0
        %3657 = vmatprep.subr.bf16.mxu0 0
        %3658 = vmatpush1.bf16.msra.mxu0 0
        %3659 = vmatprep.subr.bf16.mxu0 0
        %3660 = vmatpush1.bf16.msra.mxu0 0
        %3661 = vmatprep.subr.bf16.mxu0 0
        %3662 = vmatpush1.bf16.msra.mxu0 0
        %3663 = vmatprep.mubr.bf16.mxu0 0
        %3664 = vmatmul.mubr.bf16.gmra.mrb[0].mxu0 %v3629
        %v3665 = vpop.f32.mrb[0].mxu0
        %v3666 = vadd.f32 0.0, %v3665
        %v3667 = vpop.f32.mrb[0].mxu0
        %v3668 = vadd.f32 0.0, %v3667
        %v3669 = vpop.f32.mrb[0].mxu0
        %v3670 = vadd.f32 0.0, %v3669
        %v3671 = vpop.f32.mrb[0].mxu0
        %v3672 = vadd.f32 0.0, %v3671
        %3673 = vdwg.mxu0
        %3674 = vmatprep.subr.bf16.mxu0 0
        %3675 = vmatpush1.bf16.msra.mxu0 %v3622
        %3676 = vmatprep.subr.bf16.mxu0 0
        %3677 = vmatpush1.bf16.msra.mxu0 0
        %3678 = vmatprep.subr.bf16.mxu0 0
        %3679 = vmatpush1.bf16.msra.mxu0 0
        %3680 = vmatprep.subr.bf16.mxu0 0
        %3681 = vmatpush1.bf16.msra.mxu0 0
        %3682 = vmatprep.subr.bf16.mxu0 0
        %3683 = vmatpush1.bf16.msra.mxu0 0
        %3684 = vmatprep.subr.bf16.mxu0 0
        %3685 = vmatpush1.bf16.msra.mxu0 0
        %3686 = vmatprep.subr.bf16.mxu0 0
        %3687 = vmatpush1.bf16.msra.mxu0 0
        %3688 = vmatprep.subr.bf16.mxu0 0
        %3689 = vmatpush1.bf16.msra.mxu0 0
        %3690 = vmatprep.subr.bf16.mxu0 0
        %3691 = vmatpush1.bf16.msra.mxu0 0
        %3692 = vmatprep.subr.bf16.mxu0 0
        %3693 = vmatpush1.bf16.msra.mxu0 0
        %3694 = vmatprep.subr.bf16.mxu0 0
        %3695 = vmatpush1.bf16.msra.mxu0 0
        %3696 = vmatprep.subr.bf16.mxu0 0
        %3697 = vmatpush1.bf16.msra.mxu0 0
        %3698 = vmatprep.subr.bf16.mxu0 0
        %3699 = vmatpush1.bf16.msra.mxu0 0
        %3700 = vmatprep.subr.bf16.mxu0 0
        %3701 = vmatpush1.bf16.msra.mxu0 0
        %3702 = vmatprep.subr.bf16.mxu0 0
        %3703 = vmatpush1.bf16.msra.mxu0 0
        %3704 = vmatprep.subr.bf16.mxu0 0
        %3705 = vmatpush1.bf16.msra.mxu0 0
        %3706 = vmatprep.mubr.bf16.mxu0 0
        %3707 = vmatmul.mubr.bf16.gmra.mrb[0].mxu0 %v3629
        %v3708 = vpop.f32.mrb[0].mxu0
        %v3709 = vadd.f32 0.0, %v3708
        %v3710 = vpop.f32.mrb[0].mxu0
        %v3711 = vpop.f32.mrb[0].mxu0
        %v3712 = vadd.f32 0.0, %v3711
        %v3713 = vpop.f32.mrb[0].mxu0
        %3714 = vdwg.mxu0
        %v3715 = vadd.f32 %v3603, %v3666
        %v3716 = vadd.f32 %v3604, %v3668
        %v3717 = vadd.f32 %v3605, %v3709
        %v3718 = vadd.f32 %v3606, %v3670
        %v3719 = vadd.f32 %v3607, %v3672
        %v3720 = vadd.f32 %v3608, %v3712
        %s3721 = scalar_lea.vmem [#allocation14], 64
        %v3722 = vld [vmem:[%s3721] sm:$0xf]
        %v3723 = vld [vmem:[%s3721 + $0x4] sm:$0xf]
        %v3726 = vunpack.c.l.b16 %v3722
        %v3727 = vunpack.c.l.b16 %v3723
        %v3728 = vpack.c.b16 %v3727, %v3726
        %3729 = vrot.lane.b32.xlu0 %v1895, 107
        %v3730 = vpop.permute.xlu0 %3729
        %3731 = vrot.lane.b32.xlu0 %v1896, 107
        %v3732 = vpop.permute.xlu0 %3731
        %3733 = vrot.lane.b32.xlu0 %v1897, 107
        %v3734 = vpop.permute.xlu0 %3733
        %v3735 = vsel %vm1741, %v3730, %v3732
        %v3736 = vsel %vm1741, %v3732, %v3734
        %v3741 = vsel %vm1939, %v3728, 0
        %3743 = vmatprep.subr.bf16.mxu0 %v3736
        %3744 = vmatpush1.bf16.msra.mxu0 %v3735
        %3745 = vmatprep.subr.bf16.mxu0 0
        %3746 = vmatpush1.bf16.msra.mxu0 0
        %3747 = vmatprep.subr.bf16.mxu0 0
        %3748 = vmatpush1.bf16.msra.mxu0 0
        %3749 = vmatprep.subr.bf16.mxu0 0
        %3750 = vmatpush1.bf16.msra.mxu0 0
        %3751 = vmatprep.subr.bf16.mxu0 0
        %3752 = vmatpush1.bf16.msra.mxu0 0
        %3753 = vmatprep.subr.bf16.mxu0 0
        %3754 = vmatpush1.bf16.msra.mxu0 0
        %3755 = vmatprep.subr.bf16.mxu0 0
        %3756 = vmatpush1.bf16.msra.mxu0 0
        %3757 = vmatprep.subr.bf16.mxu0 0
        %3758 = vmatpush1.bf16.msra.mxu0 0
        %3759 = vmatprep.subr.bf16.mxu0 0
        %3760 = vmatpush1.bf16.msra.mxu0 0
        %3761 = vmatprep.subr.bf16.mxu0 0
        %3762 = vmatpush1.bf16.msra.mxu0 0
        %3763 = vmatprep.subr.bf16.mxu0 0
        %3764 = vmatpush1.bf16.msra.mxu0 0
        %3765 = vmatprep.subr.bf16.mxu0 0
        %3766 = vmatpush1.bf16.msra.mxu0 0
        %3767 = vmatprep.subr.bf16.mxu0 0
        %3768 = vmatpush1.bf16.msra.mxu0 0
        %3769 = vmatprep.subr.bf16.mxu0 0
        %3770 = vmatpush1.bf16.msra.mxu0 0
        %3771 = vmatprep.subr.bf16.mxu0 0
        %3772 = vmatpush1.bf16.msra.mxu0 0
        %3773 = vmatprep.subr.bf16.mxu0 0
        %3774 = vmatpush1.bf16.msra.mxu0 0
        %3775 = vmatprep.mubr.bf16.mxu0 0
        %3776 = vmatmul.mubr.bf16.gmra.mrb[0].mxu0 %v3741
        %v3777 = vpop.f32.mrb[0].mxu0
        %v3778 = vadd.f32 0.0, %v3777
        %v3779 = vpop.f32.mrb[0].mxu0
        %v3780 = vadd.f32 0.0, %v3779
        %v3781 = vpop.f32.mrb[0].mxu0
        %v3782 = vadd.f32 0.0, %v3781
        %v3783 = vpop.f32.mrb[0].mxu0
        %v3784 = vadd.f32 0.0, %v3783
        %3785 = vdwg.mxu0
        %3786 = vmatprep.subr.bf16.mxu0 0
        %3787 = vmatpush1.bf16.msra.mxu0 %v3734
        %3788 = vmatprep.subr.bf16.mxu0 0
        %3789 = vmatpush1.bf16.msra.mxu0 0
        %3790 = vmatprep.subr.bf16.mxu0 0
        %3791 = vmatpush1.bf16.msra.mxu0 0
        %3792 = vmatprep.subr.bf16.mxu0 0
        %3793 = vmatpush1.bf16.msra.mxu0 0
        %3794 = vmatprep.subr.bf16.mxu0 0
        %3795 = vmatpush1.bf16.msra.mxu0 0
        %3796 = vmatprep.subr.bf16.mxu0 0
        %3797 = vmatpush1.bf16.msra.mxu0 0
        %3798 = vmatprep.subr.bf16.mxu0 0
        %3799 = vmatpush1.bf16.msra.mxu0 0
        %3800 = vmatprep.subr.bf16.mxu0 0
        %3801 = vmatpush1.bf16.msra.mxu0 0
        %3802 = vmatprep.subr.bf16.mxu0 0
        %3803 = vmatpush1.bf16.msra.mxu0 0
        %3804 = vmatprep.subr.bf16.mxu0 0
        %3805 = vmatpush1.bf16.msra.mxu0 0
        %3806 = vmatprep.subr.bf16.mxu0 0
        %3807 = vmatpush1.bf16.msra.mxu0 0
        %3808 = vmatprep.subr.bf16.mxu0 0
        %3809 = vmatpush1.bf16.msra.mxu0 0
        %3810 = vmatprep.subr.bf16.mxu0 0
        %3811 = vmatpush1.bf16.msra.mxu0 0
        %3812 = vmatprep.subr.bf16.mxu0 0
        %3813 = vmatpush1.bf16.msra.mxu0 0
        %3814 = vmatprep.subr.bf16.mxu0 0
        %3815 = vmatpush1.bf16.msra.mxu0 0
        %3816 = vmatprep.subr.bf16.mxu0 0
        %3817 = vmatpush1.bf16.msra.mxu0 0
        %3818 = vmatprep.mubr.bf16.mxu0 0
        %3819 = vmatmul.mubr.bf16.gmra.mrb[0].mxu0 %v3741
        %v3820 = vpop.f32.mrb[0].mxu0
        %v3821 = vadd.f32 0.0, %v3820
        %v3822 = vpop.f32.mrb[0].mxu0
        %v3823 = vpop.f32.mrb[0].mxu0
        %v3824 = vadd.f32 0.0, %v3823
        %v3825 = vpop.f32.mrb[0].mxu0
        %3826 = vdwg.mxu0
        %v3827 = vadd.f32 %v3715, %v3778
        %v3828 = vadd.f32 %v3716, %v3780
        %v3829 = vadd.f32 %v3717, %v3821
        %v3830 = vadd.f32 %v3718, %v3782
        %v3831 = vadd.f32 %v3719, %v3784
        %v3832 = vadd.f32 %v3720, %v3824
        %s3833 = scalar_lea.vmem [#allocation15], 64
        %v3834 = vld [vmem:[%s3833] sm:$0xf]
        %v3835 = vld [vmem:[%s3833 + $0x4] sm:$0xf]
        %v3838 = vunpack.c.l.b16 %v3834
        %v3839 = vunpack.c.l.b16 %v3835
        %v3840 = vpack.c.b16 %v3839, %v3838
        %3841 = vrot.lane.b32.xlu0 %v2950, 107
        %v3842 = vpop.permute.xlu0 %3841
        %3843 = vrot.lane.b32.xlu0 %v2951, 107
        %v3844 = vpop.permute.xlu0 %3843
        %3845 = vrot.lane.b32.xlu0 %v2952, 107
        %v3846 = vpop.permute.xlu0 %3845
        %v3847 = vsel %vm1741, %v3842, %v3844
        %v3848 = vsel %vm1741, %v3844, %v3846
        %v3853 = vsel %vm1939, %v3840, 0
        %3855 = vmatprep.subr.bf16.mxu0 %v3848
        %3856 = vmatpush1.bf16.msra.mxu0 %v3847
        %3857 = vmatprep.subr.bf16.mxu0 0
        %3858 = vmatpush1.bf16.msra.mxu0 0
        %3859 = vmatprep.subr.bf16.mxu0 0
        %3860 = vmatpush1.bf16.msra.mxu0 0
        %3861 = vmatprep.subr.bf16.mxu0 0
        %3862 = vmatpush1.bf16.msra.mxu0 0
        %3863 = vmatprep.subr.bf16.mxu0 0
        %3864 = vmatpush1.bf16.msra.mxu0 0
        %3865 = vmatprep.subr.bf16.mxu0 0
        %3866 = vmatpush1.bf16.msra.mxu0 0
        %3867 = vmatprep.subr.bf16.mxu0 0
        %3868 = vmatpush1.bf16.msra.mxu0 0
        %3869 = vmatprep.subr.bf16.mxu0 0
        %3870 = vmatpush1.bf16.msra.mxu0 0
        %3871 = vmatprep.subr.bf16.mxu0 0
        %3872 = vmatpush1.bf16.msra.mxu0 0
        %3873 = vmatprep.subr.bf16.mxu0 0
        %3874 = vmatpush1.bf16.msra.mxu0 0
        %3875 = vmatprep.subr.bf16.mxu0 0
        %3876 = vmatpush1.bf16.msra.mxu0 0
        %3877 = vmatprep.subr.bf16.mxu0 0
        %3878 = vmatpush1.bf16.msra.mxu0 0
        %3879 = vmatprep.subr.bf16.mxu0 0
        %3880 = vmatpush1.bf16.msra.mxu0 0
        %3881 = vmatprep.subr.bf16.mxu0 0
        %3882 = vmatpush1.bf16.msra.mxu0 0
        %3883 = vmatprep.subr.bf16.mxu0 0
        %3884 = vmatpush1.bf16.msra.mxu0 0
        %3885 = vmatprep.subr.bf16.mxu0 0
        %3886 = vmatpush1.bf16.msra.mxu0 0
        %3887 = vmatprep.mubr.bf16.mxu0 0
        %3888 = vmatmul.mubr.bf16.gmra.mrb[0].mxu0 %v3853
        %v3889 = vpop.f32.mrb[0].mxu0
        %v3890 = vadd.f32 0.0, %v3889
        %v3891 = vpop.f32.mrb[0].mxu0
        %v3892 = vadd.f32 0.0, %v3891
        %v3893 = vpop.f32.mrb[0].mxu0
        %v3894 = vadd.f32 0.0, %v3893
        %v3895 = vpop.f32.mrb[0].mxu0
        %v3896 = vadd.f32 0.0, %v3895
        %3897 = vdwg.mxu0
        %3898 = vmatprep.subr.bf16.mxu0 0
        %3899 = vmatpush1.bf16.msra.mxu0 %v3846
        %3900 = vmatprep.subr.bf16.mxu0 0
        %3901 = vmatpush1.bf16.msra.mxu0 0
        %3902 = vmatprep.subr.bf16.mxu0 0
        %3903 = vmatpush1.bf16.msra.mxu0 0
        %3904 = vmatprep.subr.bf16.mxu0 0
        %3905 = vmatpush1.bf16.msra.mxu0 0
        %3906 = vmatprep.subr.bf16.mxu0 0
        %3907 = vmatpush1.bf16.msra.mxu0 0
        %3908 = vmatprep.subr.bf16.mxu0 0
        %3909 = vmatpush1.bf16.msra.mxu0 0
        %3910 = vmatprep.subr.bf16.mxu0 0
        %3911 = vmatpush1.bf16.msra.mxu0 0
        %3912 = vmatprep.subr.bf16.mxu0 0
        %3913 = vmatpush1.bf16.msra.mxu0 0
        %3914 = vmatprep.subr.bf16.mxu0 0
        %3915 = vmatpush1.bf16.msra.mxu0 0
        %3916 = vmatprep.subr.bf16.mxu0 0
        %3917 = vmatpush1.bf16.msra.mxu0 0
        %3918 = vmatprep.subr.bf16.mxu0 0
        %3919 = vmatpush1.bf16.msra.mxu0 0
        %3920 = vmatprep.subr.bf16.mxu0 0
        %3921 = vmatpush1.bf16.msra.mxu0 0
        %3922 = vmatprep.subr.bf16.mxu0 0
        %3923 = vmatpush1.bf16.msra.mxu0 0
        %3924 = vmatprep.subr.bf16.mxu0 0
        %3925 = vmatpush1.bf16.msra.mxu0 0
        %3926 = vmatprep.subr.bf16.mxu0 0
        %3927 = vmatpush1.bf16.msra.mxu0 0
        %3928 = vmatprep.subr.bf16.mxu0 0
        %3929 = vmatpush1.bf16.msra.mxu0 0
        %3930 = vmatprep.mubr.bf16.mxu0 0
        %3931 = vmatmul.mubr.bf16.gmra.mrb[0].mxu0 %v3853
        %v3932 = vpop.f32.mrb[0].mxu0
        %v3933 = vadd.f32 0.0, %v3932
        %v3934 = vpop.f32.mrb[0].mxu0
        %v3935 = vpop.f32.mrb[0].mxu0
        %v3936 = vadd.f32 0.0, %v3935
        %v3937 = vpop.f32.mrb[0].mxu0
        %3938 = vdwg.mxu0
        %v3939 = vadd.f32 %v3827, %v3890
        %v3940 = vadd.f32 %v3828, %v3892
        %v3941 = vadd.f32 %v3829, %v3933
        %v3942 = vadd.f32 %v3830, %v3894
        %v3943 = vadd.f32 %v3831, %v3896
        %v3944 = vadd.f32 %v3832, %v3936
        %v3945 = vld [vmem:[#allocation17] sm:$0xff]
        %v3946 = vld [vmem:[#allocation17 + $0x8] sm:$0xff]
        %v3947 = vld [vmem:[#allocation18] sm:$0xff]
        %v3948 = vld [vmem:[#allocation18 + $0x8] sm:$0xff]
        %v3949 = vmul.f32 %v3939, %v1867
        %v3950 = vmul.f32 %v3940, %v1871
        %v3951 = vmul.f32 %v3941, %v1875
        %v3952 = vmul.f32 %v3942, %v1867
        %v3953 = vmul.f32 %v3943, %v1871
        %v3954 = vmul.f32 %v3944, %v1875
        %v3955 = vadd.f32 %v3949, %v3950
        %v3956 = vsel %vm1890, %v3951, 0.0
        %v3957 = vadd.f32 %v3955, %v3956
        %3958 = vadd.xlane.f32.xlu0 %v3957
        %v3959 = vpop.xlane.xlu0 %3958
        %v3960 = vadd.f32 %v3952, %v3953
        %v3961 = vsel %vm1890, %v3954, 0.0
        %v3962 = vadd.f32 %v3960, %v3961
        %3963 = vadd.xlane.f32.xlu0 %v3962
        %v3964 = vpop.xlane.xlu0 %3963
        %v3966 = vsel %vm1939, %v653, 0
        %v3969 = vsel %vm1939, %v654, 0
        %3971 = vmatprep.subr.mxu0 0.0
        %3972 = vmatpush1.msra.mxu0 %v3959
        %3973 = vmatprep.subr.mxu0 0.0
        %3974 = vmatpush1.msra.mxu0 %v3964
        %3975 = vmatprep.subr.mxu0 0.0
        %3976 = vmatpush1.msra.mxu0 0.0
        %3977 = vmatprep.subr.mxu0 0.0
        %3978 = vmatpush1.msra.mxu0 0.0
        %3979 = vmatprep.subr.mxu0 0.0
        %3980 = vmatpush1.msra.mxu0 0.0
        %3981 = vmatprep.subr.mxu0 0.0
        %3982 = vmatpush1.msra.mxu0 0.0
        %3983 = vmatprep.subr.mxu0 0.0
        %3984 = vmatpush1.msra.mxu0 0.0
        %3985 = vmatprep.subr.mxu0 0.0
        %3986 = vmatpush1.msra.mxu0 0.0
        %3987 = vmatprep.subr.mxu0 0.0
        %3988 = vmatpush1.msra.mxu0 0.0
        %3989 = vmatprep.subr.mxu0 0.0
        %3990 = vmatpush1.msra.mxu0 0.0
        %3991 = vmatprep.subr.mxu0 0.0
        %3992 = vmatpush1.msra.mxu0 0.0
        %3993 = vmatprep.subr.mxu0 0.0
        %3994 = vmatpush1.msra.mxu0 0.0
        %3995 = vmatprep.subr.mxu0 0.0
        %3996 = vmatpush1.msra.mxu0 0.0
        %3997 = vmatprep.subr.mxu0 0.0
        %3998 = vmatpush1.msra.mxu0 0.0
        %3999 = vmatprep.subr.mxu0 0.0
        %4000 = vmatpush1.msra.mxu0 0.0
        %4001 = vmatprep.subr.mxu0 0.0
        %4002 = vmatpush1.msra.mxu0 0.0
        %4003 = vmatprep.subr.mxu0 0.0
        %4004 = vmatpush1.msra.mxu0 0.0
        %4005 = vmatprep.subr.mxu0 0.0
        %4006 = vmatpush1.msra.mxu0 0.0
        %4007 = vmatprep.subr.mxu0 0.0
        %4008 = vmatpush1.msra.mxu0 0.0
        %4009 = vmatprep.subr.mxu0 0.0
        %4010 = vmatpush1.msra.mxu0 0.0
        %4011 = vmatprep.subr.mxu0 0.0
        %4012 = vmatpush1.msra.mxu0 0.0
        %4013 = vmatprep.subr.mxu0 0.0
        %4014 = vmatpush1.msra.mxu0 0.0
        %4015 = vmatprep.subr.mxu0 0.0
        %4016 = vmatpush1.msra.mxu0 0.0
        %4017 = vmatprep.subr.mxu0 0.0
        %4018 = vmatpush1.msra.mxu0 0.0
        %4019 = vmatprep.subr.mxu0 0.0
        %4020 = vmatpush1.msra.mxu0 0.0
        %4021 = vmatprep.subr.mxu0 0.0
        %4022 = vmatpush1.msra.mxu0 0.0
        %4023 = vmatprep.subr.mxu0 0.0
        %4024 = vmatpush1.msra.mxu0 0.0
        %4025 = vmatprep.subr.mxu0 0.0
        %4026 = vmatpush1.msra.mxu0 0.0
        %4027 = vmatprep.subr.mxu0 0.0
        %4028 = vmatpush1.msra.mxu0 0.0
        %4029 = vmatprep.subr.mxu0 0.0
        %4030 = vmatpush1.msra.mxu0 0.0
        %4031 = vmatprep.subr.mxu0 0.0
        %4032 = vmatpush1.msra.mxu0 0.0
        %4033 = vmatprep.subr.mxu0 0.0
        %4034 = vmatpush1.msra.mxu0 0.0
        %4035 = vmatprep.mubr.f32.mxu0 0.0
        %4036 = vmatmul.mubr.f32.gmra.mrb[0].mxu0 %v3966
        %v4037 = vpop.f32.mrb[0].mxu0
        %v4038 = vadd.f32 0.0, %v4037
        %v4039 = vpop.f32.mrb[0].mxu0
        %4040 = vmatprep.mubr.f32.mxu0 0.0
        %4041 = vmatmul.mubr.f32.gmra.mrb[0].mxu0 %v3969
        %v4042 = vpop.f32.mrb[0].mxu0
        %v4043 = vadd.f32 0.0, %v4042
        %v4044 = vpop.f32.mrb[0].mxu0
        %4045 = vdwg.mxu0
        %v4046 = vmul.f32 %v3949, %v3949
        %v4047 = vmul.f32 %v3950, %v3950
        %v4048 = vmul.f32 %v3951, %v3951
        %v4049 = vmul.f32 %v3952, %v3952
        %v4050 = vmul.f32 %v3953, %v3953
        %v4051 = vmul.f32 %v3954, %v3954
        %v4052 = vadd.f32 %v4046, %v4047
        %v4053 = vsel %vm1890, %v4048, 0.0
        %v4054 = vadd.f32 %v4052, %v4053
        %4055 = vadd.xlane.f32.xlu0 %v4054
        %v4056 = vpop.xlane.xlu0 %4055
        %v4057 = vadd.f32 %v4049, %v4050
        %v4058 = vsel %vm1890, %v4051, 0.0
        %v4059 = vadd.f32 %v4057, %v4058
        %4060 = vadd.xlane.f32.xlu0 %v4059
        %v4061 = vpop.xlane.xlu0 %4060
        %4062 = vmatprep.subr.mxu0 0.0
        %4063 = vmatpush1.msra.mxu0 %v4056
        %4064 = vmatprep.subr.mxu0 0.0
        %4065 = vmatpush1.msra.mxu0 %v4061
        %4066 = vmatprep.subr.mxu0 0.0
        %4067 = vmatpush1.msra.mxu0 0.0
        %4068 = vmatprep.subr.mxu0 0.0
        %4069 = vmatpush1.msra.mxu0 0.0
        %4070 = vmatprep.subr.mxu0 0.0
        %4071 = vmatpush1.msra.mxu0 0.0
        %4072 = vmatprep.subr.mxu0 0.0
        %4073 = vmatpush1.msra.mxu0 0.0
        %4074 = vmatprep.subr.mxu0 0.0
        %4075 = vmatpush1.msra.mxu0 0.0
        %4076 = vmatprep.subr.mxu0 0.0
        %4077 = vmatpush1.msra.mxu0 0.0
        %4078 = vmatprep.subr.mxu0 0.0
        %4079 = vmatpush1.msra.mxu0 0.0
        %4080 = vmatprep.subr.mxu0 0.0
        %4081 = vmatpush1.msra.mxu0 0.0
        %4082 = vmatprep.subr.mxu0 0.0
        %4083 = vmatpush1.msra.mxu0 0.0
        %4084 = vmatprep.subr.mxu0 0.0
        %4085 = vmatpush1.msra.mxu0 0.0
        %4086 = vmatprep.subr.mxu0 0.0
        %4087 = vmatpush1.msra.mxu0 0.0
        %4088 = vmatprep.subr.mxu0 0.0
        %4089 = vmatpush1.msra.mxu0 0.0
        %4090 = vmatprep.subr.mxu0 0.0
        %4091 = vmatpush1.msra.mxu0 0.0
        %4092 = vmatprep.subr.mxu0 0.0
        %4093 = vmatpush1.msra.mxu0 0.0
        %4094 = vmatprep.subr.mxu0 0.0
        %4095 = vmatpush1.msra.mxu0 0.0
        %4096 = vmatprep.subr.mxu0 0.0
        %4097 = vmatpush1.msra.mxu0 0.0
        %4098 = vmatprep.subr.mxu0 0.0
        %4099 = vmatpush1.msra.mxu0 0.0
        %4100 = vmatprep.subr.mxu0 0.0
        %4101 = vmatpush1.msra.mxu0 0.0
        %4102 = vmatprep.subr.mxu0 0.0
        %4103 = vmatpush1.msra.mxu0 0.0
        %4104 = vmatprep.subr.mxu0 0.0
        %4105 = vmatpush1.msra.mxu0 0.0
        %4106 = vmatprep.subr.mxu0 0.0
        %4107 = vmatpush1.msra.mxu0 0.0
        %4108 = vmatprep.subr.mxu0 0.0
        %4109 = vmatpush1.msra.mxu0 0.0
        %4110 = vmatprep.subr.mxu0 0.0
        %4111 = vmatpush1.msra.mxu0 0.0
        %4112 = vmatprep.subr.mxu0 0.0
        %4113 = vmatpush1.msra.mxu0 0.0
        %4114 = vmatprep.subr.mxu0 0.0
        %4115 = vmatpush1.msra.mxu0 0.0
        %4116 = vmatprep.subr.mxu0 0.0
        %4117 = vmatpush1.msra.mxu0 0.0
        %4118 = vmatprep.subr.mxu0 0.0
        %4119 = vmatpush1.msra.mxu0 0.0
        %4120 = vmatprep.subr.mxu0 0.0
        %4121 = vmatpush1.msra.mxu0 0.0
        %4122 = vmatprep.subr.mxu0 0.0
        %4123 = vmatpush1.msra.mxu0 0.0
        %4124 = vmatprep.subr.mxu0 0.0
        %4125 = vmatpush1.msra.mxu0 0.0
        %4126 = vmatprep.mubr.f32.mxu0 0.0
        %4127 = vmatmul.mubr.f32.gmra.mrb[0].mxu0 %v3966
        %v4128 = vpop.f32.mrb[0].mxu0
        %v4129 = vadd.f32 0.0, %v4128
        %v4130 = vpop.f32.mrb[0].mxu0
        %4131 = vmatprep.mubr.f32.mxu0 0.0
        %4132 = vmatmul.mubr.f32.gmra.mrb[0].mxu0 %v3969
        %v4133 = vpop.f32.mrb[0].mxu0
        %v4134 = vadd.f32 0.0, %v4133
        %v4135 = vpop.f32.mrb[0].mxu0
        %4136 = vdwg.mxu0
        %v4137 = vmul.f32 %v4038, 0.001953125
        %v4138 = vmul.f32 %v4043, 0.001953125
        %v4139 = vmul.f32 %v4129, 0.001953125
        %v4140 = vmul.f32 %v4134, 0.001953125
        %v4141 = vmul.f32 %v4137, %v4137
        %v4142 = vmul.f32 %v4138, %v4138
        %v4143 = vsub.f32 %v4139, %v4141
        %v4144 = vsub.f32 %v4140, %v4142
        %v4145 = vmax.f32 %v4143, 0.0
        %v4146 = vmax.f32 %v4144, 0.0
        %4148 = vset.pattern.permute.xlu0 0
        %4149 = vperm.xlu0 %4148, %v4137
        %v4150 = vpop.permute.xlu0 %4149
        %4153 = vset.pattern.permute.xlu0 0
        %4154 = vperm.xlu0 %4153, %v4138
        %v4155 = vpop.permute.xlu0 %4154
        %v4157 = vsub.f32 %v3939, %v4150
        %v4158 = vsub.f32 %v3940, %v4150
        %v4159 = vsub.f32 %v3941, %v4150
        %v4160 = vsub.f32 %v3942, %v4155
        %v4161 = vsub.f32 %v3943, %v4155
        %v4162 = vsub.f32 %v3944, %v4155
        %v4163 = vadd.f32 %v4145, 1e-05
        %v4164 = vadd.f32 %v4146, 1e-05
        %v4165 = vrsqrt.pop %v4163
        %v4166 = vrsqrt.pop %v4164
        %4168 = vset.pattern.permute.xlu0 0
        %4169 = vperm.xlu0 %4168, %v4165
        %v4170 = vpop.permute.xlu0 %4169
        %4173 = vset.pattern.permute.xlu0 0
        %4174 = vperm.xlu0 %4173, %v4166
        %v4175 = vpop.permute.xlu0 %4174
        %v4177 = vmul.f32 %v4157, %v4170
        %v4178 = vmul.f32 %v4158, %v4170
        %v4179 = vmul.f32 %v4159, %v4170
        %v4180 = vmul.f32 %v4160, %v4175
        %v4181 = vmul.f32 %v4161, %v4175
        %v4182 = vmul.f32 %v4162, %v4175
        %4184 = vset.pattern.permute.xlu0 0
        %4185 = vperm.xlu0 %4184, %v3945
        %v4186 = vpop.permute.xlu0 %4185
        %4189 = vset.pattern.permute.xlu0 0
        %4190 = vperm.xlu0 %4189, %v3946
        %v4191 = vpop.permute.xlu0 %4190
        %v4193 = vmul.f32 %v4177, %v4186
        %v4194 = vmul.f32 %v4178, %v4186
        %v4195 = vmul.f32 %v4179, %v4186
        %v4196 = vmul.f32 %v4180, %v4191
        %v4197 = vmul.f32 %v4181, %v4191
        %v4198 = vmul.f32 %v4182, %v4191
        %4200 = vset.pattern.permute.xlu0 0
        %4201 = vperm.xlu0 %4200, %v3947
        %v4202 = vpop.permute.xlu0 %4201
        %4205 = vset.pattern.permute.xlu0 0
        %4206 = vperm.xlu0 %4205, %v3948
        %v4207 = vpop.permute.xlu0 %4206
        %v4209 = vadd.f32 %v4193, %v4202
        %v4210 = vadd.f32 %v4194, %v4202
        %v4211 = vadd.f32 %v4195, %v4202
        %v4212 = vadd.f32 %v4196, %v4207
        %v4213 = vadd.f32 %v4197, %v4207
        %v4214 = vadd.f32 %v4198, %v4207
        %vm4215 = vcmp.ge.f32.partialorder %v4209, 0.0
        %vm4216 = vcmp.ge.f32.partialorder %v4210, 0.0
        %vm4217 = vcmp.ge.f32.partialorder %v4211, 0.0
        %vm4218 = vcmp.ge.f32.partialorder %v4212, 0.0
        %vm4219 = vcmp.ge.f32.partialorder %v4213, 0.0
        %vm4220 = vcmp.ge.f32.partialorder %v4214, 0.0
        %v4221 = vmul.f32 %v4209, 0.2
        %v4222 = vmul.f32 %v4210, 0.2
        %v4223 = vmul.f32 %v4211, 0.2
        %v4224 = vmul.f32 %v4212, 0.2
        %v4225 = vmul.f32 %v4213, 0.2
        %v4226 = vmul.f32 %v4214, 0.2
        %v4227 = vsel %vm4215, %v4209, %v4221
        %v4228 = vsel %vm4216, %v4210, %v4222
        %v4229 = vsel %vm4217, %v4211, %v4223
        %v4230 = vsel %vm4218, %v4212, %v4224
        %v4231 = vsel %vm4219, %v4213, %v4225
        %v4232 = vsel %vm4220, %v4214, %v4226
        %v4233 = vmul.f32 %v4227, %v1867
        %v4234 = vmul.f32 %v4228, %v1871
        %v4235 = vmul.f32 %v4229, %v1875
        %v4236 = vmul.f32 %v4230, %v1867
        %v4237 = vmul.f32 %v4231, %v1871
        %v4238 = vmul.f32 %v4232, %v1875
        %v4239 = vpack.c.bf16 %v4236, %v4233
        %v4240 = vpack.c.bf16 %v4237, %v4234
        %v4241 = vpack.c.bf16 %v4238, %v4235
        %4242 = vst [vmem:[#allocation3 + $0x8] sm:$0xff] %v4239
        %4243 = vst [vmem:[#allocation3 + $0x10] sm:$0xff] %v4240
        %4244 = vst.msk [vmem:[#allocation3 + $0x18] sm:$0xff] %vm1890, %v4241
        %v4245 = vld [vmem:[#allocation20] sm:$0xf]
        %v4246 = vld [vmem:[#allocation20 + $0x4] sm:$0xf]
        %v4247 = vld [vmem:[#allocation3] sm:$0xff]
        %v4248 = vld [vmem:[#allocation3 + $0x8] sm:$0xff]
        %v4249 = vld [vmem:[#allocation3 + $0x10] sm:$0xff]
        %v4250 = vld [vmem:[#allocation3 + $0x18] sm:$0xff]
        %s4251 = scalar_lea.vmem [#allocation20], 8
        %v4252 = vld [vmem:[%s4251] sm:$0xf]
        %v4253 = vld [vmem:[%s4251 + $0x4] sm:$0xf]
        %v4256 = vunpack.c.l.b16 %v4252
        %v4257 = vunpack.c.l.b16 %v4253
        %v4258 = vpack.c.b16 %v4257, %v4256
        %4263 = vrot.lane.b32.xlu0 %v4247, 20
        %v4264 = vpop.permute.xlu0 %4263
        %4265 = vrot.lane.b32.xlu0 %v4248, 20
        %v4266 = vpop.permute.xlu0 %4265
        %4267 = vrot.lane.b32.xlu0 %v4249, 20
        %v4268 = vpop.permute.xlu0 %4267
        %4269 = vrot.lane.b32.xlu0 %v4250, 20
        %v4270 = vpop.permute.xlu0 %4269
        %v4271 = vsel %vm726, %v4264, %v4266
        %v4272 = vsel %vm726, %v4266, %v4268
        %v4273 = vsel %vm726, %v4268, %v4270
        %v4278 = vsel %vm1939, %v4258, 0
        %4280 = vmatprep.subr.bf16.mxu0 %v4272
        %4281 = vmatpush1.bf16.msra.mxu0 %v4271
        %4282 = vmatprep.subr.bf16.mxu0 0
        %4283 = vmatpush1.bf16.msra.mxu0 0
        %4284 = vmatprep.subr.bf16.mxu0 0
        %4285 = vmatpush1.bf16.msra.mxu0 0
        %4286 = vmatprep.subr.bf16.mxu0 0
        %4287 = vmatpush1.bf16.msra.mxu0 0
        %4288 = vmatprep.subr.bf16.mxu0 0
        %4289 = vmatpush1.bf16.msra.mxu0 0
        %4290 = vmatprep.subr.bf16.mxu0 0
        %4291 = vmatpush1.bf16.msra.mxu0 0
        %4292 = vmatprep.subr.bf16.mxu0 0
        %4293 = vmatpush1.bf16.msra.mxu0 0
        %4294 = vmatprep.subr.bf16.mxu0 0
        %4295 = vmatpush1.bf16.msra.mxu0 0
        %4296 = vmatprep.subr.bf16.mxu0 0
        %4297 = vmatpush1.bf16.msra.mxu0 0
        %4298 = vmatprep.subr.bf16.mxu0 0
        %4299 = vmatpush1.bf16.msra.mxu0 0
        %4300 = vmatprep.subr.bf16.mxu0 0
        %4301 = vmatpush1.bf16.msra.mxu0 0
        %4302 = vmatprep.subr.bf16.mxu0 0
        %4303 = vmatpush1.bf16.msra.mxu0 0
        %4304 = vmatprep.subr.bf16.mxu0 0
        %4305 = vmatpush1.bf16.msra.mxu0 0
        %4306 = vmatprep.subr.bf16.mxu0 0
        %4307 = vmatpush1.bf16.msra.mxu0 0
        %4308 = vmatprep.subr.bf16.mxu0 0
        %4309 = vmatpush1.bf16.msra.mxu0 0
        %4310 = vmatprep.subr.bf16.mxu0 0
        %4311 = vmatpush1.bf16.msra.mxu0 0
        %4312 = vmatprep.mubr.bf16.mxu0 0
        %4313 = vmatmul.mubr.bf16.gmra.mrb[0].mxu0 %v4278
        %v4314 = vpop.f32.mrb[0].mxu0
        %v4315 = vadd.f32 0.0, %v4314
        %v4316 = vpop.f32.mrb[0].mxu0
        %v4317 = vadd.f32 0.0, %v4316
        %v4318 = vpop.f32.mrb[0].mxu0
        %v4319 = vadd.f32 0.0, %v4318
        %v4320 = vpop.f32.mrb[0].mxu0
        %v4321 = vadd.f32 0.0, %v4320
        %4322 = vdwg.mxu0
        %4323 = vmatprep.subr.bf16.mxu0 0
        %4324 = vmatpush1.bf16.msra.mxu0 %v4273
        %4325 = vmatprep.subr.bf16.mxu0 0
        %4326 = vmatpush1.bf16.msra.mxu0 0
        %4327 = vmatprep.subr.bf16.mxu0 0
        %4328 = vmatpush1.bf16.msra.mxu0 0
        %4329 = vmatprep.subr.bf16.mxu0 0
        %4330 = vmatpush1.bf16.msra.mxu0 0
        %4331 = vmatprep.subr.bf16.mxu0 0
        %4332 = vmatpush1.bf16.msra.mxu0 0
        %4333 = vmatprep.subr.bf16.mxu0 0
        %4334 = vmatpush1.bf16.msra.mxu0 0
        %4335 = vmatprep.subr.bf16.mxu0 0
        %4336 = vmatpush1.bf16.msra.mxu0 0
        %4337 = vmatprep.subr.bf16.mxu0 0
        %4338 = vmatpush1.bf16.msra.mxu0 0
        %4339 = vmatprep.subr.bf16.mxu0 0
        %4340 = vmatpush1.bf16.msra.mxu0 0
        %4341 = vmatprep.subr.bf16.mxu0 0
        %4342 = vmatpush1.bf16.msra.mxu0 0
        %4343 = vmatprep.subr.bf16.mxu0 0
        %4344 = vmatpush1.bf16.msra.mxu0 0
        %4345 = vmatprep.subr.bf16.mxu0 0
        %4346 = vmatpush1.bf16.msra.mxu0 0
        %4347 = vmatprep.subr.bf16.mxu0 0
        %4348 = vmatpush1.bf16.msra.mxu0 0
        %4349 = vmatprep.subr.bf16.mxu0 0
        %4350 = vmatpush1.bf16.msra.mxu0 0
        %4351 = vmatprep.subr.bf16.mxu0 0
        %4352 = vmatpush1.bf16.msra.mxu0 0
        %4353 = vmatprep.subr.bf16.mxu0 0
        %4354 = vmatpush1.bf16.msra.mxu0 0
        %4355 = vmatprep.mubr.bf16.mxu0 0
        %4356 = vmatmul.mubr.bf16.gmra.mrb[0].mxu0 %v4278
        %v4357 = vpop.f32.mrb[0].mxu0
        %v4358 = vadd.f32 0.0, %v4357
        %v4359 = vpop.f32.mrb[0].mxu0
        %v4360 = vpop.f32.mrb[0].mxu0
        %v4361 = vadd.f32 0.0, %v4360
        %v4362 = vpop.f32.mrb[0].mxu0
        %4363 = vdwg.mxu0
        %v4366 = vunpack.c.l.b16 %v4245
        %v4367 = vunpack.c.l.b16 %v4246
        %v4368 = vpack.c.b16 %v4367, %v4366
        %4369 = vrot.lane.b32.xlu0 %v4247, 21
        %v4370 = vpop.permute.xlu0 %4369
        %4371 = vrot.lane.b32.xlu0 %v4248, 21
        %v4372 = vpop.permute.xlu0 %4371
        %4373 = vrot.lane.b32.xlu0 %v4249, 21
        %v4374 = vpop.permute.xlu0 %4373
        %4375 = vrot.lane.b32.xlu0 %v4250, 21
        %v4376 = vpop.permute.xlu0 %4375
        %v4377 = vsel %vm848, %v4370, %v4372
        %v4378 = vsel %vm848, %v4372, %v4374
        %v4379 = vsel %vm848, %v4374, %v4376
        %v4384 = vsel %vm1939, %v4368, 0
        %4386 = vmatprep.subr.bf16.mxu0 %v4378
        %4387 = vmatpush1.bf16.msra.mxu0 %v4377
        %4388 = vmatprep.subr.bf16.mxu0 0
        %4389 = vmatpush1.bf16.msra.mxu0 0
        %4390 = vmatprep.subr.bf16.mxu0 0
        %4391 = vmatpush1.bf16.msra.mxu0 0
        %4392 = vmatprep.subr.bf16.mxu0 0
        %4393 = vmatpush1.bf16.msra.mxu0 0
        %4394 = vmatprep.subr.bf16.mxu0 0
        %4395 = vmatpush1.bf16.msra.mxu0 0
        %4396 = vmatprep.subr.bf16.mxu0 0
        %4397 = vmatpush1.bf16.msra.mxu0 0
        %4398 = vmatprep.subr.bf16.mxu0 0
        %4399 = vmatpush1.bf16.msra.mxu0 0
        %4400 = vmatprep.subr.bf16.mxu0 0
        %4401 = vmatpush1.bf16.msra.mxu0 0
        %4402 = vmatprep.subr.bf16.mxu0 0
        %4403 = vmatpush1.bf16.msra.mxu0 0
        %4404 = vmatprep.subr.bf16.mxu0 0
        %4405 = vmatpush1.bf16.msra.mxu0 0
        %4406 = vmatprep.subr.bf16.mxu0 0
        %4407 = vmatpush1.bf16.msra.mxu0 0
        %4408 = vmatprep.subr.bf16.mxu0 0
        %4409 = vmatpush1.bf16.msra.mxu0 0
        %4410 = vmatprep.subr.bf16.mxu0 0
        %4411 = vmatpush1.bf16.msra.mxu0 0
        %4412 = vmatprep.subr.bf16.mxu0 0
        %4413 = vmatpush1.bf16.msra.mxu0 0
        %4414 = vmatprep.subr.bf16.mxu0 0
        %4415 = vmatpush1.bf16.msra.mxu0 0
        %4416 = vmatprep.subr.bf16.mxu0 0
        %4417 = vmatpush1.bf16.msra.mxu0 0
        %4418 = vmatprep.mubr.bf16.mxu0 0
        %4419 = vmatmul.mubr.bf16.gmra.mrb[0].mxu0 %v4384
        %v4420 = vpop.f32.mrb[0].mxu0
        %v4421 = vadd.f32 %v4315, %v4420
        %v4422 = vpop.f32.mrb[0].mxu0
        %v4423 = vadd.f32 %v4317, %v4422
        %v4424 = vpop.f32.mrb[0].mxu0
        %v4425 = vadd.f32 %v4319, %v4424
        %v4426 = vpop.f32.mrb[0].mxu0
        %v4427 = vadd.f32 %v4321, %v4426
        %4428 = vdwg.mxu0
        %4429 = vmatprep.subr.bf16.mxu0 0
        %4430 = vmatpush1.bf16.msra.mxu0 %v4379
        %4431 = vmatprep.subr.bf16.mxu0 0
        %4432 = vmatpush1.bf16.msra.mxu0 0
        %4433 = vmatprep.subr.bf16.mxu0 0
        %4434 = vmatpush1.bf16.msra.mxu0 0
        %4435 = vmatprep.subr.bf16.mxu0 0
        %4436 = vmatpush1.bf16.msra.mxu0 0
        %4437 = vmatprep.subr.bf16.mxu0 0
        %4438 = vmatpush1.bf16.msra.mxu0 0
        %4439 = vmatprep.subr.bf16.mxu0 0
        %4440 = vmatpush1.bf16.msra.mxu0 0
        %4441 = vmatprep.subr.bf16.mxu0 0
        %4442 = vmatpush1.bf16.msra.mxu0 0
        %4443 = vmatprep.subr.bf16.mxu0 0
        %4444 = vmatpush1.bf16.msra.mxu0 0
        %4445 = vmatprep.subr.bf16.mxu0 0
        %4446 = vmatpush1.bf16.msra.mxu0 0
        %4447 = vmatprep.subr.bf16.mxu0 0
        %4448 = vmatpush1.bf16.msra.mxu0 0
        %4449 = vmatprep.subr.bf16.mxu0 0
        %4450 = vmatpush1.bf16.msra.mxu0 0
        %4451 = vmatprep.subr.bf16.mxu0 0
        %4452 = vmatpush1.bf16.msra.mxu0 0
        %4453 = vmatprep.subr.bf16.mxu0 0
        %4454 = vmatpush1.bf16.msra.mxu0 0
        %4455 = vmatprep.subr.bf16.mxu0 0
        %4456 = vmatpush1.bf16.msra.mxu0 0
        %4457 = vmatprep.subr.bf16.mxu0 0
        %4458 = vmatpush1.bf16.msra.mxu0 0
        %4459 = vmatprep.subr.bf16.mxu0 0
        %4460 = vmatpush1.bf16.msra.mxu0 0
        %4461 = vmatprep.mubr.bf16.mxu0 0
        %4462 = vmatmul.mubr.bf16.gmra.mrb[0].mxu0 %v4384
        %v4463 = vpop.f32.mrb[0].mxu0
        %v4464 = vadd.f32 %v4358, %v4463
        %v4465 = vpop.f32.mrb[0].mxu0
        %v4466 = vpop.f32.mrb[0].mxu0
        %v4467 = vadd.f32 %v4361, %v4466
        %v4468 = vpop.f32.mrb[0].mxu0
        %4469 = vdwg.mxu0
        %s4470 = scalar_lea.vmem [#allocation20], 16
        %v4471 = vld [vmem:[%s4470] sm:$0xf]
        %v4472 = vld [vmem:[%s4470 + $0x4] sm:$0xf]
        %v4475 = vunpack.c.l.b16 %v4471
        %v4476 = vunpack.c.l.b16 %v4472
        %v4477 = vpack.c.b16 %v4476, %v4475
        %4478 = vrot.lane.b32.xlu0 %v4247, 19
        %v4479 = vpop.permute.xlu0 %4478
        %4480 = vrot.lane.b32.xlu0 %v4248, 19
        %v4481 = vpop.permute.xlu0 %4480
        %4482 = vrot.lane.b32.xlu0 %v4249, 19
        %v4483 = vpop.permute.xlu0 %4482
        %4484 = vrot.lane.b32.xlu0 %v4250, 19
        %v4485 = vpop.permute.xlu0 %4484
        %v4486 = vsel %vm972, %v4479, %v4481
        %v4487 = vsel %vm972, %v4481, %v4483
        %v4488 = vsel %vm972, %v4483, %v4485
        %v4493 = vsel %vm1939, %v4477, 0
        %4495 = vmatprep.subr.bf16.mxu0 %v4487
        %4496 = vmatpush1.bf16.msra.mxu0 %v4486
        %4497 = vmatprep.subr.bf16.mxu0 0
        %4498 = vmatpush1.bf16.msra.mxu0 0
        %4499 = vmatprep.subr.bf16.mxu0 0
        %4500 = vmatpush1.bf16.msra.mxu0 0
        %4501 = vmatprep.subr.bf16.mxu0 0
        %4502 = vmatpush1.bf16.msra.mxu0 0
        %4503 = vmatprep.subr.bf16.mxu0 0
        %4504 = vmatpush1.bf16.msra.mxu0 0
        %4505 = vmatprep.subr.bf16.mxu0 0
        %4506 = vmatpush1.bf16.msra.mxu0 0
        %4507 = vmatprep.subr.bf16.mxu0 0
        %4508 = vmatpush1.bf16.msra.mxu0 0
        %4509 = vmatprep.subr.bf16.mxu0 0
        %4510 = vmatpush1.bf16.msra.mxu0 0
        %4511 = vmatprep.subr.bf16.mxu0 0
        %4512 = vmatpush1.bf16.msra.mxu0 0
        %4513 = vmatprep.subr.bf16.mxu0 0
        %4514 = vmatpush1.bf16.msra.mxu0 0
        %4515 = vmatprep.subr.bf16.mxu0 0
        %4516 = vmatpush1.bf16.msra.mxu0 0
        %4517 = vmatprep.subr.bf16.mxu0 0
        %4518 = vmatpush1.bf16.msra.mxu0 0
        %4519 = vmatprep.subr.bf16.mxu0 0
        %4520 = vmatpush1.bf16.msra.mxu0 0
        %4521 = vmatprep.subr.bf16.mxu0 0
        %4522 = vmatpush1.bf16.msra.mxu0 0
        %4523 = vmatprep.subr.bf16.mxu0 0
        %4524 = vmatpush1.bf16.msra.mxu0 0
        %4525 = vmatprep.subr.bf16.mxu0 0
        %4526 = vmatpush1.bf16.msra.mxu0 0
        %4527 = vmatprep.mubr.bf16.mxu0 0
        %4528 = vmatmul.mubr.bf16.gmra.mrb[0].mxu0 %v4493
        %v4529 = vpop.f32.mrb[0].mxu0
        %v4530 = vadd.f32 0.0, %v4529
        %v4531 = vpop.f32.mrb[0].mxu0
        %v4532 = vadd.f32 0.0, %v4531
        %v4533 = vpop.f32.mrb[0].mxu0
        %v4534 = vadd.f32 0.0, %v4533
        %v4535 = vpop.f32.mrb[0].mxu0
        %v4536 = vadd.f32 0.0, %v4535
        %4537 = vdwg.mxu0
        %4538 = vmatprep.subr.bf16.mxu0 0
        %4539 = vmatpush1.bf16.msra.mxu0 %v4488
        %4540 = vmatprep.subr.bf16.mxu0 0
        %4541 = vmatpush1.bf16.msra.mxu0 0
        %4542 = vmatprep.subr.bf16.mxu0 0
        %4543 = vmatpush1.bf16.msra.mxu0 0
        %4544 = vmatprep.subr.bf16.mxu0 0
        %4545 = vmatpush1.bf16.msra.mxu0 0
        %4546 = vmatprep.subr.bf16.mxu0 0
        %4547 = vmatpush1.bf16.msra.mxu0 0
        %4548 = vmatprep.subr.bf16.mxu0 0
        %4549 = vmatpush1.bf16.msra.mxu0 0
        %4550 = vmatprep.subr.bf16.mxu0 0
        %4551 = vmatpush1.bf16.msra.mxu0 0
        %4552 = vmatprep.subr.bf16.mxu0 0
        %4553 = vmatpush1.bf16.msra.mxu0 0
        %4554 = vmatprep.subr.bf16.mxu0 0
        %4555 = vmatpush1.bf16.msra.mxu0 0
        %4556 = vmatprep.subr.bf16.mxu0 0
        %4557 = vmatpush1.bf16.msra.mxu0 0
        %4558 = vmatprep.subr.bf16.mxu0 0
        %4559 = vmatpush1.bf16.msra.mxu0 0
        %4560 = vmatprep.subr.bf16.mxu0 0
        %4561 = vmatpush1.bf16.msra.mxu0 0
        %4562 = vmatprep.subr.bf16.mxu0 0
        %4563 = vmatpush1.bf16.msra.mxu0 0
        %4564 = vmatprep.subr.bf16.mxu0 0
        %4565 = vmatpush1.bf16.msra.mxu0 0
        %4566 = vmatprep.subr.bf16.mxu0 0
        %4567 = vmatpush1.bf16.msra.mxu0 0
        %4568 = vmatprep.subr.bf16.mxu0 0
        %4569 = vmatpush1.bf16.msra.mxu0 0
        %4570 = vmatprep.mubr.bf16.mxu0 0
        %4571 = vmatmul.mubr.bf16.gmra.mrb[0].mxu0 %v4493
        %v4572 = vpop.f32.mrb[0].mxu0
        %v4573 = vadd.f32 0.0, %v4572
        %v4574 = vpop.f32.mrb[0].mxu0
        %v4575 = vpop.f32.mrb[0].mxu0
        %v4576 = vadd.f32 0.0, %v4575
        %v4577 = vpop.f32.mrb[0].mxu0
        %4578 = vdwg.mxu0
        %v4579 = vadd.f32 %v4421, %v4530
        %v4580 = vadd.f32 %v4423, %v4532
        %v4581 = vadd.f32 %v4464, %v4573
        %v4582 = vadd.f32 %v4425, %v4534
        %v4583 = vadd.f32 %v4427, %v4536
        %v4584 = vadd.f32 %v4467, %v4576
        %s4585 = scalar_lea.vmem [#allocation20], 24
        %v4586 = vld [vmem:[%s4585] sm:$0xf]
        %v4587 = vld [vmem:[%s4585 + $0x4] sm:$0xf]
        %v4590 = vunpack.c.l.b16 %v4586
        %v4591 = vunpack.c.l.b16 %v4587
        %v4592 = vpack.c.b16 %v4591, %v4590
        %4593 = vrot.lane.b32.xlu0 %v4247, 1
        %v4594 = vpop.permute.xlu0 %4593
        %4595 = vrot.lane.b32.xlu0 %v4248, 1
        %v4596 = vpop.permute.xlu0 %4595
        %4597 = vrot.lane.b32.xlu0 %v4249, 1
        %v4598 = vpop.permute.xlu0 %4597
        %4599 = vrot.lane.b32.xlu0 %v4250, 1
        %v4600 = vpop.permute.xlu0 %4599
        %v4601 = vsel %vm1102, %v4594, %v4596
        %v4602 = vsel %vm1102, %v4596, %v4598
        %v4603 = vsel %vm1102, %v4598, %v4600
        %v4608 = vsel %vm1939, %v4592, 0
        %4610 = vmatprep.subr.bf16.mxu0 %v4602
        %4611 = vmatpush1.bf16.msra.mxu0 %v4601
        %4612 = vmatprep.subr.bf16.mxu0 0
        %4613 = vmatpush1.bf16.msra.mxu0 0
        %4614 = vmatprep.subr.bf16.mxu0 0
        %4615 = vmatpush1.bf16.msra.mxu0 0
        %4616 = vmatprep.subr.bf16.mxu0 0
        %4617 = vmatpush1.bf16.msra.mxu0 0
        %4618 = vmatprep.subr.bf16.mxu0 0
        %4619 = vmatpush1.bf16.msra.mxu0 0
        %4620 = vmatprep.subr.bf16.mxu0 0
        %4621 = vmatpush1.bf16.msra.mxu0 0
        %4622 = vmatprep.subr.bf16.mxu0 0
        %4623 = vmatpush1.bf16.msra.mxu0 0
        %4624 = vmatprep.subr.bf16.mxu0 0
        %4625 = vmatpush1.bf16.msra.mxu0 0
        %4626 = vmatprep.subr.bf16.mxu0 0
        %4627 = vmatpush1.bf16.msra.mxu0 0
        %4628 = vmatprep.subr.bf16.mxu0 0
        %4629 = vmatpush1.bf16.msra.mxu0 0
        %4630 = vmatprep.subr.bf16.mxu0 0
        %4631 = vmatpush1.bf16.msra.mxu0 0
        %4632 = vmatprep.subr.bf16.mxu0 0
        %4633 = vmatpush1.bf16.msra.mxu0 0
        %4634 = vmatprep.subr.bf16.mxu0 0
        %4635 = vmatpush1.bf16.msra.mxu0 0
        %4636 = vmatprep.subr.bf16.mxu0 0
        %4637 = vmatpush1.bf16.msra.mxu0 0
        %4638 = vmatprep.subr.bf16.mxu0 0
        %4639 = vmatpush1.bf16.msra.mxu0 0
        %4640 = vmatprep.subr.bf16.mxu0 0
        %4641 = vmatpush1.bf16.msra.mxu0 0
        %4642 = vmatprep.mubr.bf16.mxu0 0
        %4643 = vmatmul.mubr.bf16.gmra.mrb[0].mxu0 %v4608
        %v4644 = vpop.f32.mrb[0].mxu0
        %v4645 = vadd.f32 0.0, %v4644
        %v4646 = vpop.f32.mrb[0].mxu0
        %v4647 = vadd.f32 0.0, %v4646
        %v4648 = vpop.f32.mrb[0].mxu0
        %v4649 = vadd.f32 0.0, %v4648
        %v4650 = vpop.f32.mrb[0].mxu0
        %v4651 = vadd.f32 0.0, %v4650
        %4652 = vdwg.mxu0
        %4653 = vmatprep.subr.bf16.mxu0 0
        %4654 = vmatpush1.bf16.msra.mxu0 %v4603
        %4655 = vmatprep.subr.bf16.mxu0 0
        %4656 = vmatpush1.bf16.msra.mxu0 0
        %4657 = vmatprep.subr.bf16.mxu0 0
        %4658 = vmatpush1.bf16.msra.mxu0 0
        %4659 = vmatprep.subr.bf16.mxu0 0
        %4660 = vmatpush1.bf16.msra.mxu0 0
        %4661 = vmatprep.subr.bf16.mxu0 0
        %4662 = vmatpush1.bf16.msra.mxu0 0
        %4663 = vmatprep.subr.bf16.mxu0 0
        %4664 = vmatpush1.bf16.msra.mxu0 0
        %4665 = vmatprep.subr.bf16.mxu0 0
        %4666 = vmatpush1.bf16.msra.mxu0 0
        %4667 = vmatprep.subr.bf16.mxu0 0
        %4668 = vmatpush1.bf16.msra.mxu0 0
        %4669 = vmatprep.subr.bf16.mxu0 0
        %4670 = vmatpush1.bf16.msra.mxu0 0
        %4671 = vmatprep.subr.bf16.mxu0 0
        %4672 = vmatpush1.bf16.msra.mxu0 0
        %4673 = vmatprep.subr.bf16.mxu0 0
        %4674 = vmatpush1.bf16.msra.mxu0 0
        %4675 = vmatprep.subr.bf16.mxu0 0
        %4676 = vmatpush1.bf16.msra.mxu0 0
        %4677 = vmatprep.subr.bf16.mxu0 0
        %4678 = vmatpush1.bf16.msra.mxu0 0
        %4679 = vmatprep.subr.bf16.mxu0 0
        %4680 = vmatpush1.bf16.msra.mxu0 0
        %4681 = vmatprep.subr.bf16.mxu0 0
        %4682 = vmatpush1.bf16.msra.mxu0 0
        %4683 = vmatprep.subr.bf16.mxu0 0
        %4684 = vmatpush1.bf16.msra.mxu0 0
        %4685 = vmatprep.mubr.bf16.mxu0 0
        %4686 = vmatmul.mubr.bf16.gmra.mrb[0].mxu0 %v4608
        %v4687 = vpop.f32.mrb[0].mxu0
        %v4688 = vadd.f32 0.0, %v4687
        %v4689 = vpop.f32.mrb[0].mxu0
        %v4690 = vpop.f32.mrb[0].mxu0
        %v4691 = vadd.f32 0.0, %v4690
        %v4692 = vpop.f32.mrb[0].mxu0
        %4693 = vdwg.mxu0
        %v4694 = vadd.f32 %v4579, %v4645
        %v4695 = vadd.f32 %v4580, %v4647
        %v4696 = vadd.f32 %v4581, %v4688
        %v4697 = vadd.f32 %v4582, %v4649
        %v4698 = vadd.f32 %v4583, %v4651
        %v4699 = vadd.f32 %v4584, %v4691
        %s4700 = scalar_lea.vmem [#allocation20], 32
        %v4701 = vld [vmem:[%s4700] sm:$0xf]
        %v4702 = vld [vmem:[%s4700 + $0x4] sm:$0xf]
        %v4705 = vunpack.c.l.b16 %v4701
        %v4706 = vunpack.c.l.b16 %v4702
        %v4707 = vpack.c.b16 %v4706, %v4705
        %v4709 = vsel %vm1939, %v4707, 0
        %4711 = vmatprep.subr.bf16.mxu0 %v4249
        %4712 = vmatpush1.bf16.msra.mxu0 %v4248
        %4713 = vmatprep.subr.bf16.mxu0 0
        %4714 = vmatpush1.bf16.msra.mxu0 0
        %4715 = vmatprep.subr.bf16.mxu0 0
        %4716 = vmatpush1.bf16.msra.mxu0 0
        %4717 = vmatprep.subr.bf16.mxu0 0
        %4718 = vmatpush1.bf16.msra.mxu0 0
        %4719 = vmatprep.subr.bf16.mxu0 0
        %4720 = vmatpush1.bf16.msra.mxu0 0
        %4721 = vmatprep.subr.bf16.mxu0 0
        %4722 = vmatpush1.bf16.msra.mxu0 0
        %4723 = vmatprep.subr.bf16.mxu0 0
        %4724 = vmatpush1.bf16.msra.mxu0 0
        %4725 = vmatprep.subr.bf16.mxu0 0
        %4726 = vmatpush1.bf16.msra.mxu0 0
        %4727 = vmatprep.subr.bf16.mxu0 0
        %4728 = vmatpush1.bf16.msra.mxu0 0
        %4729 = vmatprep.subr.bf16.mxu0 0
        %4730 = vmatpush1.bf16.msra.mxu0 0
        %4731 = vmatprep.subr.bf16.mxu0 0
        %4732 = vmatpush1.bf16.msra.mxu0 0
        %4733 = vmatprep.subr.bf16.mxu0 0
        %4734 = vmatpush1.bf16.msra.mxu0 0
        %4735 = vmatprep.subr.bf16.mxu0 0
        %4736 = vmatpush1.bf16.msra.mxu0 0
        %4737 = vmatprep.subr.bf16.mxu0 0
        %4738 = vmatpush1.bf16.msra.mxu0 0
        %4739 = vmatprep.subr.bf16.mxu0 0
        %4740 = vmatpush1.bf16.msra.mxu0 0
        %4741 = vmatprep.subr.bf16.mxu0 0
        %4742 = vmatpush1.bf16.msra.mxu0 0
        %4743 = vmatprep.mubr.bf16.mxu0 0
        %4744 = vmatmul.mubr.bf16.gmra.mrb[0].mxu0 %v4709
        %v4745 = vpop.f32.mrb[0].mxu0
        %v4746 = vadd.f32 0.0, %v4745
        %v4747 = vpop.f32.mrb[0].mxu0
        %v4748 = vadd.f32 0.0, %v4747
        %v4749 = vpop.f32.mrb[0].mxu0
        %v4750 = vadd.f32 0.0, %v4749
        %v4751 = vpop.f32.mrb[0].mxu0
        %v4752 = vadd.f32 0.0, %v4751
        %4753 = vdwg.mxu0
        %4754 = vmatprep.subr.bf16.mxu0 0
        %4755 = vmatpush1.bf16.msra.mxu0 %v4250
        %4756 = vmatprep.subr.bf16.mxu0 0
        %4757 = vmatpush1.bf16.msra.mxu0 0
        %4758 = vmatprep.subr.bf16.mxu0 0
        %4759 = vmatpush1.bf16.msra.mxu0 0
        %4760 = vmatprep.subr.bf16.mxu0 0
        %4761 = vmatpush1.bf16.msra.mxu0 0
        %4762 = vmatprep.subr.bf16.mxu0 0
        %4763 = vmatpush1.bf16.msra.mxu0 0
        %4764 = vmatprep.subr.bf16.mxu0 0
        %4765 = vmatpush1.bf16.msra.mxu0 0
        %4766 = vmatprep.subr.bf16.mxu0 0
        %4767 = vmatpush1.bf16.msra.mxu0 0
        %4768 = vmatprep.subr.bf16.mxu0 0
        %4769 = vmatpush1.bf16.msra.mxu0 0
        %4770 = vmatprep.subr.bf16.mxu0 0
        %4771 = vmatpush1.bf16.msra.mxu0 0
        %4772 = vmatprep.subr.bf16.mxu0 0
        %4773 = vmatpush1.bf16.msra.mxu0 0
        %4774 = vmatprep.subr.bf16.mxu0 0
        %4775 = vmatpush1.bf16.msra.mxu0 0
        %4776 = vmatprep.subr.bf16.mxu0 0
        %4777 = vmatpush1.bf16.msra.mxu0 0
        %4778 = vmatprep.subr.bf16.mxu0 0
        %4779 = vmatpush1.bf16.msra.mxu0 0
        %4780 = vmatprep.subr.bf16.mxu0 0
        %4781 = vmatpush1.bf16.msra.mxu0 0
        %4782 = vmatprep.subr.bf16.mxu0 0
        %4783 = vmatpush1.bf16.msra.mxu0 0
        %4784 = vmatprep.subr.bf16.mxu0 0
        %4785 = vmatpush1.bf16.msra.mxu0 0
        %4786 = vmatprep.mubr.bf16.mxu0 0
        %4787 = vmatmul.mubr.bf16.gmra.mrb[0].mxu0 %v4709
        %v4788 = vpop.f32.mrb[0].mxu0
        %v4789 = vadd.f32 0.0, %v4788
        %v4790 = vpop.f32.mrb[0].mxu0
        %v4791 = vpop.f32.mrb[0].mxu0
        %v4792 = vadd.f32 0.0, %v4791
        %v4793 = vpop.f32.mrb[0].mxu0
        %4794 = vdwg.mxu0
        %v4795 = vadd.f32 %v4694, %v4746
        %v4796 = vadd.f32 %v4695, %v4748
        %v4797 = vadd.f32 %v4696, %v4789
        %v4798 = vadd.f32 %v4697, %v4750
        %v4799 = vadd.f32 %v4698, %v4752
        %v4800 = vadd.f32 %v4699, %v4792
        %s4801 = scalar_lea.vmem [#allocation20], 40
        %v4802 = vld [vmem:[%s4801] sm:$0xf]
        %v4803 = vld [vmem:[%s4801 + $0x4] sm:$0xf]
        %v4806 = vunpack.c.l.b16 %v4802
        %v4807 = vunpack.c.l.b16 %v4803
        %v4808 = vpack.c.b16 %v4807, %v4806
        %4809 = vrot.lane.b32.xlu0 %v4248, 127
        %v4810 = vpop.permute.xlu0 %4809
        %4811 = vrot.lane.b32.xlu0 %v4249, 127
        %v4812 = vpop.permute.xlu0 %4811
        %4813 = vrot.lane.b32.xlu0 %v4250, 127
        %v4814 = vpop.permute.xlu0 %4813
        %v4815 = vsel %vm1369, %v4810, %v4812
        %v4816 = vsel %vm1369, %v4812, %v4814
        %v4821 = vsel %vm1939, %v4808, 0
        %4823 = vmatprep.subr.bf16.mxu0 %v4816
        %4824 = vmatpush1.bf16.msra.mxu0 %v4815
        %4825 = vmatprep.subr.bf16.mxu0 0
        %4826 = vmatpush1.bf16.msra.mxu0 0
        %4827 = vmatprep.subr.bf16.mxu0 0
        %4828 = vmatpush1.bf16.msra.mxu0 0
        %4829 = vmatprep.subr.bf16.mxu0 0
        %4830 = vmatpush1.bf16.msra.mxu0 0
        %4831 = vmatprep.subr.bf16.mxu0 0
        %4832 = vmatpush1.bf16.msra.mxu0 0
        %4833 = vmatprep.subr.bf16.mxu0 0
        %4834 = vmatpush1.bf16.msra.mxu0 0
        %4835 = vmatprep.subr.bf16.mxu0 0
        %4836 = vmatpush1.bf16.msra.mxu0 0
        %4837 = vmatprep.subr.bf16.mxu0 0
        %4838 = vmatpush1.bf16.msra.mxu0 0
        %4839 = vmatprep.subr.bf16.mxu0 0
        %4840 = vmatpush1.bf16.msra.mxu0 0
        %4841 = vmatprep.subr.bf16.mxu0 0
        %4842 = vmatpush1.bf16.msra.mxu0 0
        %4843 = vmatprep.subr.bf16.mxu0 0
        %4844 = vmatpush1.bf16.msra.mxu0 0
        %4845 = vmatprep.subr.bf16.mxu0 0
        %4846 = vmatpush1.bf16.msra.mxu0 0
        %4847 = vmatprep.subr.bf16.mxu0 0
        %4848 = vmatpush1.bf16.msra.mxu0 0
        %4849 = vmatprep.subr.bf16.mxu0 0
        %4850 = vmatpush1.bf16.msra.mxu0 0
        %4851 = vmatprep.subr.bf16.mxu0 0
        %4852 = vmatpush1.bf16.msra.mxu0 0
        %4853 = vmatprep.subr.bf16.mxu0 0
        %4854 = vmatpush1.bf16.msra.mxu0 0
        %4855 = vmatprep.mubr.bf16.mxu0 0
        %4856 = vmatmul.mubr.bf16.gmra.mrb[0].mxu0 %v4821
        %v4857 = vpop.f32.mrb[0].mxu0
        %v4858 = vadd.f32 0.0, %v4857
        %v4859 = vpop.f32.mrb[0].mxu0
        %v4860 = vadd.f32 0.0, %v4859
        %v4861 = vpop.f32.mrb[0].mxu0
        %v4862 = vadd.f32 0.0, %v4861
        %v4863 = vpop.f32.mrb[0].mxu0
        %v4864 = vadd.f32 0.0, %v4863
        %4865 = vdwg.mxu0
        %4866 = vmatprep.subr.bf16.mxu0 0
        %4867 = vmatpush1.bf16.msra.mxu0 %v4814
        %4868 = vmatprep.subr.bf16.mxu0 0
        %4869 = vmatpush1.bf16.msra.mxu0 0
        %4870 = vmatprep.subr.bf16.mxu0 0
        %4871 = vmatpush1.bf16.msra.mxu0 0
        %4872 = vmatprep.subr.bf16.mxu0 0
        %4873 = vmatpush1.bf16.msra.mxu0 0
        %4874 = vmatprep.subr.bf16.mxu0 0
        %4875 = vmatpush1.bf16.msra.mxu0 0
        %4876 = vmatprep.subr.bf16.mxu0 0
        %4877 = vmatpush1.bf16.msra.mxu0 0
        %4878 = vmatprep.subr.bf16.mxu0 0
        %4879 = vmatpush1.bf16.msra.mxu0 0
        %4880 = vmatprep.subr.bf16.mxu0 0
        %4881 = vmatpush1.bf16.msra.mxu0 0
        %4882 = vmatprep.subr.bf16.mxu0 0
        %4883 = vmatpush1.bf16.msra.mxu0 0
        %4884 = vmatprep.subr.bf16.mxu0 0
        %4885 = vmatpush1.bf16.msra.mxu0 0
        %4886 = vmatprep.subr.bf16.mxu0 0
        %4887 = vmatpush1.bf16.msra.mxu0 0
        %4888 = vmatprep.subr.bf16.mxu0 0
        %4889 = vmatpush1.bf16.msra.mxu0 0
        %4890 = vmatprep.subr.bf16.mxu0 0
        %4891 = vmatpush1.bf16.msra.mxu0 0
        %4892 = vmatprep.subr.bf16.mxu0 0
        %4893 = vmatpush1.bf16.msra.mxu0 0
        %4894 = vmatprep.subr.bf16.mxu0 0
        %4895 = vmatpush1.bf16.msra.mxu0 0
        %4896 = vmatprep.subr.bf16.mxu0 0
        %4897 = vmatpush1.bf16.msra.mxu0 0
        %4898 = vmatprep.mubr.bf16.mxu0 0
        %4899 = vmatmul.mubr.bf16.gmra.mrb[0].mxu0 %v4821
        %v4900 = vpop.f32.mrb[0].mxu0
        %v4901 = vadd.f32 0.0, %v4900
        %v4902 = vpop.f32.mrb[0].mxu0
        %v4903 = vpop.f32.mrb[0].mxu0
        %v4904 = vadd.f32 0.0, %v4903
        %v4905 = vpop.f32.mrb[0].mxu0
        %4906 = vdwg.mxu0
        %v4907 = vadd.f32 %v4795, %v4858
        %v4908 = vadd.f32 %v4796, %v4860
        %v4909 = vadd.f32 %v4797, %v4901
        %v4910 = vadd.f32 %v4798, %v4862
        %v4911 = vadd.f32 %v4799, %v4864
        %v4912 = vadd.f32 %v4800, %v4904
        %s4913 = scalar_lea.vmem [#allocation20], 48
        %v4914 = vld [vmem:[%s4913] sm:$0xf]
        %v4915 = vld [vmem:[%s4913 + $0x4] sm:$0xf]
        %v4918 = vunpack.c.l.b16 %v4914
        %v4919 = vunpack.c.l.b16 %v4915
        %v4920 = vpack.c.b16 %v4919, %v4918
        %4921 = vrot.lane.b32.xlu0 %v4248, 109
        %v4922 = vpop.permute.xlu0 %4921
        %4923 = vrot.lane.b32.xlu0 %v4249, 109
        %v4924 = vpop.permute.xlu0 %4923
        %4925 = vrot.lane.b32.xlu0 %v4250, 109
        %v4926 = vpop.permute.xlu0 %4925
        %v4927 = vsel %vm1493, %v4922, %v4924
        %v4928 = vsel %vm1493, %v4924, %v4926
        %v4933 = vsel %vm1939, %v4920, 0
        %4935 = vmatprep.subr.bf16.mxu0 %v4928
        %4936 = vmatpush1.bf16.msra.mxu0 %v4927
        %4937 = vmatprep.subr.bf16.mxu0 0
        %4938 = vmatpush1.bf16.msra.mxu0 0
        %4939 = vmatprep.subr.bf16.mxu0 0
        %4940 = vmatpush1.bf16.msra.mxu0 0
        %4941 = vmatprep.subr.bf16.mxu0 0
        %4942 = vmatpush1.bf16.msra.mxu0 0
        %4943 = vmatprep.subr.bf16.mxu0 0
        %4944 = vmatpush1.bf16.msra.mxu0 0
        %4945 = vmatprep.subr.bf16.mxu0 0
        %4946 = vmatpush1.bf16.msra.mxu0 0
        %4947 = vmatprep.subr.bf16.mxu0 0
        %4948 = vmatpush1.bf16.msra.mxu0 0
        %4949 = vmatprep.subr.bf16.mxu0 0
        %4950 = vmatpush1.bf16.msra.mxu0 0
        %4951 = vmatprep.subr.bf16.mxu0 0
        %4952 = vmatpush1.bf16.msra.mxu0 0
        %4953 = vmatprep.subr.bf16.mxu0 0
        %4954 = vmatpush1.bf16.msra.mxu0 0
        %4955 = vmatprep.subr.bf16.mxu0 0
        %4956 = vmatpush1.bf16.msra.mxu0 0
        %4957 = vmatprep.subr.bf16.mxu0 0
        %4958 = vmatpush1.bf16.msra.mxu0 0
        %4959 = vmatprep.subr.bf16.mxu0 0
        %4960 = vmatpush1.bf16.msra.mxu0 0
        %4961 = vmatprep.subr.bf16.mxu0 0
        %4962 = vmatpush1.bf16.msra.mxu0 0
        %4963 = vmatprep.subr.bf16.mxu0 0
        %4964 = vmatpush1.bf16.msra.mxu0 0
        %4965 = vmatprep.subr.bf16.mxu0 0
        %4966 = vmatpush1.bf16.msra.mxu0 0
        %4967 = vmatprep.mubr.bf16.mxu0 0
        %4968 = vmatmul.mubr.bf16.gmra.mrb[0].mxu0 %v4933
        %v4969 = vpop.f32.mrb[0].mxu0
        %v4970 = vadd.f32 0.0, %v4969
        %v4971 = vpop.f32.mrb[0].mxu0
        %v4972 = vadd.f32 0.0, %v4971
        %v4973 = vpop.f32.mrb[0].mxu0
        %v4974 = vadd.f32 0.0, %v4973
        %v4975 = vpop.f32.mrb[0].mxu0
        %v4976 = vadd.f32 0.0, %v4975
        %4977 = vdwg.mxu0
        %4978 = vmatprep.subr.bf16.mxu0 0
        %4979 = vmatpush1.bf16.msra.mxu0 %v4926
        %4980 = vmatprep.subr.bf16.mxu0 0
        %4981 = vmatpush1.bf16.msra.mxu0 0
        %4982 = vmatprep.subr.bf16.mxu0 0
        %4983 = vmatpush1.bf16.msra.mxu0 0
        %4984 = vmatprep.subr.bf16.mxu0 0
        %4985 = vmatpush1.bf16.msra.mxu0 0
        %4986 = vmatprep.subr.bf16.mxu0 0
        %4987 = vmatpush1.bf16.msra.mxu0 0
        %4988 = vmatprep.subr.bf16.mxu0 0
        %4989 = vmatpush1.bf16.msra.mxu0 0
        %4990 = vmatprep.subr.bf16.mxu0 0
        %4991 = vmatpush1.bf16.msra.mxu0 0
        %4992 = vmatprep.subr.bf16.mxu0 0
        %4993 = vmatpush1.bf16.msra.mxu0 0
        %4994 = vmatprep.subr.bf16.mxu0 0
        %4995 = vmatpush1.bf16.msra.mxu0 0
        %4996 = vmatprep.subr.bf16.mxu0 0
        %4997 = vmatpush1.bf16.msra.mxu0 0
        %4998 = vmatprep.subr.bf16.mxu0 0
        %4999 = vmatpush1.bf16.msra.mxu0 0
        %5000 = vmatprep.subr.bf16.mxu0 0
        %5001 = vmatpush1.bf16.msra.mxu0 0
        %5002 = vmatprep.subr.bf16.mxu0 0
        %5003 = vmatpush1.bf16.msra.mxu0 0
        %5004 = vmatprep.subr.bf16.mxu0 0
        %5005 = vmatpush1.bf16.msra.mxu0 0
        %5006 = vmatprep.subr.bf16.mxu0 0
        %5007 = vmatpush1.bf16.msra.mxu0 0
        %5008 = vmatprep.subr.bf16.mxu0 0
        %5009 = vmatpush1.bf16.msra.mxu0 0
        %5010 = vmatprep.mubr.bf16.mxu0 0
        %5011 = vmatmul.mubr.bf16.gmra.mrb[0].mxu0 %v4933
        %v5012 = vpop.f32.mrb[0].mxu0
        %v5013 = vadd.f32 0.0, %v5012
        %v5014 = vpop.f32.mrb[0].mxu0
        %v5015 = vpop.f32.mrb[0].mxu0
        %v5016 = vadd.f32 0.0, %v5015
        %v5017 = vpop.f32.mrb[0].mxu0
        %5018 = vdwg.mxu0
        %v5019 = vadd.f32 %v4907, %v4970
        %v5020 = vadd.f32 %v4908, %v4972
        %v5021 = vadd.f32 %v4909, %v5013
        %v5022 = vadd.f32 %v4910, %v4974
        %v5023 = vadd.f32 %v4911, %v4976
        %v5024 = vadd.f32 %v4912, %v5016
        %s5025 = scalar_lea.vmem [#allocation20], 56
        %v5026 = vld [vmem:[%s5025] sm:$0xf]
        %v5027 = vld [vmem:[%s5025 + $0x4] sm:$0xf]
        %v5030 = vunpack.c.l.b16 %v5026
        %v5031 = vunpack.c.l.b16 %v5027
        %v5032 = vpack.c.b16 %v5031, %v5030
        %5033 = vrot.lane.b32.xlu0 %v4248, 108
        %v5034 = vpop.permute.xlu0 %5033
        %5035 = vrot.lane.b32.xlu0 %v4249, 108
        %v5036 = vpop.permute.xlu0 %5035
        %5037 = vrot.lane.b32.xlu0 %v4250, 108
        %v5038 = vpop.permute.xlu0 %5037
        %v5039 = vsel %vm1617, %v5034, %v5036
        %v5040 = vsel %vm1617, %v5036, %v5038
        %v5045 = vsel %vm1939, %v5032, 0
        %5047 = vmatprep.subr.bf16.mxu0 %v5040
        %5048 = vmatpush1.bf16.msra.mxu0 %v5039
        %5049 = vmatprep.subr.bf16.mxu0 0
        %5050 = vmatpush1.bf16.msra.mxu0 0
        %5051 = vmatprep.subr.bf16.mxu0 0
        %5052 = vmatpush1.bf16.msra.mxu0 0
        %5053 = vmatprep.subr.bf16.mxu0 0
        %5054 = vmatpush1.bf16.msra.mxu0 0
        %5055 = vmatprep.subr.bf16.mxu0 0
        %5056 = vmatpush1.bf16.msra.mxu0 0
        %5057 = vmatprep.subr.bf16.mxu0 0
        %5058 = vmatpush1.bf16.msra.mxu0 0
        %5059 = vmatprep.subr.bf16.mxu0 0
        %5060 = vmatpush1.bf16.msra.mxu0 0
        %5061 = vmatprep.subr.bf16.mxu0 0
        %5062 = vmatpush1.bf16.msra.mxu0 0
        %5063 = vmatprep.subr.bf16.mxu0 0
        %5064 = vmatpush1.bf16.msra.mxu0 0
        %5065 = vmatprep.subr.bf16.mxu0 0
        %5066 = vmatpush1.bf16.msra.mxu0 0
        %5067 = vmatprep.subr.bf16.mxu0 0
        %5068 = vmatpush1.bf16.msra.mxu0 0
        %5069 = vmatprep.subr.bf16.mxu0 0
        %5070 = vmatpush1.bf16.msra.mxu0 0
        %5071 = vmatprep.subr.bf16.mxu0 0
        %5072 = vmatpush1.bf16.msra.mxu0 0
        %5073 = vmatprep.subr.bf16.mxu0 0
        %5074 = vmatpush1.bf16.msra.mxu0 0
        %5075 = vmatprep.subr.bf16.mxu0 0
        %5076 = vmatpush1.bf16.msra.mxu0 0
        %5077 = vmatprep.subr.bf16.mxu0 0
        %5078 = vmatpush1.bf16.msra.mxu0 0
        %5079 = vmatprep.mubr.bf16.mxu0 0
        %5080 = vmatmul.mubr.bf16.gmra.mrb[0].mxu0 %v5045
        %v5081 = vpop.f32.mrb[0].mxu0
        %v5082 = vadd.f32 0.0, %v5081
        %v5083 = vpop.f32.mrb[0].mxu0
        %v5084 = vadd.f32 0.0, %v5083
        %v5085 = vpop.f32.mrb[0].mxu0
        %v5086 = vadd.f32 0.0, %v5085
        %v5087 = vpop.f32.mrb[0].mxu0
        %v5088 = vadd.f32 0.0, %v5087
        %5089 = vdwg.mxu0
        %5090 = vmatprep.subr.bf16.mxu0 0
        %5091 = vmatpush1.bf16.msra.mxu0 %v5038
        %5092 = vmatprep.subr.bf16.mxu0 0
        %5093 = vmatpush1.bf16.msra.mxu0 0
        %5094 = vmatprep.subr.bf16.mxu0 0
        %5095 = vmatpush1.bf16.msra.mxu0 0
        %5096 = vmatprep.subr.bf16.mxu0 0
        %5097 = vmatpush1.bf16.msra.mxu0 0
        %5098 = vmatprep.subr.bf16.mxu0 0
        %5099 = vmatpush1.bf16.msra.mxu0 0
        %5100 = vmatprep.subr.bf16.mxu0 0
        %5101 = vmatpush1.bf16.msra.mxu0 0
        %5102 = vmatprep.subr.bf16.mxu0 0
        %5103 = vmatpush1.bf16.msra.mxu0 0
        %5104 = vmatprep.subr.bf16.mxu0 0
        %5105 = vmatpush1.bf16.msra.mxu0 0
        %5106 = vmatprep.subr.bf16.mxu0 0
        %5107 = vmatpush1.bf16.msra.mxu0 0
        %5108 = vmatprep.subr.bf16.mxu0 0
        %5109 = vmatpush1.bf16.msra.mxu0 0
        %5110 = vmatprep.subr.bf16.mxu0 0
        %5111 = vmatpush1.bf16.msra.mxu0 0
        %5112 = vmatprep.subr.bf16.mxu0 0
        %5113 = vmatpush1.bf16.msra.mxu0 0
        %5114 = vmatprep.subr.bf16.mxu0 0
        %5115 = vmatpush1.bf16.msra.mxu0 0
        %5116 = vmatprep.subr.bf16.mxu0 0
        %5117 = vmatpush1.bf16.msra.mxu0 0
        %5118 = vmatprep.subr.bf16.mxu0 0
        %5119 = vmatpush1.bf16.msra.mxu0 0
        %5120 = vmatprep.subr.bf16.mxu0 0
        %5121 = vmatpush1.bf16.msra.mxu0 0
        %5122 = vmatprep.mubr.bf16.mxu0 0
        %5123 = vmatmul.mubr.bf16.gmra.mrb[0].mxu0 %v5045
        %v5124 = vpop.f32.mrb[0].mxu0
        %v5125 = vadd.f32 0.0, %v5124
        %v5126 = vpop.f32.mrb[0].mxu0
        %v5127 = vpop.f32.mrb[0].mxu0
        %v5128 = vadd.f32 0.0, %v5127
        %v5129 = vpop.f32.mrb[0].mxu0
        %5130 = vdwg.mxu0
        %v5131 = vadd.f32 %v5019, %v5082
        %v5132 = vadd.f32 %v5020, %v5084
        %v5133 = vadd.f32 %v5021, %v5125
        %v5134 = vadd.f32 %v5022, %v5086
        %v5135 = vadd.f32 %v5023, %v5088
        %v5136 = vadd.f32 %v5024, %v5128
        %s5137 = scalar_lea.vmem [#allocation20], 64
        %v5138 = vld [vmem:[%s5137] sm:$0xf]
        %v5139 = vld [vmem:[%s5137 + $0x4] sm:$0xf]
        %v5142 = vunpack.c.l.b16 %v5138
        %v5143 = vunpack.c.l.b16 %v5139
        %v5144 = vpack.c.b16 %v5143, %v5142
        %5145 = vrot.lane.b32.xlu0 %v4248, 107
        %v5146 = vpop.permute.xlu0 %5145
        %5147 = vrot.lane.b32.xlu0 %v4249, 107
        %v5148 = vpop.permute.xlu0 %5147
        %5149 = vrot.lane.b32.xlu0 %v4250, 107
        %v5150 = vpop.permute.xlu0 %5149
        %v5151 = vsel %vm1741, %v5146, %v5148
        %v5152 = vsel %vm1741, %v5148, %v5150
        %v5157 = vsel %vm1939, %v5144, 0
        %5159 = vmatprep.subr.bf16.mxu0 %v5152
        %5160 = vmatpush1.bf16.msra.mxu0 %v5151
        %5161 = vmatprep.subr.bf16.mxu0 0
        %5162 = vmatpush1.bf16.msra.mxu0 0
        %5163 = vmatprep.subr.bf16.mxu0 0
        %5164 = vmatpush1.bf16.msra.mxu0 0
        %5165 = vmatprep.subr.bf16.mxu0 0
        %5166 = vmatpush1.bf16.msra.mxu0 0
        %5167 = vmatprep.subr.bf16.mxu0 0
        %5168 = vmatpush1.bf16.msra.mxu0 0
        %5169 = vmatprep.subr.bf16.mxu0 0
        %5170 = vmatpush1.bf16.msra.mxu0 0
        %5171 = vmatprep.subr.bf16.mxu0 0
        %5172 = vmatpush1.bf16.msra.mxu0 0
        %5173 = vmatprep.subr.bf16.mxu0 0
        %5174 = vmatpush1.bf16.msra.mxu0 0
        %5175 = vmatprep.subr.bf16.mxu0 0
        %5176 = vmatpush1.bf16.msra.mxu0 0
        %5177 = vmatprep.subr.bf16.mxu0 0
        %5178 = vmatpush1.bf16.msra.mxu0 0
        %5179 = vmatprep.subr.bf16.mxu0 0
        %5180 = vmatpush1.bf16.msra.mxu0 0
        %5181 = vmatprep.subr.bf16.mxu0 0
        %5182 = vmatpush1.bf16.msra.mxu0 0
        %5183 = vmatprep.subr.bf16.mxu0 0
        %5184 = vmatpush1.bf16.msra.mxu0 0
        %5185 = vmatprep.subr.bf16.mxu0 0
        %5186 = vmatpush1.bf16.msra.mxu0 0
        %5187 = vmatprep.subr.bf16.mxu0 0
        %5188 = vmatpush1.bf16.msra.mxu0 0
        %5189 = vmatprep.subr.bf16.mxu0 0
        %5190 = vmatpush1.bf16.msra.mxu0 0
        %5191 = vmatprep.mubr.bf16.mxu0 0
        %5192 = vmatmul.mubr.bf16.gmra.mrb[0].mxu0 %v5157
        %v5193 = vpop.f32.mrb[0].mxu0
        %v5194 = vadd.f32 0.0, %v5193
        %v5195 = vpop.f32.mrb[0].mxu0
        %v5196 = vadd.f32 0.0, %v5195
        %v5197 = vpop.f32.mrb[0].mxu0
        %v5198 = vadd.f32 0.0, %v5197
        %v5199 = vpop.f32.mrb[0].mxu0
        %v5200 = vadd.f32 0.0, %v5199
        %5201 = vdwg.mxu0
        %5202 = vmatprep.subr.bf16.mxu0 0
        %5203 = vmatpush1.bf16.msra.mxu0 %v5150
        %5204 = vmatprep.subr.bf16.mxu0 0
        %5205 = vmatpush1.bf16.msra.mxu0 0
        %5206 = vmatprep.subr.bf16.mxu0 0
        %5207 = vmatpush1.bf16.msra.mxu0 0
        %5208 = vmatprep.subr.bf16.mxu0 0
        %5209 = vmatpush1.bf16.msra.mxu0 0
        %5210 = vmatprep.subr.bf16.mxu0 0
        %5211 = vmatpush1.bf16.msra.mxu0 0
        %5212 = vmatprep.subr.bf16.mxu0 0
        %5213 = vmatpush1.bf16.msra.mxu0 0
        %5214 = vmatprep.subr.bf16.mxu0 0
        %5215 = vmatpush1.bf16.msra.mxu0 0
        %5216 = vmatprep.subr.bf16.mxu0 0
        %5217 = vmatpush1.bf16.msra.mxu0 0
        %5218 = vmatprep.subr.bf16.mxu0 0
        %5219 = vmatpush1.bf16.msra.mxu0 0
        %5220 = vmatprep.subr.bf16.mxu0 0
        %5221 = vmatpush1.bf16.msra.mxu0 0
        %5222 = vmatprep.subr.bf16.mxu0 0
        %5223 = vmatpush1.bf16.msra.mxu0 0
        %5224 = vmatprep.subr.bf16.mxu0 0
        %5225 = vmatpush1.bf16.msra.mxu0 0
        %5226 = vmatprep.subr.bf16.mxu0 0
        %5227 = vmatpush1.bf16.msra.mxu0 0
        %5228 = vmatprep.subr.bf16.mxu0 0
        %5229 = vmatpush1.bf16.msra.mxu0 0
        %5230 = vmatprep.subr.bf16.mxu0 0
        %5231 = vmatpush1.bf16.msra.mxu0 0
        %5232 = vmatprep.subr.bf16.mxu0 0
        %5233 = vmatpush1.bf16.msra.mxu0 0
        %5234 = vmatprep.mubr.bf16.mxu0 0
        %5235 = vmatmul.mubr.bf16.gmra.mrb[0].mxu0 %v5157
        %v5236 = vpop.f32.mrb[0].mxu0
        %v5237 = vadd.f32 0.0, %v5236
        %v5238 = vpop.f32.mrb[0].mxu0
        %v5239 = vpop.f32.mrb[0].mxu0
        %v5240 = vadd.f32 0.0, %v5239
        %v5241 = vpop.f32.mrb[0].mxu0
        %5242 = vdwg.mxu0
        %v5243 = vadd.f32 %v5131, %v5194
        %v5244 = vadd.f32 %v5132, %v5196
        %v5245 = vadd.f32 %v5133, %v5237
        %v5246 = vadd.f32 %v5134, %v5198
        %v5247 = vadd.f32 %v5135, %v5200
        %v5248 = vadd.f32 %v5136, %v5240
        %v5249 = vld [vmem:[#allocation21] sm:$0xff]
        %v5250 = vld [vmem:[#allocation21 + $0x8] sm:$0xff]
        %v5251 = vld [vmem:[#allocation23] sm:$0xff]
        %v5252 = vld [vmem:[#allocation23 + $0x8] sm:$0xff]
        %v5253 = vmul.f32 %v5243, %v1867
        %v5254 = vmul.f32 %v5244, %v1871
        %v5255 = vmul.f32 %v5245, %v1875
        %v5256 = vmul.f32 %v5246, %v1867
        %v5257 = vmul.f32 %v5247, %v1871
        %v5258 = vmul.f32 %v5248, %v1875
        %v5259 = vadd.f32 %v5253, %v5254
        %v5260 = vsel %vm1890, %v5255, 0.0
        %v5261 = vadd.f32 %v5259, %v5260
        %5262 = vadd.xlane.f32.xlu0 %v5261
        %v5263 = vpop.xlane.xlu0 %5262
        %v5264 = vadd.f32 %v5256, %v5257
        %v5265 = vsel %vm1890, %v5258, 0.0
        %v5266 = vadd.f32 %v5264, %v5265
        %5267 = vadd.xlane.f32.xlu0 %v5266
        %v5268 = vpop.xlane.xlu0 %5267
        %5269 = vmatprep.subr.mxu0 0.0
        %5270 = vmatpush1.msra.mxu0 %v5263
        %5271 = vmatprep.subr.mxu0 0.0
        %5272 = vmatpush1.msra.mxu0 %v5268
        %5273 = vmatprep.subr.mxu0 0.0
        %5274 = vmatpush1.msra.mxu0 0.0
        %5275 = vmatprep.subr.mxu0 0.0
        %5276 = vmatpush1.msra.mxu0 0.0
        %5277 = vmatprep.subr.mxu0 0.0
        %5278 = vmatpush1.msra.mxu0 0.0
        %5279 = vmatprep.subr.mxu0 0.0
        %5280 = vmatpush1.msra.mxu0 0.0
        %5281 = vmatprep.subr.mxu0 0.0
        %5282 = vmatpush1.msra.mxu0 0.0
        %5283 = vmatprep.subr.mxu0 0.0
        %5284 = vmatpush1.msra.mxu0 0.0
        %5285 = vmatprep.subr.mxu0 0.0
        %5286 = vmatpush1.msra.mxu0 0.0
        %5287 = vmatprep.subr.mxu0 0.0
        %5288 = vmatpush1.msra.mxu0 0.0
        %5289 = vmatprep.subr.mxu0 0.0
        %5290 = vmatpush1.msra.mxu0 0.0
        %5291 = vmatprep.subr.mxu0 0.0
        %5292 = vmatpush1.msra.mxu0 0.0
        %5293 = vmatprep.subr.mxu0 0.0
        %5294 = vmatpush1.msra.mxu0 0.0
        %5295 = vmatprep.subr.mxu0 0.0
        %5296 = vmatpush1.msra.mxu0 0.0
        %5297 = vmatprep.subr.mxu0 0.0
        %5298 = vmatpush1.msra.mxu0 0.0
        %5299 = vmatprep.subr.mxu0 0.0
        %5300 = vmatpush1.msra.mxu0 0.0
        %5301 = vmatprep.subr.mxu0 0.0
        %5302 = vmatpush1.msra.mxu0 0.0
        %5303 = vmatprep.subr.mxu0 0.0
        %5304 = vmatpush1.msra.mxu0 0.0
        %5305 = vmatprep.subr.mxu0 0.0
        %5306 = vmatpush1.msra.mxu0 0.0
        %5307 = vmatprep.subr.mxu0 0.0
        %5308 = vmatpush1.msra.mxu0 0.0
        %5309 = vmatprep.subr.mxu0 0.0
        %5310 = vmatpush1.msra.mxu0 0.0
        %5311 = vmatprep.subr.mxu0 0.0
        %5312 = vmatpush1.msra.mxu0 0.0
        %5313 = vmatprep.subr.mxu0 0.0
        %5314 = vmatpush1.msra.mxu0 0.0
        %5315 = vmatprep.subr.mxu0 0.0
        %5316 = vmatpush1.msra.mxu0 0.0
        %5317 = vmatprep.subr.mxu0 0.0
        %5318 = vmatpush1.msra.mxu0 0.0
        %5319 = vmatprep.subr.mxu0 0.0
        %5320 = vmatpush1.msra.mxu0 0.0
        %5321 = vmatprep.subr.mxu0 0.0
        %5322 = vmatpush1.msra.mxu0 0.0
        %5323 = vmatprep.subr.mxu0 0.0
        %5324 = vmatpush1.msra.mxu0 0.0
        %5325 = vmatprep.subr.mxu0 0.0
        %5326 = vmatpush1.msra.mxu0 0.0
        %5327 = vmatprep.subr.mxu0 0.0
        %5328 = vmatpush1.msra.mxu0 0.0
        %5329 = vmatprep.subr.mxu0 0.0
        %5330 = vmatpush1.msra.mxu0 0.0
        %5331 = vmatprep.subr.mxu0 0.0
        %5332 = vmatpush1.msra.mxu0 0.0
        %5333 = vmatprep.mubr.f32.mxu0 0.0
        %5334 = vmatmul.mubr.f32.gmra.mrb[0].mxu0 %v3966
        %v5335 = vpop.f32.mrb[0].mxu0
        %v5336 = vadd.f32 0.0, %v5335
        %v5337 = vpop.f32.mrb[0].mxu0
        %5338 = vmatprep.mubr.f32.mxu0 0.0
        %5339 = vmatmul.mubr.f32.gmra.mrb[0].mxu0 %v3969
        %v5340 = vpop.f32.mrb[0].mxu0
        %v5341 = vadd.f32 0.0, %v5340
        %v5342 = vpop.f32.mrb[0].mxu0
        %5343 = vdwg.mxu0
        %v5344 = vmul.f32 %v5253, %v5253
        %v5345 = vmul.f32 %v5254, %v5254
        %v5346 = vmul.f32 %v5255, %v5255
        %v5347 = vmul.f32 %v5256, %v5256
        %v5348 = vmul.f32 %v5257, %v5257
        %v5349 = vmul.f32 %v5258, %v5258
        %v5350 = vadd.f32 %v5344, %v5345
        %v5351 = vsel %vm1890, %v5346, 0.0
        %v5352 = vadd.f32 %v5350, %v5351
        %5353 = vadd.xlane.f32.xlu0 %v5352
        %v5354 = vpop.xlane.xlu0 %5353
        %v5355 = vadd.f32 %v5347, %v5348
        %v5356 = vsel %vm1890, %v5349, 0.0
        %v5357 = vadd.f32 %v5355, %v5356
        %5358 = vadd.xlane.f32.xlu0 %v5357
        %v5359 = vpop.xlane.xlu0 %5358
        %5360 = vmatprep.subr.mxu0 0.0
        %5361 = vmatpush1.msra.mxu0 %v5354
        %5362 = vmatprep.subr.mxu0 0.0
        %5363 = vmatpush1.msra.mxu0 %v5359
        %5364 = vmatprep.subr.mxu0 0.0
        %5365 = vmatpush1.msra.mxu0 0.0
        %5366 = vmatprep.subr.mxu0 0.0
        %5367 = vmatpush1.msra.mxu0 0.0
        %5368 = vmatprep.subr.mxu0 0.0
        %5369 = vmatpush1.msra.mxu0 0.0
        %5370 = vmatprep.subr.mxu0 0.0
        %5371 = vmatpush1.msra.mxu0 0.0
        %5372 = vmatprep.subr.mxu0 0.0
        %5373 = vmatpush1.msra.mxu0 0.0
        %5374 = vmatprep.subr.mxu0 0.0
        %5375 = vmatpush1.msra.mxu0 0.0
        %5376 = vmatprep.subr.mxu0 0.0
        %5377 = vmatpush1.msra.mxu0 0.0
        %5378 = vmatprep.subr.mxu0 0.0
        %5379 = vmatpush1.msra.mxu0 0.0
        %5380 = vmatprep.subr.mxu0 0.0
        %5381 = vmatpush1.msra.mxu0 0.0
        %5382 = vmatprep.subr.mxu0 0.0
        %5383 = vmatpush1.msra.mxu0 0.0
        %5384 = vmatprep.subr.mxu0 0.0
        %5385 = vmatpush1.msra.mxu0 0.0
        %5386 = vmatprep.subr.mxu0 0.0
        %5387 = vmatpush1.msra.mxu0 0.0
        %5388 = vmatprep.subr.mxu0 0.0
        %5389 = vmatpush1.msra.mxu0 0.0
        %5390 = vmatprep.subr.mxu0 0.0
        %5391 = vmatpush1.msra.mxu0 0.0
        %5392 = vmatprep.subr.mxu0 0.0
        %5393 = vmatpush1.msra.mxu0 0.0
        %5394 = vmatprep.subr.mxu0 0.0
        %5395 = vmatpush1.msra.mxu0 0.0
        %5396 = vmatprep.subr.mxu0 0.0
        %5397 = vmatpush1.msra.mxu0 0.0
        %5398 = vmatprep.subr.mxu0 0.0
        %5399 = vmatpush1.msra.mxu0 0.0
        %5400 = vmatprep.subr.mxu0 0.0
        %5401 = vmatpush1.msra.mxu0 0.0
        %5402 = vmatprep.subr.mxu0 0.0
        %5403 = vmatpush1.msra.mxu0 0.0
        %5404 = vmatprep.subr.mxu0 0.0
        %5405 = vmatpush1.msra.mxu0 0.0
        %5406 = vmatprep.subr.mxu0 0.0
        %5407 = vmatpush1.msra.mxu0 0.0
        %5408 = vmatprep.subr.mxu0 0.0
        %5409 = vmatpush1.msra.mxu0 0.0
        %5410 = vmatprep.subr.mxu0 0.0
        %5411 = vmatpush1.msra.mxu0 0.0
        %5412 = vmatprep.subr.mxu0 0.0
        %5413 = vmatpush1.msra.mxu0 0.0
        %5414 = vmatprep.subr.mxu0 0.0
        %5415 = vmatpush1.msra.mxu0 0.0
        %5416 = vmatprep.subr.mxu0 0.0
        %5417 = vmatpush1.msra.mxu0 0.0
        %5418 = vmatprep.subr.mxu0 0.0
        %5419 = vmatpush1.msra.mxu0 0.0
        %5420 = vmatprep.subr.mxu0 0.0
        %5421 = vmatpush1.msra.mxu0 0.0
        %5422 = vmatprep.subr.mxu0 0.0
        %5423 = vmatpush1.msra.mxu0 0.0
        %5424 = vmatprep.mubr.f32.mxu0 0.0
        %5425 = vmatmul.mubr.f32.gmra.mrb[0].mxu0 %v3966
        %v5426 = vpop.f32.mrb[0].mxu0
        %v5427 = vadd.f32 0.0, %v5426
        %v5428 = vpop.f32.mrb[0].mxu0
        %5429 = vmatprep.mubr.f32.mxu0 0.0
        %5430 = vmatmul.mubr.f32.gmra.mrb[0].mxu0 %v3969
        %v5431 = vpop.f32.mrb[0].mxu0
        %v5432 = vadd.f32 0.0, %v5431
        %v5433 = vpop.f32.mrb[0].mxu0
        %5434 = vdwg.mxu0
        %v5435 = vmul.f32 %v5336, 0.001953125
        %v5436 = vmul.f32 %v5341, 0.001953125
        %v5437 = vmul.f32 %v5427, 0.001953125
        %v5438 = vmul.f32 %v5432, 0.001953125
        %v5439 = vmul.f32 %v5435, %v5435
        %v5440 = vmul.f32 %v5436, %v5436
        %v5441 = vsub.f32 %v5437, %v5439
        %v5442 = vsub.f32 %v5438, %v5440
        %v5443 = vmax.f32 %v5441, 0.0
        %v5444 = vmax.f32 %v5442, 0.0
        %5446 = vset.pattern.permute.xlu0 0
        %5447 = vperm.xlu0 %5446, %v5435
        %v5448 = vpop.permute.xlu0 %5447
        %5451 = vset.pattern.permute.xlu0 0
        %5452 = vperm.xlu0 %5451, %v5436
        %v5453 = vpop.permute.xlu0 %5452
        %v5455 = vsub.f32 %v5243, %v5448
        %v5456 = vsub.f32 %v5244, %v5448
        %v5457 = vsub.f32 %v5245, %v5448
        %v5458 = vsub.f32 %v5246, %v5453
        %v5459 = vsub.f32 %v5247, %v5453
        %v5460 = vsub.f32 %v5248, %v5453
        %v5461 = vadd.f32 %v5443, 1e-05
        %v5462 = vadd.f32 %v5444, 1e-05
        %v5463 = vrsqrt.pop %v5461
        %v5464 = vrsqrt.pop %v5462
        %5466 = vset.pattern.permute.xlu0 0
        %5467 = vperm.xlu0 %5466, %v5463
        %v5468 = vpop.permute.xlu0 %5467
        %5471 = vset.pattern.permute.xlu0 0
        %5472 = vperm.xlu0 %5471, %v5464
        %v5473 = vpop.permute.xlu0 %5472
        %v5475 = vmul.f32 %v5455, %v5468
        %v5476 = vmul.f32 %v5456, %v5468
        %v5477 = vmul.f32 %v5457, %v5468
        %v5478 = vmul.f32 %v5458, %v5473
        %v5479 = vmul.f32 %v5459, %v5473
        %v5480 = vmul.f32 %v5460, %v5473
        %5482 = vset.pattern.permute.xlu0 0
        %5483 = vperm.xlu0 %5482, %v5249
        %v5484 = vpop.permute.xlu0 %5483
        %5487 = vset.pattern.permute.xlu0 0
        %5488 = vperm.xlu0 %5487, %v5250
        %v5489 = vpop.permute.xlu0 %5488
        %v5491 = vmul.f32 %v5475, %v5484
        %v5492 = vmul.f32 %v5476, %v5484
        %v5493 = vmul.f32 %v5477, %v5484
        %v5494 = vmul.f32 %v5478, %v5489
        %v5495 = vmul.f32 %v5479, %v5489
        %v5496 = vmul.f32 %v5480, %v5489
        %5498 = vset.pattern.permute.xlu0 0
        %5499 = vperm.xlu0 %5498, %v5251
        %v5500 = vpop.permute.xlu0 %5499
        %5503 = vset.pattern.permute.xlu0 0
        %5504 = vperm.xlu0 %5503, %v5252
        %v5505 = vpop.permute.xlu0 %5504
        %v5507 = vadd.f32 %v5491, %v5500
        %v5508 = vadd.f32 %v5492, %v5500
        %v5509 = vadd.f32 %v5493, %v5500
        %v5510 = vadd.f32 %v5494, %v5505
        %v5511 = vadd.f32 %v5495, %v5505
        %v5512 = vadd.f32 %v5496, %v5505
        %vm5513 = vcmp.ge.f32.partialorder %v5507, 0.0
        %vm5514 = vcmp.ge.f32.partialorder %v5508, 0.0
        %vm5515 = vcmp.ge.f32.partialorder %v5509, 0.0
        %vm5516 = vcmp.ge.f32.partialorder %v5510, 0.0
        %vm5517 = vcmp.ge.f32.partialorder %v5511, 0.0
        %vm5518 = vcmp.ge.f32.partialorder %v5512, 0.0
        %v5519 = vmul.f32 %v5507, 0.2
        %v5520 = vmul.f32 %v5508, 0.2
        %v5521 = vmul.f32 %v5509, 0.2
        %v5522 = vmul.f32 %v5510, 0.2
        %v5523 = vmul.f32 %v5511, 0.2
        %v5524 = vmul.f32 %v5512, 0.2
        %v5525 = vsel %vm5513, %v5507, %v5519
        %v5526 = vsel %vm5514, %v5508, %v5520
        %v5527 = vsel %vm5515, %v5509, %v5521
        %v5528 = vsel %vm5516, %v5510, %v5522
        %v5529 = vsel %vm5517, %v5511, %v5523
        %v5530 = vsel %vm5518, %v5512, %v5524
        %v5531 = vadd.f32 %v4227, %v5525
        %v5532 = vadd.f32 %v4228, %v5526
        %v5533 = vadd.f32 %v4229, %v5527
        %v5534 = vadd.f32 %v4230, %v5528
        %v5535 = vadd.f32 %v4231, %v5529
        %v5536 = vadd.f32 %v4232, %v5530
        %5537 = vst [vmem:[%s650] sm:$0xff] %v5531
        %5538 = vst [vmem:[%s650 + $0x8] sm:$0xff] %v5532
        %5539 = vst.msk [vmem:[%s650 + $0x10] sm:$0xff] %vm1890, %v5533
        %5540 = vst [vmem:[%s650 + $0x18] sm:$0xff] %v5534
        %5541 = vst [vmem:[%s650 + $0x20] sm:$0xff] %v5535
        %5542 = vst.msk [vmem:[%s650 + $0x28] sm:$0xff] %vm1890, %v5536
        %s5543 = sand.u32 %s324, 1
        %s5544 = scalar_lea.sflag [#allocation6], %s5543
        %s5545 = sand.u32 %s324, 1
        %s5546 = smul.addr %s5545, 48
        %s5547 = scalar_lea.vmem [#allocation24], %s5546
        // Predicated region
        $region125: #{decoder_up_fuse_forward.1} parent=71 // pred_check
          %p5548 = pneg %p334
        $region126: #{decoder_up_fuse_forward.1} parent=71 // pred_check_branch
          %5550 = sbr.rel (%p5548) target = $region128
        $region127: #{decoder_up_fuse_forward.1} parent=71 // pred_region
          %s5552 = ssub.s32 768, 768
          %5553 = vsyncadd %s5544, %s5552
          %s5554 = smul.addr %s33, 6
          %s5555 = smul.addr %s5554, 128
          %s5556 = scalar_lea.hbm %s13, %s5555
          %s5557 = sshll.u32 %s5547, 4
          %s5558 = int_to_ptr.vmem [resolvable:$true] %s5557
          %5563 = dma.vmem_to_hbm [thread:$0]  %s5558, 768, %s5556, %s5544, 384, 384, 24
        $region128: #{decoder_up_fuse_forward.1} parent=71 // pred_fallthru
          _
      $region72: #{decoder_up_fuse_forward.1} parent=5 // pred_fallthru
        _
      %p5564 = scmp.le.s32.totalorder 2, %s28
      // Predicated region
      $region129: #{decoder_up_fuse_forward.1} parent=5 // pred_check
        %p5565 = pneg %p5564
      $region130: #{decoder_up_fuse_forward.1} parent=5 // pred_check_branch
        %5567 = sbr.rel (%p5565) target = $region132
      $region131: #{decoder_up_fuse_forward.1} parent=5 // pred_region
        %s5568 = ssub.s32 %s28, 2
        // Predicated region
        $region133: #{decoder_up_fuse_forward.1} parent=131 // pred_check
          %p5569 = pneg %p340
        $region134: #{decoder_up_fuse_forward.1} parent=131 // pred_check_branch
          %5571 = sbr.rel (%p5569) target = $region136
        $region135: #{decoder_up_fuse_forward.1} parent=131 // pred_region
          %s5572 = sand.u32 %s325, 1
          %s5573 = scalar_lea.sflag [#allocation6], %s5572
          %s5574 = sand.u32 %s325, 1
          %s5575 = smul.addr %s5574, 48
          %s5576 = scalar_lea.vmem [#allocation24], %s5575
          %5577 = dma.done %s5573, 768
        $region136: #{decoder_up_fuse_forward.1} parent=131 // pred_fallthru
          _
      $region132: #{decoder_up_fuse_forward.1} parent=5 // pred_fallthru
        _
    $region6: #{decoder_up_fuse_forward.1} parent=1 // loop_footer
      %s32 = sadd.s32 1, %s28
    $region7: #{decoder_up_fuse_forward.1} parent=1 // loop_footer_branch
      %27 = sbr.rel target = $region3
    $region8: #{decoder_up_fuse_forward.1} parent=1 // loop_exit
      _
    %5578 = vsyncpa [#allocation5], 1
    %s5579 = scalar_lea.sflag [#allocation5], 1
    %5580 = vsyncpa %s5579, 1
    %5581 = vsyncpa [#allocation8], 1
    %5582 = vsyncpa [#allocation13], 1
    %5583 = vsyncpa [#allocation16], 1
    %5584 = vsyncpa [#allocation19], 1
    %5585 = vsyncpa [#allocation22], 1
    %5586 = vsyncpa [#allocation6], 1
    %s5587 = scalar_lea.sflag [#allocation6], 1
    %5588 = vsyncpa %s5587, 1

</llo_original>
